<compile_context>
chip_gen: v6e
topology: v6e:2x2x1
jax: 0.10.0
libtpu: 0.0.40
codegen_flags: <defaults>
</compile_context>

<pallas_src>
import functools

import numpy as np

import jax
import jax.numpy as jnp
from jax import lax
from jax.experimental import pallas as pl
from jax.experimental.pallas import tpu as pltpu


# ------------------------------ fused kernel --------------------------------

def _zero_halo(pad_ref, p, H, W, C):
    """Zero only the halo border of a (H+2p, W+2p, C) VMEM pad buffer.

    Runs every grid step (NOT gated on program_id): with 'parallel' dimension
    semantics on v7x the second TensorCore may never execute step 0, so the
    halo must be (re)written unconditionally.
    """
    wp = W + 2 * p
    z_row = jnp.zeros((p, wp, C), jnp.float32)
    pad_ref[0:p, :, :] = z_row                      # top rows (full width)
    pad_ref[p + H:2 * p + H, :, :] = z_row          # bottom rows (full width)
    z_col = jnp.zeros((H, p, C), jnp.float32)
    pad_ref[p:p + H, 0:p, :] = z_col                # left columns (interior rows)
    pad_ref[p:p + H, p + W:wp, :] = z_col           # right columns (interior rows)


def _unify_fused_kernel(xcat_ref, wal_ref, w3_ref, w5_ref, w1_ref, w2_ref,
                        wsq_ref, wfs_ref, wcv_ref, bias_ref,
                        o_ref,
                        xpad1_ref, xpad2_ref, aggf_ref,
                        *, H, W, C):
    """One batch element of Unify: align + FieldSelect + cve, all in VMEM."""
    CH = C // 2
    HW = H * W
    WP = W + 6                                       # padded width for squeeze agg

    # --- align: block-diagonal 1x1 conv over the concatenated inputs (bf16 MXU)
    xin = jnp.dot(xcat_ref[0], wal_ref[...],
                  preferred_element_type=jnp.float32) + bias_ref[0:1, :]   # (HW, C) f32

    # --- stash xin in the dw3 pad scratch (re-read at the end, keeps it out of
    #     the register file across the depthwise loops); halo-only zeroing.
    _zero_halo(xpad1_ref, 1, H, W, C)
    xpad1_ref[1:1 + H, 1:1 + W, :] = xin.reshape(H, W, C)

    # --- fs.conv0: depthwise 3x3, pad 1 --------------------------------------
    # kw outermost: one W-shifted slab per kw, free leading-dim H slices inside.
    t1 = jnp.broadcast_to(bias_ref[1, :], (H, W, C))          # bias-initialized acc
    for kw in range(3):
        slab = xpad1_ref[:, kw:kw + W, :]                     # (H+2, W, C)
        for kh in range(3):
            t1 = t1 + slab[kh:kh + H] * w3_ref[kh, kw]

    # --- stash t1 in the dw5 pad scratch (also serves as its input) ----------
    _zero_halo(xpad2_ref, 4, H, W, C)
    xpad2_ref[4:4 + H, 4:4 + W, :] = t1

    # --- fs.conv_spatial: depthwise 5x5, pad 4, dilation 2 --------------------
    t2 = jnp.broadcast_to(bias_ref[2, :], (H, W, C))
    for kw in range(5):
        slab = xpad2_ref[:, 2 * kw:2 * kw + W, :]             # (H+8, W, C)
        for kh in range(5):
            t2 = t2 + slab[2 * kh:2 * kh + H] * w5_ref[kh, kw]

    # --- fs.conv1 / fs.conv2 (1x1, bf16 MXU) ----------------------------------
    t1r = xpad2_ref[4:4 + H, 4:4 + W, :].reshape(HW, C)       # re-read t1 from VMEM
    attn1 = jnp.dot(t1r.astype(jnp.bfloat16), w1_ref[...],
                    preferred_element_type=jnp.float32) + bias_ref[3:4, 0:CH]
    attn2 = jnp.dot(t2.reshape(HW, C).astype(jnp.bfloat16), w2_ref[...],
                    preferred_element_type=jnp.float32) + bias_ref[4:5, 0:CH]
    attn1_sp = attn1.reshape(H, W, CH)
    attn2_sp = attn2.reshape(H, W, CH)

    # --- channel mean / max -> (H, W) planes (W on lanes) ---------------------
    avg2d = (jnp.sum(attn1_sp, axis=-1) + jnp.sum(attn2_sp, axis=-1)) * (1.0 / C)
    mx2d = jnp.maximum(jnp.max(attn1_sp, axis=-1), jnp.max(attn2_sp, axis=-1))

    # --- conv_squeeze 7x7 (2->2), pad 3, as ONE lane-dense MXU matmul ---------
    # aggf layout: (H+6, 2*(W+6)), lanes = [ic*(W+6) + w_pad]; tiny -> full memset.
    aggf_ref[...] = jnp.zeros_like(aggf_ref)
    aggf_ref[3:3 + H, 3:3 + W] = avg2d
    aggf_ref[3:3 + H, WP + 3:WP + 3 + W] = mx2d
    a_im2col = jnp.concatenate(
        [aggf_ref[kh:kh + H, :] for kh in range(7)], axis=-1)  # (H, 7*2*(W+6))
    s_flat = jnp.dot(a_im2col, wsq_ref[...],
                     preferred_element_type=jnp.float32) + bias_ref[5:6, 0:2 * W]
    sig = jax.nn.sigmoid(s_flat)                               # (H, 2W): [oc*W + w]
    sig1 = sig[:, 0:W].reshape(H, W, 1)
    sig2 = sig[:, W:2 * W].reshape(H, W, 1)

    # --- sigmoid-select + fs.conv (1x1) + x * attn -----------------------------
    comb = attn1_sp * sig1 + attn2_sp * sig2                   # (H, W, CH)
    y = jnp.dot(comb.reshape(HW, CH).astype(jnp.bfloat16), wfs_ref[...],
                preferred_element_type=jnp.float32) + bias_ref[6:7, :]     # (HW, C)
    xin_r = xpad1_ref[1:1 + H, 1:1 + W, :].reshape(HW, C)      # re-read xin from VMEM
    fs_out = xin_r * y

    # --- cve: 1x1 conv + folded BatchNorm + SiLU -------------------------------
    z = jnp.dot(fs_out.astype(jnp.bfloat16), wcv_ref[...],
                preferred_element_type=jnp.float32) + bias_ref[7:8, :]
    o_ref[0] = (z * jax.nn.sigmoid(z)).astype(o_ref.dtype)


_WEIGHT_ORDER = ("w_align", "w_dw3", "w_dw5", "w1", "w2",
                 "w_sq_big", "w_fs", "w_cve", "biases")


def _unify_fused_call(xcat, prep, H, W):
    B, HW, Cin = xcat.shape
    C = prep["w_dw3"].shape[-1]
    weights = [prep[k] for k in _WEIGHT_ORDER]

    in_specs = [pl.BlockSpec((1, HW, Cin), lambda b: (b, 0, 0))]
    for arr in weights:
        in_specs.append(pl.BlockSpec(arr.shape, lambda b, _n=arr.ndim: (0,) * _n))

    return pl.pallas_call(
        functools.partial(_unify_fused_kernel, H=H, W=W, C=C),
        out_shape=jax.ShapeDtypeStruct((B, HW, C), jnp.float32),
        grid=(B,),
        in_specs=in_specs,
        out_specs=pl.BlockSpec((1, HW, C), lambda b: (b, 0, 0)),
        scratch_shapes=[
            pltpu.VMEM((H + 2, W + 2, C), jnp.float32),       # dw3x3 padded input / xin stash
            pltpu.VMEM((H + 8, W + 8, C), jnp.float32),       # dw5x5(dil2) padded input / t1 stash
            pltpu.VMEM((H + 6, 2 * (W + 6)), jnp.float32),    # flattened padded agg for squeeze
        ],
        compiler_params=pltpu.CompilerParams(
            dimension_semantics=("parallel",)),               # v7x: shard batch on 2 TCs
    )(xcat, *weights)


# ----------------------------- param preparation ----------------------------

def prepare_params(p, out_w):
    """Fold BN, build block-diag align weight, banded squeeze weight, packed biases."""
    cm = p["fs_conv0_w"].shape[-1]                 # 192
    ch = cm // 2
    c0 = p["align0_w"].shape[0]
    c1 = p["align1_w"].shape[0]
    c2 = p["align2_w"].shape[0]

    # Block-diagonal align weight (one MXU matmul over the 448-ch concat input).
    w_align = jnp.zeros((c0 + c1 + c2, cm), jnp.float32)
    w_align = w_align.at[0:c0, 0:64].set(p["align0_w"])
    w_align = w_align.at[c0:c0 + c1, 64:128].set(p["align1_w"])
    w_align = w_align.at[c0 + c1:, 128:192].set(p["align2_w"])

    # Fold cve BatchNorm (eval mode) into the 1x1 conv.
    scale = p["cve_bn_g"] * lax.rsqrt(p["cve_bn_v"] + 1e-5)
    w_cve = p["cve_w"] * scale[None, :]
    b_cve = p["cve_bn_b"] - p["cve_bn_m"] * scale

    # Banded im2col weight for the 7x7 squeeze conv:
    #   A[h, j]          with j = kh*2*(W+6) + ic*(W+6) + w_pad
    #   wsq_big[j, n]    with n = oc*W + w,   kw = w_pad - w in [0, 7)
    wp_tot = out_w + 6
    wsq = np.asarray(p["fs_sq_w"], np.float32)     # (7, 7, ic, oc)
    wsq_big = np.zeros((7 * 2 * wp_tot, 2 * out_w), np.float32)
    for kh in range(7):
        for ic in range(2):
            for kw in range(7):
                for w in range(out_w):
                    j = kh * 2 * wp_tot + ic * wp_tot + (w + kw)
                    for oc in range(2):
                        wsq_big[j, oc * out_w + w] = wsq[kh, kw, ic, oc]

    # Packed per-row biases (one DMA instead of eight tiny ones).
    biases = np.zeros((8, cm), np.float32)
    biases[0, :] = np.asarray(jnp.concatenate(
        [p["align0_b"], p["align1_b"], p["align2_b"]]))
    biases[1, :] = np.asarray(p["fs_conv0_b"])
    biases[2, :] = np.asarray(p["fs_sp_b"])
    biases[3, :ch] = np.asarray(p["fs_conv1_b"])
    biases[4, :ch] = np.asarray(p["fs_conv2_b"])
    biases[5, :2 * out_w] = np.repeat(np.asarray(p["fs_sq_b"], np.float32), out_w)
    biases[6, :] = np.asarray(p["fs_conv_b"])
    biases[7, :] = np.asarray(b_cve)

    return dict(
        w_align=w_align.astype(jnp.bfloat16),
        w_dw3=p["fs_conv0_w"],                      # f32 (VPU)
        w_dw5=p["fs_sp_w"],                         # f32 (VPU)
        w1=p["fs_conv1_w"].astype(jnp.bfloat16),
        w2=p["fs_conv2_w"].astype(jnp.bfloat16),
        w_sq_big=jnp.asarray(wsq_big),              # f32 (tiny MXU dot)
        w_fs=p["fs_conv_w"].astype(jnp.bfloat16),
        w_cve=w_cve.astype(jnp.bfloat16),
        biases=jnp.asarray(biases),
    )


# ------------------------------- Unify forward ------------------------------

def unify_forward(prep, x0, x1, x2):
    """Inputs NCHW (as in PyTorch); output NCHW."""
    # NCHW -> NHWC (glue)
    x0 = jnp.transpose(x0, (0, 2, 3, 1))
    x1 = jnp.transpose(x1, (0, 2, 3, 1))
    x2 = jnp.transpose(x2, (0, 2, 3, 1))

    B, H2, W2, C0 = x0.shape
    H, W = H2 // 2, W2 // 2

    # AvgPool2d(2, 2) (glue: reshape-mean)
    x0p = x0.reshape(B, H, 2, W, 2, C0).mean(axis=(2, 4))

    # F.interpolate(..., mode='nearest') to (H, W) (glue: index gather)
    h_in, w_in = x2.shape[1], x2.shape[2]
    hi = (jnp.arange(H) * h_in // H).astype(jnp.int32)
    wi = (jnp.arange(W) * w_in // W).astype(jnp.int32)
    x2u = x2[:, hi][:, :, wi]

    # concat to 448 channels; flatten spatial; ship bf16 (halves input DMA).
    xcat = jnp.concatenate([x0p, x1, x2u], axis=-1)
    xcat = xcat.reshape(B, H * W, xcat.shape[-1]).astype(jnp.bfloat16)

    out = _unify_fused_call(xcat, prep, H, W)            # (B, HW, 192)
    C = out.shape[-1]
    return jnp.transpose(out.reshape(B, H, W, C), (0, 3, 1, 2))   # back to NCHW


# -------------------------- pure-JAX reference (NCHW) -----------------------

def reference_forward(params, x0, x1, x2):
    hp = lax.Precision.HIGHEST

    def conv1x1(x, w, b=None):
        y = jnp.einsum("bchw,co->bohw", x, w, precision=hp)
        return y if b is None else y + b[None, :, None, None]

    def dwconv(x, w, b, pad, dil):
        C = x.shape[1]
        wk = jnp.transpose(w, (2, 0, 1))[:, None, :, :]    # (C,1,K,K) OIHW
        y = lax.conv_general_dilated(
            x, wk, (1, 1), [(pad, pad), (pad, pad)], rhs_dilation=(dil, dil),
            dimension_numbers=("NCHW", "OIHW", "NCHW"),
            feature_group_count=C, precision=hp)
        return y + b[None, :, None, None]

    def conv2d(x, w, b, pad):
        wk = jnp.transpose(w, (3, 2, 0, 1))                 # OIHW
        y = lax.conv_general_dilated(
            x, wk, (1, 1), [(pad, pad), (pad, pad)],
            dimension_numbers=("NCHW", "OIHW", "NCHW"), precision=hp)
        return y + b[None, :, None, None]

    B, C0, H2, W2 = x0.shape
    H, W = H2 // 2, W2 // 2
    x0p = x0.reshape(B, C0, H, 2, W, 2).mean(axis=(3, 5))
    h_in, w_in = x2.shape[2], x2.shape[3]
    hi = (jnp.arange(H) * h_in // H).astype(jnp.int32)
    wi = (jnp.arange(W) * w_in // W).astype(jnp.int32)
    x2u = x2[:, :, hi][:, :, :, wi]

    a0 = conv1x1(x0p, params["align0_w"], params["align0_b"])
    a1 = conv1x1(x1, params["align1_w"], params["align1_b"])
    a2 = conv1x1(x2u, params["align2_w"], params["align2_b"])
    xin = jnp.concatenate([a0, a1, a2], axis=1)

    t1 = dwconv(xin, params["fs_conv0_w"], params["fs_conv0_b"], 1, 1)
    t2 = dwconv(t1, params["fs_sp_w"], params["fs_sp_b"], 4, 2)
    attn1 = conv1x1(t1, params["fs_conv1_w"], params["fs_conv1_b"])
    attn2 = conv1x1(t2, params["fs_conv2_w"], params["fs_conv2_b"])
    attn = jnp.concatenate([attn1, attn2], axis=1)
    avg_attn = jnp.mean(attn, axis=1, keepdims=True)
    max_attn = jnp.max(attn, axis=1, keepdims=True)
    agg = jnp.concatenate([avg_attn, max_attn], axis=1)
    sig = jax.nn.sigmoid(conv2d(agg, params["fs_sq_w"], params["fs_sq_b"], 3))
    attn_c = attn1 * sig[:, 0:1] + attn2 * sig[:, 1:2]
    fs = xin * conv1x1(attn_c, params["fs_conv_w"], params["fs_conv_b"])

    scale = params["cve_bn_g"] / jnp.sqrt(params["cve_bn_v"] + 1e-5)
    y = conv1x1(fs, params["cve_w"])
    y = ((y - params["cve_bn_m"][None, :, None, None]) * scale[None, :, None, None]
         + params["cve_bn_b"][None, :, None, None])
    return y * jax.nn.sigmoid(y)


# ------------------------------- parameter init -----------------------------

def init_params(key):
    cm = 192                       # int(64 * 3)
    keys = jax.random.split(key, 24)

    def nrm(k, shape, s):
        return s * jax.random.normal(k, shape, jnp.float32)

    p = {}
    # 1x1 conv weights stored as (Cin, Cout); biases as (Cout,)
    p["align0_w"] = nrm(keys[0], (64, 64), 0.10);  p["align0_b"] = nrm(keys[1], (64,), 0.05)
    p["align1_w"] = nrm(keys[2], (128, 64), 0.08); p["align1_b"] = nrm(keys[3], (64,), 0.05)
    p["align2_w"] = nrm(keys[4], (256, 64), 0.06); p["align2_b"] = nrm(keys[5], (64,), 0.05)
    # depthwise weights stored as (K, K, C)
    p["fs_conv0_w"] = nrm(keys[6], (3, 3, cm), 0.20); p["fs_conv0_b"] = nrm(keys[7], (cm,), 0.05)
    p["fs_sp_w"] = nrm(keys[8], (5, 5, cm), 0.10);    p["fs_sp_b"] = nrm(keys[9], (cm,), 0.05)
    p["fs_conv1_w"] = nrm(keys[10], (cm, cm // 2), 0.07); p["fs_conv1_b"] = nrm(keys[11], (cm // 2,), 0.05)
    p["fs_conv2_w"] = nrm(keys[12], (cm, cm // 2), 0.07); p["fs_conv2_b"] = nrm(keys[13], (cm // 2,), 0.05)
    # conv_squeeze weight stored as (7, 7, Cin=2, Cout=2)
    p["fs_sq_w"] = nrm(keys[14], (7, 7, 2, 2), 0.10); p["fs_sq_b"] = nrm(keys[15], (2,), 0.05)
    p["fs_conv_w"] = nrm(keys[16], (cm // 2, cm), 0.10); p["fs_conv_b"] = nrm(keys[17], (cm,), 0.05)
    # cve: conv (no bias) + BatchNorm params (eval mode)
    p["cve_w"] = nrm(keys[18], (cm, cm), 0.07)
    p["cve_bn_g"] = 1.0 + 0.1 * jax.random.normal(keys[19], (cm,), jnp.float32)
    p["cve_bn_b"] = nrm(keys[20], (cm,), 0.05)
    p["cve_bn_m"] = nrm(keys[21], (cm,), 0.05)
    p["cve_bn_v"] = 1.0 + 0.1 * jax.random.uniform(keys[22], (cm,), jnp.float32)
    return p


# ------------------------------------ main -----------------------------------

if __name__ == "__main__":
    key = jax.random.PRNGKey(0)
    kp, k0, k1, k2 = jax.random.split(key, 4)
    params = init_params(kp)

    B = 2
    # x[0]: (B, 64, 16, 16), x[1]: (B, 128, 8, 8), x[2]: (B, 256, 4, 4)  (NCHW)
    x0 = jax.random.normal(k0, (B, 64, 16, 16), jnp.float32)
    x1 = jax.random.normal(k1, (B, 128, 8, 8), jnp.float32)
    x2 = jax.random.normal(k2, (B, 256, 4, 4), jnp.float32)

    prep = prepare_params(params, out_w=x1.shape[-1])

    fwd = jax.jit(unify_forward)
    out = jax.block_until_ready(fwd(prep, x0, x1, x2))
    assert out.shape == (B, 192, 8, 8), out.shape

    ref = jax.block_until_ready(reference_forward(params, x0, x1, x2))
    err = float(jnp.max(jnp.abs(out - ref)))
    # bf16 MXU operands (f32 accumulate) vs the f32/HIGHEST reference: a few e-2
    # of absolute drift is expected; real indexing/semantics bugs are O(0.1-1).
    assert err < 5e-2, f"max abs diff vs reference: {err}"

    print("KERNEL_OK")
</pallas_src>

<mosaic_0001>
module attributes {stable_mosaic.version = 11 : i64} {
  func.func @_unify_fused_kernel(%arg0: i32, %arg1: memref<1x64x448xbf16, #tpu.memory_space<vmem>>, %arg2: memref<448x192xbf16, #tpu.memory_space<vmem>>, %arg3: memref<3x3x192xf32, #tpu.memory_space<vmem>>, %arg4: memref<5x5x192xf32, #tpu.memory_space<vmem>>, %arg5: memref<192x96xbf16, #tpu.memory_space<vmem>>, %arg6: memref<192x96xbf16, #tpu.memory_space<vmem>>, %arg7: memref<196x16xf32, #tpu.memory_space<vmem>>, %arg8: memref<96x192xbf16, #tpu.memory_space<vmem>>, %arg9: memref<192x192xbf16, #tpu.memory_space<vmem>>, %arg10: memref<8x192xf32, #tpu.memory_space<vmem>>, %arg11: memref<1x64x192xf32, #tpu.memory_space<vmem>>, %arg12: memref<10x10x192xf32, #tpu.memory_space<vmem>>, %arg13: memref<16x16x192xf32, #tpu.memory_space<vmem>>, %arg14: memref<14x28xf32, #tpu.memory_space<vmem>>) attributes {dimension_semantics = [#tpu.dimension_semantics<parallel>], iteration_bounds = array<i64: 2>, scalar_prefetch = 0 : i64, scratch_operands = 3 : i64, tpu.core_type = #tpu.core_type<tc>, window_params = [{transform_indices = @transform_0, window_bounds = array<i64: 1, 64, 448>}, {pipeline_mode = #tpu.pipeline_mode<synchronous>, transform_indices = @transform_1, window_bounds = array<i64: 448, 192>}, {pipeline_mode = #tpu.pipeline_mode<synchronous>, transform_indices = @transform_2, window_bounds = array<i64: 3, 3, 192>}, {pipeline_mode = #tpu.pipeline_mode<synchronous>, transform_indices = @transform_3, window_bounds = array<i64: 5, 5, 192>}, {pipeline_mode = #tpu.pipeline_mode<synchronous>, transform_indices = @transform_4, window_bounds = array<i64: 192, 96>}, {pipeline_mode = #tpu.pipeline_mode<synchronous>, transform_indices = @transform_5, window_bounds = array<i64: 192, 96>}, {pipeline_mode = #tpu.pipeline_mode<synchronous>, transform_indices = @transform_6, window_bounds = array<i64: 196, 16>}, {pipeline_mode = #tpu.pipeline_mode<synchronous>, transform_indices = @transform_7, window_bounds = array<i64: 96, 192>}, {pipeline_mode = #tpu.pipeline_mode<synchronous>, transform_indices = @transform_8, window_bounds = array<i64: 192, 192>}, {pipeline_mode = #tpu.pipeline_mode<synchronous>, transform_indices = @transform_9, window_bounds = array<i64: 8, 192>}, {transform_indices = @transform_10, window_bounds = array<i64: 1, 64, 192>}]} {
    %c0 = arith.constant 0 : index
    %c0_0 = arith.constant 0 : index
    %c0_1 = arith.constant 0 : index
    %0 = vector.load %arg1[%c0, %c0_0, %c0_1] : memref<1x64x448xbf16, #tpu.memory_space<vmem>>, vector<1x64x448xbf16>
    %1 = vector.shape_cast %0 : vector<1x64x448xbf16> to vector<64x448xbf16>
    %c0_2 = arith.constant 0 : index
    %c0_3 = arith.constant 0 : index
    %2 = vector.load %arg2[%c0_2, %c0_3] : memref<448x192xbf16, #tpu.memory_space<vmem>>, vector<448x192xbf16>
    %cst = arith.constant dense<0.000000e+00> : vector<64x192xf32>
    %3 = tpu.matmul %1, %2, %cst {dimension_numbers = #tpu.dot_dimension_numbers<[1], [0], [0], [1], [0, 0, 1, 1], [], []>} : vector<64x448xbf16>, vector<448x192xbf16>, vector<64x192xf32> -> vector<64x192xf32>
    %c0_4 = arith.constant 0 : index
    %c0_5 = arith.constant 0 : index
    %4 = vector.load %arg10[%c0_4, %c0_5] : memref<8x192xf32, #tpu.memory_space<vmem>>, vector<1x192xf32>
    %5 = vector.broadcast %4 : vector<1x192xf32> to vector<64x192xf32>
    %6 = arith.addf %3, %5 : vector<64x192xf32>
    %cst_6 = arith.constant 0.000000e+00 : f32
    %7 = vector.broadcast %cst_6 : f32 to vector<1x10x192xf32>
    %c0_7 = arith.constant 0 : index
    %c0_8 = arith.constant 0 : index
    %c0_9 = arith.constant 0 : index
    %8 = vector.load %arg12[%c0_7, %c0_8, %c0_9] : memref<10x10x192xf32, #tpu.memory_space<vmem>>, vector<1x10x192xf32>
    tpu.vector_store %arg12[%c0_7, %c0_8, %c0_9], %7 {strides = array<i32>} : memref<10x10x192xf32, #tpu.memory_space<vmem>>, vector<1x10x192xf32>,
    %c9 = arith.constant 9 : index
    %c0_10 = arith.constant 0 : index
    %c0_11 = arith.constant 0 : index
    %9 = vector.load %arg12[%c9, %c0_10, %c0_11] : memref<10x10x192xf32, #tpu.memory_space<vmem>>, vector<1x10x192xf32>
    tpu.vector_store %arg12[%c9, %c0_10, %c0_11], %7 {strides = array<i32>} : memref<10x10x192xf32, #tpu.memory_space<vmem>>, vector<1x10x192xf32>,
    %cst_12 = arith.constant 0.000000e+00 : f32
    %10 = vector.broadcast %cst_12 : f32 to vector<8x1x192xf32>
    %c1 = arith.constant 1 : index
    %c0_13 = arith.constant 0 : index
    %c0_14 = arith.constant 0 : index
    %11 = vector.load %arg12[%c1, %c0_13, %c0_14] : memref<10x10x192xf32, #tpu.memory_space<vmem>>, vector<8x1x192xf32>
    tpu.vector_store %arg12[%c1, %c0_13, %c0_14], %10 {strides = array<i32>} : memref<10x10x192xf32, #tpu.memory_space<vmem>>, vector<8x1x192xf32>,
    %c1_15 = arith.constant 1 : index
    %c9_16 = arith.constant 9 : index
    %c0_17 = arith.constant 0 : index
    %12 = vector.load %arg12[%c1_15, %c9_16, %c0_17] : memref<10x10x192xf32, #tpu.memory_space<vmem>>, vector<8x1x192xf32>
    tpu.vector_store %arg12[%c1_15, %c9_16, %c0_17], %10 {strides = array<i32>} : memref<10x10x192xf32, #tpu.memory_space<vmem>>, vector<8x1x192xf32>,
    %13 = vector.shape_cast %6 : vector<64x192xf32> to vector<8x8x192xf32>
    %c1_18 = arith.constant 1 : index
    %c1_19 = arith.constant 1 : index
    %c0_20 = arith.constant 0 : index
    %14 = vector.load %arg12[%c1_18, %c1_19, %c0_20] : memref<10x10x192xf32, #tpu.memory_space<vmem>>, vector<8x8x192xf32>
    tpu.vector_store %arg12[%c1_18, %c1_19, %c0_20], %13 {strides = array<i32>} : memref<10x10x192xf32, #tpu.memory_space<vmem>>, vector<8x8x192xf32>,
    %c1_21 = arith.constant 1 : index
    %c0_22 = arith.constant 0 : index
    %15 = vector.load %arg10[%c1_21, %c0_22] : memref<8x192xf32, #tpu.memory_space<vmem>>, vector<1x192xf32>
    %16 = vector.shape_cast %15 : vector<1x192xf32> to vector<192xf32>
    %17 = vector.shape_cast %16 : vector<192xf32> to vector<1x1x192xf32>
    %18 = vector.broadcast %17 : vector<1x1x192xf32> to vector<8x8x192xf32>
    %c0_23 = arith.constant 0 : index
    %c0_24 = arith.constant 0 : index
    %c0_25 = arith.constant 0 : index
    %19 = vector.load %arg12[%c0_23, %c0_24, %c0_25] : memref<10x10x192xf32, #tpu.memory_space<vmem>>, vector<10x8x192xf32>
    %20 = vector.extract_strided_slice %19 {offsets = [0, 0, 0], sizes = [8, 8, 192], strides = [1, 1, 1]} : vector<10x8x192xf32> to vector<8x8x192xf32>
    %c0_26 = arith.constant 0 : index
    %c0_27 = arith.constant 0 : index
    %c0_28 = arith.constant 0 : index
    %21 = vector.load %arg3[%c0_26, %c0_27, %c0_28] : memref<3x3x192xf32, #tpu.memory_space<vmem>>, vector<1x1x192xf32>
    %22 = vector.shape_cast %21 : vector<1x1x192xf32> to vector<192xf32>
    %23 = vector.shape_cast %22 : vector<192xf32> to vector<1x1x192xf32>
    %24 = vector.broadcast %23 : vector<1x1x192xf32> to vector<8x8x192xf32>
    %25 = arith.mulf %20, %24 : vector<8x8x192xf32>
    %26 = arith.addf %18, %25 : vector<8x8x192xf32>
    %27 = vector.extract_strided_slice %19 {offsets = [1, 0, 0], sizes = [8, 8, 192], strides = [1, 1, 1]} : vector<10x8x192xf32> to vector<8x8x192xf32>
    %c1_29 = arith.constant 1 : index
    %c0_30 = arith.constant 0 : index
    %c0_31 = arith.constant 0 : index
    %28 = vector.load %arg3[%c1_29, %c0_30, %c0_31] : memref<3x3x192xf32, #tpu.memory_space<vmem>>, vector<1x1x192xf32>
    %29 = vector.shape_cast %28 : vector<1x1x192xf32> to vector<192xf32>
    %30 = vector.shape_cast %29 : vector<192xf32> to vector<1x1x192xf32>
    %31 = vector.broadcast %30 : vector<1x1x192xf32> to vector<8x8x192xf32>
    %32 = arith.mulf %27, %31 : vector<8x8x192xf32>
    %33 = arith.addf %26, %32 : vector<8x8x192xf32>
    %34 = vector.extract_strided_slice %19 {offsets = [2, 0, 0], sizes = [8, 8, 192], strides = [1, 1, 1]} : vector<10x8x192xf32> to vector<8x8x192xf32>
    %c2 = arith.constant 2 : index
    %c0_32 = arith.constant 0 : index
    %c0_33 = arith.constant 0 : index
    %35 = vector.load %arg3[%c2, %c0_32, %c0_33] : memref<3x3x192xf32, #tpu.memory_space<vmem>>, vector<1x1x192xf32>
    %36 = vector.shape_cast %35 : vector<1x1x192xf32> to vector<192xf32>
    %37 = vector.shape_cast %36 : vector<192xf32> to vector<1x1x192xf32>
    %38 = vector.broadcast %37 : vector<1x1x192xf32> to vector<8x8x192xf32>
    %39 = arith.mulf %34, %38 : vector<8x8x192xf32>
    %40 = arith.addf %33, %39 : vector<8x8x192xf32>
    %c0_34 = arith.constant 0 : index
    %c1_35 = arith.constant 1 : index
    %c0_36 = arith.constant 0 : index
    %41 = vector.load %arg12[%c0_34, %c1_35, %c0_36] : memref<10x10x192xf32, #tpu.memory_space<vmem>>, vector<10x8x192xf32>
    %42 = vector.extract_strided_slice %41 {offsets = [0, 0, 0], sizes = [8, 8, 192], strides = [1, 1, 1]} : vector<10x8x192xf32> to vector<8x8x192xf32>
    %c0_37 = arith.constant 0 : index
    %c1_38 = arith.constant 1 : index
    %c0_39 = arith.constant 0 : index
    %43 = vector.load %arg3[%c0_37, %c1_38, %c0_39] : memref<3x3x192xf32, #tpu.memory_space<vmem>>, vector<1x1x192xf32>
    %44 = vector.shape_cast %43 : vector<1x1x192xf32> to vector<192xf32>
    %45 = vector.shape_cast %44 : vector<192xf32> to vector<1x1x192xf32>
    %46 = vector.broadcast %45 : vector<1x1x192xf32> to vector<8x8x192xf32>
    %47 = arith.mulf %42, %46 : vector<8x8x192xf32>
    %48 = arith.addf %40, %47 : vector<8x8x192xf32>
    %49 = vector.extract_strided_slice %41 {offsets = [1, 0, 0], sizes = [8, 8, 192], strides = [1, 1, 1]} : vector<10x8x192xf32> to vector<8x8x192xf32>
    %c1_40 = arith.constant 1 : index
    %c1_41 = arith.constant 1 : index
    %c0_42 = arith.constant 0 : index
    %50 = vector.load %arg3[%c1_40, %c1_41, %c0_42] : memref<3x3x192xf32, #tpu.memory_space<vmem>>, vector<1x1x192xf32>
    %51 = vector.shape_cast %50 : vector<1x1x192xf32> to vector<192xf32>
    %52 = vector.shape_cast %51 : vector<192xf32> to vector<1x1x192xf32>
    %53 = vector.broadcast %52 : vector<1x1x192xf32> to vector<8x8x192xf32>
    %54 = arith.mulf %49, %53 : vector<8x8x192xf32>
    %55 = arith.addf %48, %54 : vector<8x8x192xf32>
    %56 = vector.extract_strided_slice %41 {offsets = [2, 0, 0], sizes = [8, 8, 192], strides = [1, 1, 1]} : vector<10x8x192xf32> to vector<8x8x192xf32>
    %c2_43 = arith.constant 2 : index
    %c1_44 = arith.constant 1 : index
    %c0_45 = arith.constant 0 : index
    %57 = vector.load %arg3[%c2_43, %c1_44, %c0_45] : memref<3x3x192xf32, #tpu.memory_space<vmem>>, vector<1x1x192xf32>
    %58 = vector.shape_cast %57 : vector<1x1x192xf32> to vector<192xf32>
    %59 = vector.shape_cast %58 : vector<192xf32> to vector<1x1x192xf32>
    %60 = vector.broadcast %59 : vector<1x1x192xf32> to vector<8x8x192xf32>
    %61 = arith.mulf %56, %60 : vector<8x8x192xf32>
    %62 = arith.addf %55, %61 : vector<8x8x192xf32>
    %c0_46 = arith.constant 0 : index
    %c2_47 = arith.constant 2 : index
    %c0_48 = arith.constant 0 : index
    %63 = vector.load %arg12[%c0_46, %c2_47, %c0_48] : memref<10x10x192xf32, #tpu.memory_space<vmem>>, vector<10x8x192xf32>
    %64 = vector.extract_strided_slice %63 {offsets = [0, 0, 0], sizes = [8, 8, 192], strides = [1, 1, 1]} : vector<10x8x192xf32> to vector<8x8x192xf32>
    %c0_49 = arith.constant 0 : index
    %c2_50 = arith.constant 2 : index
    %c0_51 = arith.constant 0 : index
    %65 = vector.load %arg3[%c0_49, %c2_50, %c0_51] : memref<3x3x192xf32, #tpu.memory_space<vmem>>, vector<1x1x192xf32>
    %66 = vector.shape_cast %65 : vector<1x1x192xf32> to vector<192xf32>
    %67 = vector.shape_cast %66 : vector<192xf32> to vector<1x1x192xf32>
    %68 = vector.broadcast %67 : vector<1x1x192xf32> to vector<8x8x192xf32>
    %69 = arith.mulf %64, %68 : vector<8x8x192xf32>
    %70 = arith.addf %62, %69 : vector<8x8x192xf32>
    %71 = vector.extract_strided_slice %63 {offsets = [1, 0, 0], sizes = [8, 8, 192], strides = [1, 1, 1]} : vector<10x8x192xf32> to vector<8x8x192xf32>
    %c1_52 = arith.constant 1 : index
    %c2_53 = arith.constant 2 : index
    %c0_54 = arith.constant 0 : index
    %72 = vector.load %arg3[%c1_52, %c2_53, %c0_54] : memref<3x3x192xf32, #tpu.memory_space<vmem>>, vector<1x1x192xf32>
    %73 = vector.shape_cast %72 : vector<1x1x192xf32> to vector<192xf32>
    %74 = vector.shape_cast %73 : vector<192xf32> to vector<1x1x192xf32>
    %75 = vector.broadcast %74 : vector<1x1x192xf32> to vector<8x8x192xf32>
    %76 = arith.mulf %71, %75 : vector<8x8x192xf32>
    %77 = arith.addf %70, %76 : vector<8x8x192xf32>
    %78 = vector.extract_strided_slice %63 {offsets = [2, 0, 0], sizes = [8, 8, 192], strides = [1, 1, 1]} : vector<10x8x192xf32> to vector<8x8x192xf32>
    %c2_55 = arith.constant 2 : index
    %c2_56 = arith.constant 2 : index
    %c0_57 = arith.constant 0 : index
    %79 = vector.load %arg3[%c2_55, %c2_56, %c0_57] : memref<3x3x192xf32, #tpu.memory_space<vmem>>, vector<1x1x192xf32>
    %80 = vector.shape_cast %79 : vector<1x1x192xf32> to vector<192xf32>
    %81 = vector.shape_cast %80 : vector<192xf32> to vector<1x1x192xf32>
    %82 = vector.broadcast %81 : vector<1x1x192xf32> to vector<8x8x192xf32>
    %83 = arith.mulf %78, %82 : vector<8x8x192xf32>
    %84 = arith.addf %77, %83 : vector<8x8x192xf32>
    %cst_58 = arith.constant 0.000000e+00 : f32
    %85 = vector.broadcast %cst_58 : f32 to vector<4x16x192xf32>
    %c0_59 = arith.constant 0 : index
    %c0_60 = arith.constant 0 : index
    %c0_61 = arith.constant 0 : index
    %86 = vector.load %arg13[%c0_59, %c0_60, %c0_61] : memref<16x16x192xf32, #tpu.memory_space<vmem>>, vector<4x16x192xf32>
    tpu.vector_store %arg13[%c0_59, %c0_60, %c0_61], %85 {strides = array<i32>} : memref<16x16x192xf32, #tpu.memory_space<vmem>>, vector<4x16x192xf32>,
    %c12 = arith.constant 12 : index
    %c0_62 = arith.constant 0 : index
    %c0_63 = arith.constant 0 : index
    %87 = vector.load %arg13[%c12, %c0_62, %c0_63] : memref<16x16x192xf32, #tpu.memory_space<vmem>>, vector<4x16x192xf32>
    tpu.vector_store %arg13[%c12, %c0_62, %c0_63], %85 {strides = array<i32>} : memref<16x16x192xf32, #tpu.memory_space<vmem>>, vector<4x16x192xf32>,
    %cst_64 = arith.constant 0.000000e+00 : f32
    %88 = vector.broadcast %cst_64 : f32 to vector<8x4x192xf32>
    %c4 = arith.constant 4 : index
    %c0_65 = arith.constant 0 : index
    %c0_66 = arith.constant 0 : index
    %89 = vector.load %arg13[%c4, %c0_65, %c0_66] : memref<16x16x192xf32, #tpu.memory_space<vmem>>, vector<8x4x192xf32>
    tpu.vector_store %arg13[%c4, %c0_65, %c0_66], %88 {strides = array<i32>} : memref<16x16x192xf32, #tpu.memory_space<vmem>>, vector<8x4x192xf32>,
    %c4_67 = arith.constant 4 : index
    %c12_68 = arith.constant 12 : index
    %c0_69 = arith.constant 0 : index
    %90 = vector.load %arg13[%c4_67, %c12_68, %c0_69] : memref<16x16x192xf32, #tpu.memory_space<vmem>>, vector<8x4x192xf32>
    tpu.vector_store %arg13[%c4_67, %c12_68, %c0_69], %88 {strides = array<i32>} : memref<16x16x192xf32, #tpu.memory_space<vmem>>, vector<8x4x192xf32>,
    %c4_70 = arith.constant 4 : index
    %c4_71 = arith.constant 4 : index
    %c0_72 = arith.constant 0 : index
    %91 = vector.load %arg13[%c4_70, %c4_71, %c0_72] : memref<16x16x192xf32, #tpu.memory_space<vmem>>, vector<8x8x192xf32>
    tpu.vector_store %arg13[%c4_70, %c4_71, %c0_72], %84 {strides = array<i32>} : memref<16x16x192xf32, #tpu.memory_space<vmem>>, vector<8x8x192xf32>,
    %c2_73 = arith.constant 2 : index
    %c0_74 = arith.constant 0 : index
    %92 = vector.load %arg10[%c2_73, %c0_74] : memref<8x192xf32, #tpu.memory_space<vmem>>, vector<1x192xf32>
    %93 = vector.shape_cast %92 : vector<1x192xf32> to vector<192xf32>
    %94 = vector.shape_cast %93 : vector<192xf32> to vector<1x1x192xf32>
    %95 = vector.broadcast %94 : vector<1x1x192xf32> to vector<8x8x192xf32>
    %c0_75 = arith.constant 0 : index
    %c0_76 = arith.constant 0 : index
    %c0_77 = arith.constant 0 : index
    %96 = vector.load %arg13[%c0_75, %c0_76, %c0_77] : memref<16x16x192xf32, #tpu.memory_space<vmem>>, vector<16x8x192xf32>
    %97 = vector.extract_strided_slice %96 {offsets = [0, 0, 0], sizes = [8, 8, 192], strides = [1, 1, 1]} : vector<16x8x192xf32> to vector<8x8x192xf32>
    %c0_78 = arith.constant 0 : index
    %c0_79 = arith.constant 0 : index
    %c0_80 = arith.constant 0 : index
    %98 = vector.load %arg4[%c0_78, %c0_79, %c0_80] : memref<5x5x192xf32, #tpu.memory_space<vmem>>, vector<1x1x192xf32>
    %99 = vector.shape_cast %98 : vector<1x1x192xf32> to vector<192xf32>
    %100 = vector.shape_cast %99 : vector<192xf32> to vector<1x1x192xf32>
    %101 = vector.broadcast %100 : vector<1x1x192xf32> to vector<8x8x192xf32>
    %102 = arith.mulf %97, %101 : vector<8x8x192xf32>
    %103 = arith.addf %95, %102 : vector<8x8x192xf32>
    %104 = vector.extract_strided_slice %96 {offsets = [2, 0, 0], sizes = [8, 8, 192], strides = [1, 1, 1]} : vector<16x8x192xf32> to vector<8x8x192xf32>
    %c1_81 = arith.constant 1 : index
    %c0_82 = arith.constant 0 : index
    %c0_83 = arith.constant 0 : index
    %105 = vector.load %arg4[%c1_81, %c0_82, %c0_83] : memref<5x5x192xf32, #tpu.memory_space<vmem>>, vector<1x1x192xf32>
    %106 = vector.shape_cast %105 : vector<1x1x192xf32> to vector<192xf32>
    %107 = vector.shape_cast %106 : vector<192xf32> to vector<1x1x192xf32>
    %108 = vector.broadcast %107 : vector<1x1x192xf32> to vector<8x8x192xf32>
    %109 = arith.mulf %104, %108 : vector<8x8x192xf32>
    %110 = arith.addf %103, %109 : vector<8x8x192xf32>
    %111 = vector.extract_strided_slice %96 {offsets = [4, 0, 0], sizes = [8, 8, 192], strides = [1, 1, 1]} : vector<16x8x192xf32> to vector<8x8x192xf32>
    %c2_84 = arith.constant 2 : index
    %c0_85 = arith.constant 0 : index
    %c0_86 = arith.constant 0 : index
    %112 = vector.load %arg4[%c2_84, %c0_85, %c0_86] : memref<5x5x192xf32, #tpu.memory_space<vmem>>, vector<1x1x192xf32>
    %113 = vector.shape_cast %112 : vector<1x1x192xf32> to vector<192xf32>
    %114 = vector.shape_cast %113 : vector<192xf32> to vector<1x1x192xf32>
    %115 = vector.broadcast %114 : vector<1x1x192xf32> to vector<8x8x192xf32>
    %116 = arith.mulf %111, %115 : vector<8x8x192xf32>
    %117 = arith.addf %110, %116 : vector<8x8x192xf32>
    %118 = vector.extract_strided_slice %96 {offsets = [6, 0, 0], sizes = [8, 8, 192], strides = [1, 1, 1]} : vector<16x8x192xf32> to vector<8x8x192xf32>
    %c3 = arith.constant 3 : index
    %c0_87 = arith.constant 0 : index
    %c0_88 = arith.constant 0 : index
    %119 = vector.load %arg4[%c3, %c0_87, %c0_88] : memref<5x5x192xf32, #tpu.memory_space<vmem>>, vector<1x1x192xf32>
    %120 = vector.shape_cast %119 : vector<1x1x192xf32> to vector<192xf32>
    %121 = vector.shape_cast %120 : vector<192xf32> to vector<1x1x192xf32>
    %122 = vector.broadcast %121 : vector<1x1x192xf32> to vector<8x8x192xf32>
    %123 = arith.mulf %118, %122 : vector<8x8x192xf32>
    %124 = arith.addf %117, %123 : vector<8x8x192xf32>
    %125 = vector.extract_strided_slice %96 {offsets = [8, 0, 0], sizes = [8, 8, 192], strides = [1, 1, 1]} : vector<16x8x192xf32> to vector<8x8x192xf32>
    %c4_89 = arith.constant 4 : index
    %c0_90 = arith.constant 0 : index
    %c0_91 = arith.constant 0 : index
    %126 = vector.load %arg4[%c4_89, %c0_90, %c0_91] : memref<5x5x192xf32, #tpu.memory_space<vmem>>, vector<1x1x192xf32>
    %127 = vector.shape_cast %126 : vector<1x1x192xf32> to vector<192xf32>
    %128 = vector.shape_cast %127 : vector<192xf32> to vector<1x1x192xf32>
    %129 = vector.broadcast %128 : vector<1x1x192xf32> to vector<8x8x192xf32>
    %130 = arith.mulf %125, %129 : vector<8x8x192xf32>
    %131 = arith.addf %124, %130 : vector<8x8x192xf32>
    %c0_92 = arith.constant 0 : index
    %c2_93 = arith.constant 2 : index
    %c0_94 = arith.constant 0 : index
    %132 = vector.load %arg13[%c0_92, %c2_93, %c0_94] : memref<16x16x192xf32, #tpu.memory_space<vmem>>, vector<16x8x192xf32>
    %133 = vector.extract_strided_slice %132 {offsets = [0, 0, 0], sizes = [8, 8, 192], strides = [1, 1, 1]} : vector<16x8x192xf32> to vector<8x8x192xf32>
    %c0_95 = arith.constant 0 : index
    %c1_96 = arith.constant 1 : index
    %c0_97 = arith.constant 0 : index
    %134 = vector.load %arg4[%c0_95, %c1_96, %c0_97] : memref<5x5x192xf32, #tpu.memory_space<vmem>>, vector<1x1x192xf32>
    %135 = vector.shape_cast %134 : vector<1x1x192xf32> to vector<192xf32>
    %136 = vector.shape_cast %135 : vector<192xf32> to vector<1x1x192xf32>
    %137 = vector.broadcast %136 : vector<1x1x192xf32> to vector<8x8x192xf32>
    %138 = arith.mulf %133, %137 : vector<8x8x192xf32>
    %139 = arith.addf %131, %138 : vector<8x8x192xf32>
    %140 = vector.extract_strided_slice %132 {offsets = [2, 0, 0], sizes = [8, 8, 192], strides = [1, 1, 1]} : vector<16x8x192xf32> to vector<8x8x192xf32>
    %c1_98 = arith.constant 1 : index
    %c1_99 = arith.constant 1 : index
    %c0_100 = arith.constant 0 : index
    %141 = vector.load %arg4[%c1_98, %c1_99, %c0_100] : memref<5x5x192xf32, #tpu.memory_space<vmem>>, vector<1x1x192xf32>
    %142 = vector.shape_cast %141 : vector<1x1x192xf32> to vector<192xf32>
    %143 = vector.shape_cast %142 : vector<192xf32> to vector<1x1x192xf32>
    %144 = vector.broadcast %143 : vector<1x1x192xf32> to vector<8x8x192xf32>
    %145 = arith.mulf %140, %144 : vector<8x8x192xf32>
    %146 = arith.addf %139, %145 : vector<8x8x192xf32>
    %147 = vector.extract_strided_slice %132 {offsets = [4, 0, 0], sizes = [8, 8, 192], strides = [1, 1, 1]} : vector<16x8x192xf32> to vector<8x8x192xf32>
    %c2_101 = arith.constant 2 : index
    %c1_102 = arith.constant 1 : index
    %c0_103 = arith.constant 0 : index
    %148 = vector.load %arg4[%c2_101, %c1_102, %c0_103] : memref<5x5x192xf32, #tpu.memory_space<vmem>>, vector<1x1x192xf32>
    %149 = vector.shape_cast %148 : vector<1x1x192xf32> to vector<192xf32>
    %150 = vector.shape_cast %149 : vector<192xf32> to vector<1x1x192xf32>
    %151 = vector.broadcast %150 : vector<1x1x192xf32> to vector<8x8x192xf32>
    %152 = arith.mulf %147, %151 : vector<8x8x192xf32>
    %153 = arith.addf %146, %152 : vector<8x8x192xf32>
    %154 = vector.extract_strided_slice %132 {offsets = [6, 0, 0], sizes = [8, 8, 192], strides = [1, 1, 1]} : vector<16x8x192xf32> to vector<8x8x192xf32>
    %c3_104 = arith.constant 3 : index
    %c1_105 = arith.constant 1 : index
    %c0_106 = arith.constant 0 : index
    %155 = vector.load %arg4[%c3_104, %c1_105, %c0_106] : memref<5x5x192xf32, #tpu.memory_space<vmem>>, vector<1x1x192xf32>
    %156 = vector.shape_cast %155 : vector<1x1x192xf32> to vector<192xf32>
    %157 = vector.shape_cast %156 : vector<192xf32> to vector<1x1x192xf32>
    %158 = vector.broadcast %157 : vector<1x1x192xf32> to vector<8x8x192xf32>
    %159 = arith.mulf %154, %158 : vector<8x8x192xf32>
    %160 = arith.addf %153, %159 : vector<8x8x192xf32>
    %161 = vector.extract_strided_slice %132 {offsets = [8, 0, 0], sizes = [8, 8, 192], strides = [1, 1, 1]} : vector<16x8x192xf32> to vector<8x8x192xf32>
    %c4_107 = arith.constant 4 : index
    %c1_108 = arith.constant 1 : index
    %c0_109 = arith.constant 0 : index
    %162 = vector.load %arg4[%c4_107, %c1_108, %c0_109] : memref<5x5x192xf32, #tpu.memory_space<vmem>>, vector<1x1x192xf32>
    %163 = vector.shape_cast %162 : vector<1x1x192xf32> to vector<192xf32>
    %164 = vector.shape_cast %163 : vector<192xf32> to vector<1x1x192xf32>
    %165 = vector.broadcast %164 : vector<1x1x192xf32> to vector<8x8x192xf32>
    %166 = arith.mulf %161, %165 : vector<8x8x192xf32>
    %167 = arith.addf %160, %166 : vector<8x8x192xf32>
    %c0_110 = arith.constant 0 : index
    %c4_111 = arith.constant 4 : index
    %c0_112 = arith.constant 0 : index
    %168 = vector.load %arg13[%c0_110, %c4_111, %c0_112] : memref<16x16x192xf32, #tpu.memory_space<vmem>>, vector<16x8x192xf32>
    %169 = vector.extract_strided_slice %168 {offsets = [0, 0, 0], sizes = [8, 8, 192], strides = [1, 1, 1]} : vector<16x8x192xf32> to vector<8x8x192xf32>
    %c0_113 = arith.constant 0 : index
    %c2_114 = arith.constant 2 : index
    %c0_115 = arith.constant 0 : index
    %170 = vector.load %arg4[%c0_113, %c2_114, %c0_115] : memref<5x5x192xf32, #tpu.memory_space<vmem>>, vector<1x1x192xf32>
    %171 = vector.shape_cast %170 : vector<1x1x192xf32> to vector<192xf32>
    %172 = vector.shape_cast %171 : vector<192xf32> to vector<1x1x192xf32>
    %173 = vector.broadcast %172 : vector<1x1x192xf32> to vector<8x8x192xf32>
    %174 = arith.mulf %169, %173 : vector<8x8x192xf32>
    %175 = arith.addf %167, %174 : vector<8x8x192xf32>
    %176 = vector.extract_strided_slice %168 {offsets = [2, 0, 0], sizes = [8, 8, 192], strides = [1, 1, 1]} : vector<16x8x192xf32> to vector<8x8x192xf32>
    %c1_116 = arith.constant 1 : index
    %c2_117 = arith.constant 2 : index
    %c0_118 = arith.constant 0 : index
    %177 = vector.load %arg4[%c1_116, %c2_117, %c0_118] : memref<5x5x192xf32, #tpu.memory_space<vmem>>, vector<1x1x192xf32>
    %178 = vector.shape_cast %177 : vector<1x1x192xf32> to vector<192xf32>
    %179 = vector.shape_cast %178 : vector<192xf32> to vector<1x1x192xf32>
    %180 = vector.broadcast %179 : vector<1x1x192xf32> to vector<8x8x192xf32>
    %181 = arith.mulf %176, %180 : vector<8x8x192xf32>
    %182 = arith.addf %175, %181 : vector<8x8x192xf32>
    %183 = vector.extract_strided_slice %168 {offsets = [4, 0, 0], sizes = [8, 8, 192], strides = [1, 1, 1]} : vector<16x8x192xf32> to vector<8x8x192xf32>
    %c2_119 = arith.constant 2 : index
    %c2_120 = arith.constant 2 : index
    %c0_121 = arith.constant 0 : index
    %184 = vector.load %arg4[%c2_119, %c2_120, %c0_121] : memref<5x5x192xf32, #tpu.memory_space<vmem>>, vector<1x1x192xf32>
    %185 = vector.shape_cast %184 : vector<1x1x192xf32> to vector<192xf32>
    %186 = vector.shape_cast %185 : vector<192xf32> to vector<1x1x192xf32>
    %187 = vector.broadcast %186 : vector<1x1x192xf32> to vector<8x8x192xf32>
    %188 = arith.mulf %183, %187 : vector<8x8x192xf32>
    %189 = arith.addf %182, %188 : vector<8x8x192xf32>
    %190 = vector.extract_strided_slice %168 {offsets = [6, 0, 0], sizes = [8, 8, 192], strides = [1, 1, 1]} : vector<16x8x192xf32> to vector<8x8x192xf32>
    %c3_122 = arith.constant 3 : index
    %c2_123 = arith.constant 2 : index
    %c0_124 = arith.constant 0 : index
    %191 = vector.load %arg4[%c3_122, %c2_123, %c0_124] : memref<5x5x192xf32, #tpu.memory_space<vmem>>, vector<1x1x192xf32>
    %192 = vector.shape_cast %191 : vector<1x1x192xf32> to vector<192xf32>
    %193 = vector.shape_cast %192 : vector<192xf32> to vector<1x1x192xf32>
    %194 = vector.broadcast %193 : vector<1x1x192xf32> to vector<8x8x192xf32>
    %195 = arith.mulf %190, %194 : vector<8x8x192xf32>
    %196 = arith.addf %189, %195 : vector<8x8x192xf32>
    %197 = vector.extract_strided_slice %168 {offsets = [8, 0, 0], sizes = [8, 8, 192], strides = [1, 1, 1]} : vector<16x8x192xf32> to vector<8x8x192xf32>
    %c4_125 = arith.constant 4 : index
    %c2_126 = arith.constant 2 : index
    %c0_127 = arith.constant 0 : index
    %198 = vector.load %arg4[%c4_125, %c2_126, %c0_127] : memref<5x5x192xf32, #tpu.memory_space<vmem>>, vector<1x1x192xf32>
    %199 = vector.shape_cast %198 : vector<1x1x192xf32> to vector<192xf32>
    %200 = vector.shape_cast %199 : vector<192xf32> to vector<1x1x192xf32>
    %201 = vector.broadcast %200 : vector<1x1x192xf32> to vector<8x8x192xf32>
    %202 = arith.mulf %197, %201 : vector<8x8x192xf32>
    %203 = arith.addf %196, %202 : vector<8x8x192xf32>
    %c0_128 = arith.constant 0 : index
    %c6 = arith.constant 6 : index
    %c0_129 = arith.constant 0 : index
    %204 = vector.load %arg13[%c0_128, %c6, %c0_129] : memref<16x16x192xf32, #tpu.memory_space<vmem>>, vector<16x8x192xf32>
    %205 = vector.extract_strided_slice %204 {offsets = [0, 0, 0], sizes = [8, 8, 192], strides = [1, 1, 1]} : vector<16x8x192xf32> to vector<8x8x192xf32>
    %c0_130 = arith.constant 0 : index
    %c3_131 = arith.constant 3 : index
    %c0_132 = arith.constant 0 : index
    %206 = vector.load %arg4[%c0_130, %c3_131, %c0_132] : memref<5x5x192xf32, #tpu.memory_space<vmem>>, vector<1x1x192xf32>
    %207 = vector.shape_cast %206 : vector<1x1x192xf32> to vector<192xf32>
    %208 = vector.shape_cast %207 : vector<192xf32> to vector<1x1x192xf32>
    %209 = vector.broadcast %208 : vector<1x1x192xf32> to vector<8x8x192xf32>
    %210 = arith.mulf %205, %209 : vector<8x8x192xf32>
    %211 = arith.addf %203, %210 : vector<8x8x192xf32>
    %212 = vector.extract_strided_slice %204 {offsets = [2, 0, 0], sizes = [8, 8, 192], strides = [1, 1, 1]} : vector<16x8x192xf32> to vector<8x8x192xf32>
    %c1_133 = arith.constant 1 : index
    %c3_134 = arith.constant 3 : index
    %c0_135 = arith.constant 0 : index
    %213 = vector.load %arg4[%c1_133, %c3_134, %c0_135] : memref<5x5x192xf32, #tpu.memory_space<vmem>>, vector<1x1x192xf32>
    %214 = vector.shape_cast %213 : vector<1x1x192xf32> to vector<192xf32>
    %215 = vector.shape_cast %214 : vector<192xf32> to vector<1x1x192xf32>
    %216 = vector.broadcast %215 : vector<1x1x192xf32> to vector<8x8x192xf32>
    %217 = arith.mulf %212, %216 : vector<8x8x192xf32>
    %218 = arith.addf %211, %217 : vector<8x8x192xf32>
    %219 = vector.extract_strided_slice %204 {offsets = [4, 0, 0], sizes = [8, 8, 192], strides = [1, 1, 1]} : vector<16x8x192xf32> to vector<8x8x192xf32>
    %c2_136 = arith.constant 2 : index
    %c3_137 = arith.constant 3 : index
    %c0_138 = arith.constant 0 : index
    %220 = vector.load %arg4[%c2_136, %c3_137, %c0_138] : memref<5x5x192xf32, #tpu.memory_space<vmem>>, vector<1x1x192xf32>
    %221 = vector.shape_cast %220 : vector<1x1x192xf32> to vector<192xf32>
    %222 = vector.shape_cast %221 : vector<192xf32> to vector<1x1x192xf32>
    %223 = vector.broadcast %222 : vector<1x1x192xf32> to vector<8x8x192xf32>
    %224 = arith.mulf %219, %223 : vector<8x8x192xf32>
    %225 = arith.addf %218, %224 : vector<8x8x192xf32>
    %226 = vector.extract_strided_slice %204 {offsets = [6, 0, 0], sizes = [8, 8, 192], strides = [1, 1, 1]} : vector<16x8x192xf32> to vector<8x8x192xf32>
    %c3_139 = arith.constant 3 : index
    %c3_140 = arith.constant 3 : index
    %c0_141 = arith.constant 0 : index
    %227 = vector.load %arg4[%c3_139, %c3_140, %c0_141] : memref<5x5x192xf32, #tpu.memory_space<vmem>>, vector<1x1x192xf32>
    %228 = vector.shape_cast %227 : vector<1x1x192xf32> to vector<192xf32>
    %229 = vector.shape_cast %228 : vector<192xf32> to vector<1x1x192xf32>
    %230 = vector.broadcast %229 : vector<1x1x192xf32> to vector<8x8x192xf32>
    %231 = arith.mulf %226, %230 : vector<8x8x192xf32>
    %232 = arith.addf %225, %231 : vector<8x8x192xf32>
    %233 = vector.extract_strided_slice %204 {offsets = [8, 0, 0], sizes = [8, 8, 192], strides = [1, 1, 1]} : vector<16x8x192xf32> to vector<8x8x192xf32>
    %c4_142 = arith.constant 4 : index
    %c3_143 = arith.constant 3 : index
    %c0_144 = arith.constant 0 : index
    %234 = vector.load %arg4[%c4_142, %c3_143, %c0_144] : memref<5x5x192xf32, #tpu.memory_space<vmem>>, vector<1x1x192xf32>
    %235 = vector.shape_cast %234 : vector<1x1x192xf32> to vector<192xf32>
    %236 = vector.shape_cast %235 : vector<192xf32> to vector<1x1x192xf32>
    %237 = vector.broadcast %236 : vector<1x1x192xf32> to vector<8x8x192xf32>
    %238 = arith.mulf %233, %237 : vector<8x8x192xf32>
    %239 = arith.addf %232, %238 : vector<8x8x192xf32>
    %c0_145 = arith.constant 0 : index
    %c8 = arith.constant 8 : index
    %c0_146 = arith.constant 0 : index
    %240 = vector.load %arg13[%c0_145, %c8, %c0_146] : memref<16x16x192xf32, #tpu.memory_space<vmem>>, vector<16x8x192xf32>
    %241 = vector.extract_strided_slice %240 {offsets = [0, 0, 0], sizes = [8, 8, 192], strides = [1, 1, 1]} : vector<16x8x192xf32> to vector<8x8x192xf32>
    %c0_147 = arith.constant 0 : index
    %c4_148 = arith.constant 4 : index
    %c0_149 = arith.constant 0 : index
    %242 = vector.load %arg4[%c0_147, %c4_148, %c0_149] : memref<5x5x192xf32, #tpu.memory_space<vmem>>, vector<1x1x192xf32>
    %243 = vector.shape_cast %242 : vector<1x1x192xf32> to vector<192xf32>
    %244 = vector.shape_cast %243 : vector<192xf32> to vector<1x1x192xf32>
    %245 = vector.broadcast %244 : vector<1x1x192xf32> to vector<8x8x192xf32>
    %246 = arith.mulf %241, %245 : vector<8x8x192xf32>
    %247 = arith.addf %239, %246 : vector<8x8x192xf32>
    %248 = vector.extract_strided_slice %240 {offsets = [2, 0, 0], sizes = [8, 8, 192], strides = [1, 1, 1]} : vector<16x8x192xf32> to vector<8x8x192xf32>
    %c1_150 = arith.constant 1 : index
    %c4_151 = arith.constant 4 : index
    %c0_152 = arith.constant 0 : index
    %249 = vector.load %arg4[%c1_150, %c4_151, %c0_152] : memref<5x5x192xf32, #tpu.memory_space<vmem>>, vector<1x1x192xf32>
    %250 = vector.shape_cast %249 : vector<1x1x192xf32> to vector<192xf32>
    %251 = vector.shape_cast %250 : vector<192xf32> to vector<1x1x192xf32>
    %252 = vector.broadcast %251 : vector<1x1x192xf32> to vector<8x8x192xf32>
    %253 = arith.mulf %248, %252 : vector<8x8x192xf32>
    %254 = arith.addf %247, %253 : vector<8x8x192xf32>
    %255 = vector.extract_strided_slice %240 {offsets = [4, 0, 0], sizes = [8, 8, 192], strides = [1, 1, 1]} : vector<16x8x192xf32> to vector<8x8x192xf32>
    %c2_153 = arith.constant 2 : index
    %c4_154 = arith.constant 4 : index
    %c0_155 = arith.constant 0 : index
    %256 = vector.load %arg4[%c2_153, %c4_154, %c0_155] : memref<5x5x192xf32, #tpu.memory_space<vmem>>, vector<1x1x192xf32>
    %257 = vector.shape_cast %256 : vector<1x1x192xf32> to vector<192xf32>
    %258 = vector.shape_cast %257 : vector<192xf32> to vector<1x1x192xf32>
    %259 = vector.broadcast %258 : vector<1x1x192xf32> to vector<8x8x192xf32>
    %260 = arith.mulf %255, %259 : vector<8x8x192xf32>
    %261 = arith.addf %254, %260 : vector<8x8x192xf32>
    %262 = vector.extract_strided_slice %240 {offsets = [6, 0, 0], sizes = [8, 8, 192], strides = [1, 1, 1]} : vector<16x8x192xf32> to vector<8x8x192xf32>
    %c3_156 = arith.constant 3 : index
    %c4_157 = arith.constant 4 : index
    %c0_158 = arith.constant 0 : index
    %263 = vector.load %arg4[%c3_156, %c4_157, %c0_158] : memref<5x5x192xf32, #tpu.memory_space<vmem>>, vector<1x1x192xf32>
    %264 = vector.shape_cast %263 : vector<1x1x192xf32> to vector<192xf32>
    %265 = vector.shape_cast %264 : vector<192xf32> to vector<1x1x192xf32>
    %266 = vector.broadcast %265 : vector<1x1x192xf32> to vector<8x8x192xf32>
    %267 = arith.mulf %262, %266 : vector<8x8x192xf32>
    %268 = arith.addf %261, %267 : vector<8x8x192xf32>
    %269 = vector.extract_strided_slice %240 {offsets = [8, 0, 0], sizes = [8, 8, 192], strides = [1, 1, 1]} : vector<16x8x192xf32> to vector<8x8x192xf32>
    %c4_159 = arith.constant 4 : index
    %c4_160 = arith.constant 4 : index
    %c0_161 = arith.constant 0 : index
    %270 = vector.load %arg4[%c4_159, %c4_160, %c0_161] : memref<5x5x192xf32, #tpu.memory_space<vmem>>, vector<1x1x192xf32>
    %271 = vector.shape_cast %270 : vector<1x1x192xf32> to vector<192xf32>
    %272 = vector.shape_cast %271 : vector<192xf32> to vector<1x1x192xf32>
    %273 = vector.broadcast %272 : vector<1x1x192xf32> to vector<8x8x192xf32>
    %274 = arith.mulf %269, %273 : vector<8x8x192xf32>
    %275 = arith.addf %268, %274 : vector<8x8x192xf32>
    %c4_162 = arith.constant 4 : index
    %c4_163 = arith.constant 4 : index
    %c0_164 = arith.constant 0 : index
    %276 = vector.load %arg13[%c4_162, %c4_163, %c0_164] : memref<16x16x192xf32, #tpu.memory_space<vmem>>, vector<8x8x192xf32>
    %277 = vector.shape_cast %276 : vector<8x8x192xf32> to vector<64x192xf32>
    %278 = arith.truncf %277 : vector<64x192xf32> to vector<64x192xbf16>
    %c0_165 = arith.constant 0 : index
    %c0_166 = arith.constant 0 : index
    %279 = vector.load %arg5[%c0_165, %c0_166] : memref<192x96xbf16, #tpu.memory_space<vmem>>, vector<192x96xbf16>
    %cst_167 = arith.constant dense<0.000000e+00> : vector<64x96xf32>
    %280 = tpu.matmul %278, %279, %cst_167 {dimension_numbers = #tpu.dot_dimension_numbers<[1], [0], [0], [1], [0, 0, 1, 1], [], []>} : vector<64x192xbf16>, vector<192x96xbf16>, vector<64x96xf32> -> vector<64x96xf32>
    %c3_168 = arith.constant 3 : index
    %c0_169 = arith.constant 0 : index
    %281 = vector.load %arg10[%c3_168, %c0_169] : memref<8x192xf32, #tpu.memory_space<vmem>>, vector<1x96xf32>
    %282 = vector.broadcast %281 : vector<1x96xf32> to vector<64x96xf32>
    %283 = arith.addf %280, %282 : vector<64x96xf32>
    %284 = vector.shape_cast %275 : vector<8x8x192xf32> to vector<64x192xf32>
    %285 = arith.truncf %284 : vector<64x192xf32> to vector<64x192xbf16>
    %c0_170 = arith.constant 0 : index
    %c0_171 = arith.constant 0 : index
    %286 = vector.load %arg6[%c0_170, %c0_171] : memref<192x96xbf16, #tpu.memory_space<vmem>>, vector<192x96xbf16>
    %cst_172 = arith.constant dense<0.000000e+00> : vector<64x96xf32>
    %287 = tpu.matmul %285, %286, %cst_172 {dimension_numbers = #tpu.dot_dimension_numbers<[1], [0], [0], [1], [0, 0, 1, 1], [], []>} : vector<64x192xbf16>, vector<192x96xbf16>, vector<64x96xf32> -> vector<64x96xf32>
    %c4_173 = arith.constant 4 : index
    %c0_174 = arith.constant 0 : index
    %288 = vector.load %arg10[%c4_173, %c0_174] : memref<8x192xf32, #tpu.memory_space<vmem>>, vector<1x96xf32>
    %289 = vector.broadcast %288 : vector<1x96xf32> to vector<64x96xf32>
    %290 = arith.addf %287, %289 : vector<64x96xf32>
    %291 = vector.shape_cast %283 : vector<64x96xf32> to vector<8x8x96xf32>
    %292 = vector.shape_cast %290 : vector<64x96xf32> to vector<8x8x96xf32>
    %cst_175 = arith.constant dense<0.000000e+00> : vector<8x8xf32>
    %293 = vector.multi_reduction <add>, %291, %cst_175 [2] : vector<8x8x96xf32> to vector<8x8xf32>
    %cst_176 = arith.constant dense<0.000000e+00> : vector<8x8xf32>
    %294 = vector.multi_reduction <add>, %292, %cst_176 [2] : vector<8x8x96xf32> to vector<8x8xf32>
    %295 = arith.addf %293, %294 : vector<8x8xf32>
    %cst_177 = arith.constant 0.00520833349 : f32
    %296 = vector.broadcast %cst_177 : f32 to vector<8x8xf32>
    %297 = arith.mulf %295, %296 : vector<8x8xf32>
    %cst_178 = arith.constant dense<0xFF800000> : vector<8x8xf32>
    %298 = vector.multi_reduction <maximumf>, %291, %cst_178 [2] : vector<8x8x96xf32> to vector<8x8xf32>
    %cst_179 = arith.constant dense<0xFF800000> : vector<8x8xf32>
    %299 = vector.multi_reduction <maximumf>, %292, %cst_179 [2] : vector<8x8x96xf32> to vector<8x8xf32>
    %300 = arith.maximumf %298, %299 : vector<8x8xf32>
    %cst_180 = arith.constant 0.000000e+00 : f32
    %301 = vector.broadcast %cst_180 : f32 to vector<14x28xf32>
    %c0_181 = arith.constant 0 : index
    %c0_182 = arith.constant 0 : index
    %302 = vector.load %arg14[%c0_181, %c0_182] : memref<14x28xf32, #tpu.memory_space<vmem>>, vector<14x28xf32>
    tpu.vector_store %arg14[%c0_181, %c0_182], %301 {strides = array<i32>} : memref<14x28xf32, #tpu.memory_space<vmem>>, vector<14x28xf32>,
    %c3_183 = arith.constant 3 : index
    %c3_184 = arith.constant 3 : index
    %303 = vector.load %arg14[%c3_183, %c3_184] : memref<14x28xf32, #tpu.memory_space<vmem>>, vector<8x8xf32>
    tpu.vector_store %arg14[%c3_183, %c3_184], %297 {strides = array<i32>} : memref<14x28xf32, #tpu.memory_space<vmem>>, vector<8x8xf32>,
    %c3_185 = arith.constant 3 : index
    %c17 = arith.constant 17 : index
    %304 = vector.load %arg14[%c3_185, %c17] : memref<14x28xf32, #tpu.memory_space<vmem>>, vector<8x8xf32>
    tpu.vector_store %arg14[%c3_185, %c17], %300 {strides = array<i32>} : memref<14x28xf32, #tpu.memory_space<vmem>>, vector<8x8xf32>,
    %c0_186 = arith.constant 0 : index
    %c0_187 = arith.constant 0 : index
    %305 = vector.load %arg14[%c0_186, %c0_187] : memref<14x28xf32, #tpu.memory_space<vmem>>, vector<8x28xf32>
    %c1_188 = arith.constant 1 : index
    %c0_189 = arith.constant 0 : index
    %306 = vector.load %arg14[%c1_188, %c0_189] : memref<14x28xf32, #tpu.memory_space<vmem>>, vector<8x28xf32>
    %c2_190 = arith.constant 2 : index
    %c0_191 = arith.constant 0 : index
    %307 = vector.load %arg14[%c2_190, %c0_191] : memref<14x28xf32, #tpu.memory_space<vmem>>, vector<8x28xf32>
    %c3_192 = arith.constant 3 : index
    %c0_193 = arith.constant 0 : index
    %308 = vector.load %arg14[%c3_192, %c0_193] : memref<14x28xf32, #tpu.memory_space<vmem>>, vector<8x28xf32>
    %c4_194 = arith.constant 4 : index
    %c0_195 = arith.constant 0 : index
    %309 = vector.load %arg14[%c4_194, %c0_195] : memref<14x28xf32, #tpu.memory_space<vmem>>, vector<8x28xf32>
    %c5 = arith.constant 5 : index
    %c0_196 = arith.constant 0 : index
    %310 = vector.load %arg14[%c5, %c0_196] : memref<14x28xf32, #tpu.memory_space<vmem>>, vector<8x28xf32>
    %c6_197 = arith.constant 6 : index
    %c0_198 = arith.constant 0 : index
    %311 = vector.load %arg14[%c6_197, %c0_198] : memref<14x28xf32, #tpu.memory_space<vmem>>, vector<8x28xf32>
    %312 = tpu.concatenate %305, %306, %307, %308, %309, %310, %311 in 1 : vector<8x28xf32>, vector<8x28xf32>, vector<8x28xf32>, vector<8x28xf32>, vector<8x28xf32>, vector<8x28xf32>, vector<8x28xf32> -> vector<8x196xf32>
    %c0_199 = arith.constant 0 : index
    %c0_200 = arith.constant 0 : index
    %313 = vector.load %arg7[%c0_199, %c0_200] : memref<196x16xf32, #tpu.memory_space<vmem>>, vector<196x16xf32>
    %cst_201 = arith.constant dense<0.000000e+00> : vector<8x16xf32>
    %314 = tpu.matmul %312, %313, %cst_201 {dimension_numbers = #tpu.dot_dimension_numbers<[1], [0], [0], [1], [0, 0, 1, 1], [], []>} : vector<8x196xf32>, vector<196x16xf32>, vector<8x16xf32> -> vector<8x16xf32>
    %c5_202 = arith.constant 5 : index
    %c0_203 = arith.constant 0 : index
    %315 = vector.load %arg10[%c5_202, %c0_203] : memref<8x192xf32, #tpu.memory_space<vmem>>, vector<1x16xf32>
    %316 = vector.broadcast %315 : vector<1x16xf32> to vector<8x16xf32>
    %317 = arith.addf %314, %316 : vector<8x16xf32>
    %318 = arith.negf %317 : vector<8x16xf32>
    %319 = math.exp %318 : vector<8x16xf32>
    %cst_204 = arith.constant 1.000000e+00 : f32
    %320 = vector.broadcast %cst_204 : f32 to vector<8x16xf32>
    %321 = arith.addf %320, %319 : vector<8x16xf32>
    %322 = arith.divf %320, %321 : vector<8x16xf32>
    %323 = vector.extract_strided_slice %322 {offsets = [0, 0], sizes = [8, 8], strides = [1, 1]} : vector<8x16xf32> to vector<8x8xf32>
    %324 = vector.shape_cast %323 : vector<8x8xf32> to vector<8x8x1xf32>
    %325 = vector.extract_strided_slice %322 {offsets = [0, 8], sizes = [8, 8], strides = [1, 1]} : vector<8x16xf32> to vector<8x8xf32>
    %326 = vector.shape_cast %325 : vector<8x8xf32> to vector<8x8x1xf32>
    %327 = vector.broadcast %324 : vector<8x8x1xf32> to vector<8x8x96xf32>
    %328 = arith.mulf %291, %327 : vector<8x8x96xf32>
    %329 = vector.broadcast %326 : vector<8x8x1xf32> to vector<8x8x96xf32>
    %330 = arith.mulf %292, %329 : vector<8x8x96xf32>
    %331 = arith.addf %328, %330 : vector<8x8x96xf32>
    %332 = vector.shape_cast %331 : vector<8x8x96xf32> to vector<64x96xf32>
    %333 = arith.truncf %332 : vector<64x96xf32> to vector<64x96xbf16>
    %c0_205 = arith.constant 0 : index
    %c0_206 = arith.constant 0 : index
    %334 = vector.load %arg8[%c0_205, %c0_206] : memref<96x192xbf16, #tpu.memory_space<vmem>>, vector<96x192xbf16>
    %cst_207 = arith.constant dense<0.000000e+00> : vector<64x192xf32>
    %335 = tpu.matmul %333, %334, %cst_207 {dimension_numbers = #tpu.dot_dimension_numbers<[1], [0], [0], [1], [0, 0, 1, 1], [], []>} : vector<64x96xbf16>, vector<96x192xbf16>, vector<64x192xf32> -> vector<64x192xf32>
    %c6_208 = arith.constant 6 : index
    %c0_209 = arith.constant 0 : index
    %336 = vector.load %arg10[%c6_208, %c0_209] : memref<8x192xf32, #tpu.memory_space<vmem>>, vector<1x192xf32>
    %337 = vector.broadcast %336 : vector<1x192xf32> to vector<64x192xf32>
    %338 = arith.addf %335, %337 : vector<64x192xf32>
    %c1_210 = arith.constant 1 : index
    %c1_211 = arith.constant 1 : index
    %c0_212 = arith.constant 0 : index
    %339 = vector.load %arg12[%c1_210, %c1_211, %c0_212] : memref<10x10x192xf32, #tpu.memory_space<vmem>>, vector<8x8x192xf32>
    %340 = vector.shape_cast %339 : vector<8x8x192xf32> to vector<64x192xf32>
    %341 = arith.mulf %340, %338 : vector<64x192xf32>
    %342 = arith.truncf %341 : vector<64x192xf32> to vector<64x192xbf16>
    %c0_213 = arith.constant 0 : index
    %c0_214 = arith.constant 0 : index
    %343 = vector.load %arg9[%c0_213, %c0_214] : memref<192x192xbf16, #tpu.memory_space<vmem>>, vector<192x192xbf16>
    %cst_215 = arith.constant dense<0.000000e+00> : vector<64x192xf32>
    %344 = tpu.matmul %342, %343, %cst_215 {dimension_numbers = #tpu.dot_dimension_numbers<[1], [0], [0], [1], [0, 0, 1, 1], [], []>} : vector<64x192xbf16>, vector<192x192xbf16>, vector<64x192xf32> -> vector<64x192xf32>
    %c7 = arith.constant 7 : index
    %c0_216 = arith.constant 0 : index
    %345 = vector.load %arg10[%c7, %c0_216] : memref<8x192xf32, #tpu.memory_space<vmem>>, vector<1x192xf32>
    %346 = vector.broadcast %345 : vector<1x192xf32> to vector<64x192xf32>
    %347 = arith.addf %344, %346 : vector<64x192xf32>
    %348 = arith.negf %347 : vector<64x192xf32>
    %349 = math.exp %348 : vector<64x192xf32>
    %cst_217 = arith.constant 1.000000e+00 : f32
    %350 = vector.broadcast %cst_217 : f32 to vector<64x192xf32>
    %351 = arith.addf %350, %349 : vector<64x192xf32>
    %352 = arith.divf %350, %351 : vector<64x192xf32>
    %353 = arith.mulf %347, %352 : vector<64x192xf32>
    %c0_218 = arith.constant 0 : index
    %c0_219 = arith.constant 0 : index
    %c0_220 = arith.constant 0 : index
    %354 = vector.load %arg11[%c0_218, %c0_219, %c0_220] : memref<1x64x192xf32, #tpu.memory_space<vmem>>, vector<1x64x192xf32>
    %355 = vector.shape_cast %354 : vector<1x64x192xf32> to vector<64x192xf32>
    %356 = vector.shape_cast %353 : vector<64x192xf32> to vector<1x64x192xf32>
    tpu.vector_store %arg11[%c0_218, %c0_219, %c0_220], %356 {strides = array<i32>} : memref<1x64x192xf32, #tpu.memory_space<vmem>>, vector<1x64x192xf32>,
    return
  }
  func.func @transform_0(%arg0: i32) -> (i32, i32, i32) {
    %c0_i32 = arith.constant 0 : i32
    %c0_i32_0 = arith.constant 0 : i32
    %c0_i32_1 = arith.constant 0 : i32
    return %arg0, %c0_i32, %c0_i32_0 : i32, i32, i32
  }
  func.func @transform_1(%arg0: i32) -> (i32, i32) {
    %c0_i32 = arith.constant 0 : i32
    %c0_i32_0 = arith.constant 0 : i32
    %c0_i32_1 = arith.constant 0 : i32
    return %c0_i32, %c0_i32_0 : i32, i32
  }
  func.func @transform_2(%arg0: i32) -> (i32, i32, i32) {
    %c0_i32 = arith.constant 0 : i32
    %c0_i32_0 = arith.constant 0 : i32
    %c0_i32_1 = arith.constant 0 : i32
    %c0_i32_2 = arith.constant 0 : i32
    return %c0_i32, %c0_i32_0, %c0_i32_1 : i32, i32, i32
  }
  func.func @transform_3(%arg0: i32) -> (i32, i32, i32) {
    %c0_i32 = arith.constant 0 : i32
    %c0_i32_0 = arith.constant 0 : i32
    %c0_i32_1 = arith.constant 0 : i32
    %c0_i32_2 = arith.constant 0 : i32
    return %c0_i32, %c0_i32_0, %c0_i32_1 : i32, i32, i32
  }
  func.func @transform_4(%arg0: i32) -> (i32, i32) {
    %c0_i32 = arith.constant 0 : i32
    %c0_i32_0 = arith.constant 0 : i32
    %c0_i32_1 = arith.constant 0 : i32
    return %c0_i32, %c0_i32_0 : i32, i32
  }
  func.func @transform_5(%arg0: i32) -> (i32, i32) {
    %c0_i32 = arith.constant 0 : i32
    %c0_i32_0 = arith.constant 0 : i32
    %c0_i32_1 = arith.constant 0 : i32
    return %c0_i32, %c0_i32_0 : i32, i32
  }
  func.func @transform_6(%arg0: i32) -> (i32, i32) {
    %c0_i32 = arith.constant 0 : i32
    %c0_i32_0 = arith.constant 0 : i32
    %c0_i32_1 = arith.constant 0 : i32
    return %c0_i32, %c0_i32_0 : i32, i32
  }
  func.func @transform_7(%arg0: i32) -> (i32, i32) {
    %c0_i32 = arith.constant 0 : i32
    %c0_i32_0 = arith.constant 0 : i32
    %c0_i32_1 = arith.constant 0 : i32
    return %c0_i32, %c0_i32_0 : i32, i32
  }
  func.func @transform_8(%arg0: i32) -> (i32, i32) {
    %c0_i32 = arith.constant 0 : i32
    %c0_i32_0 = arith.constant 0 : i32
    %c0_i32_1 = arith.constant 0 : i32
    return %c0_i32, %c0_i32_0 : i32, i32
  }
  func.func @transform_9(%arg0: i32) -> (i32, i32) {
    %c0_i32 = arith.constant 0 : i32
    %c0_i32_0 = arith.constant 0 : i32
    %c0_i32_1 = arith.constant 0 : i32
    return %c0_i32, %c0_i32_0 : i32, i32
  }
  func.func @transform_10(%arg0: i32) -> (i32, i32, i32) {
    %c0_i32 = arith.constant 0 : i32
    %c0_i32_0 = arith.constant 0 : i32
    %c0_i32_1 = arith.constant 0 : i32
    return %arg0, %c0_i32, %c0_i32_0 : i32, i32, i32
  }
}

</mosaic_0001>

<llo_original>
// kernel: unify_forward.1
$region0: #{unify_forward.1}
  #allocation0 [shape = 'u32[]', space=smem, size = 0x4, offset = 0x4, fixed_abs, tag = 'smem constant byte address 0x4 - core index']
  #allocation1 [shape = 'u32[144,128]{1,0:T(1,128)}', space=vmem, size = 0x12000, scoped, tag = 'internal scratch']
  #allocation2 [shape = 'f32[10,10,192]{2,1,0:T(8,128)}', space=vmem, size = 0x28000, scoped, tag = 'scratch operand']
  #allocation3 [shape = 'f32[16,16,192]{2,1,0:T(8,128)}', space=vmem, size = 0x40000, scoped, tag = 'scratch operand']
  #allocation4 [shape = 'f32[14,28]{1,0:T(8,128)}', space=vmem, size = 0x2000, scoped, tag = 'scratch operand']
  %s0 = inlined_call_operand.vmem [shape: bf16[2,64,448], index: 0, kind: input, shape index: {}]
  %s1 = inlined_call_operand.vmem [shape: bf16[448,192], index: 1, kind: input, shape index: {}]
  %s2 = inlined_call_operand.vmem [shape: f32[3,3,192], index: 2, kind: input, shape index: {}]
  %s3 = inlined_call_operand.vmem [shape: f32[5,5,192], index: 3, kind: input, shape index: {}]
  %s4 = inlined_call_operand.vmem [shape: bf16[192,96], index: 4, kind: input, shape index: {}]
  %s5 = inlined_call_operand.vmem [shape: bf16[192,96], index: 5, kind: input, shape index: {}]
  %s6 = inlined_call_operand.vmem [shape: f32[196,16], index: 6, kind: input, shape index: {}]
  %s7 = inlined_call_operand.vmem [shape: bf16[96,192], index: 7, kind: input, shape index: {}]
  %s8 = inlined_call_operand.vmem [shape: bf16[192,192], index: 8, kind: input, shape index: {}]
  %s9 = inlined_call_operand.vmem [shape: f32[8,192], index: 9, kind: input, shape index: {}]
  %s10 = inlined_call_operand.hbm [shape: f32[2,64,192], index: 10, kind: output, shape index: {}]
  %s11 = sld [smem:[#allocation0]]
  $region73: #{unify_forward.1} parent=0
    _
  %s13 = ssub.s32 1, %s11
  %s14 = scalar_select 0, %s13, %s11
  $region1: #{unify_forward.1} parent=0
    #allocation5 [shape = 'u8[131072]{0}', space=vmem, size = 0x20000, scoped, tag = 'output window, operand 0']
    #allocation6 [shape = 's32[2]{0}', space=sflag, size = 0x8, scoped, tag = 'scoped memory for unify_forward.1']
    %15 = vsyncpa [#allocation6], 0
    %s16 = scalar_lea.sflag [#allocation6], 1
    %17 = vsyncpa %s16, 0
    loop: start=0, step=1, limit=4
    $region2: #{unify_forward.1} parent=1 // loop_pre_header
      _
    $region3: #{unify_forward.1} parent=1 // loop_header
      %s19 = sphi 0, %s23
      %p20 = scmp.ge.s32.totalorder %s19, 4
      %s29 = sphi 0, %s31
      %s32 = sphi 0, %s29
      %s33 = sphi 0, %s32
      %s49 = sphi 0, %s33
      %s53 = sphi 0, %s53
      %s55 = sphi 0, %s53
      %s56 = sphi 0, %s55
      %s70 = sphi 0, %s56
      %s74 = sphi 0, %s74
      %s76 = sphi 0, %s74
      %s77 = sphi 0, %s76
      %s91 = sphi 0, %s77
      %s95 = sphi 0, %s95
      %s97 = sphi 0, %s95
      %s98 = sphi 0, %s97
      %s112 = sphi 0, %s98
      %s116 = sphi 0, %s116
      %s118 = sphi 0, %s116
      %s119 = sphi 0, %s118
      %s133 = sphi 0, %s119
      %s137 = sphi 0, %s137
      %s139 = sphi 0, %s137
      %s140 = sphi 0, %s139
      %s154 = sphi 0, %s140
      %s158 = sphi 0, %s158
      %s160 = sphi 0, %s158
      %s161 = sphi 0, %s160
      %s175 = sphi 0, %s161
      %s179 = sphi 0, %s179
      %s181 = sphi 0, %s179
      %s182 = sphi 0, %s181
      %s196 = sphi 0, %s182
      %s200 = sphi 0, %s200
      %s202 = sphi 0, %s200
      %s203 = sphi 0, %s202
      %s217 = sphi 0, %s203
      %s221 = sphi 0, %s221
      %s223 = sphi 0, %s221
      %s224 = sphi 0, %s223
      %s238 = sphi 0, %s224
      %s244 = sphi 0, %s246
      %s247 = sphi 0, %s244
      %s248 = sphi 0, %s247
      %s264 = sphi 0, %s248
    $region4: #{unify_forward.1} parent=1 // loop_header_branch
      %22 = sbr.rel (%p20) target = $region8
    $region5: #{unify_forward.1} parent=1 // loop_body
      %s24 = ssub.s32 %s19, 1
      %s25 = ssub.s32 %s19, 2
      %s26 = sadd.s32 %s19, 1
      %s27 = ssub.s32 %s19, %s26
      %p28 = scmp.eq.s32.totalorder %s27, 0
      %s30 = sadd.s32 %s29, 1
      %s31 = scalar_select %p28, %s29, %s30
      %p34 = pneg %p28
      %p35 = scmp.eq.s32.totalorder %s19, 1
      %p36 = por %p34, %p35
      %p37 = scmp.ne.s32.totalorder %s29, %s32
      %p38 = scmp.eq.s32.totalorder %s19, 0
      %p39 = por %p37, %p38
      %p40 = scmp.ne.s32.totalorder %s29, %s32
      %p41 = scmp.eq.s32.totalorder %s24, 1
      %p42 = por %p40, %p41
      %p43 = scmp.ne.s32.totalorder %s32, %s33
      %p44 = scmp.eq.s32.totalorder %s24, 0
      %p45 = por %p43, %p44
      %p46 = scmp.ne.s32.totalorder %s32, %s33
      %p47 = scmp.eq.s32.totalorder %s25, 1
      %p48 = por %p46, %p47
      %p50 = scmp.ne.s32.totalorder %s33, %s49
      %p51 = scmp.eq.s32.totalorder %s25, 0
      %p52 = por %p50, %p51
      %s54 = sadd.s32 %s53, 1
      %p57 = scmp.eq.s32.totalorder %s19, 1
      %p58 = scmp.ne.s32.totalorder %s53, %s55
      %p59 = scmp.eq.s32.totalorder %s19, 0
      %p60 = por %p58, %p59
      %p61 = scmp.ne.s32.totalorder %s53, %s55
      %p62 = scmp.eq.s32.totalorder %s24, 1
      %p63 = por %p61, %p62
      %p64 = scmp.ne.s32.totalorder %s55, %s56
      %p65 = scmp.eq.s32.totalorder %s24, 0
      %p66 = por %p64, %p65
      %p67 = scmp.ne.s32.totalorder %s55, %s56
      %p68 = scmp.eq.s32.totalorder %s25, 1
      %p69 = por %p67, %p68
      %p71 = scmp.ne.s32.totalorder %s56, %s70
      %p72 = scmp.eq.s32.totalorder %s25, 0
      %p73 = por %p71, %p72
      %s75 = sadd.s32 %s74, 1
      %p78 = scmp.eq.s32.totalorder %s19, 1
      %p79 = scmp.ne.s32.totalorder %s74, %s76
      %p80 = scmp.eq.s32.totalorder %s19, 0
      %p81 = por %p79, %p80
      %p82 = scmp.ne.s32.totalorder %s74, %s76
      %p83 = scmp.eq.s32.totalorder %s24, 1
      %p84 = por %p82, %p83
      %p85 = scmp.ne.s32.totalorder %s76, %s77
      %p86 = scmp.eq.s32.totalorder %s24, 0
      %p87 = por %p85, %p86
      %p88 = scmp.ne.s32.totalorder %s76, %s77
      %p89 = scmp.eq.s32.totalorder %s25, 1
      %p90 = por %p88, %p89
      %p92 = scmp.ne.s32.totalorder %s77, %s91
      %p93 = scmp.eq.s32.totalorder %s25, 0
      %p94 = por %p92, %p93
      %s96 = sadd.s32 %s95, 1
      %p99 = scmp.eq.s32.totalorder %s19, 1
      %p100 = scmp.ne.s32.totalorder %s95, %s97
      %p101 = scmp.eq.s32.totalorder %s19, 0
      %p102 = por %p100, %p101
      %p103 = scmp.ne.s32.totalorder %s95, %s97
      %p104 = scmp.eq.s32.totalorder %s24, 1
      %p105 = por %p103, %p104
      %p106 = scmp.ne.s32.totalorder %s97, %s98
      %p107 = scmp.eq.s32.totalorder %s24, 0
      %p108 = por %p106, %p107
      %p109 = scmp.ne.s32.totalorder %s97, %s98
      %p110 = scmp.eq.s32.totalorder %s25, 1
      %p111 = por %p109, %p110
      %p113 = scmp.ne.s32.totalorder %s98, %s112
      %p114 = scmp.eq.s32.totalorder %s25, 0
      %p115 = por %p113, %p114
      %s117 = sadd.s32 %s116, 1
      %p120 = scmp.eq.s32.totalorder %s19, 1
      %p121 = scmp.ne.s32.totalorder %s116, %s118
      %p122 = scmp.eq.s32.totalorder %s19, 0
      %p123 = por %p121, %p122
      %p124 = scmp.ne.s32.totalorder %s116, %s118
      %p125 = scmp.eq.s32.totalorder %s24, 1
      %p126 = por %p124, %p125
      %p127 = scmp.ne.s32.totalorder %s118, %s119
      %p128 = scmp.eq.s32.totalorder %s24, 0
      %p129 = por %p127, %p128
      %p130 = scmp.ne.s32.totalorder %s118, %s119
      %p131 = scmp.eq.s32.totalorder %s25, 1
      %p132 = por %p130, %p131
      %p134 = scmp.ne.s32.totalorder %s119, %s133
      %p135 = scmp.eq.s32.totalorder %s25, 0
      %p136 = por %p134, %p135
      %s138 = sadd.s32 %s137, 1
      %p141 = scmp.eq.s32.totalorder %s19, 1
      %p142 = scmp.ne.s32.totalorder %s137, %s139
      %p143 = scmp.eq.s32.totalorder %s19, 0
      %p144 = por %p142, %p143
      %p145 = scmp.ne.s32.totalorder %s137, %s139
      %p146 = scmp.eq.s32.totalorder %s24, 1
      %p147 = por %p145, %p146
      %p148 = scmp.ne.s32.totalorder %s139, %s140
      %p149 = scmp.eq.s32.totalorder %s24, 0
      %p150 = por %p148, %p149
      %p151 = scmp.ne.s32.totalorder %s139, %s140
      %p152 = scmp.eq.s32.totalorder %s25, 1
      %p153 = por %p151, %p152
      %p155 = scmp.ne.s32.totalorder %s140, %s154
      %p156 = scmp.eq.s32.totalorder %s25, 0
      %p157 = por %p155, %p156
      %s159 = sadd.s32 %s158, 1
      %p162 = scmp.eq.s32.totalorder %s19, 1
      %p163 = scmp.ne.s32.totalorder %s158, %s160
      %p164 = scmp.eq.s32.totalorder %s19, 0
      %p165 = por %p163, %p164
      %p166 = scmp.ne.s32.totalorder %s158, %s160
      %p167 = scmp.eq.s32.totalorder %s24, 1
      %p168 = por %p166, %p167
      %p169 = scmp.ne.s32.totalorder %s160, %s161
      %p170 = scmp.eq.s32.totalorder %s24, 0
      %p171 = por %p169, %p170
      %p172 = scmp.ne.s32.totalorder %s160, %s161
      %p173 = scmp.eq.s32.totalorder %s25, 1
      %p174 = por %p172, %p173
      %p176 = scmp.ne.s32.totalorder %s161, %s175
      %p177 = scmp.eq.s32.totalorder %s25, 0
      %p178 = por %p176, %p177
      %s180 = sadd.s32 %s179, 1
      %p183 = scmp.eq.s32.totalorder %s19, 1
      %p184 = scmp.ne.s32.totalorder %s179, %s181
      %p185 = scmp.eq.s32.totalorder %s19, 0
      %p186 = por %p184, %p185
      %p187 = scmp.ne.s32.totalorder %s179, %s181
      %p188 = scmp.eq.s32.totalorder %s24, 1
      %p189 = por %p187, %p188
      %p190 = scmp.ne.s32.totalorder %s181, %s182
      %p191 = scmp.eq.s32.totalorder %s24, 0
      %p192 = por %p190, %p191
      %p193 = scmp.ne.s32.totalorder %s181, %s182
      %p194 = scmp.eq.s32.totalorder %s25, 1
      %p195 = por %p193, %p194
      %p197 = scmp.ne.s32.totalorder %s182, %s196
      %p198 = scmp.eq.s32.totalorder %s25, 0
      %p199 = por %p197, %p198
      %s201 = sadd.s32 %s200, 1
      %p204 = scmp.eq.s32.totalorder %s19, 1
      %p205 = scmp.ne.s32.totalorder %s200, %s202
      %p206 = scmp.eq.s32.totalorder %s19, 0
      %p207 = por %p205, %p206
      %p208 = scmp.ne.s32.totalorder %s200, %s202
      %p209 = scmp.eq.s32.totalorder %s24, 1
      %p210 = por %p208, %p209
      %p211 = scmp.ne.s32.totalorder %s202, %s203
      %p212 = scmp.eq.s32.totalorder %s24, 0
      %p213 = por %p211, %p212
      %p214 = scmp.ne.s32.totalorder %s202, %s203
      %p215 = scmp.eq.s32.totalorder %s25, 1
      %p216 = por %p214, %p215
      %p218 = scmp.ne.s32.totalorder %s203, %s217
      %p219 = scmp.eq.s32.totalorder %s25, 0
      %p220 = por %p218, %p219
      %s222 = sadd.s32 %s221, 1
      %p225 = scmp.eq.s32.totalorder %s19, 1
      %p226 = scmp.ne.s32.totalorder %s221, %s223
      %p227 = scmp.eq.s32.totalorder %s19, 0
      %p228 = por %p226, %p227
      %p229 = scmp.ne.s32.totalorder %s221, %s223
      %p230 = scmp.eq.s32.totalorder %s24, 1
      %p231 = por %p229, %p230
      %p232 = scmp.ne.s32.totalorder %s223, %s224
      %p233 = scmp.eq.s32.totalorder %s24, 0
      %p234 = por %p232, %p233
      %p235 = scmp.ne.s32.totalorder %s223, %s224
      %p236 = scmp.eq.s32.totalorder %s25, 1
      %p237 = por %p235, %p236
      %p239 = scmp.ne.s32.totalorder %s224, %s238
      %p240 = scmp.eq.s32.totalorder %s25, 0
      %p241 = por %p239, %p240
      %s242 = ssub.s32 %s19, %s26
      %p243 = scmp.eq.s32.totalorder %s242, 0
      %s245 = sadd.s32 %s244, 1
      %s246 = scalar_select %p243, %s244, %s245
      %p249 = pneg %p243
      %p250 = scmp.eq.s32.totalorder %s19, 1
      %p251 = por %p249, %p250
      %p252 = scmp.ne.s32.totalorder %s244, %s247
      %p253 = scmp.eq.s32.totalorder %s19, 0
      %p254 = por %p252, %p253
      %p255 = scmp.ne.s32.totalorder %s244, %s247
      %p256 = scmp.eq.s32.totalorder %s24, 1
      %p257 = por %p255, %p256
      %p258 = scmp.ne.s32.totalorder %s247, %s248
      %p259 = scmp.eq.s32.totalorder %s24, 0
      %p260 = por %p258, %p259
      %p261 = scmp.ne.s32.totalorder %s247, %s248
      %p262 = scmp.eq.s32.totalorder %s25, 1
      %p263 = por %p261, %p262
      %p265 = scmp.ne.s32.totalorder %s248, %s264
      %p266 = scmp.eq.s32.totalorder %s25, 0
      %p267 = por %p265, %p266
      %p268 = scmp.le.s32.totalorder 1, %s19
      %p269 = scmp.lt.s32.totalorder %s19, 3
      %p270 = pnand %p268, %p269
      %p271 = pneg %p270
      // Predicated region
      $region9: #{unify_forward.1} parent=5 // pred_check
        _
      $region10: #{unify_forward.1} parent=5 // pred_check_branch
        %273 = sbr.rel (%p270) target = $region12
      $region11: #{unify_forward.1} parent=5 // pred_region
        %s274 = ssub.s32 %s19, 1
        // Predicated region
        $region13: #{unify_forward.1} parent=11 // pred_check
          %p275 = pneg %p66
        $region14: #{unify_forward.1} parent=11 // pred_check_branch
          %277 = sbr.rel (%p275) target = $region16
        $region15: #{unify_forward.1} parent=11 // pred_region
          _
        $region16: #{unify_forward.1} parent=11 // pred_fallthru
          _
        // Predicated region
        $region17: #{unify_forward.1} parent=11 // pred_check
          %p278 = pneg %p87
        $region18: #{unify_forward.1} parent=11 // pred_check_branch
          %280 = sbr.rel (%p278) target = $region20
        $region19: #{unify_forward.1} parent=11 // pred_region
          _
        $region20: #{unify_forward.1} parent=11 // pred_fallthru
          _
        // Predicated region
        $region21: #{unify_forward.1} parent=11 // pred_check
          %p281 = pneg %p108
        $region22: #{unify_forward.1} parent=11 // pred_check_branch
          %283 = sbr.rel (%p281) target = $region24
        $region23: #{unify_forward.1} parent=11 // pred_region
          _
        $region24: #{unify_forward.1} parent=11 // pred_fallthru
          _
        // Predicated region
        $region25: #{unify_forward.1} parent=11 // pred_check
          %p284 = pneg %p129
        $region26: #{unify_forward.1} parent=11 // pred_check_branch
          %286 = sbr.rel (%p284) target = $region28
        $region27: #{unify_forward.1} parent=11 // pred_region
          _
        $region28: #{unify_forward.1} parent=11 // pred_fallthru
          _
        // Predicated region
        $region29: #{unify_forward.1} parent=11 // pred_check
          %p287 = pneg %p150
        $region30: #{unify_forward.1} parent=11 // pred_check_branch
          %289 = sbr.rel (%p287) target = $region32
        $region31: #{unify_forward.1} parent=11 // pred_region
          _
        $region32: #{unify_forward.1} parent=11 // pred_fallthru
          _
        // Predicated region
        $region33: #{unify_forward.1} parent=11 // pred_check
          %p290 = pneg %p171
        $region34: #{unify_forward.1} parent=11 // pred_check_branch
          %292 = sbr.rel (%p290) target = $region36
        $region35: #{unify_forward.1} parent=11 // pred_region
          _
        $region36: #{unify_forward.1} parent=11 // pred_fallthru
          _
        // Predicated region
        $region37: #{unify_forward.1} parent=11 // pred_check
          %p293 = pneg %p192
        $region38: #{unify_forward.1} parent=11 // pred_check_branch
          %295 = sbr.rel (%p293) target = $region40
        $region39: #{unify_forward.1} parent=11 // pred_region
          _
        $region40: #{unify_forward.1} parent=11 // pred_fallthru
          _
        // Predicated region
        $region41: #{unify_forward.1} parent=11 // pred_check
          %p296 = pneg %p213
        $region42: #{unify_forward.1} parent=11 // pred_check_branch
          %298 = sbr.rel (%p296) target = $region44
        $region43: #{unify_forward.1} parent=11 // pred_region
          _
        $region44: #{unify_forward.1} parent=11 // pred_fallthru
          _
        // Predicated region
        $region45: #{unify_forward.1} parent=11 // pred_check
          %p299 = pneg %p234
        $region46: #{unify_forward.1} parent=11 // pred_check_branch
          %301 = sbr.rel (%p299) target = $region48
        $region47: #{unify_forward.1} parent=11 // pred_region
          _
        $region48: #{unify_forward.1} parent=11 // pred_fallthru
          _
      $region12: #{unify_forward.1} parent=5 // pred_fallthru
        _
      %p302 = scmp.lt.s32.totalorder %s19, 2
      // Predicated region
      $region49: #{unify_forward.1} parent=5 // pred_check
        %p303 = pneg %p302
      $region50: #{unify_forward.1} parent=5 // pred_check_branch
        %305 = sbr.rel (%p303) target = $region52
      $region51: #{unify_forward.1} parent=5 // pred_region
        // Predicated region
        $region53: #{unify_forward.1} parent=51 // pred_check
          %p306 = pneg %p39
        $region54: #{unify_forward.1} parent=51 // pred_check_branch
          %308 = sbr.rel (%p306) target = $region56
        $region55: #{unify_forward.1} parent=51 // pred_region
          %p309 = scmp.lt.s32.totalorder %s19, 1
          %s310 = scalar_select %p309, %s19, 1
          %s311 = smul.addr %s310, 32
          %s312 = smul.addr %s311, 4
          %s313 = scalar_lea.vmem %s0, %s312
        $region56: #{unify_forward.1} parent=51 // pred_fallthru
          _
      $region52: #{unify_forward.1} parent=5 // pred_fallthru
        _
      %p314 = scmp.le.s32.totalorder 1, %s19
      %p315 = scmp.lt.s32.totalorder %s19, 3
      %p316 = pnand %p314, %p315
      %p317 = pneg %p316
      // Predicated region
      $region57: #{unify_forward.1} parent=5 // pred_check
        _
      $region58: #{unify_forward.1} parent=5 // pred_check_branch
        %319 = sbr.rel (%p316) target = $region60
      $region59: #{unify_forward.1} parent=5 // pred_region
        %s320 = ssub.s32 %s19, 1
        %p321 = scmp.lt.s32.totalorder %s24, 1
        %s322 = scalar_select %p321, %s24, 1
        %s323 = smul.addr %s322, 32
        %s324 = smul.addr %s323, 4
        %s325 = scalar_lea.vmem %s0, %s324
        %p326 = pneg %p45
        %p327 = pneg %p42
        %p328 = pneg %p66
        %p329 = pneg %p63
        %p330 = pneg %p87
        %p331 = pneg %p84
        %p332 = pneg %p108
        %p333 = pneg %p105
        %p334 = pneg %p129
        %p335 = pneg %p126
        %p336 = pneg %p150
        %p337 = pneg %p147
        %p338 = pneg %p171
        %p339 = pneg %p168
        %p340 = pneg %p192
        %p341 = pneg %p189
        %p342 = pneg %p213
        %p343 = pneg %p210
        %p344 = pneg %p234
        %p345 = pneg %p231
        %p346 = pneg %p260
        %p347 = pneg %p257
        %s348 = sand.u32 %s247, 1
        %s349 = scalar_lea.sflag [#allocation6], %s348
        %s350 = sand.u32 %s247, 1
        %s351 = smul.addr %s350, 128
        %s352 = scalar_lea.vmem [#allocation5], %s351
        %p353 = scmp.lt.s32.totalorder %s24, 1
        %s354 = scalar_select %p353, %s24, 1
        %s355 = smul.addr %s354, 32
        %s356 = smul.addr %s355, 4
        %s357 = scalar_lea.vmem %s0, %s356
        %v359 = vld [vmem:[%s357] sm:$0xff]
        %v360 = vld [vmem:[%s357 + $0x8] sm:$0xff]
        %v361 = vld [vmem:[%s357 + $0x10] sm:$0xff]
        %v362 = vld [vmem:[%s357 + $0x18] sm:$0xff]
        %v363 = vld [vmem:[%s357 + $0x20] sm:$0xff]
        %v364 = vld [vmem:[%s357 + $0x28] sm:$0xff]
        %v365 = vld [vmem:[%s357 + $0x30] sm:$0xff]
        %v366 = vld [vmem:[%s357 + $0x38] sm:$0xff]
        %v367 = vld [vmem:[%s357 + $0x40] sm:$0xff]
        %v368 = vld [vmem:[%s357 + $0x48] sm:$0xff]
        %v369 = vld [vmem:[%s357 + $0x50] sm:$0xff]
        %v370 = vld [vmem:[%s357 + $0x58] sm:$0xff]
        %v371 = vld [vmem:[%s357 + $0x60] sm:$0xff]
        %v372 = vld [vmem:[%s357 + $0x68] sm:$0xff]
        %v373 = vld [vmem:[%s357 + $0x70] sm:$0xff]
        %v374 = vld [vmem:[%s357 + $0x78] sm:$0xff]
        %v375 = vld [vmem:[%s1] sm:$0xff]
        %v376 = vld [vmem:[%s1 + $0x8] sm:$0xff]
        %v377 = vld [vmem:[%s1 + $0x10] sm:$0xff]
        %v378 = vld [vmem:[%s1 + $0x18] sm:$0xff]
        %v379 = vld [vmem:[%s1 + $0x20] sm:$0xff]
        %v380 = vld [vmem:[%s1 + $0x28] sm:$0xff]
        %v381 = vld [vmem:[%s1 + $0x30] sm:$0xff]
        %v382 = vld [vmem:[%s1 + $0x38] sm:$0xff]
        %v383 = vld [vmem:[%s1 + $0x40] sm:$0xff]
        %v384 = vld [vmem:[%s1 + $0x48] sm:$0xff]
        %v385 = vld [vmem:[%s1 + $0x50] sm:$0xff]
        %v386 = vld [vmem:[%s1 + $0x58] sm:$0xff]
        %v387 = vld [vmem:[%s1 + $0x60] sm:$0xff]
        %v388 = vld [vmem:[%s1 + $0x68] sm:$0xff]
        %v389 = vld [vmem:[%s1 + $0x70] sm:$0xff]
        %v390 = vld [vmem:[%s1 + $0x78] sm:$0xff]
        %v391 = vld [vmem:[%s1 + $0x80] sm:$0xff]
        %v392 = vld [vmem:[%s1 + $0x88] sm:$0xff]
        %v393 = vld [vmem:[%s1 + $0x90] sm:$0xff]
        %v394 = vld [vmem:[%s1 + $0x98] sm:$0xff]
        %v395 = vld [vmem:[%s1 + $0xa0] sm:$0xff]
        %v396 = vld [vmem:[%s1 + $0xa8] sm:$0xff]
        %v397 = vld [vmem:[%s1 + $0xb0] sm:$0xff]
        %v398 = vld [vmem:[%s1 + $0xb8] sm:$0xff]
        %v399 = vld [vmem:[%s1 + $0xc0] sm:$0xff]
        %v400 = vld [vmem:[%s1 + $0xc8] sm:$0xff]
        %v401 = vld [vmem:[%s1 + $0xd0] sm:$0xff]
        %v402 = vld [vmem:[%s1 + $0xd8] sm:$0xff]
        %v403 = vld [vmem:[%s1 + $0xe0] sm:$0xff]
        %v404 = vld [vmem:[%s1 + $0xe8] sm:$0xff]
        %v405 = vld [vmem:[%s1 + $0xf0] sm:$0xff]
        %v406 = vld [vmem:[%s1 + $0xf8] sm:$0xff]
        %v407 = vld [vmem:[%s1 + $0x100] sm:$0xff]
        %v408 = vld [vmem:[%s1 + $0x108] sm:$0xff]
        %v409 = vld [vmem:[%s1 + $0x110] sm:$0xff]
        %v410 = vld [vmem:[%s1 + $0x118] sm:$0xff]
        %v411 = vld [vmem:[%s1 + $0x120] sm:$0xff]
        %v412 = vld [vmem:[%s1 + $0x128] sm:$0xff]
        %v413 = vld [vmem:[%s1 + $0x130] sm:$0xff]
        %v414 = vld [vmem:[%s1 + $0x138] sm:$0xff]
        %v415 = vld [vmem:[%s1 + $0x140] sm:$0xff]
        %v416 = vld [vmem:[%s1 + $0x148] sm:$0xff]
        %v417 = vld [vmem:[%s1 + $0x150] sm:$0xff]
        %v418 = vld [vmem:[%s1 + $0x158] sm:$0xff]
        %v419 = vld [vmem:[%s1 + $0x160] sm:$0xff]
        %v420 = vld [vmem:[%s1 + $0x168] sm:$0xff]
        %v421 = vld [vmem:[%s1 + $0x170] sm:$0xff]
        %v422 = vld [vmem:[%s1 + $0x178] sm:$0xff]
        %v423 = vld [vmem:[%s1 + $0x180] sm:$0xff]
        %v424 = vld [vmem:[%s1 + $0x188] sm:$0xff]
        %v425 = vld [vmem:[%s1 + $0x190] sm:$0xff]
        %v426 = vld [vmem:[%s1 + $0x198] sm:$0xff]
        %v427 = vld [vmem:[%s1 + $0x1a0] sm:$0xff]
        %v428 = vld [vmem:[%s1 + $0x1a8] sm:$0xff]
        %v429 = vld [vmem:[%s1 + $0x1b0] sm:$0xff]
        %v430 = vld [vmem:[%s1 + $0x1b8] sm:$0xff]
        %v431 = vld [vmem:[%s9] ss:$8 sm:$0x3]
        %v433 = vlaneseq
        %v434 = vshrl.u32 %v433, 7
        %v435 = vsub.s32 0, %v434
        %v436 = vrot.slane %v431, %v435
        %v437 = vlaneseq
        %v438 = vshrl.u32 %v437, 7
        %v439 = vsub.s32 1, %v438
        %v440 = vrot.slane %v431, %v439
        %v459 = vunpack.c.l.b16 %v359
        %v460 = vunpack.c.h.b16 %v359
        %v461 = vunpack.c.l.b16 %v360
        %v462 = vunpack.c.h.b16 %v360
        %v463 = vunpack.c.l.b16 %v361
        %v464 = vunpack.c.h.b16 %v361
        %v465 = vunpack.c.l.b16 %v362
        %v466 = vunpack.c.h.b16 %v362
        %v467 = vunpack.c.l.b16 %v363
        %v468 = vunpack.c.h.b16 %v363
        %v469 = vunpack.c.l.b16 %v364
        %v470 = vunpack.c.h.b16 %v364
        %v471 = vunpack.c.l.b16 %v365
        %v472 = vunpack.c.h.b16 %v365
        %v473 = vunpack.c.l.b16 %v366
        %v474 = vunpack.c.h.b16 %v366
        %v475 = vunpack.c.l.b16 %v367
        %v476 = vunpack.c.h.b16 %v367
        %v477 = vunpack.c.l.b16 %v368
        %v478 = vunpack.c.h.b16 %v368
        %v479 = vunpack.c.l.b16 %v369
        %v480 = vunpack.c.h.b16 %v369
        %v481 = vunpack.c.l.b16 %v370
        %v482 = vunpack.c.h.b16 %v370
        %v483 = vunpack.c.l.b16 %v371
        %v484 = vunpack.c.h.b16 %v371
        %v485 = vunpack.c.l.b16 %v372
        %v486 = vunpack.c.h.b16 %v372
        %v487 = vunpack.c.l.b16 %v373
        %v488 = vunpack.c.h.b16 %v373
        %v489 = vunpack.c.l.b16 %v374
        %v490 = vunpack.c.h.b16 %v374
        %v491 = vpack.c.b16 %v463, %v459
        %v492 = vpack.c.b16 %v464, %v460
        %v493 = vpack.c.b16 %v465, %v461
        %v494 = vpack.c.b16 %v466, %v462
        %v495 = vpack.c.b16 %v471, %v467
        %v496 = vpack.c.b16 %v472, %v468
        %v497 = vpack.c.b16 %v473, %v469
        %v498 = vpack.c.b16 %v474, %v470
        %v499 = vpack.c.b16 %v479, %v475
        %v500 = vpack.c.b16 %v480, %v476
        %v501 = vpack.c.b16 %v481, %v477
        %v502 = vpack.c.b16 %v482, %v478
        %v503 = vpack.c.b16 %v487, %v483
        %v504 = vpack.c.b16 %v488, %v484
        %v505 = vpack.c.b16 %v489, %v485
        %v506 = vpack.c.b16 %v490, %v486
        %v575 = vunpack.c.l.b16 %v375
        %v576 = vunpack.c.h.b16 %v375
        %v577 = vunpack.c.l.b16 %v376
        %v578 = vunpack.c.h.b16 %v376
        %v579 = vunpack.c.l.b16 %v377
        %v580 = vunpack.c.h.b16 %v377
        %v581 = vunpack.c.l.b16 %v378
        %v582 = vunpack.c.h.b16 %v378
        %v583 = vunpack.c.l.b16 %v379
        %v584 = vunpack.c.h.b16 %v379
        %v585 = vunpack.c.l.b16 %v380
        %v586 = vunpack.c.h.b16 %v380
        %v587 = vunpack.c.l.b16 %v381
        %v588 = vunpack.c.h.b16 %v381
        %v589 = vunpack.c.l.b16 %v382
        %v590 = vunpack.c.h.b16 %v382
        %v591 = vunpack.c.l.b16 %v383
        %v592 = vunpack.c.h.b16 %v383
        %v593 = vunpack.c.l.b16 %v384
        %v594 = vunpack.c.h.b16 %v384
        %v595 = vunpack.c.l.b16 %v385
        %v596 = vunpack.c.h.b16 %v385
        %v597 = vunpack.c.l.b16 %v386
        %v598 = vunpack.c.h.b16 %v386
        %v599 = vunpack.c.l.b16 %v387
        %v600 = vunpack.c.h.b16 %v387
        %v601 = vunpack.c.l.b16 %v388
        %v602 = vunpack.c.h.b16 %v388
        %v603 = vunpack.c.l.b16 %v389
        %v604 = vunpack.c.h.b16 %v389
        %v605 = vunpack.c.l.b16 %v390
        %v606 = vunpack.c.h.b16 %v390
        %v607 = vunpack.c.l.b16 %v391
        %v608 = vunpack.c.h.b16 %v391
        %v609 = vunpack.c.l.b16 %v392
        %v610 = vunpack.c.h.b16 %v392
        %v611 = vunpack.c.l.b16 %v393
        %v612 = vunpack.c.h.b16 %v393
        %v613 = vunpack.c.l.b16 %v394
        %v614 = vunpack.c.h.b16 %v394
        %v615 = vunpack.c.l.b16 %v395
        %v616 = vunpack.c.h.b16 %v395
        %v617 = vunpack.c.l.b16 %v396
        %v618 = vunpack.c.h.b16 %v396
        %v619 = vunpack.c.l.b16 %v397
        %v620 = vunpack.c.h.b16 %v397
        %v621 = vunpack.c.l.b16 %v398
        %v622 = vunpack.c.h.b16 %v398
        %v623 = vunpack.c.l.b16 %v399
        %v624 = vunpack.c.h.b16 %v399
        %v625 = vunpack.c.l.b16 %v400
        %v626 = vunpack.c.h.b16 %v400
        %v627 = vunpack.c.l.b16 %v401
        %v628 = vunpack.c.h.b16 %v401
        %v629 = vunpack.c.l.b16 %v402
        %v630 = vunpack.c.h.b16 %v402
        %v631 = vunpack.c.l.b16 %v403
        %v632 = vunpack.c.h.b16 %v403
        %v633 = vunpack.c.l.b16 %v404
        %v634 = vunpack.c.h.b16 %v404
        %v635 = vunpack.c.l.b16 %v405
        %v636 = vunpack.c.h.b16 %v405
        %v637 = vunpack.c.l.b16 %v406
        %v638 = vunpack.c.h.b16 %v406
        %v639 = vunpack.c.l.b16 %v407
        %v640 = vunpack.c.h.b16 %v407
        %v641 = vunpack.c.l.b16 %v408
        %v642 = vunpack.c.h.b16 %v408
        %v643 = vunpack.c.l.b16 %v409
        %v644 = vunpack.c.h.b16 %v409
        %v645 = vunpack.c.l.b16 %v410
        %v646 = vunpack.c.h.b16 %v410
        %v647 = vunpack.c.l.b16 %v411
        %v648 = vunpack.c.h.b16 %v411
        %v649 = vunpack.c.l.b16 %v412
        %v650 = vunpack.c.h.b16 %v412
        %v651 = vunpack.c.l.b16 %v413
        %v652 = vunpack.c.h.b16 %v413
        %v653 = vunpack.c.l.b16 %v414
        %v654 = vunpack.c.h.b16 %v414
        %v655 = vunpack.c.l.b16 %v415
        %v656 = vunpack.c.h.b16 %v415
        %v657 = vunpack.c.l.b16 %v416
        %v658 = vunpack.c.h.b16 %v416
        %v659 = vunpack.c.l.b16 %v417
        %v660 = vunpack.c.h.b16 %v417
        %v661 = vunpack.c.l.b16 %v418
        %v662 = vunpack.c.h.b16 %v418
        %v663 = vunpack.c.l.b16 %v419
        %v664 = vunpack.c.h.b16 %v419
        %v665 = vunpack.c.l.b16 %v420
        %v666 = vunpack.c.h.b16 %v420
        %v667 = vunpack.c.l.b16 %v421
        %v668 = vunpack.c.h.b16 %v421
        %v669 = vunpack.c.l.b16 %v422
        %v670 = vunpack.c.h.b16 %v422
        %v671 = vunpack.c.l.b16 %v423
        %v672 = vunpack.c.h.b16 %v423
        %v673 = vunpack.c.l.b16 %v424
        %v674 = vunpack.c.h.b16 %v424
        %v675 = vunpack.c.l.b16 %v425
        %v676 = vunpack.c.h.b16 %v425
        %v677 = vunpack.c.l.b16 %v426
        %v678 = vunpack.c.h.b16 %v426
        %v679 = vunpack.c.l.b16 %v427
        %v680 = vunpack.c.h.b16 %v427
        %v681 = vunpack.c.l.b16 %v428
        %v682 = vunpack.c.h.b16 %v428
        %v683 = vunpack.c.l.b16 %v429
        %v684 = vunpack.c.h.b16 %v429
        %v685 = vunpack.c.l.b16 %v430
        %v686 = vunpack.c.h.b16 %v430
        %v687 = vpack.c.b16 %v577, %v575
        %v688 = vpack.c.b16 %v578, %v576
        %v689 = vpack.c.b16 %v581, %v579
        %v690 = vpack.c.b16 %v582, %v580
        %v691 = vpack.c.b16 %v585, %v583
        %v692 = vpack.c.b16 %v586, %v584
        %v693 = vpack.c.b16 %v589, %v587
        %v694 = vpack.c.b16 %v590, %v588
        %v695 = vpack.c.b16 %v593, %v591
        %v696 = vpack.c.b16 %v594, %v592
        %v697 = vpack.c.b16 %v597, %v595
        %v698 = vpack.c.b16 %v598, %v596
        %v699 = vpack.c.b16 %v601, %v599
        %v700 = vpack.c.b16 %v602, %v600
        %v701 = vpack.c.b16 %v605, %v603
        %v702 = vpack.c.b16 %v606, %v604
        %v703 = vpack.c.b16 %v609, %v607
        %v704 = vpack.c.b16 %v610, %v608
        %v705 = vpack.c.b16 %v613, %v611
        %v706 = vpack.c.b16 %v614, %v612
        %v707 = vpack.c.b16 %v617, %v615
        %v708 = vpack.c.b16 %v618, %v616
        %v709 = vpack.c.b16 %v621, %v619
        %v710 = vpack.c.b16 %v622, %v620
        %v711 = vpack.c.b16 %v625, %v623
        %v712 = vpack.c.b16 %v626, %v624
        %v713 = vpack.c.b16 %v629, %v627
        %v714 = vpack.c.b16 %v630, %v628
        %v715 = vpack.c.b16 %v633, %v631
        %v716 = vpack.c.b16 %v634, %v632
        %v717 = vpack.c.b16 %v637, %v635
        %v718 = vpack.c.b16 %v638, %v636
        %v719 = vpack.c.b16 %v641, %v639
        %v720 = vpack.c.b16 %v642, %v640
        %v721 = vpack.c.b16 %v645, %v643
        %v722 = vpack.c.b16 %v646, %v644
        %v723 = vpack.c.b16 %v649, %v647
        %v724 = vpack.c.b16 %v650, %v648
        %v725 = vpack.c.b16 %v653, %v651
        %v726 = vpack.c.b16 %v654, %v652
        %v727 = vpack.c.b16 %v657, %v655
        %v728 = vpack.c.b16 %v658, %v656
        %v729 = vpack.c.b16 %v661, %v659
        %v730 = vpack.c.b16 %v662, %v660
        %v731 = vpack.c.b16 %v665, %v663
        %v732 = vpack.c.b16 %v666, %v664
        %v733 = vpack.c.b16 %v669, %v667
        %v734 = vpack.c.b16 %v670, %v668
        %v735 = vpack.c.b16 %v673, %v671
        %v736 = vpack.c.b16 %v674, %v672
        %v737 = vpack.c.b16 %v677, %v675
        %v738 = vpack.c.b16 %v678, %v676
        %v739 = vpack.c.b16 %v681, %v679
        %v740 = vpack.c.b16 %v682, %v680
        %v741 = vpack.c.b16 %v685, %v683
        %v742 = vpack.c.b16 %v686, %v684
        %vm799 = vcmask 523264
        %v801 = vsel %vm799, %v494, 0
        %v804 = vsel %vm799, %v498, 0
        %v807 = vsel %vm799, %v502, 0
        %v810 = vsel %vm799, %v506, 0
        %812 = vmatprep.subr.bf16.mxu0 %v702
        %813 = vmatpush1.bf16.msra.mxu0 %v701
        %814 = vmatprep.subr.bf16.mxu0 %v700
        %815 = vmatpush1.bf16.msra.mxu0 %v699
        %816 = vmatprep.subr.bf16.mxu0 %v698
        %817 = vmatpush1.bf16.msra.mxu0 %v697
        %818 = vmatprep.subr.bf16.mxu0 %v696
        %819 = vmatpush1.bf16.msra.mxu0 %v695
        %820 = vmatprep.subr.bf16.mxu0 %v694
        %821 = vmatpush1.bf16.msra.mxu0 %v693
        %822 = vmatprep.subr.bf16.mxu0 %v692
        %823 = vmatpush1.bf16.msra.mxu0 %v691
        %824 = vmatprep.subr.bf16.mxu0 %v690
        %825 = vmatpush1.bf16.msra.mxu0 %v689
        %826 = vmatprep.subr.bf16.mxu0 %v688
        %827 = vmatpush1.bf16.msra.mxu0 %v687
        %828 = vmatprep.subr.bf16.mxu0 %v718
        %829 = vmatpush2.bf16.msra.mxu0 %v717
        %830 = vmatprep.subr.bf16.mxu0 %v716
        %831 = vmatpush2.bf16.msra.mxu0 %v715
        %832 = vmatprep.subr.bf16.mxu0 %v714
        %833 = vmatpush2.bf16.msra.mxu0 %v713
        %834 = vmatprep.subr.bf16.mxu0 %v712
        %835 = vmatpush2.bf16.msra.mxu0 %v711
        %836 = vmatprep.subr.bf16.mxu0 %v710
        %837 = vmatpush2.bf16.msra.mxu0 %v709
        %838 = vmatprep.subr.bf16.mxu0 %v708
        %839 = vmatpush2.bf16.msra.mxu0 %v707
        %840 = vmatprep.subr.bf16.mxu0 %v706
        %841 = vmatpush2.bf16.msra.mxu0 %v705
        %842 = vmatprep.subr.bf16.mxu0 %v704
        %843 = vmatpush2.bf16.msra.mxu0 %v703
        %844 = vmatprep.mubr.bf16.mxu0 %v492
        %845 = vmatmul.mubr.bf16.gmra.mxu0 %v491
        %v846 = vpop.f32.mrf.mxu0
        %v847 = vadd.f32 %v436, %v846
        %v848 = vpop.f32.mrf.mxu0
        %v849 = vadd.f32 %v440, %v848
        %v850 = vpop.f32.mrf.mxu0
        %v851 = vadd.f32 %v436, %v850
        %v852 = vpop.f32.mrf.mxu0
        %v853 = vadd.f32 %v440, %v852
        %854 = vmatprep.mubr.bf16.mxu0 %v496
        %855 = vmatmul.mubr.bf16.gmra.mxu0 %v495
        %v856 = vpop.f32.mrf.mxu0
        %v857 = vadd.f32 %v436, %v856
        %v858 = vpop.f32.mrf.mxu0
        %v859 = vadd.f32 %v440, %v858
        %v860 = vpop.f32.mrf.mxu0
        %v861 = vadd.f32 %v436, %v860
        %v862 = vpop.f32.mrf.mxu0
        %v863 = vadd.f32 %v440, %v862
        %864 = vmatprep.mubr.bf16.mxu0 %v500
        %865 = vmatmul.mubr.bf16.gmra.mxu0 %v499
        %v866 = vpop.f32.mrf.mxu0
        %v867 = vadd.f32 %v436, %v866
        %v868 = vpop.f32.mrf.mxu0
        %v869 = vadd.f32 %v440, %v868
        %v870 = vpop.f32.mrf.mxu0
        %v871 = vadd.f32 %v436, %v870
        %v872 = vpop.f32.mrf.mxu0
        %v873 = vadd.f32 %v440, %v872
        %874 = vmatprep.mubr.bf16.mxu0 %v504
        %875 = vmatmul.mubr.bf16.gmra.mxu0 %v503
        %v876 = vpop.f32.mrf.mxu0
        %v877 = vadd.f32 %v436, %v876
        %v878 = vpop.f32.mrf.mxu0
        %v879 = vadd.f32 %v440, %v878
        %v880 = vpop.f32.mrf.mxu0
        %v881 = vadd.f32 %v436, %v880
        %v882 = vpop.f32.mrf.mxu0
        %v883 = vadd.f32 %v440, %v882
        %884 = vdwg.mxu0
        %885 = vmatprep.subr.bf16.mxu0 %v734
        %886 = vmatpush1.bf16.msra.mxu0 %v733
        %887 = vmatprep.subr.bf16.mxu0 %v732
        %888 = vmatpush1.bf16.msra.mxu0 %v731
        %889 = vmatprep.subr.bf16.mxu0 %v730
        %890 = vmatpush1.bf16.msra.mxu0 %v729
        %891 = vmatprep.subr.bf16.mxu0 %v728
        %892 = vmatpush1.bf16.msra.mxu0 %v727
        %893 = vmatprep.subr.bf16.mxu0 %v726
        %894 = vmatpush1.bf16.msra.mxu0 %v725
        %895 = vmatprep.subr.bf16.mxu0 %v724
        %896 = vmatpush1.bf16.msra.mxu0 %v723
        %897 = vmatprep.subr.bf16.mxu0 %v722
        %898 = vmatpush1.bf16.msra.mxu0 %v721
        %899 = vmatprep.subr.bf16.mxu0 %v720
        %900 = vmatpush1.bf16.msra.mxu0 %v719
        %901 = vmatprep.subr.bf16.mxu0 0
        %902 = vmatpush2.bf16.msra.mxu0 0
        %903 = vmatprep.subr.bf16.mxu0 0
        %904 = vmatpush2.bf16.msra.mxu0 0
        %905 = vmatprep.subr.bf16.mxu0 0
        %906 = vmatpush2.bf16.msra.mxu0 0
        %907 = vmatprep.subr.bf16.mxu0 0
        %908 = vmatpush2.bf16.msra.mxu0 0
        %909 = vmatprep.subr.bf16.mxu0 %v742
        %910 = vmatpush2.bf16.msra.mxu0 %v741
        %911 = vmatprep.subr.bf16.mxu0 %v740
        %912 = vmatpush2.bf16.msra.mxu0 %v739
        %913 = vmatprep.subr.bf16.mxu0 %v738
        %914 = vmatpush2.bf16.msra.mxu0 %v737
        %915 = vmatprep.subr.bf16.mxu0 %v736
        %916 = vmatpush2.bf16.msra.mxu0 %v735
        %917 = vmatprep.mubr.bf16.mxu0 %v801
        %918 = vmatmul.mubr.bf16.gmra.mxu0 %v493
        %v919 = vpop.f32.mrf.mxu0
        %v920 = vadd.f32 %v847, %v919
        %v921 = vpop.f32.mrf.mxu0
        %v922 = vadd.f32 %v849, %v921
        %v923 = vpop.f32.mrf.mxu0
        %v924 = vadd.f32 %v851, %v923
        %v925 = vpop.f32.mrf.mxu0
        %v926 = vadd.f32 %v853, %v925
        %927 = vmatprep.mubr.bf16.mxu0 %v804
        %928 = vmatmul.mubr.bf16.gmra.mxu0 %v497
        %v929 = vpop.f32.mrf.mxu0
        %v930 = vadd.f32 %v857, %v929
        %v931 = vpop.f32.mrf.mxu0
        %v932 = vadd.f32 %v859, %v931
        %v933 = vpop.f32.mrf.mxu0
        %v934 = vadd.f32 %v861, %v933
        %v935 = vpop.f32.mrf.mxu0
        %v936 = vadd.f32 %v863, %v935
        %937 = vmatprep.mubr.bf16.mxu0 %v807
        %938 = vmatmul.mubr.bf16.gmra.mxu0 %v501
        %v939 = vpop.f32.mrf.mxu0
        %v940 = vadd.f32 %v867, %v939
        %v941 = vpop.f32.mrf.mxu0
        %v942 = vadd.f32 %v869, %v941
        %v943 = vpop.f32.mrf.mxu0
        %v944 = vadd.f32 %v871, %v943
        %v945 = vpop.f32.mrf.mxu0
        %v946 = vadd.f32 %v873, %v945
        %947 = vmatprep.mubr.bf16.mxu0 %v810
        %948 = vmatmul.mubr.bf16.gmra.mxu0 %v505
        %v949 = vpop.f32.mrf.mxu0
        %v950 = vadd.f32 %v877, %v949
        %v951 = vpop.f32.mrf.mxu0
        %v952 = vadd.f32 %v879, %v951
        %v953 = vpop.f32.mrf.mxu0
        %v954 = vadd.f32 %v881, %v953
        %v955 = vpop.f32.mrf.mxu0
        %v956 = vadd.f32 %v883, %v955
        %957 = vdwg.mxu0
        %958 = vst [vmem:[#allocation2] sm:$0xff] 0.0
        %959 = vst.msk [vmem:[#allocation2 + $0x8] sm:$0xff] %vm799, 0.0
        %960 = vst [vmem:[#allocation2 + $0x10] sm:$0x3] 0.0
        %vm961 = vcmask 517120
        %962 = vst.msk [vmem:[#allocation2 + $0x18] sm:$0x3] %vm961, 0.0
        %s963 = scalar_lea.vmem [#allocation2], 288
        %964 = vst [vmem:[%s963] sm:$0xff] 0.0
        %965 = vst.msk [vmem:[%s963 + $0x8] sm:$0xff] %vm799, 0.0
        %966 = vst [vmem:[%s963 + $0x10] sm:$0x3] 0.0
        %967 = vst.msk [vmem:[%s963 + $0x18] sm:$0x3] %vm961, 0.0
        %s968 = scalar_lea.vmem [#allocation2], 32
        %v969 = vlaneseq
        %vm970 = vcmp.ge.s32.totalorder %v969, 0
        %vm971 = vcmp.lt.s32.totalorder %v969, 192
        %vm972 = vmand %vm970, %vm971
        %973 = vst.msk [vmem:[%s968] ss:$8 sm:$0x3] %vm972, 0.0
        %974 = vst.msk [vmem:[%s968] ss:$8 sm:$0x0] %vm972, 0.0
        %s975 = scalar_lea.vmem %s968, 32 [#allocation2]
        %976 = vst.msk [vmem:[%s975] ss:$8 sm:$0x3] %vm972, 0.0
        %977 = vst.msk [vmem:[%s975] ss:$8 sm:$0x0] %vm972, 0.0
        %s978 = scalar_lea.vmem %s968, 64 [#allocation2]
        %979 = vst.msk [vmem:[%s978] ss:$8 sm:$0x3] %vm972, 0.0
        %980 = vst.msk [vmem:[%s978] ss:$8 sm:$0x0] %vm972, 0.0
        %s981 = scalar_lea.vmem %s968, 96 [#allocation2]
        %982 = vst.msk [vmem:[%s981] ss:$8 sm:$0x3] %vm972, 0.0
        %983 = vst.msk [vmem:[%s981] ss:$8 sm:$0x0] %vm972, 0.0
        %s984 = scalar_lea.vmem %s968, 128 [#allocation2]
        %985 = vst.msk [vmem:[%s984] ss:$8 sm:$0x3] %vm972, 0.0
        %986 = vst.msk [vmem:[%s984] ss:$8 sm:$0x0] %vm972, 0.0
        %s987 = scalar_lea.vmem %s968, 160 [#allocation2]
        %988 = vst.msk [vmem:[%s987] ss:$8 sm:$0x3] %vm972, 0.0
        %989 = vst.msk [vmem:[%s987] ss:$8 sm:$0x0] %vm972, 0.0
        %s990 = scalar_lea.vmem %s968, 192 [#allocation2]
        %991 = vst.msk [vmem:[%s990] ss:$8 sm:$0x3] %vm972, 0.0
        %992 = vst.msk [vmem:[%s990] ss:$8 sm:$0x0] %vm972, 0.0
        %s993 = scalar_lea.vmem %s968, 224 [#allocation2]
        %994 = vst.msk [vmem:[%s993] ss:$8 sm:$0x3] %vm972, 0.0
        %995 = vst.msk [vmem:[%s993] ss:$8 sm:$0x0] %vm972, 0.0
        %s996 = scalar_lea.vmem %s968, 17 [#allocation2]
        %997 = vst.msk [vmem:[%s996] ss:$8 sm:$0x3] %vm972, 0.0
        %998 = vst.msk [vmem:[%s996] ss:$8 sm:$0x0] %vm972, 0.0
        %s999 = scalar_lea.vmem %s968, 49 [#allocation2]
        %1000 = vst.msk [vmem:[%s999] ss:$8 sm:$0x3] %vm972, 0.0
        %1001 = vst.msk [vmem:[%s999] ss:$8 sm:$0x0] %vm972, 0.0
        %s1002 = scalar_lea.vmem %s968, 81 [#allocation2]
        %1003 = vst.msk [vmem:[%s1002] ss:$8 sm:$0x3] %vm972, 0.0
        %1004 = vst.msk [vmem:[%s1002] ss:$8 sm:$0x0] %vm972, 0.0
        %s1005 = scalar_lea.vmem %s968, 113 [#allocation2]
        %1006 = vst.msk [vmem:[%s1005] ss:$8 sm:$0x3] %vm972, 0.0
        %1007 = vst.msk [vmem:[%s1005] ss:$8 sm:$0x0] %vm972, 0.0
        %s1008 = scalar_lea.vmem %s968, 145 [#allocation2]
        %1009 = vst.msk [vmem:[%s1008] ss:$8 sm:$0x3] %vm972, 0.0
        %1010 = vst.msk [vmem:[%s1008] ss:$8 sm:$0x0] %vm972, 0.0
        %s1011 = scalar_lea.vmem %s968, 177 [#allocation2]
        %1012 = vst.msk [vmem:[%s1011] ss:$8 sm:$0x3] %vm972, 0.0
        %1013 = vst.msk [vmem:[%s1011] ss:$8 sm:$0x0] %vm972, 0.0
        %s1014 = scalar_lea.vmem %s968, 209 [#allocation2]
        %1015 = vst.msk [vmem:[%s1014] ss:$8 sm:$0x3] %vm972, 0.0
        %1016 = vst.msk [vmem:[%s1014] ss:$8 sm:$0x0] %vm972, 0.0
        %s1017 = scalar_lea.vmem %s968, 241 [#allocation2]
        %1018 = vst.msk [vmem:[%s1017] ss:$8 sm:$0x3] %vm972, 0.0
        %1019 = vst.msk [vmem:[%s1017] ss:$8 sm:$0x0] %vm972, 0.0
        %v1036 = vrot.slane %v920, 7
        %v1037 = vrot.slane %v922, 7
        %v1038 = vrot.slane %v924, 7
        %v1039 = vrot.slane %v926, 7
        %v1040 = vrot.slane %v930, 7
        %v1041 = vrot.slane %v932, 7
        %v1042 = vrot.slane %v934, 7
        %v1043 = vrot.slane %v936, 7
        %v1044 = vrot.slane %v940, 7
        %v1045 = vrot.slane %v942, 7
        %v1046 = vrot.slane %v944, 7
        %v1047 = vrot.slane %v946, 7
        %v1048 = vrot.slane %v950, 7
        %v1049 = vrot.slane %v952, 7
        %v1050 = vrot.slane %v954, 7
        %v1051 = vrot.slane %v956, 7
        %1068 = vst [vmem:[%s968] sm:$0xfe] %v1036
        %vm1069 = vcmask 523265
        %1070 = vst.msk [vmem:[%s968 + $0x8] sm:$0xfe] %vm1069, %v1037
        %1071 = vst [vmem:[%s968 + $0x10] sm:$0x1] %v1036
        %vm1072 = vcmask 516096
        %1073 = vst.msk [vmem:[%s968 + $0x18] sm:$0x1] %vm1072, %v1037
        %1074 = vst [vmem:[%s968 + $0x20] sm:$0xfe] %v1038
        %1075 = vst.msk [vmem:[%s968 + $0x28] sm:$0xfe] %vm1069, %v1039
        %1076 = vst [vmem:[%s968 + $0x30] sm:$0x1] %v1038
        %1077 = vst.msk [vmem:[%s968 + $0x38] sm:$0x1] %vm1072, %v1039
        %1078 = vst [vmem:[%s968 + $0x40] sm:$0xfe] %v1040
        %1079 = vst.msk [vmem:[%s968 + $0x48] sm:$0xfe] %vm1069, %v1041
        %1080 = vst [vmem:[%s968 + $0x50] sm:$0x1] %v1040
        %1081 = vst.msk [vmem:[%s968 + $0x58] sm:$0x1] %vm1072, %v1041
        %1082 = vst [vmem:[%s968 + $0x60] sm:$0xfe] %v1042
        %1083 = vst.msk [vmem:[%s968 + $0x68] sm:$0xfe] %vm1069, %v1043
        %1084 = vst [vmem:[%s968 + $0x70] sm:$0x1] %v1042
        %1085 = vst.msk [vmem:[%s968 + $0x78] sm:$0x1] %vm1072, %v1043
        %1086 = vst [vmem:[%s968 + $0x80] sm:$0xfe] %v1044
        %1087 = vst.msk [vmem:[%s968 + $0x88] sm:$0xfe] %vm1069, %v1045
        %1088 = vst [vmem:[%s968 + $0x90] sm:$0x1] %v1044
        %1089 = vst.msk [vmem:[%s968 + $0x98] sm:$0x1] %vm1072, %v1045
        %1090 = vst [vmem:[%s968 + $0xa0] sm:$0xfe] %v1046
        %1091 = vst.msk [vmem:[%s968 + $0xa8] sm:$0xfe] %vm1069, %v1047
        %1092 = vst [vmem:[%s968 + $0xb0] sm:$0x1] %v1046
        %1093 = vst.msk [vmem:[%s968 + $0xb8] sm:$0x1] %vm1072, %v1047
        %1094 = vst [vmem:[%s968 + $0xc0] sm:$0xfe] %v1048
        %1095 = vst.msk [vmem:[%s968 + $0xc8] sm:$0xfe] %vm1069, %v1049
        %1096 = vst [vmem:[%s968 + $0xd0] sm:$0x1] %v1048
        %1097 = vst.msk [vmem:[%s968 + $0xd8] sm:$0x1] %vm1072, %v1049
        %1098 = vst [vmem:[%s968 + $0xe0] sm:$0xfe] %v1050
        %1099 = vst.msk [vmem:[%s968 + $0xe8] sm:$0xfe] %vm1069, %v1051
        %1100 = vst [vmem:[%s968 + $0xf0] sm:$0x1] %v1050
        %1101 = vst.msk [vmem:[%s968 + $0xf8] sm:$0x1] %vm1072, %v1051
        %s1102 = scalar_lea.vmem %s9, 1
        %v1103 = vld [vmem:[%s1102] ss:$8 sm:$0x3]
        %v1105 = vlaneseq
        %v1106 = vshrl.u32 %v1105, 7
        %v1107 = vsub.s32 0, %v1106
        %v1108 = vrot.slane %v1103, %v1107
        %v1109 = vlaneseq
        %v1110 = vshrl.u32 %v1109, 7
        %v1111 = vsub.s32 1, %v1110
        %v1112 = vrot.slane %v1103, %v1111
        %v1115 = vld [vmem:[#allocation2] sm:$0xff]
        %v1116 = vld [vmem:[#allocation2 + $0x8] sm:$0xff]
        %v1117 = vld [vmem:[#allocation2 + $0x20] sm:$0xff]
        %v1118 = vld [vmem:[#allocation2 + $0x28] sm:$0xff]
        %v1119 = vld [vmem:[#allocation2 + $0x40] sm:$0xff]
        %v1120 = vld [vmem:[#allocation2 + $0x48] sm:$0xff]
        %v1121 = vld [vmem:[#allocation2 + $0x60] sm:$0xff]
        %v1122 = vld [vmem:[#allocation2 + $0x68] sm:$0xff]
        %v1123 = vld [vmem:[#allocation2 + $0x80] sm:$0xff]
        %v1124 = vld [vmem:[#allocation2 + $0x88] sm:$0xff]
        %v1125 = vld [vmem:[#allocation2 + $0xa0] sm:$0xff]
        %v1126 = vld [vmem:[#allocation2 + $0xa8] sm:$0xff]
        %v1127 = vld [vmem:[#allocation2 + $0xc0] sm:$0xff]
        %v1128 = vld [vmem:[#allocation2 + $0xc8] sm:$0xff]
        %v1129 = vld [vmem:[#allocation2 + $0xe0] sm:$0xff]
        %v1130 = vld [vmem:[#allocation2 + $0xe8] sm:$0xff]
        %v1131 = vld [vmem:[#allocation2 + $0x100] sm:$0xff]
        %v1132 = vld [vmem:[#allocation2 + $0x108] sm:$0xff]
        %v1133 = vld [vmem:[#allocation2 + $0x120] sm:$0xff]
        %v1134 = vld [vmem:[#allocation2 + $0x128] sm:$0xff]
        %v1135 = vld [vmem:[%s2] ss:$4 sm:$0x3]
        %v1137 = vlaneseq
        %v1138 = vshrl.u32 %v1137, 7
        %v1139 = vsub.s32 0, %v1138
        %v1140 = vrot.slane %v1135, %v1139
        %v1141 = vlaneseq
        %v1142 = vshrl.u32 %v1141, 7
        %v1143 = vsub.s32 1, %v1142
        %v1144 = vrot.slane %v1135, %v1143
        %v1147 = vmul.f32 %v1115, %v1140
        %v1148 = vmul.f32 %v1116, %v1144
        %v1149 = vmul.f32 %v1117, %v1140
        %v1150 = vmul.f32 %v1118, %v1144
        %v1151 = vmul.f32 %v1119, %v1140
        %v1152 = vmul.f32 %v1120, %v1144
        %v1153 = vmul.f32 %v1121, %v1140
        %v1154 = vmul.f32 %v1122, %v1144
        %v1155 = vmul.f32 %v1123, %v1140
        %v1156 = vmul.f32 %v1124, %v1144
        %v1157 = vmul.f32 %v1125, %v1140
        %v1158 = vmul.f32 %v1126, %v1144
        %v1159 = vmul.f32 %v1127, %v1140
        %v1160 = vmul.f32 %v1128, %v1144
        %v1161 = vmul.f32 %v1129, %v1140
        %v1162 = vmul.f32 %v1130, %v1144
        %v1163 = vadd.f32 %v1108, %v1147
        %v1164 = vadd.f32 %v1112, %v1148
        %v1165 = vadd.f32 %v1108, %v1149
        %v1166 = vadd.f32 %v1112, %v1150
        %v1167 = vadd.f32 %v1108, %v1151
        %v1168 = vadd.f32 %v1112, %v1152
        %v1169 = vadd.f32 %v1108, %v1153
        %v1170 = vadd.f32 %v1112, %v1154
        %v1171 = vadd.f32 %v1108, %v1155
        %v1172 = vadd.f32 %v1112, %v1156
        %v1173 = vadd.f32 %v1108, %v1157
        %v1174 = vadd.f32 %v1112, %v1158
        %v1175 = vadd.f32 %v1108, %v1159
        %v1176 = vadd.f32 %v1112, %v1160
        %v1177 = vadd.f32 %v1108, %v1161
        %v1178 = vadd.f32 %v1112, %v1162
        %s1179 = scalar_lea.vmem %s2, 8
        %v1180 = vld [vmem:[%s1179] ss:$4 sm:$0x3]
        %v1182 = vlaneseq
        %v1183 = vshrl.u32 %v1182, 7
        %v1184 = vsub.s32 0, %v1183
        %v1185 = vrot.slane %v1180, %v1184
        %v1186 = vlaneseq
        %v1187 = vshrl.u32 %v1186, 7
        %v1188 = vsub.s32 1, %v1187
        %v1189 = vrot.slane %v1180, %v1188
        %v1192 = vmul.f32 %v1117, %v1185
        %v1193 = vmul.f32 %v1118, %v1189
        %v1194 = vmul.f32 %v1119, %v1185
        %v1195 = vmul.f32 %v1120, %v1189
        %v1196 = vmul.f32 %v1121, %v1185
        %v1197 = vmul.f32 %v1122, %v1189
        %v1198 = vmul.f32 %v1123, %v1185
        %v1199 = vmul.f32 %v1124, %v1189
        %v1200 = vmul.f32 %v1125, %v1185
        %v1201 = vmul.f32 %v1126, %v1189
        %v1202 = vmul.f32 %v1127, %v1185
        %v1203 = vmul.f32 %v1128, %v1189
        %v1204 = vmul.f32 %v1129, %v1185
        %v1205 = vmul.f32 %v1130, %v1189
        %v1206 = vmul.f32 %v1131, %v1185
        %v1207 = vmul.f32 %v1132, %v1189
        %v1208 = vadd.f32 %v1163, %v1192
        %v1209 = vadd.f32 %v1164, %v1193
        %v1210 = vadd.f32 %v1165, %v1194
        %v1211 = vadd.f32 %v1166, %v1195
        %v1212 = vadd.f32 %v1167, %v1196
        %v1213 = vadd.f32 %v1168, %v1197
        %v1214 = vadd.f32 %v1169, %v1198
        %v1215 = vadd.f32 %v1170, %v1199
        %v1216 = vadd.f32 %v1171, %v1200
        %v1217 = vadd.f32 %v1172, %v1201
        %v1218 = vadd.f32 %v1173, %v1202
        %v1219 = vadd.f32 %v1174, %v1203
        %v1220 = vadd.f32 %v1175, %v1204
        %v1221 = vadd.f32 %v1176, %v1205
        %v1222 = vadd.f32 %v1177, %v1206
        %v1223 = vadd.f32 %v1178, %v1207
        %s1224 = scalar_lea.vmem %s2, 16
        %v1225 = vld [vmem:[%s1224] ss:$4 sm:$0x3]
        %v1227 = vlaneseq
        %v1228 = vshrl.u32 %v1227, 7
        %v1229 = vsub.s32 0, %v1228
        %v1230 = vrot.slane %v1225, %v1229
        %v1231 = vlaneseq
        %v1232 = vshrl.u32 %v1231, 7
        %v1233 = vsub.s32 1, %v1232
        %v1234 = vrot.slane %v1225, %v1233
        %v1237 = vmul.f32 %v1119, %v1230
        %v1238 = vmul.f32 %v1120, %v1234
        %v1239 = vmul.f32 %v1121, %v1230
        %v1240 = vmul.f32 %v1122, %v1234
        %v1241 = vmul.f32 %v1123, %v1230
        %v1242 = vmul.f32 %v1124, %v1234
        %v1243 = vmul.f32 %v1125, %v1230
        %v1244 = vmul.f32 %v1126, %v1234
        %v1245 = vmul.f32 %v1127, %v1230
        %v1246 = vmul.f32 %v1128, %v1234
        %v1247 = vmul.f32 %v1129, %v1230
        %v1248 = vmul.f32 %v1130, %v1234
        %v1249 = vmul.f32 %v1131, %v1230
        %v1250 = vmul.f32 %v1132, %v1234
        %v1251 = vmul.f32 %v1133, %v1230
        %v1252 = vmul.f32 %v1134, %v1234
        %v1253 = vadd.f32 %v1208, %v1237
        %v1254 = vadd.f32 %v1209, %v1238
        %v1255 = vadd.f32 %v1210, %v1239
        %v1256 = vadd.f32 %v1211, %v1240
        %v1257 = vadd.f32 %v1212, %v1241
        %v1258 = vadd.f32 %v1213, %v1242
        %v1259 = vadd.f32 %v1214, %v1243
        %v1260 = vadd.f32 %v1215, %v1244
        %v1261 = vadd.f32 %v1216, %v1245
        %v1262 = vadd.f32 %v1217, %v1246
        %v1263 = vadd.f32 %v1218, %v1247
        %v1264 = vadd.f32 %v1219, %v1248
        %v1265 = vadd.f32 %v1220, %v1249
        %v1266 = vadd.f32 %v1221, %v1250
        %v1267 = vadd.f32 %v1222, %v1251
        %v1268 = vadd.f32 %v1223, %v1252
        %v1269 = vld [vmem:[#allocation2] sm:$0xfe]
        %v1270 = vld [vmem:[#allocation2 + $0x8] sm:$0xfe]
        %v1271 = vld [vmem:[#allocation2 + $0x10] sm:$0x1]
        %v1272 = vld [vmem:[#allocation2 + $0x18] sm:$0x1]
        %v1273 = vld [vmem:[#allocation2 + $0x20] sm:$0xfe]
        %v1274 = vld [vmem:[#allocation2 + $0x28] sm:$0xfe]
        %v1275 = vld [vmem:[#allocation2 + $0x30] sm:$0x1]
        %v1276 = vld [vmem:[#allocation2 + $0x38] sm:$0x1]
        %v1277 = vld [vmem:[#allocation2 + $0x40] sm:$0xfe]
        %v1278 = vld [vmem:[#allocation2 + $0x48] sm:$0xfe]
        %v1279 = vld [vmem:[#allocation2 + $0x50] sm:$0x1]
        %v1280 = vld [vmem:[#allocation2 + $0x58] sm:$0x1]
        %v1281 = vld [vmem:[#allocation2 + $0x60] sm:$0xfe]
        %v1282 = vld [vmem:[#allocation2 + $0x68] sm:$0xfe]
        %v1283 = vld [vmem:[#allocation2 + $0x70] sm:$0x1]
        %v1284 = vld [vmem:[#allocation2 + $0x78] sm:$0x1]
        %v1285 = vld [vmem:[#allocation2 + $0x80] sm:$0xfe]
        %v1286 = vld [vmem:[#allocation2 + $0x88] sm:$0xfe]
        %v1287 = vld [vmem:[#allocation2 + $0x90] sm:$0x1]
        %v1288 = vld [vmem:[#allocation2 + $0x98] sm:$0x1]
        %v1289 = vld [vmem:[#allocation2 + $0xa0] sm:$0xfe]
        %v1290 = vld [vmem:[#allocation2 + $0xa8] sm:$0xfe]
        %v1291 = vld [vmem:[#allocation2 + $0xb0] sm:$0x1]
        %v1292 = vld [vmem:[#allocation2 + $0xb8] sm:$0x1]
        %v1293 = vld [vmem:[#allocation2 + $0xc0] sm:$0xfe]
        %v1294 = vld [vmem:[#allocation2 + $0xc8] sm:$0xfe]
        %v1295 = vld [vmem:[#allocation2 + $0xd0] sm:$0x1]
        %v1296 = vld [vmem:[#allocation2 + $0xd8] sm:$0x1]
        %v1297 = vld [vmem:[#allocation2 + $0xe0] sm:$0xfe]
        %v1298 = vld [vmem:[#allocation2 + $0xe8] sm:$0xfe]
        %v1299 = vld [vmem:[#allocation2 + $0xf0] sm:$0x1]
        %v1300 = vld [vmem:[#allocation2 + $0xf8] sm:$0x1]
        %v1301 = vld [vmem:[#allocation2 + $0x100] sm:$0xfe]
        %v1302 = vld [vmem:[#allocation2 + $0x108] sm:$0xfe]
        %v1303 = vld [vmem:[#allocation2 + $0x110] sm:$0x1]
        %v1304 = vld [vmem:[#allocation2 + $0x118] sm:$0x1]
        %v1305 = vld [vmem:[#allocation2 + $0x120] sm:$0xfe]
        %v1306 = vld [vmem:[#allocation2 + $0x128] sm:$0xfe]
        %v1307 = vld [vmem:[#allocation2 + $0x130] sm:$0x1]
        %v1308 = vld [vmem:[#allocation2 + $0x138] sm:$0x1]
        %s1309 = scalar_lea.vmem %s2, 1
        %v1310 = vld [vmem:[%s1309] ss:$4 sm:$0x3]
        %v1312 = vlaneseq
        %v1313 = vshrl.u32 %v1312, 7
        %v1314 = vsub.s32 0, %v1313
        %v1315 = vrot.slane %v1310, %v1314
        %v1316 = vlaneseq
        %v1317 = vshrl.u32 %v1316, 7
        %v1318 = vsub.s32 1, %v1317
        %v1319 = vrot.slane %v1310, %v1318
        %v1322 = vmul.f32 %v1269, %v1315
        %v1323 = vmul.f32 %v1270, %v1319
        %v1324 = vmul.f32 %v1271, %v1315
        %v1325 = vmul.f32 %v1272, %v1319
        %v1326 = vmul.f32 %v1273, %v1315
        %v1327 = vmul.f32 %v1274, %v1319
        %v1328 = vmul.f32 %v1275, %v1315
        %v1329 = vmul.f32 %v1276, %v1319
        %v1330 = vmul.f32 %v1277, %v1315
        %v1331 = vmul.f32 %v1278, %v1319
        %v1332 = vmul.f32 %v1279, %v1315
        %v1333 = vmul.f32 %v1280, %v1319
        %v1334 = vmul.f32 %v1281, %v1315
        %v1335 = vmul.f32 %v1282, %v1319
        %v1336 = vmul.f32 %v1283, %v1315
        %v1337 = vmul.f32 %v1284, %v1319
        %v1338 = vmul.f32 %v1285, %v1315
        %v1339 = vmul.f32 %v1286, %v1319
        %v1340 = vmul.f32 %v1287, %v1315
        %v1341 = vmul.f32 %v1288, %v1319
        %v1342 = vmul.f32 %v1289, %v1315
        %v1343 = vmul.f32 %v1290, %v1319
        %v1344 = vmul.f32 %v1291, %v1315
        %v1345 = vmul.f32 %v1292, %v1319
        %v1346 = vmul.f32 %v1293, %v1315
        %v1347 = vmul.f32 %v1294, %v1319
        %v1348 = vmul.f32 %v1295, %v1315
        %v1349 = vmul.f32 %v1296, %v1319
        %v1350 = vmul.f32 %v1297, %v1315
        %v1351 = vmul.f32 %v1298, %v1319
        %v1352 = vmul.f32 %v1299, %v1315
        %v1353 = vmul.f32 %v1300, %v1319
        %vm1386 = vcmask 1046528
        %v1387 = vrot.slane %v1322, 1
        %v1388 = vrot.slane %v1324, 1
        %v1389 = vsel %vm1386, %v1387, %v1388
        %v1390 = vrot.slane %v1323, 1
        %v1391 = vrot.slane %v1325, 1
        %v1392 = vsel %vm1386, %v1390, %v1391
        %v1393 = vrot.slane %v1326, 1
        %v1394 = vrot.slane %v1328, 1
        %v1395 = vsel %vm1386, %v1393, %v1394
        %v1396 = vrot.slane %v1327, 1
        %v1397 = vrot.slane %v1329, 1
        %v1398 = vsel %vm1386, %v1396, %v1397
        %v1399 = vrot.slane %v1330, 1
        %v1400 = vrot.slane %v1332, 1
        %v1401 = vsel %vm1386, %v1399, %v1400
        %v1402 = vrot.slane %v1331, 1
        %v1403 = vrot.slane %v1333, 1
        %v1404 = vsel %vm1386, %v1402, %v1403
        %v1405 = vrot.slane %v1334, 1
        %v1406 = vrot.slane %v1336, 1
        %v1407 = vsel %vm1386, %v1405, %v1406
        %v1408 = vrot.slane %v1335, 1
        %v1409 = vrot.slane %v1337, 1
        %v1410 = vsel %vm1386, %v1408, %v1409
        %v1411 = vrot.slane %v1338, 1
        %v1412 = vrot.slane %v1340, 1
        %v1413 = vsel %vm1386, %v1411, %v1412
        %v1414 = vrot.slane %v1339, 1
        %v1415 = vrot.slane %v1341, 1
        %v1416 = vsel %vm1386, %v1414, %v1415
        %v1417 = vrot.slane %v1342, 1
        %v1418 = vrot.slane %v1344, 1
        %v1419 = vsel %vm1386, %v1417, %v1418
        %v1420 = vrot.slane %v1343, 1
        %v1421 = vrot.slane %v1345, 1
        %v1422 = vsel %vm1386, %v1420, %v1421
        %v1423 = vrot.slane %v1346, 1
        %v1424 = vrot.slane %v1348, 1
        %v1425 = vsel %vm1386, %v1423, %v1424
        %v1426 = vrot.slane %v1347, 1
        %v1427 = vrot.slane %v1349, 1
        %v1428 = vsel %vm1386, %v1426, %v1427
        %v1429 = vrot.slane %v1350, 1
        %v1430 = vrot.slane %v1352, 1
        %v1431 = vsel %vm1386, %v1429, %v1430
        %v1432 = vrot.slane %v1351, 1
        %v1433 = vrot.slane %v1353, 1
        %v1434 = vsel %vm1386, %v1432, %v1433
        %v1451 = vadd.f32 %v1253, %v1389
        %v1452 = vadd.f32 %v1254, %v1392
        %v1453 = vadd.f32 %v1255, %v1395
        %v1454 = vadd.f32 %v1256, %v1398
        %v1455 = vadd.f32 %v1257, %v1401
        %v1456 = vadd.f32 %v1258, %v1404
        %v1457 = vadd.f32 %v1259, %v1407
        %v1458 = vadd.f32 %v1260, %v1410
        %v1459 = vadd.f32 %v1261, %v1413
        %v1460 = vadd.f32 %v1262, %v1416
        %v1461 = vadd.f32 %v1263, %v1419
        %v1462 = vadd.f32 %v1264, %v1422
        %v1463 = vadd.f32 %v1265, %v1425
        %v1464 = vadd.f32 %v1266, %v1428
        %v1465 = vadd.f32 %v1267, %v1431
        %v1466 = vadd.f32 %v1268, %v1434
        %s1467 = scalar_lea.vmem %s1179, 1
        %v1468 = vld [vmem:[%s1467] ss:$4 sm:$0x3]
        %v1470 = vlaneseq
        %v1471 = vshrl.u32 %v1470, 7
        %v1472 = vsub.s32 0, %v1471
        %v1473 = vrot.slane %v1468, %v1472
        %v1474 = vlaneseq
        %v1475 = vshrl.u32 %v1474, 7
        %v1476 = vsub.s32 1, %v1475
        %v1477 = vrot.slane %v1468, %v1476
        %v1480 = vmul.f32 %v1273, %v1473
        %v1481 = vmul.f32 %v1274, %v1477
        %v1482 = vmul.f32 %v1275, %v1473
        %v1483 = vmul.f32 %v1276, %v1477
        %v1484 = vmul.f32 %v1277, %v1473
        %v1485 = vmul.f32 %v1278, %v1477
        %v1486 = vmul.f32 %v1279, %v1473
        %v1487 = vmul.f32 %v1280, %v1477
        %v1488 = vmul.f32 %v1281, %v1473
        %v1489 = vmul.f32 %v1282, %v1477
        %v1490 = vmul.f32 %v1283, %v1473
        %v1491 = vmul.f32 %v1284, %v1477
        %v1492 = vmul.f32 %v1285, %v1473
        %v1493 = vmul.f32 %v1286, %v1477
        %v1494 = vmul.f32 %v1287, %v1473
        %v1495 = vmul.f32 %v1288, %v1477
        %v1496 = vmul.f32 %v1289, %v1473
        %v1497 = vmul.f32 %v1290, %v1477
        %v1498 = vmul.f32 %v1291, %v1473
        %v1499 = vmul.f32 %v1292, %v1477
        %v1500 = vmul.f32 %v1293, %v1473
        %v1501 = vmul.f32 %v1294, %v1477
        %v1502 = vmul.f32 %v1295, %v1473
        %v1503 = vmul.f32 %v1296, %v1477
        %v1504 = vmul.f32 %v1297, %v1473
        %v1505 = vmul.f32 %v1298, %v1477
        %v1506 = vmul.f32 %v1299, %v1473
        %v1507 = vmul.f32 %v1300, %v1477
        %v1508 = vmul.f32 %v1301, %v1473
        %v1509 = vmul.f32 %v1302, %v1477
        %v1510 = vmul.f32 %v1303, %v1473
        %v1511 = vmul.f32 %v1304, %v1477
        %v1544 = vrot.slane %v1480, 1
        %v1545 = vrot.slane %v1482, 1
        %v1546 = vsel %vm1386, %v1544, %v1545
        %v1547 = vrot.slane %v1481, 1
        %v1548 = vrot.slane %v1483, 1
        %v1549 = vsel %vm1386, %v1547, %v1548
        %v1550 = vrot.slane %v1484, 1
        %v1551 = vrot.slane %v1486, 1
        %v1552 = vsel %vm1386, %v1550, %v1551
        %v1553 = vrot.slane %v1485, 1
        %v1554 = vrot.slane %v1487, 1
        %v1555 = vsel %vm1386, %v1553, %v1554
        %v1556 = vrot.slane %v1488, 1
        %v1557 = vrot.slane %v1490, 1
        %v1558 = vsel %vm1386, %v1556, %v1557
        %v1559 = vrot.slane %v1489, 1
        %v1560 = vrot.slane %v1491, 1
        %v1561 = vsel %vm1386, %v1559, %v1560
        %v1562 = vrot.slane %v1492, 1
        %v1563 = vrot.slane %v1494, 1
        %v1564 = vsel %vm1386, %v1562, %v1563
        %v1565 = vrot.slane %v1493, 1
        %v1566 = vrot.slane %v1495, 1
        %v1567 = vsel %vm1386, %v1565, %v1566
        %v1568 = vrot.slane %v1496, 1
        %v1569 = vrot.slane %v1498, 1
        %v1570 = vsel %vm1386, %v1568, %v1569
        %v1571 = vrot.slane %v1497, 1
        %v1572 = vrot.slane %v1499, 1
        %v1573 = vsel %vm1386, %v1571, %v1572
        %v1574 = vrot.slane %v1500, 1
        %v1575 = vrot.slane %v1502, 1
        %v1576 = vsel %vm1386, %v1574, %v1575
        %v1577 = vrot.slane %v1501, 1
        %v1578 = vrot.slane %v1503, 1
        %v1579 = vsel %vm1386, %v1577, %v1578
        %v1580 = vrot.slane %v1504, 1
        %v1581 = vrot.slane %v1506, 1
        %v1582 = vsel %vm1386, %v1580, %v1581
        %v1583 = vrot.slane %v1505, 1
        %v1584 = vrot.slane %v1507, 1
        %v1585 = vsel %vm1386, %v1583, %v1584
        %v1586 = vrot.slane %v1508, 1
        %v1587 = vrot.slane %v1510, 1
        %v1588 = vsel %vm1386, %v1586, %v1587
        %v1589 = vrot.slane %v1509, 1
        %v1590 = vrot.slane %v1511, 1
        %v1591 = vsel %vm1386, %v1589, %v1590
        %v1608 = vadd.f32 %v1451, %v1546
        %v1609 = vadd.f32 %v1452, %v1549
        %v1610 = vadd.f32 %v1453, %v1552
        %v1611 = vadd.f32 %v1454, %v1555
        %v1612 = vadd.f32 %v1455, %v1558
        %v1613 = vadd.f32 %v1456, %v1561
        %v1614 = vadd.f32 %v1457, %v1564
        %v1615 = vadd.f32 %v1458, %v1567
        %v1616 = vadd.f32 %v1459, %v1570
        %v1617 = vadd.f32 %v1460, %v1573
        %v1618 = vadd.f32 %v1461, %v1576
        %v1619 = vadd.f32 %v1462, %v1579
        %v1620 = vadd.f32 %v1463, %v1582
        %v1621 = vadd.f32 %v1464, %v1585
        %v1622 = vadd.f32 %v1465, %v1588
        %v1623 = vadd.f32 %v1466, %v1591
        %s1624 = scalar_lea.vmem %s1224, 1
        %v1625 = vld [vmem:[%s1624] ss:$4 sm:$0x3]
        %v1627 = vlaneseq
        %v1628 = vshrl.u32 %v1627, 7
        %v1629 = vsub.s32 0, %v1628
        %v1630 = vrot.slane %v1625, %v1629
        %v1631 = vlaneseq
        %v1632 = vshrl.u32 %v1631, 7
        %v1633 = vsub.s32 1, %v1632
        %v1634 = vrot.slane %v1625, %v1633
        %v1637 = vmul.f32 %v1277, %v1630
        %v1638 = vmul.f32 %v1278, %v1634
        %v1639 = vmul.f32 %v1279, %v1630
        %v1640 = vmul.f32 %v1280, %v1634
        %v1641 = vmul.f32 %v1281, %v1630
        %v1642 = vmul.f32 %v1282, %v1634
        %v1643 = vmul.f32 %v1283, %v1630
        %v1644 = vmul.f32 %v1284, %v1634
        %v1645 = vmul.f32 %v1285, %v1630
        %v1646 = vmul.f32 %v1286, %v1634
        %v1647 = vmul.f32 %v1287, %v1630
        %v1648 = vmul.f32 %v1288, %v1634
        %v1649 = vmul.f32 %v1289, %v1630
        %v1650 = vmul.f32 %v1290, %v1634
        %v1651 = vmul.f32 %v1291, %v1630
        %v1652 = vmul.f32 %v1292, %v1634
        %v1653 = vmul.f32 %v1293, %v1630
        %v1654 = vmul.f32 %v1294, %v1634
        %v1655 = vmul.f32 %v1295, %v1630
        %v1656 = vmul.f32 %v1296, %v1634
        %v1657 = vmul.f32 %v1297, %v1630
        %v1658 = vmul.f32 %v1298, %v1634
        %v1659 = vmul.f32 %v1299, %v1630
        %v1660 = vmul.f32 %v1300, %v1634
        %v1661 = vmul.f32 %v1301, %v1630
        %v1662 = vmul.f32 %v1302, %v1634
        %v1663 = vmul.f32 %v1303, %v1630
        %v1664 = vmul.f32 %v1304, %v1634
        %v1665 = vmul.f32 %v1305, %v1630
        %v1666 = vmul.f32 %v1306, %v1634
        %v1667 = vmul.f32 %v1307, %v1630
        %v1668 = vmul.f32 %v1308, %v1634
        %v1701 = vrot.slane %v1637, 1
        %v1702 = vrot.slane %v1639, 1
        %v1703 = vsel %vm1386, %v1701, %v1702
        %v1704 = vrot.slane %v1638, 1
        %v1705 = vrot.slane %v1640, 1
        %v1706 = vsel %vm1386, %v1704, %v1705
        %v1707 = vrot.slane %v1641, 1
        %v1708 = vrot.slane %v1643, 1
        %v1709 = vsel %vm1386, %v1707, %v1708
        %v1710 = vrot.slane %v1642, 1
        %v1711 = vrot.slane %v1644, 1
        %v1712 = vsel %vm1386, %v1710, %v1711
        %v1713 = vrot.slane %v1645, 1
        %v1714 = vrot.slane %v1647, 1
        %v1715 = vsel %vm1386, %v1713, %v1714
        %v1716 = vrot.slane %v1646, 1
        %v1717 = vrot.slane %v1648, 1
        %v1718 = vsel %vm1386, %v1716, %v1717
        %v1719 = vrot.slane %v1649, 1
        %v1720 = vrot.slane %v1651, 1
        %v1721 = vsel %vm1386, %v1719, %v1720
        %v1722 = vrot.slane %v1650, 1
        %v1723 = vrot.slane %v1652, 1
        %v1724 = vsel %vm1386, %v1722, %v1723
        %v1725 = vrot.slane %v1653, 1
        %v1726 = vrot.slane %v1655, 1
        %v1727 = vsel %vm1386, %v1725, %v1726
        %v1728 = vrot.slane %v1654, 1
        %v1729 = vrot.slane %v1656, 1
        %v1730 = vsel %vm1386, %v1728, %v1729
        %v1731 = vrot.slane %v1657, 1
        %v1732 = vrot.slane %v1659, 1
        %v1733 = vsel %vm1386, %v1731, %v1732
        %v1734 = vrot.slane %v1658, 1
        %v1735 = vrot.slane %v1660, 1
        %v1736 = vsel %vm1386, %v1734, %v1735
        %v1737 = vrot.slane %v1661, 1
        %v1738 = vrot.slane %v1663, 1
        %v1739 = vsel %vm1386, %v1737, %v1738
        %v1740 = vrot.slane %v1662, 1
        %v1741 = vrot.slane %v1664, 1
        %v1742 = vsel %vm1386, %v1740, %v1741
        %v1743 = vrot.slane %v1665, 1
        %v1744 = vrot.slane %v1667, 1
        %v1745 = vsel %vm1386, %v1743, %v1744
        %v1746 = vrot.slane %v1666, 1
        %v1747 = vrot.slane %v1668, 1
        %v1748 = vsel %vm1386, %v1746, %v1747
        %v1765 = vadd.f32 %v1608, %v1703
        %v1766 = vadd.f32 %v1609, %v1706
        %v1767 = vadd.f32 %v1610, %v1709
        %v1768 = vadd.f32 %v1611, %v1712
        %v1769 = vadd.f32 %v1612, %v1715
        %v1770 = vadd.f32 %v1613, %v1718
        %v1771 = vadd.f32 %v1614, %v1721
        %v1772 = vadd.f32 %v1615, %v1724
        %v1773 = vadd.f32 %v1616, %v1727
        %v1774 = vadd.f32 %v1617, %v1730
        %v1775 = vadd.f32 %v1618, %v1733
        %v1776 = vadd.f32 %v1619, %v1736
        %v1777 = vadd.f32 %v1620, %v1739
        %v1778 = vadd.f32 %v1621, %v1742
        %v1779 = vadd.f32 %v1622, %v1745
        %v1780 = vadd.f32 %v1623, %v1748
        %v1781 = vld [vmem:[#allocation2] sm:$0xfc]
        %v1782 = vld [vmem:[#allocation2 + $0x8] sm:$0xfc]
        %v1783 = vld [vmem:[#allocation2 + $0x10] sm:$0x3]
        %v1784 = vld [vmem:[#allocation2 + $0x18] sm:$0x3]
        %v1785 = vld [vmem:[#allocation2 + $0x20] sm:$0xfc]
        %v1786 = vld [vmem:[#allocation2 + $0x28] sm:$0xfc]
        %v1787 = vld [vmem:[#allocation2 + $0x30] sm:$0x3]
        %v1788 = vld [vmem:[#allocation2 + $0x38] sm:$0x3]
        %v1789 = vld [vmem:[#allocation2 + $0x40] sm:$0xfc]
        %v1790 = vld [vmem:[#allocation2 + $0x48] sm:$0xfc]
        %v1791 = vld [vmem:[#allocation2 + $0x50] sm:$0x3]
        %v1792 = vld [vmem:[#allocation2 + $0x58] sm:$0x3]
        %v1793 = vld [vmem:[#allocation2 + $0x60] sm:$0xfc]
        %v1794 = vld [vmem:[#allocation2 + $0x68] sm:$0xfc]
        %v1795 = vld [vmem:[#allocation2 + $0x70] sm:$0x3]
        %v1796 = vld [vmem:[#allocation2 + $0x78] sm:$0x3]
        %v1797 = vld [vmem:[#allocation2 + $0x80] sm:$0xfc]
        %v1798 = vld [vmem:[#allocation2 + $0x88] sm:$0xfc]
        %v1799 = vld [vmem:[#allocation2 + $0x90] sm:$0x3]
        %v1800 = vld [vmem:[#allocation2 + $0x98] sm:$0x3]
        %v1801 = vld [vmem:[#allocation2 + $0xa0] sm:$0xfc]
        %v1802 = vld [vmem:[#allocation2 + $0xa8] sm:$0xfc]
        %v1803 = vld [vmem:[#allocation2 + $0xb0] sm:$0x3]
        %v1804 = vld [vmem:[#allocation2 + $0xb8] sm:$0x3]
        %v1805 = vld [vmem:[#allocation2 + $0xc0] sm:$0xfc]
        %v1806 = vld [vmem:[#allocation2 + $0xc8] sm:$0xfc]
        %v1807 = vld [vmem:[#allocation2 + $0xd0] sm:$0x3]
        %v1808 = vld [vmem:[#allocation2 + $0xd8] sm:$0x3]
        %v1809 = vld [vmem:[#allocation2 + $0xe0] sm:$0xfc]
        %v1810 = vld [vmem:[#allocation2 + $0xe8] sm:$0xfc]
        %v1811 = vld [vmem:[#allocation2 + $0xf0] sm:$0x3]
        %v1812 = vld [vmem:[#allocation2 + $0xf8] sm:$0x3]
        %v1813 = vld [vmem:[#allocation2 + $0x100] sm:$0xfc]
        %v1814 = vld [vmem:[#allocation2 + $0x108] sm:$0xfc]
        %v1815 = vld [vmem:[#allocation2 + $0x110] sm:$0x3]
        %v1816 = vld [vmem:[#allocation2 + $0x118] sm:$0x3]
        %v1817 = vld [vmem:[#allocation2 + $0x120] sm:$0xfc]
        %v1818 = vld [vmem:[#allocation2 + $0x128] sm:$0xfc]
        %v1819 = vld [vmem:[#allocation2 + $0x130] sm:$0x3]
        %v1820 = vld [vmem:[#allocation2 + $0x138] sm:$0x3]
        %s1821 = scalar_lea.vmem %s2, 2
        %v1822 = vld [vmem:[%s1821] ss:$4 sm:$0x3]
        %v1824 = vlaneseq
        %v1825 = vshrl.u32 %v1824, 7
        %v1826 = vsub.s32 0, %v1825
        %v1827 = vrot.slane %v1822, %v1826
        %v1828 = vlaneseq
        %v1829 = vshrl.u32 %v1828, 7
        %v1830 = vsub.s32 1, %v1829
        %v1831 = vrot.slane %v1822, %v1830
        %v1834 = vmul.f32 %v1781, %v1827
        %v1835 = vmul.f32 %v1782, %v1831
        %v1836 = vmul.f32 %v1783, %v1827
        %v1837 = vmul.f32 %v1784, %v1831
        %v1838 = vmul.f32 %v1785, %v1827
        %v1839 = vmul.f32 %v1786, %v1831
        %v1840 = vmul.f32 %v1787, %v1827
        %v1841 = vmul.f32 %v1788, %v1831
        %v1842 = vmul.f32 %v1789, %v1827
        %v1843 = vmul.f32 %v1790, %v1831
        %v1844 = vmul.f32 %v1791, %v1827
        %v1845 = vmul.f32 %v1792, %v1831
        %v1846 = vmul.f32 %v1793, %v1827
        %v1847 = vmul.f32 %v1794, %v1831
        %v1848 = vmul.f32 %v1795, %v1827
        %v1849 = vmul.f32 %v1796, %v1831
        %v1850 = vmul.f32 %v1797, %v1827
        %v1851 = vmul.f32 %v1798, %v1831
        %v1852 = vmul.f32 %v1799, %v1827
        %v1853 = vmul.f32 %v1800, %v1831
        %v1854 = vmul.f32 %v1801, %v1827
        %v1855 = vmul.f32 %v1802, %v1831
        %v1856 = vmul.f32 %v1803, %v1827
        %v1857 = vmul.f32 %v1804, %v1831
        %v1858 = vmul.f32 %v1805, %v1827
        %v1859 = vmul.f32 %v1806, %v1831
        %v1860 = vmul.f32 %v1807, %v1827
        %v1861 = vmul.f32 %v1808, %v1831
        %v1862 = vmul.f32 %v1809, %v1827
        %v1863 = vmul.f32 %v1810, %v1831
        %v1864 = vmul.f32 %v1811, %v1827
        %v1865 = vmul.f32 %v1812, %v1831
        %vm1898 = vcmask 1045504
        %v1899 = vrot.slane %v1834, 2
        %v1900 = vrot.slane %v1836, 2
        %v1901 = vsel %vm1898, %v1899, %v1900
        %v1902 = vrot.slane %v1835, 2
        %v1903 = vrot.slane %v1837, 2
        %v1904 = vsel %vm1898, %v1902, %v1903
        %v1905 = vrot.slane %v1838, 2
        %v1906 = vrot.slane %v1840, 2
        %v1907 = vsel %vm1898, %v1905, %v1906
        %v1908 = vrot.slane %v1839, 2
        %v1909 = vrot.slane %v1841, 2
        %v1910 = vsel %vm1898, %v1908, %v1909
        %v1911 = vrot.slane %v1842, 2
        %v1912 = vrot.slane %v1844, 2
        %v1913 = vsel %vm1898, %v1911, %v1912
        %v1914 = vrot.slane %v1843, 2
        %v1915 = vrot.slane %v1845, 2
        %v1916 = vsel %vm1898, %v1914, %v1915
        %v1917 = vrot.slane %v1846, 2
        %v1918 = vrot.slane %v1848, 2
        %v1919 = vsel %vm1898, %v1917, %v1918
        %v1920 = vrot.slane %v1847, 2
        %v1921 = vrot.slane %v1849, 2
        %v1922 = vsel %vm1898, %v1920, %v1921
        %v1923 = vrot.slane %v1850, 2
        %v1924 = vrot.slane %v1852, 2
        %v1925 = vsel %vm1898, %v1923, %v1924
        %v1926 = vrot.slane %v1851, 2
        %v1927 = vrot.slane %v1853, 2
        %v1928 = vsel %vm1898, %v1926, %v1927
        %v1929 = vrot.slane %v1854, 2
        %v1930 = vrot.slane %v1856, 2
        %v1931 = vsel %vm1898, %v1929, %v1930
        %v1932 = vrot.slane %v1855, 2
        %v1933 = vrot.slane %v1857, 2
        %v1934 = vsel %vm1898, %v1932, %v1933
        %v1935 = vrot.slane %v1858, 2
        %v1936 = vrot.slane %v1860, 2
        %v1937 = vsel %vm1898, %v1935, %v1936
        %v1938 = vrot.slane %v1859, 2
        %v1939 = vrot.slane %v1861, 2
        %v1940 = vsel %vm1898, %v1938, %v1939
        %v1941 = vrot.slane %v1862, 2
        %v1942 = vrot.slane %v1864, 2
        %v1943 = vsel %vm1898, %v1941, %v1942
        %v1944 = vrot.slane %v1863, 2
        %v1945 = vrot.slane %v1865, 2
        %v1946 = vsel %vm1898, %v1944, %v1945
        %v1963 = vadd.f32 %v1765, %v1901
        %v1964 = vadd.f32 %v1766, %v1904
        %v1965 = vadd.f32 %v1767, %v1907
        %v1966 = vadd.f32 %v1768, %v1910
        %v1967 = vadd.f32 %v1769, %v1913
        %v1968 = vadd.f32 %v1770, %v1916
        %v1969 = vadd.f32 %v1771, %v1919
        %v1970 = vadd.f32 %v1772, %v1922
        %v1971 = vadd.f32 %v1773, %v1925
        %v1972 = vadd.f32 %v1774, %v1928
        %v1973 = vadd.f32 %v1775, %v1931
        %v1974 = vadd.f32 %v1776, %v1934
        %v1975 = vadd.f32 %v1777, %v1937
        %v1976 = vadd.f32 %v1778, %v1940
        %v1977 = vadd.f32 %v1779, %v1943
        %v1978 = vadd.f32 %v1780, %v1946
        %s1979 = scalar_lea.vmem %s1179, 2
        %v1980 = vld [vmem:[%s1979] ss:$4 sm:$0x3]
        %v1982 = vlaneseq
        %v1983 = vshrl.u32 %v1982, 7
        %v1984 = vsub.s32 0, %v1983
        %v1985 = vrot.slane %v1980, %v1984
        %v1986 = vlaneseq
        %v1987 = vshrl.u32 %v1986, 7
        %v1988 = vsub.s32 1, %v1987
        %v1989 = vrot.slane %v1980, %v1988
        %v1992 = vmul.f32 %v1785, %v1985
        %v1993 = vmul.f32 %v1786, %v1989
        %v1994 = vmul.f32 %v1787, %v1985
        %v1995 = vmul.f32 %v1788, %v1989
        %v1996 = vmul.f32 %v1789, %v1985
        %v1997 = vmul.f32 %v1790, %v1989
        %v1998 = vmul.f32 %v1791, %v1985
        %v1999 = vmul.f32 %v1792, %v1989
        %v2000 = vmul.f32 %v1793, %v1985
        %v2001 = vmul.f32 %v1794, %v1989
        %v2002 = vmul.f32 %v1795, %v1985
        %v2003 = vmul.f32 %v1796, %v1989
        %v2004 = vmul.f32 %v1797, %v1985
        %v2005 = vmul.f32 %v1798, %v1989
        %v2006 = vmul.f32 %v1799, %v1985
        %v2007 = vmul.f32 %v1800, %v1989
        %v2008 = vmul.f32 %v1801, %v1985
        %v2009 = vmul.f32 %v1802, %v1989
        %v2010 = vmul.f32 %v1803, %v1985
        %v2011 = vmul.f32 %v1804, %v1989
        %v2012 = vmul.f32 %v1805, %v1985
        %v2013 = vmul.f32 %v1806, %v1989
        %v2014 = vmul.f32 %v1807, %v1985
        %v2015 = vmul.f32 %v1808, %v1989
        %v2016 = vmul.f32 %v1809, %v1985
        %v2017 = vmul.f32 %v1810, %v1989
        %v2018 = vmul.f32 %v1811, %v1985
        %v2019 = vmul.f32 %v1812, %v1989
        %v2020 = vmul.f32 %v1813, %v1985
        %v2021 = vmul.f32 %v1814, %v1989
        %v2022 = vmul.f32 %v1815, %v1985
        %v2023 = vmul.f32 %v1816, %v1989
        %v2056 = vrot.slane %v1992, 2
        %v2057 = vrot.slane %v1994, 2
        %v2058 = vsel %vm1898, %v2056, %v2057
        %v2059 = vrot.slane %v1993, 2
        %v2060 = vrot.slane %v1995, 2
        %v2061 = vsel %vm1898, %v2059, %v2060
        %v2062 = vrot.slane %v1996, 2
        %v2063 = vrot.slane %v1998, 2
        %v2064 = vsel %vm1898, %v2062, %v2063
        %v2065 = vrot.slane %v1997, 2
        %v2066 = vrot.slane %v1999, 2
        %v2067 = vsel %vm1898, %v2065, %v2066
        %v2068 = vrot.slane %v2000, 2
        %v2069 = vrot.slane %v2002, 2
        %v2070 = vsel %vm1898, %v2068, %v2069
        %v2071 = vrot.slane %v2001, 2
        %v2072 = vrot.slane %v2003, 2
        %v2073 = vsel %vm1898, %v2071, %v2072
        %v2074 = vrot.slane %v2004, 2
        %v2075 = vrot.slane %v2006, 2
        %v2076 = vsel %vm1898, %v2074, %v2075
        %v2077 = vrot.slane %v2005, 2
        %v2078 = vrot.slane %v2007, 2
        %v2079 = vsel %vm1898, %v2077, %v2078
        %v2080 = vrot.slane %v2008, 2
        %v2081 = vrot.slane %v2010, 2
        %v2082 = vsel %vm1898, %v2080, %v2081
        %v2083 = vrot.slane %v2009, 2
        %v2084 = vrot.slane %v2011, 2
        %v2085 = vsel %vm1898, %v2083, %v2084
        %v2086 = vrot.slane %v2012, 2
        %v2087 = vrot.slane %v2014, 2
        %v2088 = vsel %vm1898, %v2086, %v2087
        %v2089 = vrot.slane %v2013, 2
        %v2090 = vrot.slane %v2015, 2
        %v2091 = vsel %vm1898, %v2089, %v2090
        %v2092 = vrot.slane %v2016, 2
        %v2093 = vrot.slane %v2018, 2
        %v2094 = vsel %vm1898, %v2092, %v2093
        %v2095 = vrot.slane %v2017, 2
        %v2096 = vrot.slane %v2019, 2
        %v2097 = vsel %vm1898, %v2095, %v2096
        %v2098 = vrot.slane %v2020, 2
        %v2099 = vrot.slane %v2022, 2
        %v2100 = vsel %vm1898, %v2098, %v2099
        %v2101 = vrot.slane %v2021, 2
        %v2102 = vrot.slane %v2023, 2
        %v2103 = vsel %vm1898, %v2101, %v2102
        %v2120 = vadd.f32 %v1963, %v2058
        %v2121 = vadd.f32 %v1964, %v2061
        %v2122 = vadd.f32 %v1965, %v2064
        %v2123 = vadd.f32 %v1966, %v2067
        %v2124 = vadd.f32 %v1967, %v2070
        %v2125 = vadd.f32 %v1968, %v2073
        %v2126 = vadd.f32 %v1969, %v2076
        %v2127 = vadd.f32 %v1970, %v2079
        %v2128 = vadd.f32 %v1971, %v2082
        %v2129 = vadd.f32 %v1972, %v2085
        %v2130 = vadd.f32 %v1973, %v2088
        %v2131 = vadd.f32 %v1974, %v2091
        %v2132 = vadd.f32 %v1975, %v2094
        %v2133 = vadd.f32 %v1976, %v2097
        %v2134 = vadd.f32 %v1977, %v2100
        %v2135 = vadd.f32 %v1978, %v2103
        %s2136 = scalar_lea.vmem %s1224, 2
        %v2137 = vld [vmem:[%s2136] ss:$4 sm:$0x3]
        %v2139 = vlaneseq
        %v2140 = vshrl.u32 %v2139, 7
        %v2141 = vsub.s32 0, %v2140
        %v2142 = vrot.slane %v2137, %v2141
        %v2143 = vlaneseq
        %v2144 = vshrl.u32 %v2143, 7
        %v2145 = vsub.s32 1, %v2144
        %v2146 = vrot.slane %v2137, %v2145
        %v2149 = vmul.f32 %v1789, %v2142
        %v2150 = vmul.f32 %v1790, %v2146
        %v2151 = vmul.f32 %v1791, %v2142
        %v2152 = vmul.f32 %v1792, %v2146
        %v2153 = vmul.f32 %v1793, %v2142
        %v2154 = vmul.f32 %v1794, %v2146
        %v2155 = vmul.f32 %v1795, %v2142
        %v2156 = vmul.f32 %v1796, %v2146
        %v2157 = vmul.f32 %v1797, %v2142
        %v2158 = vmul.f32 %v1798, %v2146
        %v2159 = vmul.f32 %v1799, %v2142
        %v2160 = vmul.f32 %v1800, %v2146
        %v2161 = vmul.f32 %v1801, %v2142
        %v2162 = vmul.f32 %v1802, %v2146
        %v2163 = vmul.f32 %v1803, %v2142
        %v2164 = vmul.f32 %v1804, %v2146
        %v2165 = vmul.f32 %v1805, %v2142
        %v2166 = vmul.f32 %v1806, %v2146
        %v2167 = vmul.f32 %v1807, %v2142
        %v2168 = vmul.f32 %v1808, %v2146
        %v2169 = vmul.f32 %v1809, %v2142
        %v2170 = vmul.f32 %v1810, %v2146
        %v2171 = vmul.f32 %v1811, %v2142
        %v2172 = vmul.f32 %v1812, %v2146
        %v2173 = vmul.f32 %v1813, %v2142
        %v2174 = vmul.f32 %v1814, %v2146
        %v2175 = vmul.f32 %v1815, %v2142
        %v2176 = vmul.f32 %v1816, %v2146
        %v2177 = vmul.f32 %v1817, %v2142
        %v2178 = vmul.f32 %v1818, %v2146
        %v2179 = vmul.f32 %v1819, %v2142
        %v2180 = vmul.f32 %v1820, %v2146
        %v2213 = vrot.slane %v2149, 2
        %v2214 = vrot.slane %v2151, 2
        %v2215 = vsel %vm1898, %v2213, %v2214
        %v2216 = vrot.slane %v2150, 2
        %v2217 = vrot.slane %v2152, 2
        %v2218 = vsel %vm1898, %v2216, %v2217
        %v2219 = vrot.slane %v2153, 2
        %v2220 = vrot.slane %v2155, 2
        %v2221 = vsel %vm1898, %v2219, %v2220
        %v2222 = vrot.slane %v2154, 2
        %v2223 = vrot.slane %v2156, 2
        %v2224 = vsel %vm1898, %v2222, %v2223
        %v2225 = vrot.slane %v2157, 2
        %v2226 = vrot.slane %v2159, 2
        %v2227 = vsel %vm1898, %v2225, %v2226
        %v2228 = vrot.slane %v2158, 2
        %v2229 = vrot.slane %v2160, 2
        %v2230 = vsel %vm1898, %v2228, %v2229
        %v2231 = vrot.slane %v2161, 2
        %v2232 = vrot.slane %v2163, 2
        %v2233 = vsel %vm1898, %v2231, %v2232
        %v2234 = vrot.slane %v2162, 2
        %v2235 = vrot.slane %v2164, 2
        %v2236 = vsel %vm1898, %v2234, %v2235
        %v2237 = vrot.slane %v2165, 2
        %v2238 = vrot.slane %v2167, 2
        %v2239 = vsel %vm1898, %v2237, %v2238
        %v2240 = vrot.slane %v2166, 2
        %v2241 = vrot.slane %v2168, 2
        %v2242 = vsel %vm1898, %v2240, %v2241
        %v2243 = vrot.slane %v2169, 2
        %v2244 = vrot.slane %v2171, 2
        %v2245 = vsel %vm1898, %v2243, %v2244
        %v2246 = vrot.slane %v2170, 2
        %v2247 = vrot.slane %v2172, 2
        %v2248 = vsel %vm1898, %v2246, %v2247
        %v2249 = vrot.slane %v2173, 2
        %v2250 = vrot.slane %v2175, 2
        %v2251 = vsel %vm1898, %v2249, %v2250
        %v2252 = vrot.slane %v2174, 2
        %v2253 = vrot.slane %v2176, 2
        %v2254 = vsel %vm1898, %v2252, %v2253
        %v2255 = vrot.slane %v2177, 2
        %v2256 = vrot.slane %v2179, 2
        %v2257 = vsel %vm1898, %v2255, %v2256
        %v2258 = vrot.slane %v2178, 2
        %v2259 = vrot.slane %v2180, 2
        %v2260 = vsel %vm1898, %v2258, %v2259
        %v2277 = vadd.f32 %v2120, %v2215
        %v2278 = vadd.f32 %v2121, %v2218
        %v2279 = vadd.f32 %v2122, %v2221
        %v2280 = vadd.f32 %v2123, %v2224
        %v2281 = vadd.f32 %v2124, %v2227
        %v2282 = vadd.f32 %v2125, %v2230
        %v2283 = vadd.f32 %v2126, %v2233
        %v2284 = vadd.f32 %v2127, %v2236
        %v2285 = vadd.f32 %v2128, %v2239
        %v2286 = vadd.f32 %v2129, %v2242
        %v2287 = vadd.f32 %v2130, %v2245
        %v2288 = vadd.f32 %v2131, %v2248
        %v2289 = vadd.f32 %v2132, %v2251
        %v2290 = vadd.f32 %v2133, %v2254
        %v2291 = vadd.f32 %v2134, %v2257
        %v2292 = vadd.f32 %v2135, %v2260
        %2293 = vst [vmem:[#allocation3] sm:$0xff] 0.0
        %2294 = vst.msk [vmem:[#allocation3 + $0x8] sm:$0xff] %vm799, 0.0
        %2295 = vst [vmem:[#allocation3 + $0x10] sm:$0xff] 0.0
        %2296 = vst.msk [vmem:[#allocation3 + $0x18] sm:$0xff] %vm799, 0.0
        %2297 = vst [vmem:[#allocation3 + $0x20] sm:$0xff] 0.0
        %2298 = vst.msk [vmem:[#allocation3 + $0x28] sm:$0xff] %vm799, 0.0
        %2299 = vst [vmem:[#allocation3 + $0x30] sm:$0xff] 0.0
        %2300 = vst.msk [vmem:[#allocation3 + $0x38] sm:$0xff] %vm799, 0.0
        %2301 = vst [vmem:[#allocation3 + $0x40] sm:$0xff] 0.0
        %2302 = vst.msk [vmem:[#allocation3 + $0x48] sm:$0xff] %vm799, 0.0
        %2303 = vst [vmem:[#allocation3 + $0x50] sm:$0xff] 0.0
        %2304 = vst.msk [vmem:[#allocation3 + $0x58] sm:$0xff] %vm799, 0.0
        %2305 = vst [vmem:[#allocation3 + $0x60] sm:$0xff] 0.0
        %2306 = vst.msk [vmem:[#allocation3 + $0x68] sm:$0xff] %vm799, 0.0
        %2307 = vst [vmem:[#allocation3 + $0x70] sm:$0xff] 0.0
        %2308 = vst.msk [vmem:[#allocation3 + $0x78] sm:$0xff] %vm799, 0.0
        %s2309 = scalar_lea.vmem [#allocation3], 384
        %2310 = vst [vmem:[%s2309] sm:$0xff] 0.0
        %2311 = vst.msk [vmem:[%s2309 + $0x8] sm:$0xff] %vm799, 0.0
        %2312 = vst [vmem:[%s2309 + $0x10] sm:$0xff] 0.0
        %2313 = vst.msk [vmem:[%s2309 + $0x18] sm:$0xff] %vm799, 0.0
        %2314 = vst [vmem:[%s2309 + $0x20] sm:$0xff] 0.0
        %2315 = vst.msk [vmem:[%s2309 + $0x28] sm:$0xff] %vm799, 0.0
        %2316 = vst [vmem:[%s2309 + $0x30] sm:$0xff] 0.0
        %2317 = vst.msk [vmem:[%s2309 + $0x38] sm:$0xff] %vm799, 0.0
        %2318 = vst [vmem:[%s2309 + $0x40] sm:$0xff] 0.0
        %2319 = vst.msk [vmem:[%s2309 + $0x48] sm:$0xff] %vm799, 0.0
        %2320 = vst [vmem:[%s2309 + $0x50] sm:$0xff] 0.0
        %2321 = vst.msk [vmem:[%s2309 + $0x58] sm:$0xff] %vm799, 0.0
        %2322 = vst [vmem:[%s2309 + $0x60] sm:$0xff] 0.0
        %2323 = vst.msk [vmem:[%s2309 + $0x68] sm:$0xff] %vm799, 0.0
        %2324 = vst [vmem:[%s2309 + $0x70] sm:$0xff] 0.0
        %2325 = vst.msk [vmem:[%s2309 + $0x78] sm:$0xff] %vm799, 0.0
        %s2326 = scalar_lea.vmem [#allocation3], 128
        %2327 = vst [vmem:[%s2326] sm:$0xf] 0.0
        %vm2328 = vcmask 519168
        %2329 = vst.msk [vmem:[%s2326 + $0x8] sm:$0xf] %vm2328, 0.0
        %2330 = vst [vmem:[%s2326 + $0x20] sm:$0xf] 0.0
        %2331 = vst.msk [vmem:[%s2326 + $0x28] sm:$0xf] %vm2328, 0.0
        %2332 = vst [vmem:[%s2326 + $0x40] sm:$0xf] 0.0
        %2333 = vst.msk [vmem:[%s2326 + $0x48] sm:$0xf] %vm2328, 0.0
        %2334 = vst [vmem:[%s2326 + $0x60] sm:$0xf] 0.0
        %2335 = vst.msk [vmem:[%s2326 + $0x68] sm:$0xf] %vm2328, 0.0
        %2336 = vst [vmem:[%s2326 + $0x80] sm:$0xf] 0.0
        %2337 = vst.msk [vmem:[%s2326 + $0x88] sm:$0xf] %vm2328, 0.0
        %2338 = vst [vmem:[%s2326 + $0xa0] sm:$0xf] 0.0
        %2339 = vst.msk [vmem:[%s2326 + $0xa8] sm:$0xf] %vm2328, 0.0
        %2340 = vst [vmem:[%s2326 + $0xc0] sm:$0xf] 0.0
        %2341 = vst.msk [vmem:[%s2326 + $0xc8] sm:$0xf] %vm2328, 0.0
        %2342 = vst [vmem:[%s2326 + $0xe0] sm:$0xf] 0.0
        %2343 = vst.msk [vmem:[%s2326 + $0xe8] sm:$0xf] %vm2328, 0.0
        %2344 = vst [vmem:[%s2326 + $0x10] sm:$0xf0] 0.0
        %vm2345 = vcmask 523268
        %2346 = vst.msk [vmem:[%s2326 + $0x18] sm:$0xf0] %vm2345, 0.0
        %2347 = vst [vmem:[%s2326 + $0x30] sm:$0xf0] 0.0
        %2348 = vst.msk [vmem:[%s2326 + $0x38] sm:$0xf0] %vm2345, 0.0
        %2349 = vst [vmem:[%s2326 + $0x50] sm:$0xf0] 0.0
        %2350 = vst.msk [vmem:[%s2326 + $0x58] sm:$0xf0] %vm2345, 0.0
        %2351 = vst [vmem:[%s2326 + $0x70] sm:$0xf0] 0.0
        %2352 = vst.msk [vmem:[%s2326 + $0x78] sm:$0xf0] %vm2345, 0.0
        %2353 = vst [vmem:[%s2326 + $0x90] sm:$0xf0] 0.0
        %2354 = vst.msk [vmem:[%s2326 + $0x98] sm:$0xf0] %vm2345, 0.0
        %2355 = vst [vmem:[%s2326 + $0xb0] sm:$0xf0] 0.0
        %2356 = vst.msk [vmem:[%s2326 + $0xb8] sm:$0xf0] %vm2345, 0.0
        %2357 = vst [vmem:[%s2326 + $0xd0] sm:$0xf0] 0.0
        %2358 = vst.msk [vmem:[%s2326 + $0xd8] sm:$0xf0] %vm2345, 0.0
        %2359 = vst [vmem:[%s2326 + $0xf0] sm:$0xf0] 0.0
        %2360 = vst.msk [vmem:[%s2326 + $0xf8] sm:$0xf0] %vm2345, 0.0
        %v2377 = vrot.slane %v2277, 4
        %v2378 = vrot.slane %v2278, 4
        %v2379 = vrot.slane %v2279, 4
        %v2380 = vrot.slane %v2280, 4
        %v2381 = vrot.slane %v2281, 4
        %v2382 = vrot.slane %v2282, 4
        %v2383 = vrot.slane %v2283, 4
        %v2384 = vrot.slane %v2284, 4
        %v2385 = vrot.slane %v2285, 4
        %v2386 = vrot.slane %v2286, 4
        %v2387 = vrot.slane %v2287, 4
        %v2388 = vrot.slane %v2288, 4
        %v2389 = vrot.slane %v2289, 4
        %v2390 = vrot.slane %v2290, 4
        %v2391 = vrot.slane %v2291, 4
        %v2392 = vrot.slane %v2292, 4
        %2409 = vst [vmem:[%s2326] sm:$0xf0] %v2377
        %2410 = vst.msk [vmem:[%s2326 + $0x8] sm:$0xf0] %vm2345, %v2378
        %2411 = vst [vmem:[%s2326 + $0x10] sm:$0xf] %v2377
        %2412 = vst.msk [vmem:[%s2326 + $0x18] sm:$0xf] %vm2328, %v2378
        %2413 = vst [vmem:[%s2326 + $0x20] sm:$0xf0] %v2379
        %2414 = vst.msk [vmem:[%s2326 + $0x28] sm:$0xf0] %vm2345, %v2380
        %2415 = vst [vmem:[%s2326 + $0x30] sm:$0xf] %v2379
        %2416 = vst.msk [vmem:[%s2326 + $0x38] sm:$0xf] %vm2328, %v2380
        %2417 = vst [vmem:[%s2326 + $0x40] sm:$0xf0] %v2381
        %2418 = vst.msk [vmem:[%s2326 + $0x48] sm:$0xf0] %vm2345, %v2382
        %2419 = vst [vmem:[%s2326 + $0x50] sm:$0xf] %v2381
        %2420 = vst.msk [vmem:[%s2326 + $0x58] sm:$0xf] %vm2328, %v2382
        %2421 = vst [vmem:[%s2326 + $0x60] sm:$0xf0] %v2383
        %2422 = vst.msk [vmem:[%s2326 + $0x68] sm:$0xf0] %vm2345, %v2384
        %2423 = vst [vmem:[%s2326 + $0x70] sm:$0xf] %v2383
        %2424 = vst.msk [vmem:[%s2326 + $0x78] sm:$0xf] %vm2328, %v2384
        %2425 = vst [vmem:[%s2326 + $0x80] sm:$0xf0] %v2385
        %2426 = vst.msk [vmem:[%s2326 + $0x88] sm:$0xf0] %vm2345, %v2386
        %2427 = vst [vmem:[%s2326 + $0x90] sm:$0xf] %v2385
        %2428 = vst.msk [vmem:[%s2326 + $0x98] sm:$0xf] %vm2328, %v2386
        %2429 = vst [vmem:[%s2326 + $0xa0] sm:$0xf0] %v2387
        %2430 = vst.msk [vmem:[%s2326 + $0xa8] sm:$0xf0] %vm2345, %v2388
        %2431 = vst [vmem:[%s2326 + $0xb0] sm:$0xf] %v2387
        %2432 = vst.msk [vmem:[%s2326 + $0xb8] sm:$0xf] %vm2328, %v2388
        %2433 = vst [vmem:[%s2326 + $0xc0] sm:$0xf0] %v2389
        %2434 = vst.msk [vmem:[%s2326 + $0xc8] sm:$0xf0] %vm2345, %v2390
        %2435 = vst [vmem:[%s2326 + $0xd0] sm:$0xf] %v2389
        %2436 = vst.msk [vmem:[%s2326 + $0xd8] sm:$0xf] %vm2328, %v2390
        %2437 = vst [vmem:[%s2326 + $0xe0] sm:$0xf0] %v2391
        %2438 = vst.msk [vmem:[%s2326 + $0xe8] sm:$0xf0] %vm2345, %v2392
        %2439 = vst [vmem:[%s2326 + $0xf0] sm:$0xf] %v2391
        %2440 = vst.msk [vmem:[%s2326 + $0xf8] sm:$0xf] %vm2328, %v2392
        %s2441 = scalar_lea.vmem %s9, 2
        %v2442 = vld [vmem:[%s2441] ss:$8 sm:$0x3]
        %v2444 = vlaneseq
        %v2445 = vshrl.u32 %v2444, 7
        %v2446 = vsub.s32 0, %v2445
        %v2447 = vrot.slane %v2442, %v2446
        %v2448 = vlaneseq
        %v2449 = vshrl.u32 %v2448, 7
        %v2450 = vsub.s32 1, %v2449
        %v2451 = vrot.slane %v2442, %v2450
        %v2454 = vld [vmem:[#allocation3] sm:$0xff]
        %v2455 = vld [vmem:[#allocation3 + $0x8] sm:$0xff]
        %v2456 = vld [vmem:[#allocation3 + $0x20] sm:$0xff]
        %v2457 = vld [vmem:[#allocation3 + $0x28] sm:$0xff]
        %v2458 = vld [vmem:[#allocation3 + $0x40] sm:$0xff]
        %v2459 = vld [vmem:[#allocation3 + $0x48] sm:$0xff]
        %v2460 = vld [vmem:[#allocation3 + $0x60] sm:$0xff]
        %v2461 = vld [vmem:[#allocation3 + $0x68] sm:$0xff]
        %v2462 = vld [vmem:[#allocation3 + $0x80] sm:$0xff]
        %v2463 = vld [vmem:[#allocation3 + $0x88] sm:$0xff]
        %v2464 = vld [vmem:[#allocation3 + $0xa0] sm:$0xff]
        %v2465 = vld [vmem:[#allocation3 + $0xa8] sm:$0xff]
        %v2466 = vld [vmem:[#allocation3 + $0xc0] sm:$0xff]
        %v2467 = vld [vmem:[#allocation3 + $0xc8] sm:$0xff]
        %v2468 = vld [vmem:[#allocation3 + $0xe0] sm:$0xff]
        %v2469 = vld [vmem:[#allocation3 + $0xe8] sm:$0xff]
        %v2470 = vld [vmem:[#allocation3 + $0x100] sm:$0xff]
        %v2471 = vld [vmem:[#allocation3 + $0x108] sm:$0xff]
        %v2472 = vld [vmem:[#allocation3 + $0x120] sm:$0xff]
        %v2473 = vld [vmem:[#allocation3 + $0x128] sm:$0xff]
        %v2474 = vld [vmem:[#allocation3 + $0x140] sm:$0xff]
        %v2475 = vld [vmem:[#allocation3 + $0x148] sm:$0xff]
        %v2476 = vld [vmem:[#allocation3 + $0x160] sm:$0xff]
        %v2477 = vld [vmem:[#allocation3 + $0x168] sm:$0xff]
        %v2478 = vld [vmem:[#allocation3 + $0x180] sm:$0xff]
        %v2479 = vld [vmem:[#allocation3 + $0x188] sm:$0xff]
        %v2480 = vld [vmem:[#allocation3 + $0x1a0] sm:$0xff]
        %v2481 = vld [vmem:[#allocation3 + $0x1a8] sm:$0xff]
        %v2482 = vld [vmem:[#allocation3 + $0x1c0] sm:$0xff]
        %v2483 = vld [vmem:[#allocation3 + $0x1c8] sm:$0xff]
        %v2484 = vld [vmem:[#allocation3 + $0x1e0] sm:$0xff]
        %v2485 = vld [vmem:[#allocation3 + $0x1e8] sm:$0xff]
        %v2486 = vld [vmem:[%s3] ss:$8 sm:$0x3]
        %v2488 = vlaneseq
        %v2489 = vshrl.u32 %v2488, 7
        %v2490 = vsub.s32 0, %v2489
        %v2491 = vrot.slane %v2486, %v2490
        %v2492 = vlaneseq
        %v2493 = vshrl.u32 %v2492, 7
        %v2494 = vsub.s32 1, %v2493
        %v2495 = vrot.slane %v2486, %v2494
        %v2498 = vmul.f32 %v2454, %v2491
        %v2499 = vmul.f32 %v2455, %v2495
        %v2500 = vmul.f32 %v2456, %v2491
        %v2501 = vmul.f32 %v2457, %v2495
        %v2502 = vmul.f32 %v2458, %v2491
        %v2503 = vmul.f32 %v2459, %v2495
        %v2504 = vmul.f32 %v2460, %v2491
        %v2505 = vmul.f32 %v2461, %v2495
        %v2506 = vmul.f32 %v2462, %v2491
        %v2507 = vmul.f32 %v2463, %v2495
        %v2508 = vmul.f32 %v2464, %v2491
        %v2509 = vmul.f32 %v2465, %v2495
        %v2510 = vmul.f32 %v2466, %v2491
        %v2511 = vmul.f32 %v2467, %v2495
        %v2512 = vmul.f32 %v2468, %v2491
        %v2513 = vmul.f32 %v2469, %v2495
        %v2514 = vadd.f32 %v2447, %v2498
        %v2515 = vadd.f32 %v2451, %v2499
        %v2516 = vadd.f32 %v2447, %v2500
        %v2517 = vadd.f32 %v2451, %v2501
        %v2518 = vadd.f32 %v2447, %v2502
        %v2519 = vadd.f32 %v2451, %v2503
        %v2520 = vadd.f32 %v2447, %v2504
        %v2521 = vadd.f32 %v2451, %v2505
        %v2522 = vadd.f32 %v2447, %v2506
        %v2523 = vadd.f32 %v2451, %v2507
        %v2524 = vadd.f32 %v2447, %v2508
        %v2525 = vadd.f32 %v2451, %v2509
        %v2526 = vadd.f32 %v2447, %v2510
        %v2527 = vadd.f32 %v2451, %v2511
        %v2528 = vadd.f32 %v2447, %v2512
        %v2529 = vadd.f32 %v2451, %v2513
        %s2530 = scalar_lea.vmem %s3, 16
        %v2531 = vld [vmem:[%s2530] ss:$8 sm:$0x3]
        %v2533 = vlaneseq
        %v2534 = vshrl.u32 %v2533, 7
        %v2535 = vsub.s32 0, %v2534
        %v2536 = vrot.slane %v2531, %v2535
        %v2537 = vlaneseq
        %v2538 = vshrl.u32 %v2537, 7
        %v2539 = vsub.s32 1, %v2538
        %v2540 = vrot.slane %v2531, %v2539
        %v2543 = vmul.f32 %v2458, %v2536
        %v2544 = vmul.f32 %v2459, %v2540
        %v2545 = vmul.f32 %v2460, %v2536
        %v2546 = vmul.f32 %v2461, %v2540
        %v2547 = vmul.f32 %v2462, %v2536
        %v2548 = vmul.f32 %v2463, %v2540
        %v2549 = vmul.f32 %v2464, %v2536
        %v2550 = vmul.f32 %v2465, %v2540
        %v2551 = vmul.f32 %v2466, %v2536
        %v2552 = vmul.f32 %v2467, %v2540
        %v2553 = vmul.f32 %v2468, %v2536
        %v2554 = vmul.f32 %v2469, %v2540
        %v2555 = vmul.f32 %v2470, %v2536
        %v2556 = vmul.f32 %v2471, %v2540
        %v2557 = vmul.f32 %v2472, %v2536
        %v2558 = vmul.f32 %v2473, %v2540
        %v2559 = vadd.f32 %v2514, %v2543
        %v2560 = vadd.f32 %v2515, %v2544
        %v2561 = vadd.f32 %v2516, %v2545
        %v2562 = vadd.f32 %v2517, %v2546
        %v2563 = vadd.f32 %v2518, %v2547
        %v2564 = vadd.f32 %v2519, %v2548
        %v2565 = vadd.f32 %v2520, %v2549
        %v2566 = vadd.f32 %v2521, %v2550
        %v2567 = vadd.f32 %v2522, %v2551
        %v2568 = vadd.f32 %v2523, %v2552
        %v2569 = vadd.f32 %v2524, %v2553
        %v2570 = vadd.f32 %v2525, %v2554
        %v2571 = vadd.f32 %v2526, %v2555
        %v2572 = vadd.f32 %v2527, %v2556
        %v2573 = vadd.f32 %v2528, %v2557
        %v2574 = vadd.f32 %v2529, %v2558
        %s2575 = scalar_lea.vmem %s3, 32
        %v2576 = vld [vmem:[%s2575] ss:$8 sm:$0x3]
        %v2578 = vlaneseq
        %v2579 = vshrl.u32 %v2578, 7
        %v2580 = vsub.s32 0, %v2579
        %v2581 = vrot.slane %v2576, %v2580
        %v2582 = vlaneseq
        %v2583 = vshrl.u32 %v2582, 7
        %v2584 = vsub.s32 1, %v2583
        %v2585 = vrot.slane %v2576, %v2584
        %v2588 = vmul.f32 %v2462, %v2581
        %v2589 = vmul.f32 %v2463, %v2585
        %v2590 = vmul.f32 %v2464, %v2581
        %v2591 = vmul.f32 %v2465, %v2585
        %v2592 = vmul.f32 %v2466, %v2581
        %v2593 = vmul.f32 %v2467, %v2585
        %v2594 = vmul.f32 %v2468, %v2581
        %v2595 = vmul.f32 %v2469, %v2585
        %v2596 = vmul.f32 %v2470, %v2581
        %v2597 = vmul.f32 %v2471, %v2585
        %v2598 = vmul.f32 %v2472, %v2581
        %v2599 = vmul.f32 %v2473, %v2585
        %v2600 = vmul.f32 %v2474, %v2581
        %v2601 = vmul.f32 %v2475, %v2585
        %v2602 = vmul.f32 %v2476, %v2581
        %v2603 = vmul.f32 %v2477, %v2585
        %v2604 = vadd.f32 %v2559, %v2588
        %v2605 = vadd.f32 %v2560, %v2589
        %v2606 = vadd.f32 %v2561, %v2590
        %v2607 = vadd.f32 %v2562, %v2591
        %v2608 = vadd.f32 %v2563, %v2592
        %v2609 = vadd.f32 %v2564, %v2593
        %v2610 = vadd.f32 %v2565, %v2594
        %v2611 = vadd.f32 %v2566, %v2595
        %v2612 = vadd.f32 %v2567, %v2596
        %v2613 = vadd.f32 %v2568, %v2597
        %v2614 = vadd.f32 %v2569, %v2598
        %v2615 = vadd.f32 %v2570, %v2599
        %v2616 = vadd.f32 %v2571, %v2600
        %v2617 = vadd.f32 %v2572, %v2601
        %v2618 = vadd.f32 %v2573, %v2602
        %v2619 = vadd.f32 %v2574, %v2603
        %s2620 = scalar_lea.vmem %s3, 48
        %v2621 = vld [vmem:[%s2620] ss:$8 sm:$0x3]
        %v2623 = vlaneseq
        %v2624 = vshrl.u32 %v2623, 7
        %v2625 = vsub.s32 0, %v2624
        %v2626 = vrot.slane %v2621, %v2625
        %v2627 = vlaneseq
        %v2628 = vshrl.u32 %v2627, 7
        %v2629 = vsub.s32 1, %v2628
        %v2630 = vrot.slane %v2621, %v2629
        %v2633 = vmul.f32 %v2466, %v2626
        %v2634 = vmul.f32 %v2467, %v2630
        %v2635 = vmul.f32 %v2468, %v2626
        %v2636 = vmul.f32 %v2469, %v2630
        %v2637 = vmul.f32 %v2470, %v2626
        %v2638 = vmul.f32 %v2471, %v2630
        %v2639 = vmul.f32 %v2472, %v2626
        %v2640 = vmul.f32 %v2473, %v2630
        %v2641 = vmul.f32 %v2474, %v2626
        %v2642 = vmul.f32 %v2475, %v2630
        %v2643 = vmul.f32 %v2476, %v2626
        %v2644 = vmul.f32 %v2477, %v2630
        %v2645 = vmul.f32 %v2478, %v2626
        %v2646 = vmul.f32 %v2479, %v2630
        %v2647 = vmul.f32 %v2480, %v2626
        %v2648 = vmul.f32 %v2481, %v2630
        %v2649 = vadd.f32 %v2604, %v2633
        %v2650 = vadd.f32 %v2605, %v2634
        %v2651 = vadd.f32 %v2606, %v2635
        %v2652 = vadd.f32 %v2607, %v2636
        %v2653 = vadd.f32 %v2608, %v2637
        %v2654 = vadd.f32 %v2609, %v2638
        %v2655 = vadd.f32 %v2610, %v2639
        %v2656 = vadd.f32 %v2611, %v2640
        %v2657 = vadd.f32 %v2612, %v2641
        %v2658 = vadd.f32 %v2613, %v2642
        %v2659 = vadd.f32 %v2614, %v2643
        %v2660 = vadd.f32 %v2615, %v2644
        %v2661 = vadd.f32 %v2616, %v2645
        %v2662 = vadd.f32 %v2617, %v2646
        %v2663 = vadd.f32 %v2618, %v2647
        %v2664 = vadd.f32 %v2619, %v2648
        %s2665 = scalar_lea.vmem %s3, 64
        %v2666 = vld [vmem:[%s2665] ss:$8 sm:$0x3]
        %v2668 = vlaneseq
        %v2669 = vshrl.u32 %v2668, 7
        %v2670 = vsub.s32 0, %v2669
        %v2671 = vrot.slane %v2666, %v2670
        %v2672 = vlaneseq
        %v2673 = vshrl.u32 %v2672, 7
        %v2674 = vsub.s32 1, %v2673
        %v2675 = vrot.slane %v2666, %v2674
        %v2678 = vmul.f32 %v2470, %v2671
        %v2679 = vmul.f32 %v2471, %v2675
        %v2680 = vmul.f32 %v2472, %v2671
        %v2681 = vmul.f32 %v2473, %v2675
        %v2682 = vmul.f32 %v2474, %v2671
        %v2683 = vmul.f32 %v2475, %v2675
        %v2684 = vmul.f32 %v2476, %v2671
        %v2685 = vmul.f32 %v2477, %v2675
        %v2686 = vmul.f32 %v2478, %v2671
        %v2687 = vmul.f32 %v2479, %v2675
        %v2688 = vmul.f32 %v2480, %v2671
        %v2689 = vmul.f32 %v2481, %v2675
        %v2690 = vmul.f32 %v2482, %v2671
        %v2691 = vmul.f32 %v2483, %v2675
        %v2692 = vmul.f32 %v2484, %v2671
        %v2693 = vmul.f32 %v2485, %v2675
        %v2694 = vadd.f32 %v2649, %v2678
        %v2695 = vadd.f32 %v2650, %v2679
        %v2696 = vadd.f32 %v2651, %v2680
        %v2697 = vadd.f32 %v2652, %v2681
        %v2698 = vadd.f32 %v2653, %v2682
        %v2699 = vadd.f32 %v2654, %v2683
        %v2700 = vadd.f32 %v2655, %v2684
        %v2701 = vadd.f32 %v2656, %v2685
        %v2702 = vadd.f32 %v2657, %v2686
        %v2703 = vadd.f32 %v2658, %v2687
        %v2704 = vadd.f32 %v2659, %v2688
        %v2705 = vadd.f32 %v2660, %v2689
        %v2706 = vadd.f32 %v2661, %v2690
        %v2707 = vadd.f32 %v2662, %v2691
        %v2708 = vadd.f32 %v2663, %v2692
        %v2709 = vadd.f32 %v2664, %v2693
        %v2710 = vld [vmem:[#allocation3] sm:$0xfc]
        %v2711 = vld [vmem:[#allocation3 + $0x8] sm:$0xfc]
        %v2712 = vld [vmem:[#allocation3 + $0x10] sm:$0x3]
        %v2713 = vld [vmem:[#allocation3 + $0x18] sm:$0x3]
        %v2714 = vld [vmem:[#allocation3 + $0x20] sm:$0xfc]
        %v2715 = vld [vmem:[#allocation3 + $0x28] sm:$0xfc]
        %v2716 = vld [vmem:[#allocation3 + $0x30] sm:$0x3]
        %v2717 = vld [vmem:[#allocation3 + $0x38] sm:$0x3]
        %v2718 = vld [vmem:[#allocation3 + $0x40] sm:$0xfc]
        %v2719 = vld [vmem:[#allocation3 + $0x48] sm:$0xfc]
        %v2720 = vld [vmem:[#allocation3 + $0x50] sm:$0x3]
        %v2721 = vld [vmem:[#allocation3 + $0x58] sm:$0x3]
        %v2722 = vld [vmem:[#allocation3 + $0x60] sm:$0xfc]
        %v2723 = vld [vmem:[#allocation3 + $0x68] sm:$0xfc]
        %v2724 = vld [vmem:[#allocation3 + $0x70] sm:$0x3]
        %v2725 = vld [vmem:[#allocation3 + $0x78] sm:$0x3]
        %v2726 = vld [vmem:[#allocation3 + $0x80] sm:$0xfc]
        %v2727 = vld [vmem:[#allocation3 + $0x88] sm:$0xfc]
        %v2728 = vld [vmem:[#allocation3 + $0x90] sm:$0x3]
        %v2729 = vld [vmem:[#allocation3 + $0x98] sm:$0x3]
        %v2730 = vld [vmem:[#allocation3 + $0xa0] sm:$0xfc]
        %v2731 = vld [vmem:[#allocation3 + $0xa8] sm:$0xfc]
        %v2732 = vld [vmem:[#allocation3 + $0xb0] sm:$0x3]
        %v2733 = vld [vmem:[#allocation3 + $0xb8] sm:$0x3]
        %v2734 = vld [vmem:[#allocation3 + $0xc0] sm:$0xfc]
        %v2735 = vld [vmem:[#allocation3 + $0xc8] sm:$0xfc]
        %v2736 = vld [vmem:[#allocation3 + $0xd0] sm:$0x3]
        %v2737 = vld [vmem:[#allocation3 + $0xd8] sm:$0x3]
        %v2738 = vld [vmem:[#allocation3 + $0xe0] sm:$0xfc]
        %v2739 = vld [vmem:[#allocation3 + $0xe8] sm:$0xfc]
        %v2740 = vld [vmem:[#allocation3 + $0xf0] sm:$0x3]
        %v2741 = vld [vmem:[#allocation3 + $0xf8] sm:$0x3]
        %v2742 = vld [vmem:[#allocation3 + $0x100] sm:$0xfc]
        %v2743 = vld [vmem:[#allocation3 + $0x108] sm:$0xfc]
        %v2744 = vld [vmem:[#allocation3 + $0x110] sm:$0x3]
        %v2745 = vld [vmem:[#allocation3 + $0x118] sm:$0x3]
        %v2746 = vld [vmem:[#allocation3 + $0x120] sm:$0xfc]
        %v2747 = vld [vmem:[#allocation3 + $0x128] sm:$0xfc]
        %v2748 = vld [vmem:[#allocation3 + $0x130] sm:$0x3]
        %v2749 = vld [vmem:[#allocation3 + $0x138] sm:$0x3]
        %v2750 = vld [vmem:[#allocation3 + $0x140] sm:$0xfc]
        %v2751 = vld [vmem:[#allocation3 + $0x148] sm:$0xfc]
        %v2752 = vld [vmem:[#allocation3 + $0x150] sm:$0x3]
        %v2753 = vld [vmem:[#allocation3 + $0x158] sm:$0x3]
        %v2754 = vld [vmem:[#allocation3 + $0x160] sm:$0xfc]
        %v2755 = vld [vmem:[#allocation3 + $0x168] sm:$0xfc]
        %v2756 = vld [vmem:[#allocation3 + $0x170] sm:$0x3]
        %v2757 = vld [vmem:[#allocation3 + $0x178] sm:$0x3]
        %v2758 = vld [vmem:[#allocation3 + $0x180] sm:$0xfc]
        %v2759 = vld [vmem:[#allocation3 + $0x188] sm:$0xfc]
        %v2760 = vld [vmem:[#allocation3 + $0x190] sm:$0x3]
        %v2761 = vld [vmem:[#allocation3 + $0x198] sm:$0x3]
        %v2762 = vld [vmem:[#allocation3 + $0x1a0] sm:$0xfc]
        %v2763 = vld [vmem:[#allocation3 + $0x1a8] sm:$0xfc]
        %v2764 = vld [vmem:[#allocation3 + $0x1b0] sm:$0x3]
        %v2765 = vld [vmem:[#allocation3 + $0x1b8] sm:$0x3]
        %v2766 = vld [vmem:[#allocation3 + $0x1c0] sm:$0xfc]
        %v2767 = vld [vmem:[#allocation3 + $0x1c8] sm:$0xfc]
        %v2768 = vld [vmem:[#allocation3 + $0x1d0] sm:$0x3]
        %v2769 = vld [vmem:[#allocation3 + $0x1d8] sm:$0x3]
        %v2770 = vld [vmem:[#allocation3 + $0x1e0] sm:$0xfc]
        %v2771 = vld [vmem:[#allocation3 + $0x1e8] sm:$0xfc]
        %v2772 = vld [vmem:[#allocation3 + $0x1f0] sm:$0x3]
        %v2773 = vld [vmem:[#allocation3 + $0x1f8] sm:$0x3]
        %s2774 = scalar_lea.vmem %s3, 1
        %v2775 = vld [vmem:[%s2774] ss:$8 sm:$0x3]
        %v2777 = vlaneseq
        %v2778 = vshrl.u32 %v2777, 7
        %v2779 = vsub.s32 0, %v2778
        %v2780 = vrot.slane %v2775, %v2779
        %v2781 = vlaneseq
        %v2782 = vshrl.u32 %v2781, 7
        %v2783 = vsub.s32 1, %v2782
        %v2784 = vrot.slane %v2775, %v2783
        %v2787 = vmul.f32 %v2710, %v2780
        %v2788 = vmul.f32 %v2711, %v2784
        %v2789 = vmul.f32 %v2712, %v2780
        %v2790 = vmul.f32 %v2713, %v2784
        %v2791 = vmul.f32 %v2714, %v2780
        %v2792 = vmul.f32 %v2715, %v2784
        %v2793 = vmul.f32 %v2716, %v2780
        %v2794 = vmul.f32 %v2717, %v2784
        %v2795 = vmul.f32 %v2718, %v2780
        %v2796 = vmul.f32 %v2719, %v2784
        %v2797 = vmul.f32 %v2720, %v2780
        %v2798 = vmul.f32 %v2721, %v2784
        %v2799 = vmul.f32 %v2722, %v2780
        %v2800 = vmul.f32 %v2723, %v2784
        %v2801 = vmul.f32 %v2724, %v2780
        %v2802 = vmul.f32 %v2725, %v2784
        %v2803 = vmul.f32 %v2726, %v2780
        %v2804 = vmul.f32 %v2727, %v2784
        %v2805 = vmul.f32 %v2728, %v2780
        %v2806 = vmul.f32 %v2729, %v2784
        %v2807 = vmul.f32 %v2730, %v2780
        %v2808 = vmul.f32 %v2731, %v2784
        %v2809 = vmul.f32 %v2732, %v2780
        %v2810 = vmul.f32 %v2733, %v2784
        %v2811 = vmul.f32 %v2734, %v2780
        %v2812 = vmul.f32 %v2735, %v2784
        %v2813 = vmul.f32 %v2736, %v2780
        %v2814 = vmul.f32 %v2737, %v2784
        %v2815 = vmul.f32 %v2738, %v2780
        %v2816 = vmul.f32 %v2739, %v2784
        %v2817 = vmul.f32 %v2740, %v2780
        %v2818 = vmul.f32 %v2741, %v2784
        %v2851 = vrot.slane %v2787, 2
        %v2852 = vrot.slane %v2789, 2
        %v2853 = vsel %vm1898, %v2851, %v2852
        %v2854 = vrot.slane %v2788, 2
        %v2855 = vrot.slane %v2790, 2
        %v2856 = vsel %vm1898, %v2854, %v2855
        %v2857 = vrot.slane %v2791, 2
        %v2858 = vrot.slane %v2793, 2
        %v2859 = vsel %vm1898, %v2857, %v2858
        %v2860 = vrot.slane %v2792, 2
        %v2861 = vrot.slane %v2794, 2
        %v2862 = vsel %vm1898, %v2860, %v2861
        %v2863 = vrot.slane %v2795, 2
        %v2864 = vrot.slane %v2797, 2
        %v2865 = vsel %vm1898, %v2863, %v2864
        %v2866 = vrot.slane %v2796, 2
        %v2867 = vrot.slane %v2798, 2
        %v2868 = vsel %vm1898, %v2866, %v2867
        %v2869 = vrot.slane %v2799, 2
        %v2870 = vrot.slane %v2801, 2
        %v2871 = vsel %vm1898, %v2869, %v2870
        %v2872 = vrot.slane %v2800, 2
        %v2873 = vrot.slane %v2802, 2
        %v2874 = vsel %vm1898, %v2872, %v2873
        %v2875 = vrot.slane %v2803, 2
        %v2876 = vrot.slane %v2805, 2
        %v2877 = vsel %vm1898, %v2875, %v2876
        %v2878 = vrot.slane %v2804, 2
        %v2879 = vrot.slane %v2806, 2
        %v2880 = vsel %vm1898, %v2878, %v2879
        %v2881 = vrot.slane %v2807, 2
        %v2882 = vrot.slane %v2809, 2
        %v2883 = vsel %vm1898, %v2881, %v2882
        %v2884 = vrot.slane %v2808, 2
        %v2885 = vrot.slane %v2810, 2
        %v2886 = vsel %vm1898, %v2884, %v2885
        %v2887 = vrot.slane %v2811, 2
        %v2888 = vrot.slane %v2813, 2
        %v2889 = vsel %vm1898, %v2887, %v2888
        %v2890 = vrot.slane %v2812, 2
        %v2891 = vrot.slane %v2814, 2
        %v2892 = vsel %vm1898, %v2890, %v2891
        %v2893 = vrot.slane %v2815, 2
        %v2894 = vrot.slane %v2817, 2
        %v2895 = vsel %vm1898, %v2893, %v2894
        %v2896 = vrot.slane %v2816, 2
        %v2897 = vrot.slane %v2818, 2
        %v2898 = vsel %vm1898, %v2896, %v2897
        %v2915 = vadd.f32 %v2694, %v2853
        %v2916 = vadd.f32 %v2695, %v2856
        %v2917 = vadd.f32 %v2696, %v2859
        %v2918 = vadd.f32 %v2697, %v2862
        %v2919 = vadd.f32 %v2698, %v2865
        %v2920 = vadd.f32 %v2699, %v2868
        %v2921 = vadd.f32 %v2700, %v2871
        %v2922 = vadd.f32 %v2701, %v2874
        %v2923 = vadd.f32 %v2702, %v2877
        %v2924 = vadd.f32 %v2703, %v2880
        %v2925 = vadd.f32 %v2704, %v2883
        %v2926 = vadd.f32 %v2705, %v2886
        %v2927 = vadd.f32 %v2706, %v2889
        %v2928 = vadd.f32 %v2707, %v2892
        %v2929 = vadd.f32 %v2708, %v2895
        %v2930 = vadd.f32 %v2709, %v2898
        %s2931 = scalar_lea.vmem %s2530, 1
        %v2932 = vld [vmem:[%s2931] ss:$8 sm:$0x3]
        %v2934 = vlaneseq
        %v2935 = vshrl.u32 %v2934, 7
        %v2936 = vsub.s32 0, %v2935
        %v2937 = vrot.slane %v2932, %v2936
        %v2938 = vlaneseq
        %v2939 = vshrl.u32 %v2938, 7
        %v2940 = vsub.s32 1, %v2939
        %v2941 = vrot.slane %v2932, %v2940
        %v2944 = vmul.f32 %v2718, %v2937
        %v2945 = vmul.f32 %v2719, %v2941
        %v2946 = vmul.f32 %v2720, %v2937
        %v2947 = vmul.f32 %v2721, %v2941
        %v2948 = vmul.f32 %v2722, %v2937
        %v2949 = vmul.f32 %v2723, %v2941
        %v2950 = vmul.f32 %v2724, %v2937
        %v2951 = vmul.f32 %v2725, %v2941
        %v2952 = vmul.f32 %v2726, %v2937
        %v2953 = vmul.f32 %v2727, %v2941
        %v2954 = vmul.f32 %v2728, %v2937
        %v2955 = vmul.f32 %v2729, %v2941
        %v2956 = vmul.f32 %v2730, %v2937
        %v2957 = vmul.f32 %v2731, %v2941
        %v2958 = vmul.f32 %v2732, %v2937
        %v2959 = vmul.f32 %v2733, %v2941
        %v2960 = vmul.f32 %v2734, %v2937
        %v2961 = vmul.f32 %v2735, %v2941
        %v2962 = vmul.f32 %v2736, %v2937
        %v2963 = vmul.f32 %v2737, %v2941
        %v2964 = vmul.f32 %v2738, %v2937
        %v2965 = vmul.f32 %v2739, %v2941
        %v2966 = vmul.f32 %v2740, %v2937
        %v2967 = vmul.f32 %v2741, %v2941
        %v2968 = vmul.f32 %v2742, %v2937
        %v2969 = vmul.f32 %v2743, %v2941
        %v2970 = vmul.f32 %v2744, %v2937
        %v2971 = vmul.f32 %v2745, %v2941
        %v2972 = vmul.f32 %v2746, %v2937
        %v2973 = vmul.f32 %v2747, %v2941
        %v2974 = vmul.f32 %v2748, %v2937
        %v2975 = vmul.f32 %v2749, %v2941
        %v3008 = vrot.slane %v2944, 2
        %v3009 = vrot.slane %v2946, 2
        %v3010 = vsel %vm1898, %v3008, %v3009
        %v3011 = vrot.slane %v2945, 2
        %v3012 = vrot.slane %v2947, 2
        %v3013 = vsel %vm1898, %v3011, %v3012
        %v3014 = vrot.slane %v2948, 2
        %v3015 = vrot.slane %v2950, 2
        %v3016 = vsel %vm1898, %v3014, %v3015
        %v3017 = vrot.slane %v2949, 2
        %v3018 = vrot.slane %v2951, 2
        %v3019 = vsel %vm1898, %v3017, %v3018
        %v3020 = vrot.slane %v2952, 2
        %v3021 = vrot.slane %v2954, 2
        %v3022 = vsel %vm1898, %v3020, %v3021
        %v3023 = vrot.slane %v2953, 2
        %v3024 = vrot.slane %v2955, 2
        %v3025 = vsel %vm1898, %v3023, %v3024
        %v3026 = vrot.slane %v2956, 2
        %v3027 = vrot.slane %v2958, 2
        %v3028 = vsel %vm1898, %v3026, %v3027
        %v3029 = vrot.slane %v2957, 2
        %v3030 = vrot.slane %v2959, 2
        %v3031 = vsel %vm1898, %v3029, %v3030
        %v3032 = vrot.slane %v2960, 2
        %v3033 = vrot.slane %v2962, 2
        %v3034 = vsel %vm1898, %v3032, %v3033
        %v3035 = vrot.slane %v2961, 2
        %v3036 = vrot.slane %v2963, 2
        %v3037 = vsel %vm1898, %v3035, %v3036
        %v3038 = vrot.slane %v2964, 2
        %v3039 = vrot.slane %v2966, 2
        %v3040 = vsel %vm1898, %v3038, %v3039
        %v3041 = vrot.slane %v2965, 2
        %v3042 = vrot.slane %v2967, 2
        %v3043 = vsel %vm1898, %v3041, %v3042
        %v3044 = vrot.slane %v2968, 2
        %v3045 = vrot.slane %v2970, 2
        %v3046 = vsel %vm1898, %v3044, %v3045
        %v3047 = vrot.slane %v2969, 2
        %v3048 = vrot.slane %v2971, 2
        %v3049 = vsel %vm1898, %v3047, %v3048
        %v3050 = vrot.slane %v2972, 2
        %v3051 = vrot.slane %v2974, 2
        %v3052 = vsel %vm1898, %v3050, %v3051
        %v3053 = vrot.slane %v2973, 2
        %v3054 = vrot.slane %v2975, 2
        %v3055 = vsel %vm1898, %v3053, %v3054
        %v3072 = vadd.f32 %v2915, %v3010
        %v3073 = vadd.f32 %v2916, %v3013
        %v3074 = vadd.f32 %v2917, %v3016
        %v3075 = vadd.f32 %v2918, %v3019
        %v3076 = vadd.f32 %v2919, %v3022
        %v3077 = vadd.f32 %v2920, %v3025
        %v3078 = vadd.f32 %v2921, %v3028
        %v3079 = vadd.f32 %v2922, %v3031
        %v3080 = vadd.f32 %v2923, %v3034
        %v3081 = vadd.f32 %v2924, %v3037
        %v3082 = vadd.f32 %v2925, %v3040
        %v3083 = vadd.f32 %v2926, %v3043
        %v3084 = vadd.f32 %v2927, %v3046
        %v3085 = vadd.f32 %v2928, %v3049
        %v3086 = vadd.f32 %v2929, %v3052
        %v3087 = vadd.f32 %v2930, %v3055
        %s3088 = scalar_lea.vmem %s2575, 1
        %v3089 = vld [vmem:[%s3088] ss:$8 sm:$0x3]
        %v3091 = vlaneseq
        %v3092 = vshrl.u32 %v3091, 7
        %v3093 = vsub.s32 0, %v3092
        %v3094 = vrot.slane %v3089, %v3093
        %v3095 = vlaneseq
        %v3096 = vshrl.u32 %v3095, 7
        %v3097 = vsub.s32 1, %v3096
        %v3098 = vrot.slane %v3089, %v3097
        %v3101 = vmul.f32 %v2726, %v3094
        %v3102 = vmul.f32 %v2727, %v3098
        %v3103 = vmul.f32 %v2728, %v3094
        %v3104 = vmul.f32 %v2729, %v3098
        %v3105 = vmul.f32 %v2730, %v3094
        %v3106 = vmul.f32 %v2731, %v3098
        %v3107 = vmul.f32 %v2732, %v3094
        %v3108 = vmul.f32 %v2733, %v3098
        %v3109 = vmul.f32 %v2734, %v3094
        %v3110 = vmul.f32 %v2735, %v3098
        %v3111 = vmul.f32 %v2736, %v3094
        %v3112 = vmul.f32 %v2737, %v3098
        %v3113 = vmul.f32 %v2738, %v3094
        %v3114 = vmul.f32 %v2739, %v3098
        %v3115 = vmul.f32 %v2740, %v3094
        %v3116 = vmul.f32 %v2741, %v3098
        %v3117 = vmul.f32 %v2742, %v3094
        %v3118 = vmul.f32 %v2743, %v3098
        %v3119 = vmul.f32 %v2744, %v3094
        %v3120 = vmul.f32 %v2745, %v3098
        %v3121 = vmul.f32 %v2746, %v3094
        %v3122 = vmul.f32 %v2747, %v3098
        %v3123 = vmul.f32 %v2748, %v3094
        %v3124 = vmul.f32 %v2749, %v3098
        %v3125 = vmul.f32 %v2750, %v3094
        %v3126 = vmul.f32 %v2751, %v3098
        %v3127 = vmul.f32 %v2752, %v3094
        %v3128 = vmul.f32 %v2753, %v3098
        %v3129 = vmul.f32 %v2754, %v3094
        %v3130 = vmul.f32 %v2755, %v3098
        %v3131 = vmul.f32 %v2756, %v3094
        %v3132 = vmul.f32 %v2757, %v3098
        %v3165 = vrot.slane %v3101, 2
        %v3166 = vrot.slane %v3103, 2
        %v3167 = vsel %vm1898, %v3165, %v3166
        %v3168 = vrot.slane %v3102, 2
        %v3169 = vrot.slane %v3104, 2
        %v3170 = vsel %vm1898, %v3168, %v3169
        %v3171 = vrot.slane %v3105, 2
        %v3172 = vrot.slane %v3107, 2
        %v3173 = vsel %vm1898, %v3171, %v3172
        %v3174 = vrot.slane %v3106, 2
        %v3175 = vrot.slane %v3108, 2
        %v3176 = vsel %vm1898, %v3174, %v3175
        %v3177 = vrot.slane %v3109, 2
        %v3178 = vrot.slane %v3111, 2
        %v3179 = vsel %vm1898, %v3177, %v3178
        %v3180 = vrot.slane %v3110, 2
        %v3181 = vrot.slane %v3112, 2
        %v3182 = vsel %vm1898, %v3180, %v3181
        %v3183 = vrot.slane %v3113, 2
        %v3184 = vrot.slane %v3115, 2
        %v3185 = vsel %vm1898, %v3183, %v3184
        %v3186 = vrot.slane %v3114, 2
        %v3187 = vrot.slane %v3116, 2
        %v3188 = vsel %vm1898, %v3186, %v3187
        %v3189 = vrot.slane %v3117, 2
        %v3190 = vrot.slane %v3119, 2
        %v3191 = vsel %vm1898, %v3189, %v3190
        %v3192 = vrot.slane %v3118, 2
        %v3193 = vrot.slane %v3120, 2
        %v3194 = vsel %vm1898, %v3192, %v3193
        %v3195 = vrot.slane %v3121, 2
        %v3196 = vrot.slane %v3123, 2
        %v3197 = vsel %vm1898, %v3195, %v3196
        %v3198 = vrot.slane %v3122, 2
        %v3199 = vrot.slane %v3124, 2
        %v3200 = vsel %vm1898, %v3198, %v3199
        %v3201 = vrot.slane %v3125, 2
        %v3202 = vrot.slane %v3127, 2
        %v3203 = vsel %vm1898, %v3201, %v3202
        %v3204 = vrot.slane %v3126, 2
        %v3205 = vrot.slane %v3128, 2
        %v3206 = vsel %vm1898, %v3204, %v3205
        %v3207 = vrot.slane %v3129, 2
        %v3208 = vrot.slane %v3131, 2
        %v3209 = vsel %vm1898, %v3207, %v3208
        %v3210 = vrot.slane %v3130, 2
        %v3211 = vrot.slane %v3132, 2
        %v3212 = vsel %vm1898, %v3210, %v3211
        %v3229 = vadd.f32 %v3072, %v3167
        %v3230 = vadd.f32 %v3073, %v3170
        %v3231 = vadd.f32 %v3074, %v3173
        %v3232 = vadd.f32 %v3075, %v3176
        %v3233 = vadd.f32 %v3076, %v3179
        %v3234 = vadd.f32 %v3077, %v3182
        %v3235 = vadd.f32 %v3078, %v3185
        %v3236 = vadd.f32 %v3079, %v3188
        %v3237 = vadd.f32 %v3080, %v3191
        %v3238 = vadd.f32 %v3081, %v3194
        %v3239 = vadd.f32 %v3082, %v3197
        %v3240 = vadd.f32 %v3083, %v3200
        %v3241 = vadd.f32 %v3084, %v3203
        %v3242 = vadd.f32 %v3085, %v3206
        %v3243 = vadd.f32 %v3086, %v3209
        %v3244 = vadd.f32 %v3087, %v3212
        %s3245 = scalar_lea.vmem %s2620, 1
        %v3246 = vld [vmem:[%s3245] ss:$8 sm:$0x3]
        %v3248 = vlaneseq
        %v3249 = vshrl.u32 %v3248, 7
        %v3250 = vsub.s32 0, %v3249
        %v3251 = vrot.slane %v3246, %v3250
        %v3252 = vlaneseq
        %v3253 = vshrl.u32 %v3252, 7
        %v3254 = vsub.s32 1, %v3253
        %v3255 = vrot.slane %v3246, %v3254
        %v3258 = vmul.f32 %v2734, %v3251
        %v3259 = vmul.f32 %v2735, %v3255
        %v3260 = vmul.f32 %v2736, %v3251
        %v3261 = vmul.f32 %v2737, %v3255
        %v3262 = vmul.f32 %v2738, %v3251
        %v3263 = vmul.f32 %v2739, %v3255
        %v3264 = vmul.f32 %v2740, %v3251
        %v3265 = vmul.f32 %v2741, %v3255
        %v3266 = vmul.f32 %v2742, %v3251
        %v3267 = vmul.f32 %v2743, %v3255
        %v3268 = vmul.f32 %v2744, %v3251
        %v3269 = vmul.f32 %v2745, %v3255
        %v3270 = vmul.f32 %v2746, %v3251
        %v3271 = vmul.f32 %v2747, %v3255
        %v3272 = vmul.f32 %v2748, %v3251
        %v3273 = vmul.f32 %v2749, %v3255
        %v3274 = vmul.f32 %v2750, %v3251
        %v3275 = vmul.f32 %v2751, %v3255
        %v3276 = vmul.f32 %v2752, %v3251
        %v3277 = vmul.f32 %v2753, %v3255
        %v3278 = vmul.f32 %v2754, %v3251
        %v3279 = vmul.f32 %v2755, %v3255
        %v3280 = vmul.f32 %v2756, %v3251
        %v3281 = vmul.f32 %v2757, %v3255
        %v3282 = vmul.f32 %v2758, %v3251
        %v3283 = vmul.f32 %v2759, %v3255
        %v3284 = vmul.f32 %v2760, %v3251
        %v3285 = vmul.f32 %v2761, %v3255
        %v3286 = vmul.f32 %v2762, %v3251
        %v3287 = vmul.f32 %v2763, %v3255
        %v3288 = vmul.f32 %v2764, %v3251
        %v3289 = vmul.f32 %v2765, %v3255
        %v3322 = vrot.slane %v3258, 2
        %v3323 = vrot.slane %v3260, 2
        %v3324 = vsel %vm1898, %v3322, %v3323
        %v3325 = vrot.slane %v3259, 2
        %v3326 = vrot.slane %v3261, 2
        %v3327 = vsel %vm1898, %v3325, %v3326
        %v3328 = vrot.slane %v3262, 2
        %v3329 = vrot.slane %v3264, 2
        %v3330 = vsel %vm1898, %v3328, %v3329
        %v3331 = vrot.slane %v3263, 2
        %v3332 = vrot.slane %v3265, 2
        %v3333 = vsel %vm1898, %v3331, %v3332
        %v3334 = vrot.slane %v3266, 2
        %v3335 = vrot.slane %v3268, 2
        %v3336 = vsel %vm1898, %v3334, %v3335
        %v3337 = vrot.slane %v3267, 2
        %v3338 = vrot.slane %v3269, 2
        %v3339 = vsel %vm1898, %v3337, %v3338
        %v3340 = vrot.slane %v3270, 2
        %v3341 = vrot.slane %v3272, 2
        %v3342 = vsel %vm1898, %v3340, %v3341
        %v3343 = vrot.slane %v3271, 2
        %v3344 = vrot.slane %v3273, 2
        %v3345 = vsel %vm1898, %v3343, %v3344
        %v3346 = vrot.slane %v3274, 2
        %v3347 = vrot.slane %v3276, 2
        %v3348 = vsel %vm1898, %v3346, %v3347
        %v3349 = vrot.slane %v3275, 2
        %v3350 = vrot.slane %v3277, 2
        %v3351 = vsel %vm1898, %v3349, %v3350
        %v3352 = vrot.slane %v3278, 2
        %v3353 = vrot.slane %v3280, 2
        %v3354 = vsel %vm1898, %v3352, %v3353
        %v3355 = vrot.slane %v3279, 2
        %v3356 = vrot.slane %v3281, 2
        %v3357 = vsel %vm1898, %v3355, %v3356
        %v3358 = vrot.slane %v3282, 2
        %v3359 = vrot.slane %v3284, 2
        %v3360 = vsel %vm1898, %v3358, %v3359
        %v3361 = vrot.slane %v3283, 2
        %v3362 = vrot.slane %v3285, 2
        %v3363 = vsel %vm1898, %v3361, %v3362
        %v3364 = vrot.slane %v3286, 2
        %v3365 = vrot.slane %v3288, 2
        %v3366 = vsel %vm1898, %v3364, %v3365
        %v3367 = vrot.slane %v3287, 2
        %v3368 = vrot.slane %v3289, 2
        %v3369 = vsel %vm1898, %v3367, %v3368
        %v3386 = vadd.f32 %v3229, %v3324
        %v3387 = vadd.f32 %v3230, %v3327
        %v3388 = vadd.f32 %v3231, %v3330
        %v3389 = vadd.f32 %v3232, %v3333
        %v3390 = vadd.f32 %v3233, %v3336
        %v3391 = vadd.f32 %v3234, %v3339
        %v3392 = vadd.f32 %v3235, %v3342
        %v3393 = vadd.f32 %v3236, %v3345
        %v3394 = vadd.f32 %v3237, %v3348
        %v3395 = vadd.f32 %v3238, %v3351
        %v3396 = vadd.f32 %v3239, %v3354
        %v3397 = vadd.f32 %v3240, %v3357
        %v3398 = vadd.f32 %v3241, %v3360
        %v3399 = vadd.f32 %v3242, %v3363
        %v3400 = vadd.f32 %v3243, %v3366
        %v3401 = vadd.f32 %v3244, %v3369
        %s3402 = scalar_lea.vmem %s2665, 1
        %v3403 = vld [vmem:[%s3402] ss:$8 sm:$0x3]
        %v3405 = vlaneseq
        %v3406 = vshrl.u32 %v3405, 7
        %v3407 = vsub.s32 0, %v3406
        %v3408 = vrot.slane %v3403, %v3407
        %v3409 = vlaneseq
        %v3410 = vshrl.u32 %v3409, 7
        %v3411 = vsub.s32 1, %v3410
        %v3412 = vrot.slane %v3403, %v3411
        %v3415 = vmul.f32 %v2742, %v3408
        %v3416 = vmul.f32 %v2743, %v3412
        %v3417 = vmul.f32 %v2744, %v3408
        %v3418 = vmul.f32 %v2745, %v3412
        %v3419 = vmul.f32 %v2746, %v3408
        %v3420 = vmul.f32 %v2747, %v3412
        %v3421 = vmul.f32 %v2748, %v3408
        %v3422 = vmul.f32 %v2749, %v3412
        %v3423 = vmul.f32 %v2750, %v3408
        %v3424 = vmul.f32 %v2751, %v3412
        %v3425 = vmul.f32 %v2752, %v3408
        %v3426 = vmul.f32 %v2753, %v3412
        %v3427 = vmul.f32 %v2754, %v3408
        %v3428 = vmul.f32 %v2755, %v3412
        %v3429 = vmul.f32 %v2756, %v3408
        %v3430 = vmul.f32 %v2757, %v3412
        %v3431 = vmul.f32 %v2758, %v3408
        %v3432 = vmul.f32 %v2759, %v3412
        %v3433 = vmul.f32 %v2760, %v3408
        %v3434 = vmul.f32 %v2761, %v3412
        %v3435 = vmul.f32 %v2762, %v3408
        %v3436 = vmul.f32 %v2763, %v3412
        %v3437 = vmul.f32 %v2764, %v3408
        %v3438 = vmul.f32 %v2765, %v3412
        %v3439 = vmul.f32 %v2766, %v3408
        %v3440 = vmul.f32 %v2767, %v3412
        %v3441 = vmul.f32 %v2768, %v3408
        %v3442 = vmul.f32 %v2769, %v3412
        %v3443 = vmul.f32 %v2770, %v3408
        %v3444 = vmul.f32 %v2771, %v3412
        %v3445 = vmul.f32 %v2772, %v3408
        %v3446 = vmul.f32 %v2773, %v3412
        %v3479 = vrot.slane %v3415, 2
        %v3480 = vrot.slane %v3417, 2
        %v3481 = vsel %vm1898, %v3479, %v3480
        %v3482 = vrot.slane %v3416, 2
        %v3483 = vrot.slane %v3418, 2
        %v3484 = vsel %vm1898, %v3482, %v3483
        %v3485 = vrot.slane %v3419, 2
        %v3486 = vrot.slane %v3421, 2
        %v3487 = vsel %vm1898, %v3485, %v3486
        %v3488 = vrot.slane %v3420, 2
        %v3489 = vrot.slane %v3422, 2
        %v3490 = vsel %vm1898, %v3488, %v3489
        %v3491 = vrot.slane %v3423, 2
        %v3492 = vrot.slane %v3425, 2
        %v3493 = vsel %vm1898, %v3491, %v3492
        %v3494 = vrot.slane %v3424, 2
        %v3495 = vrot.slane %v3426, 2
        %v3496 = vsel %vm1898, %v3494, %v3495
        %v3497 = vrot.slane %v3427, 2
        %v3498 = vrot.slane %v3429, 2
        %v3499 = vsel %vm1898, %v3497, %v3498
        %v3500 = vrot.slane %v3428, 2
        %v3501 = vrot.slane %v3430, 2
        %v3502 = vsel %vm1898, %v3500, %v3501
        %v3503 = vrot.slane %v3431, 2
        %v3504 = vrot.slane %v3433, 2
        %v3505 = vsel %vm1898, %v3503, %v3504
        %v3506 = vrot.slane %v3432, 2
        %v3507 = vrot.slane %v3434, 2
        %v3508 = vsel %vm1898, %v3506, %v3507
        %v3509 = vrot.slane %v3435, 2
        %v3510 = vrot.slane %v3437, 2
        %v3511 = vsel %vm1898, %v3509, %v3510
        %v3512 = vrot.slane %v3436, 2
        %v3513 = vrot.slane %v3438, 2
        %v3514 = vsel %vm1898, %v3512, %v3513
        %v3515 = vrot.slane %v3439, 2
        %v3516 = vrot.slane %v3441, 2
        %v3517 = vsel %vm1898, %v3515, %v3516
        %v3518 = vrot.slane %v3440, 2
        %v3519 = vrot.slane %v3442, 2
        %v3520 = vsel %vm1898, %v3518, %v3519
        %v3521 = vrot.slane %v3443, 2
        %v3522 = vrot.slane %v3445, 2
        %v3523 = vsel %vm1898, %v3521, %v3522
        %v3524 = vrot.slane %v3444, 2
        %v3525 = vrot.slane %v3446, 2
        %v3526 = vsel %vm1898, %v3524, %v3525
        %v3543 = vadd.f32 %v3386, %v3481
        %v3544 = vadd.f32 %v3387, %v3484
        %v3545 = vadd.f32 %v3388, %v3487
        %v3546 = vadd.f32 %v3389, %v3490
        %v3547 = vadd.f32 %v3390, %v3493
        %v3548 = vadd.f32 %v3391, %v3496
        %v3549 = vadd.f32 %v3392, %v3499
        %v3550 = vadd.f32 %v3393, %v3502
        %v3551 = vadd.f32 %v3394, %v3505
        %v3552 = vadd.f32 %v3395, %v3508
        %v3553 = vadd.f32 %v3396, %v3511
        %v3554 = vadd.f32 %v3397, %v3514
        %v3555 = vadd.f32 %v3398, %v3517
        %v3556 = vadd.f32 %v3399, %v3520
        %v3557 = vadd.f32 %v3400, %v3523
        %v3558 = vadd.f32 %v3401, %v3526
        %v3559 = vld [vmem:[#allocation3] sm:$0xf0]
        %v3560 = vld [vmem:[#allocation3 + $0x8] sm:$0xf0]
        %v3561 = vld [vmem:[#allocation3 + $0x10] sm:$0xf]
        %v3562 = vld [vmem:[#allocation3 + $0x18] sm:$0xf]
        %v3563 = vld [vmem:[#allocation3 + $0x20] sm:$0xf0]
        %v3564 = vld [vmem:[#allocation3 + $0x28] sm:$0xf0]
        %v3565 = vld [vmem:[#allocation3 + $0x30] sm:$0xf]
        %v3566 = vld [vmem:[#allocation3 + $0x38] sm:$0xf]
        %v3567 = vld [vmem:[#allocation3 + $0x40] sm:$0xf0]
        %v3568 = vld [vmem:[#allocation3 + $0x48] sm:$0xf0]
        %v3569 = vld [vmem:[#allocation3 + $0x50] sm:$0xf]
        %v3570 = vld [vmem:[#allocation3 + $0x58] sm:$0xf]
        %v3571 = vld [vmem:[#allocation3 + $0x60] sm:$0xf0]
        %v3572 = vld [vmem:[#allocation3 + $0x68] sm:$0xf0]
        %v3573 = vld [vmem:[#allocation3 + $0x70] sm:$0xf]
        %v3574 = vld [vmem:[#allocation3 + $0x78] sm:$0xf]
        %v3575 = vld [vmem:[#allocation3 + $0x80] sm:$0xf0]
        %v3576 = vld [vmem:[#allocation3 + $0x88] sm:$0xf0]
        %v3577 = vld [vmem:[#allocation3 + $0x90] sm:$0xf]
        %v3578 = vld [vmem:[#allocation3 + $0x98] sm:$0xf]
        %v3579 = vld [vmem:[#allocation3 + $0xa0] sm:$0xf0]
        %v3580 = vld [vmem:[#allocation3 + $0xa8] sm:$0xf0]
        %v3581 = vld [vmem:[#allocation3 + $0xb0] sm:$0xf]
        %v3582 = vld [vmem:[#allocation3 + $0xb8] sm:$0xf]
        %v3583 = vld [vmem:[#allocation3 + $0xc0] sm:$0xf0]
        %v3584 = vld [vmem:[#allocation3 + $0xc8] sm:$0xf0]
        %v3585 = vld [vmem:[#allocation3 + $0xd0] sm:$0xf]
        %v3586 = vld [vmem:[#allocation3 + $0xd8] sm:$0xf]
        %v3587 = vld [vmem:[#allocation3 + $0xe0] sm:$0xf0]
        %v3588 = vld [vmem:[#allocation3 + $0xe8] sm:$0xf0]
        %v3589 = vld [vmem:[#allocation3 + $0xf0] sm:$0xf]
        %v3590 = vld [vmem:[#allocation3 + $0xf8] sm:$0xf]
        %v3591 = vld [vmem:[#allocation3 + $0x100] sm:$0xf0]
        %v3592 = vld [vmem:[#allocation3 + $0x108] sm:$0xf0]
        %v3593 = vld [vmem:[#allocation3 + $0x110] sm:$0xf]
        %v3594 = vld [vmem:[#allocation3 + $0x118] sm:$0xf]
        %v3595 = vld [vmem:[#allocation3 + $0x120] sm:$0xf0]
        %v3596 = vld [vmem:[#allocation3 + $0x128] sm:$0xf0]
        %v3597 = vld [vmem:[#allocation3 + $0x130] sm:$0xf]
        %v3598 = vld [vmem:[#allocation3 + $0x138] sm:$0xf]
        %v3599 = vld [vmem:[#allocation3 + $0x140] sm:$0xf0]
        %v3600 = vld [vmem:[#allocation3 + $0x148] sm:$0xf0]
        %v3601 = vld [vmem:[#allocation3 + $0x150] sm:$0xf]
        %v3602 = vld [vmem:[#allocation3 + $0x158] sm:$0xf]
        %v3603 = vld [vmem:[#allocation3 + $0x160] sm:$0xf0]
        %v3604 = vld [vmem:[#allocation3 + $0x168] sm:$0xf0]
        %v3605 = vld [vmem:[#allocation3 + $0x170] sm:$0xf]
        %v3606 = vld [vmem:[#allocation3 + $0x178] sm:$0xf]
        %v3607 = vld [vmem:[#allocation3 + $0x180] sm:$0xf0]
        %v3608 = vld [vmem:[#allocation3 + $0x188] sm:$0xf0]
        %v3609 = vld [vmem:[#allocation3 + $0x190] sm:$0xf]
        %v3610 = vld [vmem:[#allocation3 + $0x198] sm:$0xf]
        %v3611 = vld [vmem:[#allocation3 + $0x1a0] sm:$0xf0]
        %v3612 = vld [vmem:[#allocation3 + $0x1a8] sm:$0xf0]
        %v3613 = vld [vmem:[#allocation3 + $0x1b0] sm:$0xf]
        %v3614 = vld [vmem:[#allocation3 + $0x1b8] sm:$0xf]
        %v3615 = vld [vmem:[#allocation3 + $0x1c0] sm:$0xf0]
        %v3616 = vld [vmem:[#allocation3 + $0x1c8] sm:$0xf0]
        %v3617 = vld [vmem:[#allocation3 + $0x1d0] sm:$0xf]
        %v3618 = vld [vmem:[#allocation3 + $0x1d8] sm:$0xf]
        %v3619 = vld [vmem:[#allocation3 + $0x1e0] sm:$0xf0]
        %v3620 = vld [vmem:[#allocation3 + $0x1e8] sm:$0xf0]
        %v3621 = vld [vmem:[#allocation3 + $0x1f0] sm:$0xf]
        %v3622 = vld [vmem:[#allocation3 + $0x1f8] sm:$0xf]
        %s3623 = scalar_lea.vmem %s3, 2
        %v3624 = vld [vmem:[%s3623] ss:$8 sm:$0x3]
        %v3626 = vlaneseq
        %v3627 = vshrl.u32 %v3626, 7
        %v3628 = vsub.s32 0, %v3627
        %v3629 = vrot.slane %v3624, %v3628
        %v3630 = vlaneseq
        %v3631 = vshrl.u32 %v3630, 7
        %v3632 = vsub.s32 1, %v3631
        %v3633 = vrot.slane %v3624, %v3632
        %v3636 = vmul.f32 %v3559, %v3629
        %v3637 = vmul.f32 %v3560, %v3633
        %v3638 = vmul.f32 %v3561, %v3629
        %v3639 = vmul.f32 %v3562, %v3633
        %v3640 = vmul.f32 %v3563, %v3629
        %v3641 = vmul.f32 %v3564, %v3633
        %v3642 = vmul.f32 %v3565, %v3629
        %v3643 = vmul.f32 %v3566, %v3633
        %v3644 = vmul.f32 %v3567, %v3629
        %v3645 = vmul.f32 %v3568, %v3633
        %v3646 = vmul.f32 %v3569, %v3629
        %v3647 = vmul.f32 %v3570, %v3633
        %v3648 = vmul.f32 %v3571, %v3629
        %v3649 = vmul.f32 %v3572, %v3633
        %v3650 = vmul.f32 %v3573, %v3629
        %v3651 = vmul.f32 %v3574, %v3633
        %v3652 = vmul.f32 %v3575, %v3629
        %v3653 = vmul.f32 %v3576, %v3633
        %v3654 = vmul.f32 %v3577, %v3629
        %v3655 = vmul.f32 %v3578, %v3633
        %v3656 = vmul.f32 %v3579, %v3629
        %v3657 = vmul.f32 %v3580, %v3633
        %v3658 = vmul.f32 %v3581, %v3629
        %v3659 = vmul.f32 %v3582, %v3633
        %v3660 = vmul.f32 %v3583, %v3629
        %v3661 = vmul.f32 %v3584, %v3633
        %v3662 = vmul.f32 %v3585, %v3629
        %v3663 = vmul.f32 %v3586, %v3633
        %v3664 = vmul.f32 %v3587, %v3629
        %v3665 = vmul.f32 %v3588, %v3633
        %v3666 = vmul.f32 %v3589, %v3629
        %v3667 = vmul.f32 %v3590, %v3633
        %vm3700 = vcmask 1043456
        %v3701 = vrot.slane %v3636, 4
        %v3702 = vrot.slane %v3638, 4
        %v3703 = vsel %vm3700, %v3701, %v3702
        %v3704 = vrot.slane %v3637, 4
        %v3705 = vrot.slane %v3639, 4
        %v3706 = vsel %vm3700, %v3704, %v3705
        %v3707 = vrot.slane %v3640, 4
        %v3708 = vrot.slane %v3642, 4
        %v3709 = vsel %vm3700, %v3707, %v3708
        %v3710 = vrot.slane %v3641, 4
        %v3711 = vrot.slane %v3643, 4
        %v3712 = vsel %vm3700, %v3710, %v3711
        %v3713 = vrot.slane %v3644, 4
        %v3714 = vrot.slane %v3646, 4
        %v3715 = vsel %vm3700, %v3713, %v3714
        %v3716 = vrot.slane %v3645, 4
        %v3717 = vrot.slane %v3647, 4
        %v3718 = vsel %vm3700, %v3716, %v3717
        %v3719 = vrot.slane %v3648, 4
        %v3720 = vrot.slane %v3650, 4
        %v3721 = vsel %vm3700, %v3719, %v3720
        %v3722 = vrot.slane %v3649, 4
        %v3723 = vrot.slane %v3651, 4
        %v3724 = vsel %vm3700, %v3722, %v3723
        %v3725 = vrot.slane %v3652, 4
        %v3726 = vrot.slane %v3654, 4
        %v3727 = vsel %vm3700, %v3725, %v3726
        %v3728 = vrot.slane %v3653, 4
        %v3729 = vrot.slane %v3655, 4
        %v3730 = vsel %vm3700, %v3728, %v3729
        %v3731 = vrot.slane %v3656, 4
        %v3732 = vrot.slane %v3658, 4
        %v3733 = vsel %vm3700, %v3731, %v3732
        %v3734 = vrot.slane %v3657, 4
        %v3735 = vrot.slane %v3659, 4
        %v3736 = vsel %vm3700, %v3734, %v3735
        %v3737 = vrot.slane %v3660, 4
        %v3738 = vrot.slane %v3662, 4
        %v3739 = vsel %vm3700, %v3737, %v3738
        %v3740 = vrot.slane %v3661, 4
        %v3741 = vrot.slane %v3663, 4
        %v3742 = vsel %vm3700, %v3740, %v3741
        %v3743 = vrot.slane %v3664, 4
        %v3744 = vrot.slane %v3666, 4
        %v3745 = vsel %vm3700, %v3743, %v3744
        %v3746 = vrot.slane %v3665, 4
        %v3747 = vrot.slane %v3667, 4
        %v3748 = vsel %vm3700, %v3746, %v3747
        %v3765 = vadd.f32 %v3543, %v3703
        %v3766 = vadd.f32 %v3544, %v3706
        %v3767 = vadd.f32 %v3545, %v3709
        %v3768 = vadd.f32 %v3546, %v3712
        %v3769 = vadd.f32 %v3547, %v3715
        %v3770 = vadd.f32 %v3548, %v3718
        %v3771 = vadd.f32 %v3549, %v3721
        %v3772 = vadd.f32 %v3550, %v3724
        %v3773 = vadd.f32 %v3551, %v3727
        %v3774 = vadd.f32 %v3552, %v3730
        %v3775 = vadd.f32 %v3553, %v3733
        %v3776 = vadd.f32 %v3554, %v3736
        %v3777 = vadd.f32 %v3555, %v3739
        %v3778 = vadd.f32 %v3556, %v3742
        %v3779 = vadd.f32 %v3557, %v3745
        %v3780 = vadd.f32 %v3558, %v3748
        %s3781 = scalar_lea.vmem %s2530, 2
        %v3782 = vld [vmem:[%s3781] ss:$8 sm:$0x3]
        %v3784 = vlaneseq
        %v3785 = vshrl.u32 %v3784, 7
        %v3786 = vsub.s32 0, %v3785
        %v3787 = vrot.slane %v3782, %v3786
        %v3788 = vlaneseq
        %v3789 = vshrl.u32 %v3788, 7
        %v3790 = vsub.s32 1, %v3789
        %v3791 = vrot.slane %v3782, %v3790
        %v3794 = vmul.f32 %v3567, %v3787
        %v3795 = vmul.f32 %v3568, %v3791
        %v3796 = vmul.f32 %v3569, %v3787
        %v3797 = vmul.f32 %v3570, %v3791
        %v3798 = vmul.f32 %v3571, %v3787
        %v3799 = vmul.f32 %v3572, %v3791
        %v3800 = vmul.f32 %v3573, %v3787
        %v3801 = vmul.f32 %v3574, %v3791
        %v3802 = vmul.f32 %v3575, %v3787
        %v3803 = vmul.f32 %v3576, %v3791
        %v3804 = vmul.f32 %v3577, %v3787
        %v3805 = vmul.f32 %v3578, %v3791
        %v3806 = vmul.f32 %v3579, %v3787
        %v3807 = vmul.f32 %v3580, %v3791
        %v3808 = vmul.f32 %v3581, %v3787
        %v3809 = vmul.f32 %v3582, %v3791
        %v3810 = vmul.f32 %v3583, %v3787
        %v3811 = vmul.f32 %v3584, %v3791
        %v3812 = vmul.f32 %v3585, %v3787
        %v3813 = vmul.f32 %v3586, %v3791
        %v3814 = vmul.f32 %v3587, %v3787
        %v3815 = vmul.f32 %v3588, %v3791
        %v3816 = vmul.f32 %v3589, %v3787
        %v3817 = vmul.f32 %v3590, %v3791
        %v3818 = vmul.f32 %v3591, %v3787
        %v3819 = vmul.f32 %v3592, %v3791
        %v3820 = vmul.f32 %v3593, %v3787
        %v3821 = vmul.f32 %v3594, %v3791
        %v3822 = vmul.f32 %v3595, %v3787
        %v3823 = vmul.f32 %v3596, %v3791
        %v3824 = vmul.f32 %v3597, %v3787
        %v3825 = vmul.f32 %v3598, %v3791
        %v3858 = vrot.slane %v3794, 4
        %v3859 = vrot.slane %v3796, 4
        %v3860 = vsel %vm3700, %v3858, %v3859
        %v3861 = vrot.slane %v3795, 4
        %v3862 = vrot.slane %v3797, 4
        %v3863 = vsel %vm3700, %v3861, %v3862
        %v3864 = vrot.slane %v3798, 4
        %v3865 = vrot.slane %v3800, 4
        %v3866 = vsel %vm3700, %v3864, %v3865
        %v3867 = vrot.slane %v3799, 4
        %v3868 = vrot.slane %v3801, 4
        %v3869 = vsel %vm3700, %v3867, %v3868
        %v3870 = vrot.slane %v3802, 4
        %v3871 = vrot.slane %v3804, 4
        %v3872 = vsel %vm3700, %v3870, %v3871
        %v3873 = vrot.slane %v3803, 4
        %v3874 = vrot.slane %v3805, 4
        %v3875 = vsel %vm3700, %v3873, %v3874
        %v3876 = vrot.slane %v3806, 4
        %v3877 = vrot.slane %v3808, 4
        %v3878 = vsel %vm3700, %v3876, %v3877
        %v3879 = vrot.slane %v3807, 4
        %v3880 = vrot.slane %v3809, 4
        %v3881 = vsel %vm3700, %v3879, %v3880
        %v3882 = vrot.slane %v3810, 4
        %v3883 = vrot.slane %v3812, 4
        %v3884 = vsel %vm3700, %v3882, %v3883
        %v3885 = vrot.slane %v3811, 4
        %v3886 = vrot.slane %v3813, 4
        %v3887 = vsel %vm3700, %v3885, %v3886
        %v3888 = vrot.slane %v3814, 4
        %v3889 = vrot.slane %v3816, 4
        %v3890 = vsel %vm3700, %v3888, %v3889
        %v3891 = vrot.slane %v3815, 4
        %v3892 = vrot.slane %v3817, 4
        %v3893 = vsel %vm3700, %v3891, %v3892
        %v3894 = vrot.slane %v3818, 4
        %v3895 = vrot.slane %v3820, 4
        %v3896 = vsel %vm3700, %v3894, %v3895
        %v3897 = vrot.slane %v3819, 4
        %v3898 = vrot.slane %v3821, 4
        %v3899 = vsel %vm3700, %v3897, %v3898
        %v3900 = vrot.slane %v3822, 4
        %v3901 = vrot.slane %v3824, 4
        %v3902 = vsel %vm3700, %v3900, %v3901
        %v3903 = vrot.slane %v3823, 4
        %v3904 = vrot.slane %v3825, 4
        %v3905 = vsel %vm3700, %v3903, %v3904
        %v3922 = vadd.f32 %v3765, %v3860
        %v3923 = vadd.f32 %v3766, %v3863
        %v3924 = vadd.f32 %v3767, %v3866
        %v3925 = vadd.f32 %v3768, %v3869
        %v3926 = vadd.f32 %v3769, %v3872
        %v3927 = vadd.f32 %v3770, %v3875
        %v3928 = vadd.f32 %v3771, %v3878
        %v3929 = vadd.f32 %v3772, %v3881
        %v3930 = vadd.f32 %v3773, %v3884
        %v3931 = vadd.f32 %v3774, %v3887
        %v3932 = vadd.f32 %v3775, %v3890
        %v3933 = vadd.f32 %v3776, %v3893
        %v3934 = vadd.f32 %v3777, %v3896
        %v3935 = vadd.f32 %v3778, %v3899
        %v3936 = vadd.f32 %v3779, %v3902
        %v3937 = vadd.f32 %v3780, %v3905
        %s3938 = scalar_lea.vmem %s2575, 2
        %v3939 = vld [vmem:[%s3938] ss:$8 sm:$0x3]
        %v3941 = vlaneseq
        %v3942 = vshrl.u32 %v3941, 7
        %v3943 = vsub.s32 0, %v3942
        %v3944 = vrot.slane %v3939, %v3943
        %v3945 = vlaneseq
        %v3946 = vshrl.u32 %v3945, 7
        %v3947 = vsub.s32 1, %v3946
        %v3948 = vrot.slane %v3939, %v3947
        %v3951 = vmul.f32 %v3575, %v3944
        %v3952 = vmul.f32 %v3576, %v3948
        %v3953 = vmul.f32 %v3577, %v3944
        %v3954 = vmul.f32 %v3578, %v3948
        %v3955 = vmul.f32 %v3579, %v3944
        %v3956 = vmul.f32 %v3580, %v3948
        %v3957 = vmul.f32 %v3581, %v3944
        %v3958 = vmul.f32 %v3582, %v3948
        %v3959 = vmul.f32 %v3583, %v3944
        %v3960 = vmul.f32 %v3584, %v3948
        %v3961 = vmul.f32 %v3585, %v3944
        %v3962 = vmul.f32 %v3586, %v3948
        %v3963 = vmul.f32 %v3587, %v3944
        %v3964 = vmul.f32 %v3588, %v3948
        %v3965 = vmul.f32 %v3589, %v3944
        %v3966 = vmul.f32 %v3590, %v3948
        %v3967 = vmul.f32 %v3591, %v3944
        %v3968 = vmul.f32 %v3592, %v3948
        %v3969 = vmul.f32 %v3593, %v3944
        %v3970 = vmul.f32 %v3594, %v3948
        %v3971 = vmul.f32 %v3595, %v3944
        %v3972 = vmul.f32 %v3596, %v3948
        %v3973 = vmul.f32 %v3597, %v3944
        %v3974 = vmul.f32 %v3598, %v3948
        %v3975 = vmul.f32 %v3599, %v3944
        %v3976 = vmul.f32 %v3600, %v3948
        %v3977 = vmul.f32 %v3601, %v3944
        %v3978 = vmul.f32 %v3602, %v3948
        %v3979 = vmul.f32 %v3603, %v3944
        %v3980 = vmul.f32 %v3604, %v3948
        %v3981 = vmul.f32 %v3605, %v3944
        %v3982 = vmul.f32 %v3606, %v3948
        %v4015 = vrot.slane %v3951, 4
        %v4016 = vrot.slane %v3953, 4
        %v4017 = vsel %vm3700, %v4015, %v4016
        %v4018 = vrot.slane %v3952, 4
        %v4019 = vrot.slane %v3954, 4
        %v4020 = vsel %vm3700, %v4018, %v4019
        %v4021 = vrot.slane %v3955, 4
        %v4022 = vrot.slane %v3957, 4
        %v4023 = vsel %vm3700, %v4021, %v4022
        %v4024 = vrot.slane %v3956, 4
        %v4025 = vrot.slane %v3958, 4
        %v4026 = vsel %vm3700, %v4024, %v4025
        %v4027 = vrot.slane %v3959, 4
        %v4028 = vrot.slane %v3961, 4
        %v4029 = vsel %vm3700, %v4027, %v4028
        %v4030 = vrot.slane %v3960, 4
        %v4031 = vrot.slane %v3962, 4
        %v4032 = vsel %vm3700, %v4030, %v4031
        %v4033 = vrot.slane %v3963, 4
        %v4034 = vrot.slane %v3965, 4
        %v4035 = vsel %vm3700, %v4033, %v4034
        %v4036 = vrot.slane %v3964, 4
        %v4037 = vrot.slane %v3966, 4
        %v4038 = vsel %vm3700, %v4036, %v4037
        %v4039 = vrot.slane %v3967, 4
        %v4040 = vrot.slane %v3969, 4
        %v4041 = vsel %vm3700, %v4039, %v4040
        %v4042 = vrot.slane %v3968, 4
        %v4043 = vrot.slane %v3970, 4
        %v4044 = vsel %vm3700, %v4042, %v4043
        %v4045 = vrot.slane %v3971, 4
        %v4046 = vrot.slane %v3973, 4
        %v4047 = vsel %vm3700, %v4045, %v4046
        %v4048 = vrot.slane %v3972, 4
        %v4049 = vrot.slane %v3974, 4
        %v4050 = vsel %vm3700, %v4048, %v4049
        %v4051 = vrot.slane %v3975, 4
        %v4052 = vrot.slane %v3977, 4
        %v4053 = vsel %vm3700, %v4051, %v4052
        %v4054 = vrot.slane %v3976, 4
        %v4055 = vrot.slane %v3978, 4
        %v4056 = vsel %vm3700, %v4054, %v4055
        %v4057 = vrot.slane %v3979, 4
        %v4058 = vrot.slane %v3981, 4
        %v4059 = vsel %vm3700, %v4057, %v4058
        %v4060 = vrot.slane %v3980, 4
        %v4061 = vrot.slane %v3982, 4
        %v4062 = vsel %vm3700, %v4060, %v4061
        %v4079 = vadd.f32 %v3922, %v4017
        %v4080 = vadd.f32 %v3923, %v4020
        %v4081 = vadd.f32 %v3924, %v4023
        %v4082 = vadd.f32 %v3925, %v4026
        %v4083 = vadd.f32 %v3926, %v4029
        %v4084 = vadd.f32 %v3927, %v4032
        %v4085 = vadd.f32 %v3928, %v4035
        %v4086 = vadd.f32 %v3929, %v4038
        %v4087 = vadd.f32 %v3930, %v4041
        %v4088 = vadd.f32 %v3931, %v4044
        %v4089 = vadd.f32 %v3932, %v4047
        %v4090 = vadd.f32 %v3933, %v4050
        %v4091 = vadd.f32 %v3934, %v4053
        %v4092 = vadd.f32 %v3935, %v4056
        %v4093 = vadd.f32 %v3936, %v4059
        %v4094 = vadd.f32 %v3937, %v4062
        %s4095 = scalar_lea.vmem %s2620, 2
        %v4096 = vld [vmem:[%s4095] ss:$8 sm:$0x3]
        %v4098 = vlaneseq
        %v4099 = vshrl.u32 %v4098, 7
        %v4100 = vsub.s32 0, %v4099
        %v4101 = vrot.slane %v4096, %v4100
        %v4102 = vlaneseq
        %v4103 = vshrl.u32 %v4102, 7
        %v4104 = vsub.s32 1, %v4103
        %v4105 = vrot.slane %v4096, %v4104
        %v4108 = vmul.f32 %v3583, %v4101
        %v4109 = vmul.f32 %v3584, %v4105
        %v4110 = vmul.f32 %v3585, %v4101
        %v4111 = vmul.f32 %v3586, %v4105
        %v4112 = vmul.f32 %v3587, %v4101
        %v4113 = vmul.f32 %v3588, %v4105
        %v4114 = vmul.f32 %v3589, %v4101
        %v4115 = vmul.f32 %v3590, %v4105
        %v4116 = vmul.f32 %v3591, %v4101
        %v4117 = vmul.f32 %v3592, %v4105
        %v4118 = vmul.f32 %v3593, %v4101
        %v4119 = vmul.f32 %v3594, %v4105
        %v4120 = vmul.f32 %v3595, %v4101
        %v4121 = vmul.f32 %v3596, %v4105
        %v4122 = vmul.f32 %v3597, %v4101
        %v4123 = vmul.f32 %v3598, %v4105
        %v4124 = vmul.f32 %v3599, %v4101
        %v4125 = vmul.f32 %v3600, %v4105
        %v4126 = vmul.f32 %v3601, %v4101
        %v4127 = vmul.f32 %v3602, %v4105
        %v4128 = vmul.f32 %v3603, %v4101
        %v4129 = vmul.f32 %v3604, %v4105
        %v4130 = vmul.f32 %v3605, %v4101
        %v4131 = vmul.f32 %v3606, %v4105
        %v4132 = vmul.f32 %v3607, %v4101
        %v4133 = vmul.f32 %v3608, %v4105
        %v4134 = vmul.f32 %v3609, %v4101
        %v4135 = vmul.f32 %v3610, %v4105
        %v4136 = vmul.f32 %v3611, %v4101
        %v4137 = vmul.f32 %v3612, %v4105
        %v4138 = vmul.f32 %v3613, %v4101
        %v4139 = vmul.f32 %v3614, %v4105
        %v4172 = vrot.slane %v4108, 4
        %v4173 = vrot.slane %v4110, 4
        %v4174 = vsel %vm3700, %v4172, %v4173
        %v4175 = vrot.slane %v4109, 4
        %v4176 = vrot.slane %v4111, 4
        %v4177 = vsel %vm3700, %v4175, %v4176
        %v4178 = vrot.slane %v4112, 4
        %v4179 = vrot.slane %v4114, 4
        %v4180 = vsel %vm3700, %v4178, %v4179
        %v4181 = vrot.slane %v4113, 4
        %v4182 = vrot.slane %v4115, 4
        %v4183 = vsel %vm3700, %v4181, %v4182
        %v4184 = vrot.slane %v4116, 4
        %v4185 = vrot.slane %v4118, 4
        %v4186 = vsel %vm3700, %v4184, %v4185
        %v4187 = vrot.slane %v4117, 4
        %v4188 = vrot.slane %v4119, 4
        %v4189 = vsel %vm3700, %v4187, %v4188
        %v4190 = vrot.slane %v4120, 4
        %v4191 = vrot.slane %v4122, 4
        %v4192 = vsel %vm3700, %v4190, %v4191
        %v4193 = vrot.slane %v4121, 4
        %v4194 = vrot.slane %v4123, 4
        %v4195 = vsel %vm3700, %v4193, %v4194
        %v4196 = vrot.slane %v4124, 4
        %v4197 = vrot.slane %v4126, 4
        %v4198 = vsel %vm3700, %v4196, %v4197
        %v4199 = vrot.slane %v4125, 4
        %v4200 = vrot.slane %v4127, 4
        %v4201 = vsel %vm3700, %v4199, %v4200
        %v4202 = vrot.slane %v4128, 4
        %v4203 = vrot.slane %v4130, 4
        %v4204 = vsel %vm3700, %v4202, %v4203
        %v4205 = vrot.slane %v4129, 4
        %v4206 = vrot.slane %v4131, 4
        %v4207 = vsel %vm3700, %v4205, %v4206
        %v4208 = vrot.slane %v4132, 4
        %v4209 = vrot.slane %v4134, 4
        %v4210 = vsel %vm3700, %v4208, %v4209
        %v4211 = vrot.slane %v4133, 4
        %v4212 = vrot.slane %v4135, 4
        %v4213 = vsel %vm3700, %v4211, %v4212
        %v4214 = vrot.slane %v4136, 4
        %v4215 = vrot.slane %v4138, 4
        %v4216 = vsel %vm3700, %v4214, %v4215
        %v4217 = vrot.slane %v4137, 4
        %v4218 = vrot.slane %v4139, 4
        %v4219 = vsel %vm3700, %v4217, %v4218
        %v4236 = vadd.f32 %v4079, %v4174
        %v4237 = vadd.f32 %v4080, %v4177
        %v4238 = vadd.f32 %v4081, %v4180
        %v4239 = vadd.f32 %v4082, %v4183
        %v4240 = vadd.f32 %v4083, %v4186
        %v4241 = vadd.f32 %v4084, %v4189
        %v4242 = vadd.f32 %v4085, %v4192
        %v4243 = vadd.f32 %v4086, %v4195
        %v4244 = vadd.f32 %v4087, %v4198
        %v4245 = vadd.f32 %v4088, %v4201
        %v4246 = vadd.f32 %v4089, %v4204
        %v4247 = vadd.f32 %v4090, %v4207
        %v4248 = vadd.f32 %v4091, %v4210
        %v4249 = vadd.f32 %v4092, %v4213
        %v4250 = vadd.f32 %v4093, %v4216
        %v4251 = vadd.f32 %v4094, %v4219
        %s4252 = scalar_lea.vmem %s2665, 2
        %v4253 = vld [vmem:[%s4252] ss:$8 sm:$0x3]
        %v4255 = vlaneseq
        %v4256 = vshrl.u32 %v4255, 7
        %v4257 = vsub.s32 0, %v4256
        %v4258 = vrot.slane %v4253, %v4257
        %v4259 = vlaneseq
        %v4260 = vshrl.u32 %v4259, 7
        %v4261 = vsub.s32 1, %v4260
        %v4262 = vrot.slane %v4253, %v4261
        %v4265 = vmul.f32 %v3591, %v4258
        %v4266 = vmul.f32 %v3592, %v4262
        %v4267 = vmul.f32 %v3593, %v4258
        %v4268 = vmul.f32 %v3594, %v4262
        %v4269 = vmul.f32 %v3595, %v4258
        %v4270 = vmul.f32 %v3596, %v4262
        %v4271 = vmul.f32 %v3597, %v4258
        %v4272 = vmul.f32 %v3598, %v4262
        %v4273 = vmul.f32 %v3599, %v4258
        %v4274 = vmul.f32 %v3600, %v4262
        %v4275 = vmul.f32 %v3601, %v4258
        %v4276 = vmul.f32 %v3602, %v4262
        %v4277 = vmul.f32 %v3603, %v4258
        %v4278 = vmul.f32 %v3604, %v4262
        %v4279 = vmul.f32 %v3605, %v4258
        %v4280 = vmul.f32 %v3606, %v4262
        %v4281 = vmul.f32 %v3607, %v4258
        %v4282 = vmul.f32 %v3608, %v4262
        %v4283 = vmul.f32 %v3609, %v4258
        %v4284 = vmul.f32 %v3610, %v4262
        %v4285 = vmul.f32 %v3611, %v4258
        %v4286 = vmul.f32 %v3612, %v4262
        %v4287 = vmul.f32 %v3613, %v4258
        %v4288 = vmul.f32 %v3614, %v4262
        %v4289 = vmul.f32 %v3615, %v4258
        %v4290 = vmul.f32 %v3616, %v4262
        %v4291 = vmul.f32 %v3617, %v4258
        %v4292 = vmul.f32 %v3618, %v4262
        %v4293 = vmul.f32 %v3619, %v4258
        %v4294 = vmul.f32 %v3620, %v4262
        %v4295 = vmul.f32 %v3621, %v4258
        %v4296 = vmul.f32 %v3622, %v4262
        %v4329 = vrot.slane %v4265, 4
        %v4330 = vrot.slane %v4267, 4
        %v4331 = vsel %vm3700, %v4329, %v4330
        %v4332 = vrot.slane %v4266, 4
        %v4333 = vrot.slane %v4268, 4
        %v4334 = vsel %vm3700, %v4332, %v4333
        %v4335 = vrot.slane %v4269, 4
        %v4336 = vrot.slane %v4271, 4
        %v4337 = vsel %vm3700, %v4335, %v4336
        %v4338 = vrot.slane %v4270, 4
        %v4339 = vrot.slane %v4272, 4
        %v4340 = vsel %vm3700, %v4338, %v4339
        %v4341 = vrot.slane %v4273, 4
        %v4342 = vrot.slane %v4275, 4
        %v4343 = vsel %vm3700, %v4341, %v4342
        %v4344 = vrot.slane %v4274, 4
        %v4345 = vrot.slane %v4276, 4
        %v4346 = vsel %vm3700, %v4344, %v4345
        %v4347 = vrot.slane %v4277, 4
        %v4348 = vrot.slane %v4279, 4
        %v4349 = vsel %vm3700, %v4347, %v4348
        %v4350 = vrot.slane %v4278, 4
        %v4351 = vrot.slane %v4280, 4
        %v4352 = vsel %vm3700, %v4350, %v4351
        %v4353 = vrot.slane %v4281, 4
        %v4354 = vrot.slane %v4283, 4
        %v4355 = vsel %vm3700, %v4353, %v4354
        %v4356 = vrot.slane %v4282, 4
        %v4357 = vrot.slane %v4284, 4
        %v4358 = vsel %vm3700, %v4356, %v4357
        %v4359 = vrot.slane %v4285, 4
        %v4360 = vrot.slane %v4287, 4
        %v4361 = vsel %vm3700, %v4359, %v4360
        %v4362 = vrot.slane %v4286, 4
        %v4363 = vrot.slane %v4288, 4
        %v4364 = vsel %vm3700, %v4362, %v4363
        %v4365 = vrot.slane %v4289, 4
        %v4366 = vrot.slane %v4291, 4
        %v4367 = vsel %vm3700, %v4365, %v4366
        %v4368 = vrot.slane %v4290, 4
        %v4369 = vrot.slane %v4292, 4
        %v4370 = vsel %vm3700, %v4368, %v4369
        %v4371 = vrot.slane %v4293, 4
        %v4372 = vrot.slane %v4295, 4
        %v4373 = vsel %vm3700, %v4371, %v4372
        %v4374 = vrot.slane %v4294, 4
        %v4375 = vrot.slane %v4296, 4
        %v4376 = vsel %vm3700, %v4374, %v4375
        %v4393 = vadd.f32 %v4236, %v4331
        %v4394 = vadd.f32 %v4237, %v4334
        %v4395 = vadd.f32 %v4238, %v4337
        %v4396 = vadd.f32 %v4239, %v4340
        %v4397 = vadd.f32 %v4240, %v4343
        %v4398 = vadd.f32 %v4241, %v4346
        %v4399 = vadd.f32 %v4242, %v4349
        %v4400 = vadd.f32 %v4243, %v4352
        %v4401 = vadd.f32 %v4244, %v4355
        %v4402 = vadd.f32 %v4245, %v4358
        %v4403 = vadd.f32 %v4246, %v4361
        %v4404 = vadd.f32 %v4247, %v4364
        %v4405 = vadd.f32 %v4248, %v4367
        %v4406 = vadd.f32 %v4249, %v4370
        %v4407 = vadd.f32 %v4250, %v4373
        %v4408 = vadd.f32 %v4251, %v4376
        %v4409 = vld [vmem:[#allocation3] sm:$0xc0]
        %v4410 = vld [vmem:[#allocation3 + $0x8] sm:$0xc0]
        %v4411 = vld [vmem:[#allocation3 + $0x10] sm:$0x3f]
        %v4412 = vld [vmem:[#allocation3 + $0x18] sm:$0x3f]
        %v4413 = vld [vmem:[#allocation3 + $0x20] sm:$0xc0]
        %v4414 = vld [vmem:[#allocation3 + $0x28] sm:$0xc0]
        %v4415 = vld [vmem:[#allocation3 + $0x30] sm:$0x3f]
        %v4416 = vld [vmem:[#allocation3 + $0x38] sm:$0x3f]
        %v4417 = vld [vmem:[#allocation3 + $0x40] sm:$0xc0]
        %v4418 = vld [vmem:[#allocation3 + $0x48] sm:$0xc0]
        %v4419 = vld [vmem:[#allocation3 + $0x50] sm:$0x3f]
        %v4420 = vld [vmem:[#allocation3 + $0x58] sm:$0x3f]
        %v4421 = vld [vmem:[#allocation3 + $0x60] sm:$0xc0]
        %v4422 = vld [vmem:[#allocation3 + $0x68] sm:$0xc0]
        %v4423 = vld [vmem:[#allocation3 + $0x70] sm:$0x3f]
        %v4424 = vld [vmem:[#allocation3 + $0x78] sm:$0x3f]
        %v4425 = vld [vmem:[#allocation3 + $0x80] sm:$0xc0]
        %v4426 = vld [vmem:[#allocation3 + $0x88] sm:$0xc0]
        %v4427 = vld [vmem:[#allocation3 + $0x90] sm:$0x3f]
        %v4428 = vld [vmem:[#allocation3 + $0x98] sm:$0x3f]
        %v4429 = vld [vmem:[#allocation3 + $0xa0] sm:$0xc0]
        %v4430 = vld [vmem:[#allocation3 + $0xa8] sm:$0xc0]
        %v4431 = vld [vmem:[#allocation3 + $0xb0] sm:$0x3f]
        %v4432 = vld [vmem:[#allocation3 + $0xb8] sm:$0x3f]
        %v4433 = vld [vmem:[#allocation3 + $0xc0] sm:$0xc0]
        %v4434 = vld [vmem:[#allocation3 + $0xc8] sm:$0xc0]
        %v4435 = vld [vmem:[#allocation3 + $0xd0] sm:$0x3f]
        %v4436 = vld [vmem:[#allocation3 + $0xd8] sm:$0x3f]
        %v4437 = vld [vmem:[#allocation3 + $0xe0] sm:$0xc0]
        %v4438 = vld [vmem:[#allocation3 + $0xe8] sm:$0xc0]
        %v4439 = vld [vmem:[#allocation3 + $0xf0] sm:$0x3f]
        %v4440 = vld [vmem:[#allocation3 + $0xf8] sm:$0x3f]
        %v4441 = vld [vmem:[#allocation3 + $0x100] sm:$0xc0]
        %v4442 = vld [vmem:[#allocation3 + $0x108] sm:$0xc0]
        %v4443 = vld [vmem:[#allocation3 + $0x110] sm:$0x3f]
        %v4444 = vld [vmem:[#allocation3 + $0x118] sm:$0x3f]
        %v4445 = vld [vmem:[#allocation3 + $0x120] sm:$0xc0]
        %v4446 = vld [vmem:[#allocation3 + $0x128] sm:$0xc0]
        %v4447 = vld [vmem:[#allocation3 + $0x130] sm:$0x3f]
        %v4448 = vld [vmem:[#allocation3 + $0x138] sm:$0x3f]
        %v4449 = vld [vmem:[#allocation3 + $0x140] sm:$0xc0]
        %v4450 = vld [vmem:[#allocation3 + $0x148] sm:$0xc0]
        %v4451 = vld [vmem:[#allocation3 + $0x150] sm:$0x3f]
        %v4452 = vld [vmem:[#allocation3 + $0x158] sm:$0x3f]
        %v4453 = vld [vmem:[#allocation3 + $0x160] sm:$0xc0]
        %v4454 = vld [vmem:[#allocation3 + $0x168] sm:$0xc0]
        %v4455 = vld [vmem:[#allocation3 + $0x170] sm:$0x3f]
        %v4456 = vld [vmem:[#allocation3 + $0x178] sm:$0x3f]
        %v4457 = vld [vmem:[#allocation3 + $0x180] sm:$0xc0]
        %v4458 = vld [vmem:[#allocation3 + $0x188] sm:$0xc0]
        %v4459 = vld [vmem:[#allocation3 + $0x190] sm:$0x3f]
        %v4460 = vld [vmem:[#allocation3 + $0x198] sm:$0x3f]
        %v4461 = vld [vmem:[#allocation3 + $0x1a0] sm:$0xc0]
        %v4462 = vld [vmem:[#allocation3 + $0x1a8] sm:$0xc0]
        %v4463 = vld [vmem:[#allocation3 + $0x1b0] sm:$0x3f]
        %v4464 = vld [vmem:[#allocation3 + $0x1b8] sm:$0x3f]
        %v4465 = vld [vmem:[#allocation3 + $0x1c0] sm:$0xc0]
        %v4466 = vld [vmem:[#allocation3 + $0x1c8] sm:$0xc0]
        %v4467 = vld [vmem:[#allocation3 + $0x1d0] sm:$0x3f]
        %v4468 = vld [vmem:[#allocation3 + $0x1d8] sm:$0x3f]
        %v4469 = vld [vmem:[#allocation3 + $0x1e0] sm:$0xc0]
        %v4470 = vld [vmem:[#allocation3 + $0x1e8] sm:$0xc0]
        %v4471 = vld [vmem:[#allocation3 + $0x1f0] sm:$0x3f]
        %v4472 = vld [vmem:[#allocation3 + $0x1f8] sm:$0x3f]
        %s4473 = scalar_lea.vmem %s3, 3
        %v4474 = vld [vmem:[%s4473] ss:$8 sm:$0x3]
        %v4476 = vlaneseq
        %v4477 = vshrl.u32 %v4476, 7
        %v4478 = vsub.s32 0, %v4477
        %v4479 = vrot.slane %v4474, %v4478
        %v4480 = vlaneseq
        %v4481 = vshrl.u32 %v4480, 7
        %v4482 = vsub.s32 1, %v4481
        %v4483 = vrot.slane %v4474, %v4482
        %v4486 = vmul.f32 %v4409, %v4479
        %v4487 = vmul.f32 %v4410, %v4483
        %v4488 = vmul.f32 %v4411, %v4479
        %v4489 = vmul.f32 %v4412, %v4483
        %v4490 = vmul.f32 %v4413, %v4479
        %v4491 = vmul.f32 %v4414, %v4483
        %v4492 = vmul.f32 %v4415, %v4479
        %v4493 = vmul.f32 %v4416, %v4483
        %v4494 = vmul.f32 %v4417, %v4479
        %v4495 = vmul.f32 %v4418, %v4483
        %v4496 = vmul.f32 %v4419, %v4479
        %v4497 = vmul.f32 %v4420, %v4483
        %v4498 = vmul.f32 %v4421, %v4479
        %v4499 = vmul.f32 %v4422, %v4483
        %v4500 = vmul.f32 %v4423, %v4479
        %v4501 = vmul.f32 %v4424, %v4483
        %v4502 = vmul.f32 %v4425, %v4479
        %v4503 = vmul.f32 %v4426, %v4483
        %v4504 = vmul.f32 %v4427, %v4479
        %v4505 = vmul.f32 %v4428, %v4483
        %v4506 = vmul.f32 %v4429, %v4479
        %v4507 = vmul.f32 %v4430, %v4483
        %v4508 = vmul.f32 %v4431, %v4479
        %v4509 = vmul.f32 %v4432, %v4483
        %v4510 = vmul.f32 %v4433, %v4479
        %v4511 = vmul.f32 %v4434, %v4483
        %v4512 = vmul.f32 %v4435, %v4479
        %v4513 = vmul.f32 %v4436, %v4483
        %v4514 = vmul.f32 %v4437, %v4479
        %v4515 = vmul.f32 %v4438, %v4483
        %v4516 = vmul.f32 %v4439, %v4479
        %v4517 = vmul.f32 %v4440, %v4483
        %vm4550 = vcmask 1041408
        %v4551 = vrot.slane %v4486, 6
        %v4552 = vrot.slane %v4488, 6
        %v4553 = vsel %vm4550, %v4551, %v4552
        %v4554 = vrot.slane %v4487, 6
        %v4555 = vrot.slane %v4489, 6
        %v4556 = vsel %vm4550, %v4554, %v4555
        %v4557 = vrot.slane %v4490, 6
        %v4558 = vrot.slane %v4492, 6
        %v4559 = vsel %vm4550, %v4557, %v4558
        %v4560 = vrot.slane %v4491, 6
        %v4561 = vrot.slane %v4493, 6
        %v4562 = vsel %vm4550, %v4560, %v4561
        %v4563 = vrot.slane %v4494, 6
        %v4564 = vrot.slane %v4496, 6
        %v4565 = vsel %vm4550, %v4563, %v4564
        %v4566 = vrot.slane %v4495, 6
        %v4567 = vrot.slane %v4497, 6
        %v4568 = vsel %vm4550, %v4566, %v4567
        %v4569 = vrot.slane %v4498, 6
        %v4570 = vrot.slane %v4500, 6
        %v4571 = vsel %vm4550, %v4569, %v4570
        %v4572 = vrot.slane %v4499, 6
        %v4573 = vrot.slane %v4501, 6
        %v4574 = vsel %vm4550, %v4572, %v4573
        %v4575 = vrot.slane %v4502, 6
        %v4576 = vrot.slane %v4504, 6
        %v4577 = vsel %vm4550, %v4575, %v4576
        %v4578 = vrot.slane %v4503, 6
        %v4579 = vrot.slane %v4505, 6
        %v4580 = vsel %vm4550, %v4578, %v4579
        %v4581 = vrot.slane %v4506, 6
        %v4582 = vrot.slane %v4508, 6
        %v4583 = vsel %vm4550, %v4581, %v4582
        %v4584 = vrot.slane %v4507, 6
        %v4585 = vrot.slane %v4509, 6
        %v4586 = vsel %vm4550, %v4584, %v4585
        %v4587 = vrot.slane %v4510, 6
        %v4588 = vrot.slane %v4512, 6
        %v4589 = vsel %vm4550, %v4587, %v4588
        %v4590 = vrot.slane %v4511, 6
        %v4591 = vrot.slane %v4513, 6
        %v4592 = vsel %vm4550, %v4590, %v4591
        %v4593 = vrot.slane %v4514, 6
        %v4594 = vrot.slane %v4516, 6
        %v4595 = vsel %vm4550, %v4593, %v4594
        %v4596 = vrot.slane %v4515, 6
        %v4597 = vrot.slane %v4517, 6
        %v4598 = vsel %vm4550, %v4596, %v4597
        %v4615 = vadd.f32 %v4393, %v4553
        %v4616 = vadd.f32 %v4394, %v4556
        %v4617 = vadd.f32 %v4395, %v4559
        %v4618 = vadd.f32 %v4396, %v4562
        %v4619 = vadd.f32 %v4397, %v4565
        %v4620 = vadd.f32 %v4398, %v4568
        %v4621 = vadd.f32 %v4399, %v4571
        %v4622 = vadd.f32 %v4400, %v4574
        %v4623 = vadd.f32 %v4401, %v4577
        %v4624 = vadd.f32 %v4402, %v4580
        %v4625 = vadd.f32 %v4403, %v4583
        %v4626 = vadd.f32 %v4404, %v4586
        %v4627 = vadd.f32 %v4405, %v4589
        %v4628 = vadd.f32 %v4406, %v4592
        %v4629 = vadd.f32 %v4407, %v4595
        %v4630 = vadd.f32 %v4408, %v4598
        %s4631 = scalar_lea.vmem %s2530, 3
        %v4632 = vld [vmem:[%s4631] ss:$8 sm:$0x3]
        %v4634 = vlaneseq
        %v4635 = vshrl.u32 %v4634, 7
        %v4636 = vsub.s32 0, %v4635
        %v4637 = vrot.slane %v4632, %v4636
        %v4638 = vlaneseq
        %v4639 = vshrl.u32 %v4638, 7
        %v4640 = vsub.s32 1, %v4639
        %v4641 = vrot.slane %v4632, %v4640
        %v4644 = vmul.f32 %v4417, %v4637
        %v4645 = vmul.f32 %v4418, %v4641
        %v4646 = vmul.f32 %v4419, %v4637
        %v4647 = vmul.f32 %v4420, %v4641
        %v4648 = vmul.f32 %v4421, %v4637
        %v4649 = vmul.f32 %v4422, %v4641
        %v4650 = vmul.f32 %v4423, %v4637
        %v4651 = vmul.f32 %v4424, %v4641
        %v4652 = vmul.f32 %v4425, %v4637
        %v4653 = vmul.f32 %v4426, %v4641
        %v4654 = vmul.f32 %v4427, %v4637
        %v4655 = vmul.f32 %v4428, %v4641
        %v4656 = vmul.f32 %v4429, %v4637
        %v4657 = vmul.f32 %v4430, %v4641
        %v4658 = vmul.f32 %v4431, %v4637
        %v4659 = vmul.f32 %v4432, %v4641
        %v4660 = vmul.f32 %v4433, %v4637
        %v4661 = vmul.f32 %v4434, %v4641
        %v4662 = vmul.f32 %v4435, %v4637
        %v4663 = vmul.f32 %v4436, %v4641
        %v4664 = vmul.f32 %v4437, %v4637
        %v4665 = vmul.f32 %v4438, %v4641
        %v4666 = vmul.f32 %v4439, %v4637
        %v4667 = vmul.f32 %v4440, %v4641
        %v4668 = vmul.f32 %v4441, %v4637
        %v4669 = vmul.f32 %v4442, %v4641
        %v4670 = vmul.f32 %v4443, %v4637
        %v4671 = vmul.f32 %v4444, %v4641
        %v4672 = vmul.f32 %v4445, %v4637
        %v4673 = vmul.f32 %v4446, %v4641
        %v4674 = vmul.f32 %v4447, %v4637
        %v4675 = vmul.f32 %v4448, %v4641
        %v4708 = vrot.slane %v4644, 6
        %v4709 = vrot.slane %v4646, 6
        %v4710 = vsel %vm4550, %v4708, %v4709
        %v4711 = vrot.slane %v4645, 6
        %v4712 = vrot.slane %v4647, 6
        %v4713 = vsel %vm4550, %v4711, %v4712
        %v4714 = vrot.slane %v4648, 6
        %v4715 = vrot.slane %v4650, 6
        %v4716 = vsel %vm4550, %v4714, %v4715
        %v4717 = vrot.slane %v4649, 6
        %v4718 = vrot.slane %v4651, 6
        %v4719 = vsel %vm4550, %v4717, %v4718
        %v4720 = vrot.slane %v4652, 6
        %v4721 = vrot.slane %v4654, 6
        %v4722 = vsel %vm4550, %v4720, %v4721
        %v4723 = vrot.slane %v4653, 6
        %v4724 = vrot.slane %v4655, 6
        %v4725 = vsel %vm4550, %v4723, %v4724
        %v4726 = vrot.slane %v4656, 6
        %v4727 = vrot.slane %v4658, 6
        %v4728 = vsel %vm4550, %v4726, %v4727
        %v4729 = vrot.slane %v4657, 6
        %v4730 = vrot.slane %v4659, 6
        %v4731 = vsel %vm4550, %v4729, %v4730
        %v4732 = vrot.slane %v4660, 6
        %v4733 = vrot.slane %v4662, 6
        %v4734 = vsel %vm4550, %v4732, %v4733
        %v4735 = vrot.slane %v4661, 6
        %v4736 = vrot.slane %v4663, 6
        %v4737 = vsel %vm4550, %v4735, %v4736
        %v4738 = vrot.slane %v4664, 6
        %v4739 = vrot.slane %v4666, 6
        %v4740 = vsel %vm4550, %v4738, %v4739
        %v4741 = vrot.slane %v4665, 6
        %v4742 = vrot.slane %v4667, 6
        %v4743 = vsel %vm4550, %v4741, %v4742
        %v4744 = vrot.slane %v4668, 6
        %v4745 = vrot.slane %v4670, 6
        %v4746 = vsel %vm4550, %v4744, %v4745
        %v4747 = vrot.slane %v4669, 6
        %v4748 = vrot.slane %v4671, 6
        %v4749 = vsel %vm4550, %v4747, %v4748
        %v4750 = vrot.slane %v4672, 6
        %v4751 = vrot.slane %v4674, 6
        %v4752 = vsel %vm4550, %v4750, %v4751
        %v4753 = vrot.slane %v4673, 6
        %v4754 = vrot.slane %v4675, 6
        %v4755 = vsel %vm4550, %v4753, %v4754
        %v4772 = vadd.f32 %v4615, %v4710
        %v4773 = vadd.f32 %v4616, %v4713
        %v4774 = vadd.f32 %v4617, %v4716
        %v4775 = vadd.f32 %v4618, %v4719
        %v4776 = vadd.f32 %v4619, %v4722
        %v4777 = vadd.f32 %v4620, %v4725
        %v4778 = vadd.f32 %v4621, %v4728
        %v4779 = vadd.f32 %v4622, %v4731
        %v4780 = vadd.f32 %v4623, %v4734
        %v4781 = vadd.f32 %v4624, %v4737
        %v4782 = vadd.f32 %v4625, %v4740
        %v4783 = vadd.f32 %v4626, %v4743
        %v4784 = vadd.f32 %v4627, %v4746
        %v4785 = vadd.f32 %v4628, %v4749
        %v4786 = vadd.f32 %v4629, %v4752
        %v4787 = vadd.f32 %v4630, %v4755
        %s4788 = scalar_lea.vmem %s2575, 3
        %v4789 = vld [vmem:[%s4788] ss:$8 sm:$0x3]
        %v4791 = vlaneseq
        %v4792 = vshrl.u32 %v4791, 7
        %v4793 = vsub.s32 0, %v4792
        %v4794 = vrot.slane %v4789, %v4793
        %v4795 = vlaneseq
        %v4796 = vshrl.u32 %v4795, 7
        %v4797 = vsub.s32 1, %v4796
        %v4798 = vrot.slane %v4789, %v4797
        %v4801 = vmul.f32 %v4425, %v4794
        %v4802 = vmul.f32 %v4426, %v4798
        %v4803 = vmul.f32 %v4427, %v4794
        %v4804 = vmul.f32 %v4428, %v4798
        %v4805 = vmul.f32 %v4429, %v4794
        %v4806 = vmul.f32 %v4430, %v4798
        %v4807 = vmul.f32 %v4431, %v4794
        %v4808 = vmul.f32 %v4432, %v4798
        %v4809 = vmul.f32 %v4433, %v4794
        %v4810 = vmul.f32 %v4434, %v4798
        %v4811 = vmul.f32 %v4435, %v4794
        %v4812 = vmul.f32 %v4436, %v4798
        %v4813 = vmul.f32 %v4437, %v4794
        %v4814 = vmul.f32 %v4438, %v4798
        %v4815 = vmul.f32 %v4439, %v4794
        %v4816 = vmul.f32 %v4440, %v4798
        %v4817 = vmul.f32 %v4441, %v4794
        %v4818 = vmul.f32 %v4442, %v4798
        %v4819 = vmul.f32 %v4443, %v4794
        %v4820 = vmul.f32 %v4444, %v4798
        %v4821 = vmul.f32 %v4445, %v4794
        %v4822 = vmul.f32 %v4446, %v4798
        %v4823 = vmul.f32 %v4447, %v4794
        %v4824 = vmul.f32 %v4448, %v4798
        %v4825 = vmul.f32 %v4449, %v4794
        %v4826 = vmul.f32 %v4450, %v4798
        %v4827 = vmul.f32 %v4451, %v4794
        %v4828 = vmul.f32 %v4452, %v4798
        %v4829 = vmul.f32 %v4453, %v4794
        %v4830 = vmul.f32 %v4454, %v4798
        %v4831 = vmul.f32 %v4455, %v4794
        %v4832 = vmul.f32 %v4456, %v4798
        %v4865 = vrot.slane %v4801, 6
        %v4866 = vrot.slane %v4803, 6
        %v4867 = vsel %vm4550, %v4865, %v4866
        %v4868 = vrot.slane %v4802, 6
        %v4869 = vrot.slane %v4804, 6
        %v4870 = vsel %vm4550, %v4868, %v4869
        %v4871 = vrot.slane %v4805, 6
        %v4872 = vrot.slane %v4807, 6
        %v4873 = vsel %vm4550, %v4871, %v4872
        %v4874 = vrot.slane %v4806, 6
        %v4875 = vrot.slane %v4808, 6
        %v4876 = vsel %vm4550, %v4874, %v4875
        %v4877 = vrot.slane %v4809, 6
        %v4878 = vrot.slane %v4811, 6
        %v4879 = vsel %vm4550, %v4877, %v4878
        %v4880 = vrot.slane %v4810, 6
        %v4881 = vrot.slane %v4812, 6
        %v4882 = vsel %vm4550, %v4880, %v4881
        %v4883 = vrot.slane %v4813, 6
        %v4884 = vrot.slane %v4815, 6
        %v4885 = vsel %vm4550, %v4883, %v4884
        %v4886 = vrot.slane %v4814, 6
        %v4887 = vrot.slane %v4816, 6
        %v4888 = vsel %vm4550, %v4886, %v4887
        %v4889 = vrot.slane %v4817, 6
        %v4890 = vrot.slane %v4819, 6
        %v4891 = vsel %vm4550, %v4889, %v4890
        %v4892 = vrot.slane %v4818, 6
        %v4893 = vrot.slane %v4820, 6
        %v4894 = vsel %vm4550, %v4892, %v4893
        %v4895 = vrot.slane %v4821, 6
        %v4896 = vrot.slane %v4823, 6
        %v4897 = vsel %vm4550, %v4895, %v4896
        %v4898 = vrot.slane %v4822, 6
        %v4899 = vrot.slane %v4824, 6
        %v4900 = vsel %vm4550, %v4898, %v4899
        %v4901 = vrot.slane %v4825, 6
        %v4902 = vrot.slane %v4827, 6
        %v4903 = vsel %vm4550, %v4901, %v4902
        %v4904 = vrot.slane %v4826, 6
        %v4905 = vrot.slane %v4828, 6
        %v4906 = vsel %vm4550, %v4904, %v4905
        %v4907 = vrot.slane %v4829, 6
        %v4908 = vrot.slane %v4831, 6
        %v4909 = vsel %vm4550, %v4907, %v4908
        %v4910 = vrot.slane %v4830, 6
        %v4911 = vrot.slane %v4832, 6
        %v4912 = vsel %vm4550, %v4910, %v4911
        %v4929 = vadd.f32 %v4772, %v4867
        %v4930 = vadd.f32 %v4773, %v4870
        %v4931 = vadd.f32 %v4774, %v4873
        %v4932 = vadd.f32 %v4775, %v4876
        %v4933 = vadd.f32 %v4776, %v4879
        %v4934 = vadd.f32 %v4777, %v4882
        %v4935 = vadd.f32 %v4778, %v4885
        %v4936 = vadd.f32 %v4779, %v4888
        %v4937 = vadd.f32 %v4780, %v4891
        %v4938 = vadd.f32 %v4781, %v4894
        %v4939 = vadd.f32 %v4782, %v4897
        %v4940 = vadd.f32 %v4783, %v4900
        %v4941 = vadd.f32 %v4784, %v4903
        %v4942 = vadd.f32 %v4785, %v4906
        %v4943 = vadd.f32 %v4786, %v4909
        %v4944 = vadd.f32 %v4787, %v4912
        %s4945 = scalar_lea.vmem %s2620, 3
        %v4946 = vld [vmem:[%s4945] ss:$8 sm:$0x3]
        %v4948 = vlaneseq
        %v4949 = vshrl.u32 %v4948, 7
        %v4950 = vsub.s32 0, %v4949
        %v4951 = vrot.slane %v4946, %v4950
        %v4952 = vlaneseq
        %v4953 = vshrl.u32 %v4952, 7
        %v4954 = vsub.s32 1, %v4953
        %v4955 = vrot.slane %v4946, %v4954
        %v4958 = vmul.f32 %v4433, %v4951
        %v4959 = vmul.f32 %v4434, %v4955
        %v4960 = vmul.f32 %v4435, %v4951
        %v4961 = vmul.f32 %v4436, %v4955
        %v4962 = vmul.f32 %v4437, %v4951
        %v4963 = vmul.f32 %v4438, %v4955
        %v4964 = vmul.f32 %v4439, %v4951
        %v4965 = vmul.f32 %v4440, %v4955
        %v4966 = vmul.f32 %v4441, %v4951
        %v4967 = vmul.f32 %v4442, %v4955
        %v4968 = vmul.f32 %v4443, %v4951
        %v4969 = vmul.f32 %v4444, %v4955
        %v4970 = vmul.f32 %v4445, %v4951
        %v4971 = vmul.f32 %v4446, %v4955
        %v4972 = vmul.f32 %v4447, %v4951
        %v4973 = vmul.f32 %v4448, %v4955
        %v4974 = vmul.f32 %v4449, %v4951
        %v4975 = vmul.f32 %v4450, %v4955
        %v4976 = vmul.f32 %v4451, %v4951
        %v4977 = vmul.f32 %v4452, %v4955
        %v4978 = vmul.f32 %v4453, %v4951
        %v4979 = vmul.f32 %v4454, %v4955
        %v4980 = vmul.f32 %v4455, %v4951
        %v4981 = vmul.f32 %v4456, %v4955
        %v4982 = vmul.f32 %v4457, %v4951
        %v4983 = vmul.f32 %v4458, %v4955
        %v4984 = vmul.f32 %v4459, %v4951
        %v4985 = vmul.f32 %v4460, %v4955
        %v4986 = vmul.f32 %v4461, %v4951
        %v4987 = vmul.f32 %v4462, %v4955
        %v4988 = vmul.f32 %v4463, %v4951
        %v4989 = vmul.f32 %v4464, %v4955
        %v5022 = vrot.slane %v4958, 6
        %v5023 = vrot.slane %v4960, 6
        %v5024 = vsel %vm4550, %v5022, %v5023
        %v5025 = vrot.slane %v4959, 6
        %v5026 = vrot.slane %v4961, 6
        %v5027 = vsel %vm4550, %v5025, %v5026
        %v5028 = vrot.slane %v4962, 6
        %v5029 = vrot.slane %v4964, 6
        %v5030 = vsel %vm4550, %v5028, %v5029
        %v5031 = vrot.slane %v4963, 6
        %v5032 = vrot.slane %v4965, 6
        %v5033 = vsel %vm4550, %v5031, %v5032
        %v5034 = vrot.slane %v4966, 6
        %v5035 = vrot.slane %v4968, 6
        %v5036 = vsel %vm4550, %v5034, %v5035
        %v5037 = vrot.slane %v4967, 6
        %v5038 = vrot.slane %v4969, 6
        %v5039 = vsel %vm4550, %v5037, %v5038
        %v5040 = vrot.slane %v4970, 6
        %v5041 = vrot.slane %v4972, 6
        %v5042 = vsel %vm4550, %v5040, %v5041
        %v5043 = vrot.slane %v4971, 6
        %v5044 = vrot.slane %v4973, 6
        %v5045 = vsel %vm4550, %v5043, %v5044
        %v5046 = vrot.slane %v4974, 6
        %v5047 = vrot.slane %v4976, 6
        %v5048 = vsel %vm4550, %v5046, %v5047
        %v5049 = vrot.slane %v4975, 6
        %v5050 = vrot.slane %v4977, 6
        %v5051 = vsel %vm4550, %v5049, %v5050
        %v5052 = vrot.slane %v4978, 6
        %v5053 = vrot.slane %v4980, 6
        %v5054 = vsel %vm4550, %v5052, %v5053
        %v5055 = vrot.slane %v4979, 6
        %v5056 = vrot.slane %v4981, 6
        %v5057 = vsel %vm4550, %v5055, %v5056
        %v5058 = vrot.slane %v4982, 6
        %v5059 = vrot.slane %v4984, 6
        %v5060 = vsel %vm4550, %v5058, %v5059
        %v5061 = vrot.slane %v4983, 6
        %v5062 = vrot.slane %v4985, 6
        %v5063 = vsel %vm4550, %v5061, %v5062
        %v5064 = vrot.slane %v4986, 6
        %v5065 = vrot.slane %v4988, 6
        %v5066 = vsel %vm4550, %v5064, %v5065
        %v5067 = vrot.slane %v4987, 6
        %v5068 = vrot.slane %v4989, 6
        %v5069 = vsel %vm4550, %v5067, %v5068
        %v5086 = vadd.f32 %v4929, %v5024
        %v5087 = vadd.f32 %v4930, %v5027
        %v5088 = vadd.f32 %v4931, %v5030
        %v5089 = vadd.f32 %v4932, %v5033
        %v5090 = vadd.f32 %v4933, %v5036
        %v5091 = vadd.f32 %v4934, %v5039
        %v5092 = vadd.f32 %v4935, %v5042
        %v5093 = vadd.f32 %v4936, %v5045
        %v5094 = vadd.f32 %v4937, %v5048
        %v5095 = vadd.f32 %v4938, %v5051
        %v5096 = vadd.f32 %v4939, %v5054
        %v5097 = vadd.f32 %v4940, %v5057
        %v5098 = vadd.f32 %v4941, %v5060
        %v5099 = vadd.f32 %v4942, %v5063
        %v5100 = vadd.f32 %v4943, %v5066
        %v5101 = vadd.f32 %v4944, %v5069
        %s5102 = scalar_lea.vmem %s2665, 3
        %v5103 = vld [vmem:[%s5102] ss:$8 sm:$0x3]
        %v5105 = vlaneseq
        %v5106 = vshrl.u32 %v5105, 7
        %v5107 = vsub.s32 0, %v5106
        %v5108 = vrot.slane %v5103, %v5107
        %v5109 = vlaneseq
        %v5110 = vshrl.u32 %v5109, 7
        %v5111 = vsub.s32 1, %v5110
        %v5112 = vrot.slane %v5103, %v5111
        %v5115 = vmul.f32 %v4441, %v5108
        %v5116 = vmul.f32 %v4442, %v5112
        %v5117 = vmul.f32 %v4443, %v5108
        %v5118 = vmul.f32 %v4444, %v5112
        %v5119 = vmul.f32 %v4445, %v5108
        %v5120 = vmul.f32 %v4446, %v5112
        %v5121 = vmul.f32 %v4447, %v5108
        %v5122 = vmul.f32 %v4448, %v5112
        %v5123 = vmul.f32 %v4449, %v5108
        %v5124 = vmul.f32 %v4450, %v5112
        %v5125 = vmul.f32 %v4451, %v5108
        %v5126 = vmul.f32 %v4452, %v5112
        %v5127 = vmul.f32 %v4453, %v5108
        %v5128 = vmul.f32 %v4454, %v5112
        %v5129 = vmul.f32 %v4455, %v5108
        %v5130 = vmul.f32 %v4456, %v5112
        %v5131 = vmul.f32 %v4457, %v5108
        %v5132 = vmul.f32 %v4458, %v5112
        %v5133 = vmul.f32 %v4459, %v5108
        %v5134 = vmul.f32 %v4460, %v5112
        %v5135 = vmul.f32 %v4461, %v5108
        %v5136 = vmul.f32 %v4462, %v5112
        %v5137 = vmul.f32 %v4463, %v5108
        %v5138 = vmul.f32 %v4464, %v5112
        %v5139 = vmul.f32 %v4465, %v5108
        %v5140 = vmul.f32 %v4466, %v5112
        %v5141 = vmul.f32 %v4467, %v5108
        %v5142 = vmul.f32 %v4468, %v5112
        %v5143 = vmul.f32 %v4469, %v5108
        %v5144 = vmul.f32 %v4470, %v5112
        %v5145 = vmul.f32 %v4471, %v5108
        %v5146 = vmul.f32 %v4472, %v5112
        %v5179 = vrot.slane %v5115, 6
        %v5180 = vrot.slane %v5117, 6
        %v5181 = vsel %vm4550, %v5179, %v5180
        %v5182 = vrot.slane %v5116, 6
        %v5183 = vrot.slane %v5118, 6
        %v5184 = vsel %vm4550, %v5182, %v5183
        %v5185 = vrot.slane %v5119, 6
        %v5186 = vrot.slane %v5121, 6
        %v5187 = vsel %vm4550, %v5185, %v5186
        %v5188 = vrot.slane %v5120, 6
        %v5189 = vrot.slane %v5122, 6
        %v5190 = vsel %vm4550, %v5188, %v5189
        %v5191 = vrot.slane %v5123, 6
        %v5192 = vrot.slane %v5125, 6
        %v5193 = vsel %vm4550, %v5191, %v5192
        %v5194 = vrot.slane %v5124, 6
        %v5195 = vrot.slane %v5126, 6
        %v5196 = vsel %vm4550, %v5194, %v5195
        %v5197 = vrot.slane %v5127, 6
        %v5198 = vrot.slane %v5129, 6
        %v5199 = vsel %vm4550, %v5197, %v5198
        %v5200 = vrot.slane %v5128, 6
        %v5201 = vrot.slane %v5130, 6
        %v5202 = vsel %vm4550, %v5200, %v5201
        %v5203 = vrot.slane %v5131, 6
        %v5204 = vrot.slane %v5133, 6
        %v5205 = vsel %vm4550, %v5203, %v5204
        %v5206 = vrot.slane %v5132, 6
        %v5207 = vrot.slane %v5134, 6
        %v5208 = vsel %vm4550, %v5206, %v5207
        %v5209 = vrot.slane %v5135, 6
        %v5210 = vrot.slane %v5137, 6
        %v5211 = vsel %vm4550, %v5209, %v5210
        %v5212 = vrot.slane %v5136, 6
        %v5213 = vrot.slane %v5138, 6
        %v5214 = vsel %vm4550, %v5212, %v5213
        %v5215 = vrot.slane %v5139, 6
        %v5216 = vrot.slane %v5141, 6
        %v5217 = vsel %vm4550, %v5215, %v5216
        %v5218 = vrot.slane %v5140, 6
        %v5219 = vrot.slane %v5142, 6
        %v5220 = vsel %vm4550, %v5218, %v5219
        %v5221 = vrot.slane %v5143, 6
        %v5222 = vrot.slane %v5145, 6
        %v5223 = vsel %vm4550, %v5221, %v5222
        %v5224 = vrot.slane %v5144, 6
        %v5225 = vrot.slane %v5146, 6
        %v5226 = vsel %vm4550, %v5224, %v5225
        %v5243 = vadd.f32 %v5086, %v5181
        %v5244 = vadd.f32 %v5087, %v5184
        %v5245 = vadd.f32 %v5088, %v5187
        %v5246 = vadd.f32 %v5089, %v5190
        %v5247 = vadd.f32 %v5090, %v5193
        %v5248 = vadd.f32 %v5091, %v5196
        %v5249 = vadd.f32 %v5092, %v5199
        %v5250 = vadd.f32 %v5093, %v5202
        %v5251 = vadd.f32 %v5094, %v5205
        %v5252 = vadd.f32 %v5095, %v5208
        %v5253 = vadd.f32 %v5096, %v5211
        %v5254 = vadd.f32 %v5097, %v5214
        %v5255 = vadd.f32 %v5098, %v5217
        %v5256 = vadd.f32 %v5099, %v5220
        %v5257 = vadd.f32 %v5100, %v5223
        %v5258 = vadd.f32 %v5101, %v5226
        %v5259 = vld [vmem:[#allocation3 + $0x10] sm:$0xff]
        %v5260 = vld [vmem:[#allocation3 + $0x18] sm:$0xff]
        %v5261 = vld [vmem:[#allocation3 + $0x30] sm:$0xff]
        %v5262 = vld [vmem:[#allocation3 + $0x38] sm:$0xff]
        %v5263 = vld [vmem:[#allocation3 + $0x50] sm:$0xff]
        %v5264 = vld [vmem:[#allocation3 + $0x58] sm:$0xff]
        %v5265 = vld [vmem:[#allocation3 + $0x70] sm:$0xff]
        %v5266 = vld [vmem:[#allocation3 + $0x78] sm:$0xff]
        %v5267 = vld [vmem:[#allocation3 + $0x90] sm:$0xff]
        %v5268 = vld [vmem:[#allocation3 + $0x98] sm:$0xff]
        %v5269 = vld [vmem:[#allocation3 + $0xb0] sm:$0xff]
        %v5270 = vld [vmem:[#allocation3 + $0xb8] sm:$0xff]
        %v5271 = vld [vmem:[#allocation3 + $0xd0] sm:$0xff]
        %v5272 = vld [vmem:[#allocation3 + $0xd8] sm:$0xff]
        %v5273 = vld [vmem:[#allocation3 + $0xf0] sm:$0xff]
        %v5274 = vld [vmem:[#allocation3 + $0xf8] sm:$0xff]
        %v5275 = vld [vmem:[#allocation3 + $0x110] sm:$0xff]
        %v5276 = vld [vmem:[#allocation3 + $0x118] sm:$0xff]
        %v5277 = vld [vmem:[#allocation3 + $0x130] sm:$0xff]
        %v5278 = vld [vmem:[#allocation3 + $0x138] sm:$0xff]
        %v5279 = vld [vmem:[#allocation3 + $0x150] sm:$0xff]
        %v5280 = vld [vmem:[#allocation3 + $0x158] sm:$0xff]
        %v5281 = vld [vmem:[#allocation3 + $0x170] sm:$0xff]
        %v5282 = vld [vmem:[#allocation3 + $0x178] sm:$0xff]
        %v5283 = vld [vmem:[#allocation3 + $0x190] sm:$0xff]
        %v5284 = vld [vmem:[#allocation3 + $0x198] sm:$0xff]
        %v5285 = vld [vmem:[#allocation3 + $0x1b0] sm:$0xff]
        %v5286 = vld [vmem:[#allocation3 + $0x1b8] sm:$0xff]
        %v5287 = vld [vmem:[#allocation3 + $0x1d0] sm:$0xff]
        %v5288 = vld [vmem:[#allocation3 + $0x1d8] sm:$0xff]
        %v5289 = vld [vmem:[#allocation3 + $0x1f0] sm:$0xff]
        %v5290 = vld [vmem:[#allocation3 + $0x1f8] sm:$0xff]
        %s5291 = scalar_lea.vmem %s3, 4
        %v5292 = vld [vmem:[%s5291] ss:$8 sm:$0x3]
        %v5294 = vlaneseq
        %v5295 = vshrl.u32 %v5294, 7
        %v5296 = vsub.s32 0, %v5295
        %v5297 = vrot.slane %v5292, %v5296
        %v5298 = vlaneseq
        %v5299 = vshrl.u32 %v5298, 7
        %v5300 = vsub.s32 1, %v5299
        %v5301 = vrot.slane %v5292, %v5300
        %v5304 = vmul.f32 %v5259, %v5297
        %v5305 = vmul.f32 %v5260, %v5301
        %v5306 = vmul.f32 %v5261, %v5297
        %v5307 = vmul.f32 %v5262, %v5301
        %v5308 = vmul.f32 %v5263, %v5297
        %v5309 = vmul.f32 %v5264, %v5301
        %v5310 = vmul.f32 %v5265, %v5297
        %v5311 = vmul.f32 %v5266, %v5301
        %v5312 = vmul.f32 %v5267, %v5297
        %v5313 = vmul.f32 %v5268, %v5301
        %v5314 = vmul.f32 %v5269, %v5297
        %v5315 = vmul.f32 %v5270, %v5301
        %v5316 = vmul.f32 %v5271, %v5297
        %v5317 = vmul.f32 %v5272, %v5301
        %v5318 = vmul.f32 %v5273, %v5297
        %v5319 = vmul.f32 %v5274, %v5301
        %v5320 = vadd.f32 %v5243, %v5304
        %v5321 = vadd.f32 %v5244, %v5305
        %v5322 = vadd.f32 %v5245, %v5306
        %v5323 = vadd.f32 %v5246, %v5307
        %v5324 = vadd.f32 %v5247, %v5308
        %v5325 = vadd.f32 %v5248, %v5309
        %v5326 = vadd.f32 %v5249, %v5310
        %v5327 = vadd.f32 %v5250, %v5311
        %v5328 = vadd.f32 %v5251, %v5312
        %v5329 = vadd.f32 %v5252, %v5313
        %v5330 = vadd.f32 %v5253, %v5314
        %v5331 = vadd.f32 %v5254, %v5315
        %v5332 = vadd.f32 %v5255, %v5316
        %v5333 = vadd.f32 %v5256, %v5317
        %v5334 = vadd.f32 %v5257, %v5318
        %v5335 = vadd.f32 %v5258, %v5319
        %s5336 = scalar_lea.vmem %s2530, 4
        %v5337 = vld [vmem:[%s5336] ss:$8 sm:$0x3]
        %v5339 = vlaneseq
        %v5340 = vshrl.u32 %v5339, 7
        %v5341 = vsub.s32 0, %v5340
        %v5342 = vrot.slane %v5337, %v5341
        %v5343 = vlaneseq
        %v5344 = vshrl.u32 %v5343, 7
        %v5345 = vsub.s32 1, %v5344
        %v5346 = vrot.slane %v5337, %v5345
        %v5349 = vmul.f32 %v5263, %v5342
        %v5350 = vmul.f32 %v5264, %v5346
        %v5351 = vmul.f32 %v5265, %v5342
        %v5352 = vmul.f32 %v5266, %v5346
        %v5353 = vmul.f32 %v5267, %v5342
        %v5354 = vmul.f32 %v5268, %v5346
        %v5355 = vmul.f32 %v5269, %v5342
        %v5356 = vmul.f32 %v5270, %v5346
        %v5357 = vmul.f32 %v5271, %v5342
        %v5358 = vmul.f32 %v5272, %v5346
        %v5359 = vmul.f32 %v5273, %v5342
        %v5360 = vmul.f32 %v5274, %v5346
        %v5361 = vmul.f32 %v5275, %v5342
        %v5362 = vmul.f32 %v5276, %v5346
        %v5363 = vmul.f32 %v5277, %v5342
        %v5364 = vmul.f32 %v5278, %v5346
        %v5365 = vadd.f32 %v5320, %v5349
        %v5366 = vadd.f32 %v5321, %v5350
        %v5367 = vadd.f32 %v5322, %v5351
        %v5368 = vadd.f32 %v5323, %v5352
        %v5369 = vadd.f32 %v5324, %v5353
        %v5370 = vadd.f32 %v5325, %v5354
        %v5371 = vadd.f32 %v5326, %v5355
        %v5372 = vadd.f32 %v5327, %v5356
        %v5373 = vadd.f32 %v5328, %v5357
        %v5374 = vadd.f32 %v5329, %v5358
        %v5375 = vadd.f32 %v5330, %v5359
        %v5376 = vadd.f32 %v5331, %v5360
        %v5377 = vadd.f32 %v5332, %v5361
        %v5378 = vadd.f32 %v5333, %v5362
        %v5379 = vadd.f32 %v5334, %v5363
        %v5380 = vadd.f32 %v5335, %v5364
        %s5381 = scalar_lea.vmem %s2575, 4
        %v5382 = vld [vmem:[%s5381] ss:$8 sm:$0x3]
        %v5384 = vlaneseq
        %v5385 = vshrl.u32 %v5384, 7
        %v5386 = vsub.s32 0, %v5385
        %v5387 = vrot.slane %v5382, %v5386
        %v5388 = vlaneseq
        %v5389 = vshrl.u32 %v5388, 7
        %v5390 = vsub.s32 1, %v5389
        %v5391 = vrot.slane %v5382, %v5390
        %v5394 = vmul.f32 %v5267, %v5387
        %v5395 = vmul.f32 %v5268, %v5391
        %v5396 = vmul.f32 %v5269, %v5387
        %v5397 = vmul.f32 %v5270, %v5391
        %v5398 = vmul.f32 %v5271, %v5387
        %v5399 = vmul.f32 %v5272, %v5391
        %v5400 = vmul.f32 %v5273, %v5387
        %v5401 = vmul.f32 %v5274, %v5391
        %v5402 = vmul.f32 %v5275, %v5387
        %v5403 = vmul.f32 %v5276, %v5391
        %v5404 = vmul.f32 %v5277, %v5387
        %v5405 = vmul.f32 %v5278, %v5391
        %v5406 = vmul.f32 %v5279, %v5387
        %v5407 = vmul.f32 %v5280, %v5391
        %v5408 = vmul.f32 %v5281, %v5387
        %v5409 = vmul.f32 %v5282, %v5391
        %v5410 = vadd.f32 %v5365, %v5394
        %v5411 = vadd.f32 %v5366, %v5395
        %v5412 = vadd.f32 %v5367, %v5396
        %v5413 = vadd.f32 %v5368, %v5397
        %v5414 = vadd.f32 %v5369, %v5398
        %v5415 = vadd.f32 %v5370, %v5399
        %v5416 = vadd.f32 %v5371, %v5400
        %v5417 = vadd.f32 %v5372, %v5401
        %v5418 = vadd.f32 %v5373, %v5402
        %v5419 = vadd.f32 %v5374, %v5403
        %v5420 = vadd.f32 %v5375, %v5404
        %v5421 = vadd.f32 %v5376, %v5405
        %v5422 = vadd.f32 %v5377, %v5406
        %v5423 = vadd.f32 %v5378, %v5407
        %v5424 = vadd.f32 %v5379, %v5408
        %v5425 = vadd.f32 %v5380, %v5409
        %s5426 = scalar_lea.vmem %s2620, 4
        %v5427 = vld [vmem:[%s5426] ss:$8 sm:$0x3]
        %v5429 = vlaneseq
        %v5430 = vshrl.u32 %v5429, 7
        %v5431 = vsub.s32 0, %v5430
        %v5432 = vrot.slane %v5427, %v5431
        %v5433 = vlaneseq
        %v5434 = vshrl.u32 %v5433, 7
        %v5435 = vsub.s32 1, %v5434
        %v5436 = vrot.slane %v5427, %v5435
        %v5439 = vmul.f32 %v5271, %v5432
        %v5440 = vmul.f32 %v5272, %v5436
        %v5441 = vmul.f32 %v5273, %v5432
        %v5442 = vmul.f32 %v5274, %v5436
        %v5443 = vmul.f32 %v5275, %v5432
        %v5444 = vmul.f32 %v5276, %v5436
        %v5445 = vmul.f32 %v5277, %v5432
        %v5446 = vmul.f32 %v5278, %v5436
        %v5447 = vmul.f32 %v5279, %v5432
        %v5448 = vmul.f32 %v5280, %v5436
        %v5449 = vmul.f32 %v5281, %v5432
        %v5450 = vmul.f32 %v5282, %v5436
        %v5451 = vmul.f32 %v5283, %v5432
        %v5452 = vmul.f32 %v5284, %v5436
        %v5453 = vmul.f32 %v5285, %v5432
        %v5454 = vmul.f32 %v5286, %v5436
        %v5455 = vadd.f32 %v5410, %v5439
        %v5456 = vadd.f32 %v5411, %v5440
        %v5457 = vadd.f32 %v5412, %v5441
        %v5458 = vadd.f32 %v5413, %v5442
        %v5459 = vadd.f32 %v5414, %v5443
        %v5460 = vadd.f32 %v5415, %v5444
        %v5461 = vadd.f32 %v5416, %v5445
        %v5462 = vadd.f32 %v5417, %v5446
        %v5463 = vadd.f32 %v5418, %v5447
        %v5464 = vadd.f32 %v5419, %v5448
        %v5465 = vadd.f32 %v5420, %v5449
        %v5466 = vadd.f32 %v5421, %v5450
        %v5467 = vadd.f32 %v5422, %v5451
        %v5468 = vadd.f32 %v5423, %v5452
        %v5469 = vadd.f32 %v5424, %v5453
        %v5470 = vadd.f32 %v5425, %v5454
        %s5471 = scalar_lea.vmem %s2665, 4
        %v5472 = vld [vmem:[%s5471] ss:$8 sm:$0x3]
        %v5474 = vlaneseq
        %v5475 = vshrl.u32 %v5474, 7
        %v5476 = vsub.s32 0, %v5475
        %v5477 = vrot.slane %v5472, %v5476
        %v5478 = vlaneseq
        %v5479 = vshrl.u32 %v5478, 7
        %v5480 = vsub.s32 1, %v5479
        %v5481 = vrot.slane %v5472, %v5480
        %v5484 = vmul.f32 %v5275, %v5477
        %v5485 = vmul.f32 %v5276, %v5481
        %v5486 = vmul.f32 %v5277, %v5477
        %v5487 = vmul.f32 %v5278, %v5481
        %v5488 = vmul.f32 %v5279, %v5477
        %v5489 = vmul.f32 %v5280, %v5481
        %v5490 = vmul.f32 %v5281, %v5477
        %v5491 = vmul.f32 %v5282, %v5481
        %v5492 = vmul.f32 %v5283, %v5477
        %v5493 = vmul.f32 %v5284, %v5481
        %v5494 = vmul.f32 %v5285, %v5477
        %v5495 = vmul.f32 %v5286, %v5481
        %v5496 = vmul.f32 %v5287, %v5477
        %v5497 = vmul.f32 %v5288, %v5481
        %v5498 = vmul.f32 %v5289, %v5477
        %v5499 = vmul.f32 %v5290, %v5481
        %v5500 = vadd.f32 %v5455, %v5484
        %v5501 = vadd.f32 %v5456, %v5485
        %v5502 = vadd.f32 %v5457, %v5486
        %v5503 = vadd.f32 %v5458, %v5487
        %v5504 = vadd.f32 %v5459, %v5488
        %v5505 = vadd.f32 %v5460, %v5489
        %v5506 = vadd.f32 %v5461, %v5490
        %v5507 = vadd.f32 %v5462, %v5491
        %v5508 = vadd.f32 %v5463, %v5492
        %v5509 = vadd.f32 %v5464, %v5493
        %v5510 = vadd.f32 %v5465, %v5494
        %v5511 = vadd.f32 %v5466, %v5495
        %v5512 = vadd.f32 %v5467, %v5496
        %v5513 = vadd.f32 %v5468, %v5497
        %v5514 = vadd.f32 %v5469, %v5498
        %v5515 = vadd.f32 %v5470, %v5499
        %v5516 = vld [vmem:[%s2326] sm:$0xf0]
        %v5517 = vld [vmem:[%s2326 + $0x8] sm:$0xf0]
        %v5518 = vld [vmem:[%s2326 + $0x10] sm:$0xf]
        %v5519 = vld [vmem:[%s2326 + $0x18] sm:$0xf]
        %v5520 = vld [vmem:[%s2326 + $0x20] sm:$0xf0]
        %v5521 = vld [vmem:[%s2326 + $0x28] sm:$0xf0]
        %v5522 = vld [vmem:[%s2326 + $0x30] sm:$0xf]
        %v5523 = vld [vmem:[%s2326 + $0x38] sm:$0xf]
        %v5524 = vld [vmem:[%s2326 + $0x40] sm:$0xf0]
        %v5525 = vld [vmem:[%s2326 + $0x48] sm:$0xf0]
        %v5526 = vld [vmem:[%s2326 + $0x50] sm:$0xf]
        %v5527 = vld [vmem:[%s2326 + $0x58] sm:$0xf]
        %v5528 = vld [vmem:[%s2326 + $0x60] sm:$0xf0]
        %v5529 = vld [vmem:[%s2326 + $0x68] sm:$0xf0]
        %v5530 = vld [vmem:[%s2326 + $0x70] sm:$0xf]
        %v5531 = vld [vmem:[%s2326 + $0x78] sm:$0xf]
        %v5532 = vld [vmem:[%s2326 + $0x80] sm:$0xf0]
        %v5533 = vld [vmem:[%s2326 + $0x88] sm:$0xf0]
        %v5534 = vld [vmem:[%s2326 + $0x90] sm:$0xf]
        %v5535 = vld [vmem:[%s2326 + $0x98] sm:$0xf]
        %v5536 = vld [vmem:[%s2326 + $0xa0] sm:$0xf0]
        %v5537 = vld [vmem:[%s2326 + $0xa8] sm:$0xf0]
        %v5538 = vld [vmem:[%s2326 + $0xb0] sm:$0xf]
        %v5539 = vld [vmem:[%s2326 + $0xb8] sm:$0xf]
        %v5540 = vld [vmem:[%s2326 + $0xc0] sm:$0xf0]
        %v5541 = vld [vmem:[%s2326 + $0xc8] sm:$0xf0]
        %v5542 = vld [vmem:[%s2326 + $0xd0] sm:$0xf]
        %v5543 = vld [vmem:[%s2326 + $0xd8] sm:$0xf]
        %v5544 = vld [vmem:[%s2326 + $0xe0] sm:$0xf0]
        %v5545 = vld [vmem:[%s2326 + $0xe8] sm:$0xf0]
        %v5546 = vld [vmem:[%s2326 + $0xf0] sm:$0xf]
        %v5547 = vld [vmem:[%s2326 + $0xf8] sm:$0xf]
        %v5580 = vrot.slane %v5516, 4
        %v5581 = vrot.slane %v5518, 4
        %v5582 = vsel %vm3700, %v5580, %v5581
        %v5583 = vrot.slane %v5517, 4
        %v5584 = vrot.slane %v5519, 4
        %v5585 = vsel %vm3700, %v5583, %v5584
        %v5586 = vrot.slane %v5520, 4
        %v5587 = vrot.slane %v5522, 4
        %v5588 = vsel %vm3700, %v5586, %v5587
        %v5589 = vrot.slane %v5521, 4
        %v5590 = vrot.slane %v5523, 4
        %v5591 = vsel %vm3700, %v5589, %v5590
        %v5592 = vrot.slane %v5524, 4
        %v5593 = vrot.slane %v5526, 4
        %v5594 = vsel %vm3700, %v5592, %v5593
        %v5595 = vrot.slane %v5525, 4
        %v5596 = vrot.slane %v5527, 4
        %v5597 = vsel %vm3700, %v5595, %v5596
        %v5598 = vrot.slane %v5528, 4
        %v5599 = vrot.slane %v5530, 4
        %v5600 = vsel %vm3700, %v5598, %v5599
        %v5601 = vrot.slane %v5529, 4
        %v5602 = vrot.slane %v5531, 4
        %v5603 = vsel %vm3700, %v5601, %v5602
        %v5604 = vrot.slane %v5532, 4
        %v5605 = vrot.slane %v5534, 4
        %v5606 = vsel %vm3700, %v5604, %v5605
        %v5607 = vrot.slane %v5533, 4
        %v5608 = vrot.slane %v5535, 4
        %v5609 = vsel %vm3700, %v5607, %v5608
        %v5610 = vrot.slane %v5536, 4
        %v5611 = vrot.slane %v5538, 4
        %v5612 = vsel %vm3700, %v5610, %v5611
        %v5613 = vrot.slane %v5537, 4
        %v5614 = vrot.slane %v5539, 4
        %v5615 = vsel %vm3700, %v5613, %v5614
        %v5616 = vrot.slane %v5540, 4
        %v5617 = vrot.slane %v5542, 4
        %v5618 = vsel %vm3700, %v5616, %v5617
        %v5619 = vrot.slane %v5541, 4
        %v5620 = vrot.slane %v5543, 4
        %v5621 = vsel %vm3700, %v5619, %v5620
        %v5622 = vrot.slane %v5544, 4
        %v5623 = vrot.slane %v5546, 4
        %v5624 = vsel %vm3700, %v5622, %v5623
        %v5625 = vrot.slane %v5545, 4
        %v5626 = vrot.slane %v5547, 4
        %v5627 = vsel %vm3700, %v5625, %v5626
        %v5644 = vpack.c.bf16 %v5588, %v5582
        %v5645 = vpack.c.bf16 %v5591, %v5585
        %v5646 = vpack.c.bf16 %v5600, %v5594
        %v5647 = vpack.c.bf16 %v5603, %v5597
        %v5648 = vpack.c.bf16 %v5612, %v5606
        %v5649 = vpack.c.bf16 %v5615, %v5609
        %v5650 = vpack.c.bf16 %v5624, %v5618
        %v5651 = vpack.c.bf16 %v5627, %v5621
        %v5652 = vld [vmem:[%s4] sm:$0xf]
        %v5653 = vld [vmem:[%s4 + $0x4] sm:$0xf]
        %v5654 = vld [vmem:[%s4 + $0x8] sm:$0xf]
        %v5655 = vld [vmem:[%s4 + $0xc] sm:$0xf]
        %v5656 = vld [vmem:[%s4 + $0x10] sm:$0xf]
        %v5657 = vld [vmem:[%s4 + $0x14] sm:$0xf]
        %v5658 = vld [vmem:[%s4 + $0x18] sm:$0xf]
        %v5659 = vld [vmem:[%s4 + $0x1c] sm:$0xf]
        %v5660 = vld [vmem:[%s4 + $0x20] sm:$0xf]
        %v5661 = vld [vmem:[%s4 + $0x24] sm:$0xf]
        %v5662 = vld [vmem:[%s4 + $0x28] sm:$0xf]
        %v5663 = vld [vmem:[%s4 + $0x2c] sm:$0xf]
        %v5664 = vld [vmem:[%s4 + $0x30] sm:$0xf]
        %v5665 = vld [vmem:[%s4 + $0x34] sm:$0xf]
        %v5666 = vld [vmem:[%s4 + $0x38] sm:$0xf]
        %v5667 = vld [vmem:[%s4 + $0x3c] sm:$0xf]
        %v5668 = vld [vmem:[%s4 + $0x40] sm:$0xf]
        %v5669 = vld [vmem:[%s4 + $0x44] sm:$0xf]
        %v5670 = vld [vmem:[%s4 + $0x48] sm:$0xf]
        %v5671 = vld [vmem:[%s4 + $0x4c] sm:$0xf]
        %v5672 = vld [vmem:[%s4 + $0x50] sm:$0xf]
        %v5673 = vld [vmem:[%s4 + $0x54] sm:$0xf]
        %v5674 = vld [vmem:[%s4 + $0x58] sm:$0xf]
        %v5675 = vld [vmem:[%s4 + $0x5c] sm:$0xf]
        %v5676 = vld [vmem:[%s9 + $0x3] ss:$0 sm:$0xff]
        %v5701 = vunpack.c.l.b16 %v5652
        %v5702 = vunpack.c.l.b16 %v5653
        %v5703 = vunpack.c.l.b16 %v5654
        %v5704 = vunpack.c.l.b16 %v5655
        %v5705 = vunpack.c.l.b16 %v5656
        %v5706 = vunpack.c.l.b16 %v5657
        %v5707 = vunpack.c.l.b16 %v5658
        %v5708 = vunpack.c.l.b16 %v5659
        %v5709 = vunpack.c.l.b16 %v5660
        %v5710 = vunpack.c.l.b16 %v5661
        %v5711 = vunpack.c.l.b16 %v5662
        %v5712 = vunpack.c.l.b16 %v5663
        %v5713 = vunpack.c.l.b16 %v5664
        %v5714 = vunpack.c.l.b16 %v5665
        %v5715 = vunpack.c.l.b16 %v5666
        %v5716 = vunpack.c.l.b16 %v5667
        %v5717 = vunpack.c.l.b16 %v5668
        %v5718 = vunpack.c.l.b16 %v5669
        %v5719 = vunpack.c.l.b16 %v5670
        %v5720 = vunpack.c.l.b16 %v5671
        %v5721 = vunpack.c.l.b16 %v5672
        %v5722 = vunpack.c.l.b16 %v5673
        %v5723 = vunpack.c.l.b16 %v5674
        %v5724 = vunpack.c.l.b16 %v5675
        %v5725 = vpack.c.b16 %v5702, %v5701
        %v5726 = vpack.c.b16 %v5704, %v5703
        %v5727 = vpack.c.b16 %v5706, %v5705
        %v5728 = vpack.c.b16 %v5708, %v5707
        %v5729 = vpack.c.b16 %v5710, %v5709
        %v5730 = vpack.c.b16 %v5712, %v5711
        %v5731 = vpack.c.b16 %v5714, %v5713
        %v5732 = vpack.c.b16 %v5716, %v5715
        %v5733 = vpack.c.b16 %v5718, %v5717
        %v5734 = vpack.c.b16 %v5720, %v5719
        %v5735 = vpack.c.b16 %v5722, %v5721
        %v5736 = vpack.c.b16 %v5724, %v5723
        %v5750 = vsel %vm799, %v5645, 0
        %v5753 = vsel %vm799, %v5647, 0
        %v5756 = vsel %vm799, %v5649, 0
        %v5759 = vsel %vm799, %v5651, 0
        %5761 = vmatprep.subr.bf16.mxu0 0
        %5762 = vmatpush1.bf16.msra.mxu0 %v5732
        %5763 = vmatprep.subr.bf16.mxu0 0
        %5764 = vmatpush1.bf16.msra.mxu0 %v5731
        %5765 = vmatprep.subr.bf16.mxu0 0
        %5766 = vmatpush1.bf16.msra.mxu0 %v5730
        %5767 = vmatprep.subr.bf16.mxu0 0
        %5768 = vmatpush1.bf16.msra.mxu0 %v5729
        %5769 = vmatprep.subr.bf16.mxu0 0
        %5770 = vmatpush1.bf16.msra.mxu0 %v5728
        %5771 = vmatprep.subr.bf16.mxu0 0
        %5772 = vmatpush1.bf16.msra.mxu0 %v5727
        %5773 = vmatprep.subr.bf16.mxu0 0
        %5774 = vmatpush1.bf16.msra.mxu0 %v5726
        %5775 = vmatprep.subr.bf16.mxu0 0
        %5776 = vmatpush1.bf16.msra.mxu0 %v5725
        %5777 = vmatprep.subr.bf16.mxu0 0
        %5778 = vmatpush2.bf16.msra.mxu0 0
        %5779 = vmatprep.subr.bf16.mxu0 0
        %5780 = vmatpush2.bf16.msra.mxu0 0
        %5781 = vmatprep.subr.bf16.mxu0 0
        %5782 = vmatpush2.bf16.msra.mxu0 0
        %5783 = vmatprep.subr.bf16.mxu0 0
        %5784 = vmatpush2.bf16.msra.mxu0 0
        %5785 = vmatprep.subr.bf16.mxu0 0
        %5786 = vmatpush2.bf16.msra.mxu0 %v5736
        %5787 = vmatprep.subr.bf16.mxu0 0
        %5788 = vmatpush2.bf16.msra.mxu0 %v5735
        %5789 = vmatprep.subr.bf16.mxu0 0
        %5790 = vmatpush2.bf16.msra.mxu0 %v5734
        %5791 = vmatprep.subr.bf16.mxu0 0
        %5792 = vmatpush2.bf16.msra.mxu0 %v5733
        %5793 = vmatprep.mubr.bf16.mxu0 %v5750
        %5794 = vmatmul.mubr.bf16.gmra.mxu0 %v5644
        %v5795 = vpop.f32.mrf.mxu0
        %v5796 = vadd.f32 %v5676, %v5795
        %v5797 = vpop.f32.mrf.mxu0
        %v5798 = vpop.f32.mrf.mxu0
        %v5799 = vadd.f32 %v5676, %v5798
        %v5800 = vpop.f32.mrf.mxu0
        %5801 = vmatprep.mubr.bf16.mxu0 %v5753
        %5802 = vmatmul.mubr.bf16.gmra.mxu0 %v5646
        %v5803 = vpop.f32.mrf.mxu0
        %v5804 = vadd.f32 %v5676, %v5803
        %v5805 = vpop.f32.mrf.mxu0
        %v5806 = vpop.f32.mrf.mxu0
        %v5807 = vadd.f32 %v5676, %v5806
        %v5808 = vpop.f32.mrf.mxu0
        %5809 = vmatprep.mubr.bf16.mxu0 %v5756
        %5810 = vmatmul.mubr.bf16.gmra.mxu0 %v5648
        %v5811 = vpop.f32.mrf.mxu0
        %v5812 = vadd.f32 %v5676, %v5811
        %v5813 = vpop.f32.mrf.mxu0
        %v5814 = vpop.f32.mrf.mxu0
        %v5815 = vadd.f32 %v5676, %v5814
        %v5816 = vpop.f32.mrf.mxu0
        %5817 = vmatprep.mubr.bf16.mxu0 %v5759
        %5818 = vmatmul.mubr.bf16.gmra.mxu0 %v5650
        %v5819 = vpop.f32.mrf.mxu0
        %v5820 = vadd.f32 %v5676, %v5819
        %v5821 = vpop.f32.mrf.mxu0
        %v5822 = vpop.f32.mrf.mxu0
        %v5823 = vadd.f32 %v5676, %v5822
        %v5824 = vpop.f32.mrf.mxu0
        %5825 = vdwg.mxu0
        %v5826 = vpack.c.bf16 %v5502, %v5500
        %v5827 = vpack.c.bf16 %v5503, %v5501
        %v5828 = vpack.c.bf16 %v5506, %v5504
        %v5829 = vpack.c.bf16 %v5507, %v5505
        %v5830 = vpack.c.bf16 %v5510, %v5508
        %v5831 = vpack.c.bf16 %v5511, %v5509
        %v5832 = vpack.c.bf16 %v5514, %v5512
        %v5833 = vpack.c.bf16 %v5515, %v5513
        %v5834 = vld [vmem:[%s5] sm:$0xf]
        %v5835 = vld [vmem:[%s5 + $0x4] sm:$0xf]
        %v5836 = vld [vmem:[%s5 + $0x8] sm:$0xf]
        %v5837 = vld [vmem:[%s5 + $0xc] sm:$0xf]
        %v5838 = vld [vmem:[%s5 + $0x10] sm:$0xf]
        %v5839 = vld [vmem:[%s5 + $0x14] sm:$0xf]
        %v5840 = vld [vmem:[%s5 + $0x18] sm:$0xf]
        %v5841 = vld [vmem:[%s5 + $0x1c] sm:$0xf]
        %v5842 = vld [vmem:[%s5 + $0x20] sm:$0xf]
        %v5843 = vld [vmem:[%s5 + $0x24] sm:$0xf]
        %v5844 = vld [vmem:[%s5 + $0x28] sm:$0xf]
        %v5845 = vld [vmem:[%s5 + $0x2c] sm:$0xf]
        %v5846 = vld [vmem:[%s5 + $0x30] sm:$0xf]
        %v5847 = vld [vmem:[%s5 + $0x34] sm:$0xf]
        %v5848 = vld [vmem:[%s5 + $0x38] sm:$0xf]
        %v5849 = vld [vmem:[%s5 + $0x3c] sm:$0xf]
        %v5850 = vld [vmem:[%s5 + $0x40] sm:$0xf]
        %v5851 = vld [vmem:[%s5 + $0x44] sm:$0xf]
        %v5852 = vld [vmem:[%s5 + $0x48] sm:$0xf]
        %v5853 = vld [vmem:[%s5 + $0x4c] sm:$0xf]
        %v5854 = vld [vmem:[%s5 + $0x50] sm:$0xf]
        %v5855 = vld [vmem:[%s5 + $0x54] sm:$0xf]
        %v5856 = vld [vmem:[%s5 + $0x58] sm:$0xf]
        %v5857 = vld [vmem:[%s5 + $0x5c] sm:$0xf]
        %v5858 = vld [vmem:[%s9 + $0x4] ss:$0 sm:$0xff]
        %v5883 = vunpack.c.l.b16 %v5834
        %v5884 = vunpack.c.l.b16 %v5835
        %v5885 = vunpack.c.l.b16 %v5836
        %v5886 = vunpack.c.l.b16 %v5837
        %v5887 = vunpack.c.l.b16 %v5838
        %v5888 = vunpack.c.l.b16 %v5839
        %v5889 = vunpack.c.l.b16 %v5840
        %v5890 = vunpack.c.l.b16 %v5841
        %v5891 = vunpack.c.l.b16 %v5842
        %v5892 = vunpack.c.l.b16 %v5843
        %v5893 = vunpack.c.l.b16 %v5844
        %v5894 = vunpack.c.l.b16 %v5845
        %v5895 = vunpack.c.l.b16 %v5846
        %v5896 = vunpack.c.l.b16 %v5847
        %v5897 = vunpack.c.l.b16 %v5848
        %v5898 = vunpack.c.l.b16 %v5849
        %v5899 = vunpack.c.l.b16 %v5850
        %v5900 = vunpack.c.l.b16 %v5851
        %v5901 = vunpack.c.l.b16 %v5852
        %v5902 = vunpack.c.l.b16 %v5853
        %v5903 = vunpack.c.l.b16 %v5854
        %v5904 = vunpack.c.l.b16 %v5855
        %v5905 = vunpack.c.l.b16 %v5856
        %v5906 = vunpack.c.l.b16 %v5857
        %v5907 = vpack.c.b16 %v5884, %v5883
        %v5908 = vpack.c.b16 %v5886, %v5885
        %v5909 = vpack.c.b16 %v5888, %v5887
        %v5910 = vpack.c.b16 %v5890, %v5889
        %v5911 = vpack.c.b16 %v5892, %v5891
        %v5912 = vpack.c.b16 %v5894, %v5893
        %v5913 = vpack.c.b16 %v5896, %v5895
        %v5914 = vpack.c.b16 %v5898, %v5897
        %v5915 = vpack.c.b16 %v5900, %v5899
        %v5916 = vpack.c.b16 %v5902, %v5901
        %v5917 = vpack.c.b16 %v5904, %v5903
        %v5918 = vpack.c.b16 %v5906, %v5905
        %v5932 = vsel %vm799, %v5827, 0
        %v5935 = vsel %vm799, %v5829, 0
        %v5938 = vsel %vm799, %v5831, 0
        %v5941 = vsel %vm799, %v5833, 0
        %5943 = vmatprep.subr.bf16.mxu0 0
        %5944 = vmatpush1.bf16.msra.mxu0 %v5914
        %5945 = vmatprep.subr.bf16.mxu0 0
        %5946 = vmatpush1.bf16.msra.mxu0 %v5913
        %5947 = vmatprep.subr.bf16.mxu0 0
        %5948 = vmatpush1.bf16.msra.mxu0 %v5912
        %5949 = vmatprep.subr.bf16.mxu0 0
        %5950 = vmatpush1.bf16.msra.mxu0 %v5911
        %5951 = vmatprep.subr.bf16.mxu0 0
        %5952 = vmatpush1.bf16.msra.mxu0 %v5910
        %5953 = vmatprep.subr.bf16.mxu0 0
        %5954 = vmatpush1.bf16.msra.mxu0 %v5909
        %5955 = vmatprep.subr.bf16.mxu0 0
        %5956 = vmatpush1.bf16.msra.mxu0 %v5908
        %5957 = vmatprep.subr.bf16.mxu0 0
        %5958 = vmatpush1.bf16.msra.mxu0 %v5907
        %5959 = vmatprep.subr.bf16.mxu0 0
        %5960 = vmatpush2.bf16.msra.mxu0 0
        %5961 = vmatprep.subr.bf16.mxu0 0
        %5962 = vmatpush2.bf16.msra.mxu0 0
        %5963 = vmatprep.subr.bf16.mxu0 0
        %5964 = vmatpush2.bf16.msra.mxu0 0
        %5965 = vmatprep.subr.bf16.mxu0 0
        %5966 = vmatpush2.bf16.msra.mxu0 0
        %5967 = vmatprep.subr.bf16.mxu0 0
        %5968 = vmatpush2.bf16.msra.mxu0 %v5918
        %5969 = vmatprep.subr.bf16.mxu0 0
        %5970 = vmatpush2.bf16.msra.mxu0 %v5917
        %5971 = vmatprep.subr.bf16.mxu0 0
        %5972 = vmatpush2.bf16.msra.mxu0 %v5916
        %5973 = vmatprep.subr.bf16.mxu0 0
        %5974 = vmatpush2.bf16.msra.mxu0 %v5915
        %5975 = vmatprep.mubr.bf16.mxu0 %v5932
        %5976 = vmatmul.mubr.bf16.gmra.mxu0 %v5826
        %v5977 = vpop.f32.mrf.mxu0
        %v5978 = vadd.f32 %v5858, %v5977
        %v5979 = vpop.f32.mrf.mxu0
        %v5980 = vpop.f32.mrf.mxu0
        %v5981 = vadd.f32 %v5858, %v5980
        %v5982 = vpop.f32.mrf.mxu0
        %5983 = vmatprep.mubr.bf16.mxu0 %v5935
        %5984 = vmatmul.mubr.bf16.gmra.mxu0 %v5828
        %v5985 = vpop.f32.mrf.mxu0
        %v5986 = vadd.f32 %v5858, %v5985
        %v5987 = vpop.f32.mrf.mxu0
        %v5988 = vpop.f32.mrf.mxu0
        %v5989 = vadd.f32 %v5858, %v5988
        %v5990 = vpop.f32.mrf.mxu0
        %5991 = vmatprep.mubr.bf16.mxu0 %v5938
        %5992 = vmatmul.mubr.bf16.gmra.mxu0 %v5830
        %v5993 = vpop.f32.mrf.mxu0
        %v5994 = vadd.f32 %v5858, %v5993
        %v5995 = vpop.f32.mrf.mxu0
        %v5996 = vpop.f32.mrf.mxu0
        %v5997 = vadd.f32 %v5858, %v5996
        %v5998 = vpop.f32.mrf.mxu0
        %5999 = vmatprep.mubr.bf16.mxu0 %v5941
        %6000 = vmatmul.mubr.bf16.gmra.mxu0 %v5832
        %v6001 = vpop.f32.mrf.mxu0
        %v6002 = vadd.f32 %v5858, %v6001
        %v6003 = vpop.f32.mrf.mxu0
        %v6004 = vpop.f32.mrf.mxu0
        %v6005 = vadd.f32 %v5858, %v6004
        %v6006 = vpop.f32.mrf.mxu0
        %6007 = vdwg.mxu0
        %vm6008 = vcmask 785408
        %v6009 = vsel %vm6008, %v5796, 0.0
        %6010 = vadd.xlane.f32.xlu0 %v6009
        %v6011 = vpop.xlane.xlu0 %6010
        %v6012 = vsel %vm6008, %v5799, 0.0
        %6013 = vadd.xlane.f32.xlu0 %v6012
        %v6014 = vpop.xlane.xlu0 %6013
        %v6015 = vsel %vm6008, %v5804, 0.0
        %6016 = vadd.xlane.f32.xlu0 %v6015
        %v6017 = vpop.xlane.xlu0 %6016
        %v6018 = vsel %vm6008, %v5807, 0.0
        %6019 = vadd.xlane.f32.xlu0 %v6018
        %v6020 = vpop.xlane.xlu0 %6019
        %v6021 = vsel %vm6008, %v5812, 0.0
        %6022 = vadd.xlane.f32.xlu0 %v6021
        %v6023 = vpop.xlane.xlu0 %6022
        %v6024 = vsel %vm6008, %v5815, 0.0
        %6025 = vadd.xlane.f32.xlu0 %v6024
        %v6026 = vpop.xlane.xlu0 %6025
        %v6027 = vsel %vm6008, %v5820, 0.0
        %6028 = vadd.xlane.f32.xlu0 %v6027
        %v6029 = vpop.xlane.xlu0 %6028
        %v6030 = vsel %vm6008, %v5823, 0.0
        %6031 = vadd.xlane.f32.xlu0 %v6030
        %v6032 = vpop.xlane.xlu0 %6031
        %v6033 = vsel %vm6008, %v5978, 0.0
        %6034 = vadd.xlane.f32.xlu0 %v6033
        %v6035 = vpop.xlane.xlu0 %6034
        %v6036 = vsel %vm6008, %v5981, 0.0
        %6037 = vadd.xlane.f32.xlu0 %v6036
        %v6038 = vpop.xlane.xlu0 %6037
        %v6039 = vsel %vm6008, %v5986, 0.0
        %6040 = vadd.xlane.f32.xlu0 %v6039
        %v6041 = vpop.xlane.xlu0 %6040
        %v6042 = vsel %vm6008, %v5989, 0.0
        %6043 = vadd.xlane.f32.xlu0 %v6042
        %v6044 = vpop.xlane.xlu0 %6043
        %v6045 = vsel %vm6008, %v5994, 0.0
        %6046 = vadd.xlane.f32.xlu0 %v6045
        %v6047 = vpop.xlane.xlu0 %6046
        %v6048 = vsel %vm6008, %v5997, 0.0
        %6049 = vadd.xlane.f32.xlu0 %v6048
        %v6050 = vpop.xlane.xlu0 %6049
        %v6051 = vsel %vm6008, %v6002, 0.0
        %6052 = vadd.xlane.f32.xlu0 %v6051
        %v6053 = vpop.xlane.xlu0 %6052
        %v6054 = vsel %vm6008, %v6005, 0.0
        %6055 = vadd.xlane.f32.xlu0 %v6054
        %v6056 = vpop.xlane.xlu0 %6055
        %v6057 = vadd.f32 %v6011, %v6035
        %v6058 = vadd.f32 %v6014, %v6038
        %v6059 = vadd.f32 %v6017, %v6041
        %v6060 = vadd.f32 %v6020, %v6044
        %v6061 = vadd.f32 %v6023, %v6047
        %v6062 = vadd.f32 %v6026, %v6050
        %v6063 = vadd.f32 %v6029, %v6053
        %v6064 = vadd.f32 %v6032, %v6056
        %v6065 = vmul.f32 %v6057, 0.0052083335
        %v6066 = vmul.f32 %v6058, 0.0052083335
        %v6067 = vmul.f32 %v6059, 0.0052083335
        %v6068 = vmul.f32 %v6060, 0.0052083335
        %v6069 = vmul.f32 %v6061, 0.0052083335
        %v6070 = vmul.f32 %v6062, 0.0052083335
        %v6071 = vmul.f32 %v6063, 0.0052083335
        %v6072 = vmul.f32 %v6064, 0.0052083335
        %v6073 = vsel %vm6008, %v5796, -inf
        %6074 = vmax.xlane.f32.xlu0 %v6073
        %v6075 = vpop.xlane.xlu0 %6074
        %v6076 = vsel %vm6008, %v5799, -inf
        %6077 = vmax.xlane.f32.xlu0 %v6076
        %v6078 = vpop.xlane.xlu0 %6077
        %v6079 = vsel %vm6008, %v5804, -inf
        %6080 = vmax.xlane.f32.xlu0 %v6079
        %v6081 = vpop.xlane.xlu0 %6080
        %v6082 = vsel %vm6008, %v5807, -inf
        %6083 = vmax.xlane.f32.xlu0 %v6082
        %v6084 = vpop.xlane.xlu0 %6083
        %v6085 = vsel %vm6008, %v5812, -inf
        %6086 = vmax.xlane.f32.xlu0 %v6085
        %v6087 = vpop.xlane.xlu0 %6086
        %v6088 = vsel %vm6008, %v5815, -inf
        %6089 = vmax.xlane.f32.xlu0 %v6088
        %v6090 = vpop.xlane.xlu0 %6089
        %v6091 = vsel %vm6008, %v5820, -inf
        %6092 = vmax.xlane.f32.xlu0 %v6091
        %v6093 = vpop.xlane.xlu0 %6092
        %v6094 = vsel %vm6008, %v5823, -inf
        %6095 = vmax.xlane.f32.xlu0 %v6094
        %v6096 = vpop.xlane.xlu0 %6095
        %v6097 = vsel %vm6008, %v5978, -inf
        %6098 = vmax.xlane.f32.xlu0 %v6097
        %v6099 = vpop.xlane.xlu0 %6098
        %v6100 = vsel %vm6008, %v5981, -inf
        %6101 = vmax.xlane.f32.xlu0 %v6100
        %v6102 = vpop.xlane.xlu0 %6101
        %v6103 = vsel %vm6008, %v5986, -inf
        %6104 = vmax.xlane.f32.xlu0 %v6103
        %v6105 = vpop.xlane.xlu0 %6104
        %v6106 = vsel %vm6008, %v5989, -inf
        %6107 = vmax.xlane.f32.xlu0 %v6106
        %v6108 = vpop.xlane.xlu0 %6107
        %v6109 = vsel %vm6008, %v5994, -inf
        %6110 = vmax.xlane.f32.xlu0 %v6109
        %v6111 = vpop.xlane.xlu0 %6110
        %v6112 = vsel %vm6008, %v5997, -inf
        %6113 = vmax.xlane.f32.xlu0 %v6112
        %v6114 = vpop.xlane.xlu0 %6113
        %v6115 = vsel %vm6008, %v6002, -inf
        %6116 = vmax.xlane.f32.xlu0 %v6115
        %v6117 = vpop.xlane.xlu0 %6116
        %v6118 = vsel %vm6008, %v6005, -inf
        %6119 = vmax.xlane.f32.xlu0 %v6118
        %v6120 = vpop.xlane.xlu0 %6119
        %v6121 = vmax.f32 %v6075, %v6099
        %v6122 = vmax.f32 %v6078, %v6102
        %v6123 = vmax.f32 %v6081, %v6105
        %v6124 = vmax.f32 %v6084, %v6108
        %v6125 = vmax.f32 %v6087, %v6111
        %v6126 = vmax.f32 %v6090, %v6114
        %v6127 = vmax.f32 %v6093, %v6117
        %v6128 = vmax.f32 %v6096, %v6120
        %vm6129 = vcmask 228352
        %6130 = vst.msk [vmem:[#allocation4] sm:$0xff] %vm6129, 0.0
        %vm6131 = vcmask 226304
        %6132 = vst.msk [vmem:[#allocation4 + $0x8] sm:$0x3f] %vm6131, 0.0
        %v6141 = vlaneseq
        %v6142 = vand.u32 %v6141, 127
        %v6143 = vadd.s32 %v6142, 4294967293
        %v6144 = vlaneseq
        %v6145 = vshrl.u32 %v6144, 7
        %v6146 = vsub.s32 %v6143, %v6145
        %v6147 = vrot.slane %v6065, %v6146
        %v6148 = vlaneseq
        %v6149 = vshrl.u32 %v6148, 7
        %v6150 = vsub.s32 %v6143, %v6149
        %v6151 = vrot.slane %v6066, %v6150
        %v6152 = vlaneseq
        %v6153 = vshrl.u32 %v6152, 7
        %v6154 = vsub.s32 %v6143, %v6153
        %v6155 = vrot.slane %v6067, %v6154
        %v6156 = vlaneseq
        %v6157 = vshrl.u32 %v6156, 7
        %v6158 = vsub.s32 %v6143, %v6157
        %v6159 = vrot.slane %v6068, %v6158
        %v6160 = vlaneseq
        %v6161 = vshrl.u32 %v6160, 7
        %v6162 = vsub.s32 %v6143, %v6161
        %v6163 = vrot.slane %v6069, %v6162
        %v6164 = vlaneseq
        %v6165 = vshrl.u32 %v6164, 7
        %v6166 = vsub.s32 %v6143, %v6165
        %v6167 = vrot.slane %v6070, %v6166
        %v6168 = vlaneseq
        %v6169 = vshrl.u32 %v6168, 7
        %v6170 = vsub.s32 %v6143, %v6169
        %v6171 = vrot.slane %v6071, %v6170
        %v6172 = vlaneseq
        %v6173 = vshrl.u32 %v6172, 7
        %v6174 = vsub.s32 %v6143, %v6173
        %v6175 = vrot.slane %v6072, %v6174
        %vm6176 = vcmask 1041409
        %v6177 = vsel %vm6176, %v6151, %v6147
        %vm6178 = vcmask 1042434
        %v6179 = vsel %vm6178, %v6155, %v6177
        %vm6180 = vcmask 1043459
        %v6181 = vsel %vm6180, %v6159, %v6179
        %vm6182 = vcmask 1044484
        %v6183 = vsel %vm6182, %v6163, %v6181
        %vm6184 = vcmask 1045509
        %v6185 = vsel %vm6184, %v6167, %v6183
        %vm6186 = vcmask 1046534
        %v6187 = vsel %vm6186, %v6171, %v6185
        %vm6188 = vcmask 1047559
        %v6189 = vsel %vm6188, %v6175, %v6187
        %vm6191 = vcmask 89112
        %6192 = vst.msk [vmem:[#allocation4 + $0x3] sm:$0xff] %vm6191, %v6189
        %v6201 = vadd.s32 %v6142, 4294967279
        %v6202 = vlaneseq
        %v6203 = vshrl.u32 %v6202, 7
        %v6204 = vsub.s32 %v6201, %v6203
        %v6205 = vrot.slane %v6121, %v6204
        %v6206 = vlaneseq
        %v6207 = vshrl.u32 %v6206, 7
        %v6208 = vsub.s32 %v6201, %v6207
        %v6209 = vrot.slane %v6122, %v6208
        %v6210 = vlaneseq
        %v6211 = vshrl.u32 %v6210, 7
        %v6212 = vsub.s32 %v6201, %v6211
        %v6213 = vrot.slane %v6123, %v6212
        %v6214 = vlaneseq
        %v6215 = vshrl.u32 %v6214, 7
        %v6216 = vsub.s32 %v6201, %v6215
        %v6217 = vrot.slane %v6124, %v6216
        %v6218 = vlaneseq
        %v6219 = vshrl.u32 %v6218, 7
        %v6220 = vsub.s32 %v6201, %v6219
        %v6221 = vrot.slane %v6125, %v6220
        %v6222 = vlaneseq
        %v6223 = vshrl.u32 %v6222, 7
        %v6224 = vsub.s32 %v6201, %v6223
        %v6225 = vrot.slane %v6126, %v6224
        %v6226 = vlaneseq
        %v6227 = vshrl.u32 %v6226, 7
        %v6228 = vsub.s32 %v6201, %v6227
        %v6229 = vrot.slane %v6127, %v6228
        %v6230 = vlaneseq
        %v6231 = vshrl.u32 %v6230, 7
        %v6232 = vsub.s32 %v6201, %v6231
        %v6233 = vrot.slane %v6128, %v6232
        %v6234 = vsel %vm6176, %v6209, %v6205
        %v6235 = vsel %vm6178, %v6213, %v6234
        %v6236 = vsel %vm6180, %v6217, %v6235
        %v6237 = vsel %vm6182, %v6221, %v6236
        %v6238 = vsel %vm6184, %v6225, %v6237
        %v6239 = vsel %vm6186, %v6229, %v6238
        %v6240 = vsel %vm6188, %v6233, %v6239
        %vm6242 = vcmask 203912
        %6243 = vst.msk [vmem:[#allocation4 + $0x3] sm:$0xff] %vm6242, %v6240
        %v6244 = vld [vmem:[#allocation4] sm:$0xff]
        %v6245 = vld [vmem:[#allocation4 + $0x1] sm:$0xff]
        %v6246 = vld [vmem:[#allocation4 + $0x2] sm:$0xff]
        %v6247 = vld [vmem:[#allocation4 + $0x3] sm:$0xff]
        %v6248 = vld [vmem:[#allocation4 + $0x4] sm:$0xff]
        %v6249 = vld [vmem:[#allocation4 + $0x5] sm:$0xff]
        %v6250 = vld [vmem:[#allocation4 + $0x6] sm:$0xff]
        %6252 = vrot.lane.b32.xlu0 %v6245, 28
        %v6253 = vpop.permute.xlu0 %6252
        %6256 = vrot.lane.b32.xlu0 %v6246, 56
        %v6257 = vpop.permute.xlu0 %6256
        %6260 = vrot.lane.b32.xlu0 %v6247, 84
        %v6261 = vpop.permute.xlu0 %6260
        %6264 = vrot.lane.b32.xlu0 %v6248, 112
        %v6265 = vpop.permute.xlu0 %6264
        %6268 = vrot.lane.b32.xlu0 %v6249, 12
        %v6269 = vpop.permute.xlu0 %6268
        %6272 = vrot.lane.b32.xlu0 %v6250, 40
        %v6273 = vpop.permute.xlu0 %6272
        %v6275 = vsel %vm6129, %v6244, %v6253
        %vm6276 = vcmask 457728
        %v6277 = vsel %vm6276, %v6275, %v6257
        %vm6278 = vcmask 687104
        %v6279 = vsel %vm6278, %v6277, %v6261
        %vm6280 = vcmask 916480
        %v6281 = vsel %vm6280, %v6279, %v6265
        %vm6282 = vcmask 97280
        %v6283 = vsel %vm6282, %v6265, %v6269
        %vm6284 = vcmask 326656
        %v6285 = vsel %vm6284, %v6283, %v6273
        %v6286 = vld [vmem:[%s6] sm:$0xff]
        %v6287 = vld [vmem:[%s6 + $0x8] sm:$0xff]
        %v6288 = vld [vmem:[%s6 + $0x10] sm:$0xff]
        %v6289 = vld [vmem:[%s6 + $0x18] sm:$0xff]
        %v6290 = vld [vmem:[%s6 + $0x20] sm:$0xff]
        %v6291 = vld [vmem:[%s6 + $0x28] sm:$0xff]
        %v6292 = vld [vmem:[%s6 + $0x30] sm:$0xff]
        %v6293 = vld [vmem:[%s6 + $0x38] sm:$0xff]
        %v6294 = vld [vmem:[%s6 + $0x40] sm:$0xff]
        %v6295 = vld [vmem:[%s6 + $0x48] sm:$0xff]
        %v6296 = vld [vmem:[%s6 + $0x50] sm:$0xff]
        %v6297 = vld [vmem:[%s6 + $0x58] sm:$0xff]
        %v6298 = vld [vmem:[%s6 + $0x60] sm:$0xff]
        %v6299 = vld [vmem:[%s6 + $0x68] sm:$0xff]
        %v6300 = vld [vmem:[%s6 + $0x70] sm:$0xff]
        %v6301 = vld [vmem:[%s6 + $0x78] sm:$0xff]
        %v6302 = vld [vmem:[%s6 + $0x80] sm:$0xff]
        %v6303 = vld [vmem:[%s6 + $0x88] sm:$0xff]
        %v6304 = vld [vmem:[%s6 + $0x90] sm:$0xff]
        %v6305 = vld [vmem:[%s6 + $0x98] sm:$0xff]
        %v6306 = vld [vmem:[%s6 + $0xa0] sm:$0xff]
        %v6307 = vld [vmem:[%s6 + $0xa8] sm:$0xff]
        %v6308 = vld [vmem:[%s6 + $0xb0] sm:$0xff]
        %v6309 = vld [vmem:[%s6 + $0xb8] sm:$0xff]
        %v6310 = vld [vmem:[%s6 + $0xc0] sm:$0xf]
        %v6311 = vld [vmem:[%s9 + $0x5] ss:$0 sm:$0xff]
        %vm6312 = vcmask 556032
        %v6314 = vsel %vm6312, %v6285, 0
        %v6317 = vsel %vm3700, %v6310, 0
        %6319 = vmatprep.subr.mxu0 0.0
        %6320 = vmatpush1.msra.mxu0 %v6301
        %6321 = vmatprep.subr.mxu0 0.0
        %6322 = vmatpush1.msra.mxu0 %v6300
        %6323 = vmatprep.subr.mxu0 0.0
        %6324 = vmatpush1.msra.mxu0 %v6299
        %6325 = vmatprep.subr.mxu0 0.0
        %6326 = vmatpush1.msra.mxu0 %v6298
        %6327 = vmatprep.subr.mxu0 0.0
        %6328 = vmatpush1.msra.mxu0 %v6297
        %6329 = vmatprep.subr.mxu0 0.0
        %6330 = vmatpush1.msra.mxu0 %v6296
        %6331 = vmatprep.subr.mxu0 0.0
        %6332 = vmatpush1.msra.mxu0 %v6295
        %6333 = vmatprep.subr.mxu0 0.0
        %6334 = vmatpush1.msra.mxu0 %v6294
        %6335 = vmatprep.subr.mxu0 0.0
        %6336 = vmatpush1.msra.mxu0 %v6293
        %6337 = vmatprep.subr.mxu0 0.0
        %6338 = vmatpush1.msra.mxu0 %v6292
        %6339 = vmatprep.subr.mxu0 0.0
        %6340 = vmatpush1.msra.mxu0 %v6291
        %6341 = vmatprep.subr.mxu0 0.0
        %6342 = vmatpush1.msra.mxu0 %v6290
        %6343 = vmatprep.subr.mxu0 0.0
        %6344 = vmatpush1.msra.mxu0 %v6289
        %6345 = vmatprep.subr.mxu0 0.0
        %6346 = vmatpush1.msra.mxu0 %v6288
        %6347 = vmatprep.subr.mxu0 0.0
        %6348 = vmatpush1.msra.mxu0 %v6287
        %6349 = vmatprep.subr.mxu0 0.0
        %6350 = vmatpush1.msra.mxu0 %v6286
        %6351 = vmatprep.subr.mxu0 0.0
        %6352 = vmatpush2.msra.mxu0 0.0
        %6353 = vmatprep.subr.mxu0 0.0
        %6354 = vmatpush2.msra.mxu0 0.0
        %6355 = vmatprep.subr.mxu0 0.0
        %6356 = vmatpush2.msra.mxu0 0.0
        %6357 = vmatprep.subr.mxu0 0.0
        %6358 = vmatpush2.msra.mxu0 0.0
        %6359 = vmatprep.subr.mxu0 0.0
        %6360 = vmatpush2.msra.mxu0 0.0
        %6361 = vmatprep.subr.mxu0 0.0
        %6362 = vmatpush2.msra.mxu0 0.0
        %6363 = vmatprep.subr.mxu0 0.0
        %6364 = vmatpush2.msra.mxu0 0.0
        %6365 = vmatprep.subr.mxu0 0.0
        %6366 = vmatpush2.msra.mxu0 %v6317
        %6367 = vmatprep.subr.mxu0 0.0
        %6368 = vmatpush2.msra.mxu0 %v6309
        %6369 = vmatprep.subr.mxu0 0.0
        %6370 = vmatpush2.msra.mxu0 %v6308
        %6371 = vmatprep.subr.mxu0 0.0
        %6372 = vmatpush2.msra.mxu0 %v6307
        %6373 = vmatprep.subr.mxu0 0.0
        %6374 = vmatpush2.msra.mxu0 %v6306
        %6375 = vmatprep.subr.mxu0 0.0
        %6376 = vmatpush2.msra.mxu0 %v6305
        %6377 = vmatprep.subr.mxu0 0.0
        %6378 = vmatpush2.msra.mxu0 %v6304
        %6379 = vmatprep.subr.mxu0 0.0
        %6380 = vmatpush2.msra.mxu0 %v6303
        %6381 = vmatprep.subr.mxu0 0.0
        %6382 = vmatpush2.msra.mxu0 %v6302
        %6383 = vmatprep.mubr.f32.mxu0 %v6314
        %6384 = vmatmul.mubr.f32.gmra.mxu0 %v6281
        %v6385 = vpop.f32.mrf.mxu0
        %v6386 = vadd.f32 %v6311, %v6385
        %v6387 = vpop.f32.mrf.mxu0
        %6388 = vdwg.mxu0
        %v6389 = vxor.u32 %v6386, 2147483648
        %v6390 = vmul.f32 %v6389, 1.442695
        %v6391 = vpow.pop %v6390
        %v6392 = vadd.f32 %v6391, 1.0
        %v6393 = vrcp.pop %v6392
        %v6394 = vmul.f32 1.0, %v6393
        %v6395 = vlaneseq
        %v6396 = vshrl.u32 %v6395, 7
        %v6397 = vsub.s32 0, %v6396
        %v6398 = vrot.slane %v6394, %v6397
        %6400 = vbcast.lane.b32.xlu0 %v6398, 256
        %v6401 = vpop.permute.xlu0 %6400
        %v6402 = vlaneseq
        %v6403 = vshrl.u32 %v6402, 7
        %v6404 = vsub.s32 1, %v6403
        %v6405 = vrot.slane %v6394, %v6404
        %6407 = vbcast.lane.b32.xlu0 %v6405, 256
        %v6408 = vpop.permute.xlu0 %6407
        %v6409 = vlaneseq
        %v6410 = vshrl.u32 %v6409, 7
        %v6411 = vsub.s32 2, %v6410
        %v6412 = vrot.slane %v6394, %v6411
        %6414 = vbcast.lane.b32.xlu0 %v6412, 256
        %v6415 = vpop.permute.xlu0 %6414
        %v6416 = vlaneseq
        %v6417 = vshrl.u32 %v6416, 7
        %v6418 = vsub.s32 3, %v6417
        %v6419 = vrot.slane %v6394, %v6418
        %6421 = vbcast.lane.b32.xlu0 %v6419, 256
        %v6422 = vpop.permute.xlu0 %6421
        %v6423 = vlaneseq
        %v6424 = vshrl.u32 %v6423, 7
        %v6425 = vsub.s32 4, %v6424
        %v6426 = vrot.slane %v6394, %v6425
        %6428 = vbcast.lane.b32.xlu0 %v6426, 256
        %v6429 = vpop.permute.xlu0 %6428
        %v6430 = vlaneseq
        %v6431 = vshrl.u32 %v6430, 7
        %v6432 = vsub.s32 5, %v6431
        %v6433 = vrot.slane %v6394, %v6432
        %6435 = vbcast.lane.b32.xlu0 %v6433, 256
        %v6436 = vpop.permute.xlu0 %6435
        %v6437 = vlaneseq
        %v6438 = vshrl.u32 %v6437, 7
        %v6439 = vsub.s32 6, %v6438
        %v6440 = vrot.slane %v6394, %v6439
        %6442 = vbcast.lane.b32.xlu0 %v6440, 256
        %v6443 = vpop.permute.xlu0 %6442
        %v6444 = vlaneseq
        %v6445 = vshrl.u32 %v6444, 7
        %v6446 = vsub.s32 7, %v6445
        %v6447 = vrot.slane %v6394, %v6446
        %6449 = vbcast.lane.b32.xlu0 %v6447, 256
        %v6450 = vpop.permute.xlu0 %6449
        %s6452 = sor.u32 256, 8
        %6453 = vbcast.lane.b32.xlu0 %v6398, %s6452
        %v6454 = vpop.permute.xlu0 %6453
        %s6456 = sor.u32 256, 8
        %6457 = vbcast.lane.b32.xlu0 %v6405, %s6456
        %v6458 = vpop.permute.xlu0 %6457
        %s6460 = sor.u32 256, 8
        %6461 = vbcast.lane.b32.xlu0 %v6412, %s6460
        %v6462 = vpop.permute.xlu0 %6461
        %s6464 = sor.u32 256, 8
        %6465 = vbcast.lane.b32.xlu0 %v6419, %s6464
        %v6466 = vpop.permute.xlu0 %6465
        %s6468 = sor.u32 256, 8
        %6469 = vbcast.lane.b32.xlu0 %v6426, %s6468
        %v6470 = vpop.permute.xlu0 %6469
        %s6472 = sor.u32 256, 8
        %6473 = vbcast.lane.b32.xlu0 %v6433, %s6472
        %v6474 = vpop.permute.xlu0 %6473
        %s6476 = sor.u32 256, 8
        %6477 = vbcast.lane.b32.xlu0 %v6440, %s6476
        %v6478 = vpop.permute.xlu0 %6477
        %s6480 = sor.u32 256, 8
        %6481 = vbcast.lane.b32.xlu0 %v6447, %s6480
        %v6482 = vpop.permute.xlu0 %6481
        %v6483 = vmul.f32 %v5796, %v6401
        %v6484 = vmul.f32 %v5799, %v6408
        %v6485 = vmul.f32 %v5804, %v6415
        %v6486 = vmul.f32 %v5807, %v6422
        %v6487 = vmul.f32 %v5812, %v6429
        %v6488 = vmul.f32 %v5815, %v6436
        %v6489 = vmul.f32 %v5820, %v6443
        %v6490 = vmul.f32 %v5823, %v6450
        %v6491 = vmul.f32 %v5978, %v6454
        %v6492 = vmul.f32 %v5981, %v6458
        %v6493 = vmul.f32 %v5986, %v6462
        %v6494 = vmul.f32 %v5989, %v6466
        %v6495 = vmul.f32 %v5994, %v6470
        %v6496 = vmul.f32 %v5997, %v6474
        %v6497 = vmul.f32 %v6002, %v6478
        %v6498 = vmul.f32 %v6005, %v6482
        %v6499 = vadd.f32 %v6483, %v6491
        %v6500 = vadd.f32 %v6484, %v6492
        %v6501 = vadd.f32 %v6485, %v6493
        %v6502 = vadd.f32 %v6486, %v6494
        %v6503 = vadd.f32 %v6487, %v6495
        %v6504 = vadd.f32 %v6488, %v6496
        %v6505 = vadd.f32 %v6489, %v6497
        %v6506 = vadd.f32 %v6490, %v6498
        %v6507 = vpack.c.bf16 %v6500, %v6499
        %v6508 = vpack.c.bf16 %v6502, %v6501
        %v6509 = vpack.c.bf16 %v6504, %v6503
        %v6510 = vpack.c.bf16 %v6506, %v6505
        %v6511 = vld [vmem:[%s7] sm:$0xff]
        %v6512 = vld [vmem:[%s7 + $0x8] sm:$0xff]
        %v6513 = vld [vmem:[%s7 + $0x10] sm:$0xff]
        %v6514 = vld [vmem:[%s7 + $0x18] sm:$0xff]
        %v6515 = vld [vmem:[%s7 + $0x20] sm:$0xff]
        %v6516 = vld [vmem:[%s7 + $0x28] sm:$0xff]
        %v6517 = vld [vmem:[%s7 + $0x30] sm:$0xff]
        %v6518 = vld [vmem:[%s7 + $0x38] sm:$0xff]
        %v6519 = vld [vmem:[%s7 + $0x40] sm:$0xff]
        %v6520 = vld [vmem:[%s7 + $0x48] sm:$0xff]
        %v6521 = vld [vmem:[%s7 + $0x50] sm:$0xff]
        %v6522 = vld [vmem:[%s7 + $0x58] sm:$0xff]
        %s6523 = scalar_lea.vmem %s9, 6
        %v6524 = vld [vmem:[%s6523] ss:$8 sm:$0x3]
        %v6526 = vlaneseq
        %v6527 = vshrl.u32 %v6526, 7
        %v6528 = vsub.s32 0, %v6527
        %v6529 = vrot.slane %v6524, %v6528
        %v6530 = vlaneseq
        %v6531 = vshrl.u32 %v6530, 7
        %v6532 = vsub.s32 1, %v6531
        %v6533 = vrot.slane %v6524, %v6532
        %v6548 = vunpack.c.l.b16 %v6511
        %v6549 = vunpack.c.h.b16 %v6511
        %v6550 = vunpack.c.l.b16 %v6512
        %v6551 = vunpack.c.h.b16 %v6512
        %v6552 = vunpack.c.l.b16 %v6513
        %v6553 = vunpack.c.h.b16 %v6513
        %v6554 = vunpack.c.l.b16 %v6514
        %v6555 = vunpack.c.h.b16 %v6514
        %v6556 = vunpack.c.l.b16 %v6515
        %v6557 = vunpack.c.h.b16 %v6515
        %v6558 = vunpack.c.l.b16 %v6516
        %v6559 = vunpack.c.h.b16 %v6516
        %v6560 = vunpack.c.l.b16 %v6517
        %v6561 = vunpack.c.h.b16 %v6517
        %v6562 = vunpack.c.l.b16 %v6518
        %v6563 = vunpack.c.h.b16 %v6518
        %v6564 = vunpack.c.l.b16 %v6519
        %v6565 = vunpack.c.h.b16 %v6519
        %v6566 = vunpack.c.l.b16 %v6520
        %v6567 = vunpack.c.h.b16 %v6520
        %v6568 = vunpack.c.l.b16 %v6521
        %v6569 = vunpack.c.h.b16 %v6521
        %v6570 = vunpack.c.l.b16 %v6522
        %v6571 = vunpack.c.h.b16 %v6522
        %v6572 = vpack.c.b16 %v6550, %v6548
        %v6573 = vpack.c.b16 %v6551, %v6549
        %v6574 = vpack.c.b16 %v6554, %v6552
        %v6575 = vpack.c.b16 %v6555, %v6553
        %v6576 = vpack.c.b16 %v6558, %v6556
        %v6577 = vpack.c.b16 %v6559, %v6557
        %v6578 = vpack.c.b16 %v6562, %v6560
        %v6579 = vpack.c.b16 %v6563, %v6561
        %v6580 = vpack.c.b16 %v6566, %v6564
        %v6581 = vpack.c.b16 %v6567, %v6565
        %v6582 = vpack.c.b16 %v6570, %v6568
        %v6583 = vpack.c.b16 %v6571, %v6569
        %v6597 = vsel %vm6008, %v6507, 0
        %v6600 = vsel %vm6008, %v6508, 0
        %v6603 = vsel %vm6008, %v6509, 0
        %v6606 = vsel %vm6008, %v6510, 0
        %6608 = vmatprep.subr.bf16.mxu0 0
        %6609 = vmatpush1.bf16.msra.mxu0 0
        %6610 = vmatprep.subr.bf16.mxu0 0
        %6611 = vmatpush1.bf16.msra.mxu0 0
        %6612 = vmatprep.subr.bf16.mxu0 %v6583
        %6613 = vmatpush1.bf16.msra.mxu0 %v6582
        %6614 = vmatprep.subr.bf16.mxu0 %v6581
        %6615 = vmatpush1.bf16.msra.mxu0 %v6580
        %6616 = vmatprep.subr.bf16.mxu0 %v6579
        %6617 = vmatpush1.bf16.msra.mxu0 %v6578
        %6618 = vmatprep.subr.bf16.mxu0 %v6577
        %6619 = vmatpush1.bf16.msra.mxu0 %v6576
        %6620 = vmatprep.subr.bf16.mxu0 %v6575
        %6621 = vmatpush1.bf16.msra.mxu0 %v6574
        %6622 = vmatprep.subr.bf16.mxu0 %v6573
        %6623 = vmatpush1.bf16.msra.mxu0 %v6572
        %6624 = vmatprep.subr.bf16.mxu0 0
        %6625 = vmatpush2.bf16.msra.mxu0 0
        %6626 = vmatprep.subr.bf16.mxu0 0
        %6627 = vmatpush2.bf16.msra.mxu0 0
        %6628 = vmatprep.subr.bf16.mxu0 0
        %6629 = vmatpush2.bf16.msra.mxu0 0
        %6630 = vmatprep.subr.bf16.mxu0 0
        %6631 = vmatpush2.bf16.msra.mxu0 0
        %6632 = vmatprep.subr.bf16.mxu0 0
        %6633 = vmatpush2.bf16.msra.mxu0 0
        %6634 = vmatprep.subr.bf16.mxu0 0
        %6635 = vmatpush2.bf16.msra.mxu0 0
        %6636 = vmatprep.subr.bf16.mxu0 0
        %6637 = vmatpush2.bf16.msra.mxu0 0
        %6638 = vmatprep.subr.bf16.mxu0 0
        %6639 = vmatpush2.bf16.msra.mxu0 0
        %6640 = vmatprep.mubr.bf16.mxu0 0
        %6641 = vmatmul.mubr.bf16.gmra.mxu0 %v6597
        %v6642 = vpop.f32.mrf.mxu0
        %v6643 = vadd.f32 %v6529, %v6642
        %v6644 = vpop.f32.mrf.mxu0
        %v6645 = vadd.f32 %v6533, %v6644
        %v6646 = vpop.f32.mrf.mxu0
        %v6647 = vadd.f32 %v6529, %v6646
        %v6648 = vpop.f32.mrf.mxu0
        %v6649 = vadd.f32 %v6533, %v6648
        %6650 = vmatprep.mubr.bf16.mxu0 0
        %6651 = vmatmul.mubr.bf16.gmra.mxu0 %v6600
        %v6652 = vpop.f32.mrf.mxu0
        %v6653 = vadd.f32 %v6529, %v6652
        %v6654 = vpop.f32.mrf.mxu0
        %v6655 = vadd.f32 %v6533, %v6654
        %v6656 = vpop.f32.mrf.mxu0
        %v6657 = vadd.f32 %v6529, %v6656
        %v6658 = vpop.f32.mrf.mxu0
        %v6659 = vadd.f32 %v6533, %v6658
        %6660 = vmatprep.mubr.bf16.mxu0 0
        %6661 = vmatmul.mubr.bf16.gmra.mxu0 %v6603
        %v6662 = vpop.f32.mrf.mxu0
        %v6663 = vadd.f32 %v6529, %v6662
        %v6664 = vpop.f32.mrf.mxu0
        %v6665 = vadd.f32 %v6533, %v6664
        %v6666 = vpop.f32.mrf.mxu0
        %v6667 = vadd.f32 %v6529, %v6666
        %v6668 = vpop.f32.mrf.mxu0
        %v6669 = vadd.f32 %v6533, %v6668
        %6670 = vmatprep.mubr.bf16.mxu0 0
        %6671 = vmatmul.mubr.bf16.gmra.mxu0 %v6606
        %v6672 = vpop.f32.mrf.mxu0
        %v6673 = vadd.f32 %v6529, %v6672
        %v6674 = vpop.f32.mrf.mxu0
        %v6675 = vadd.f32 %v6533, %v6674
        %v6676 = vpop.f32.mrf.mxu0
        %v6677 = vadd.f32 %v6529, %v6676
        %v6678 = vpop.f32.mrf.mxu0
        %v6679 = vadd.f32 %v6533, %v6678
        %6680 = vdwg.mxu0
        %v6681 = vld [vmem:[%s968] sm:$0xfe]
        %v6682 = vld [vmem:[%s968 + $0x8] sm:$0xfe]
        %v6683 = vld [vmem:[%s968 + $0x10] sm:$0x1]
        %v6684 = vld [vmem:[%s968 + $0x18] sm:$0x1]
        %v6685 = vld [vmem:[%s968 + $0x20] sm:$0xfe]
        %v6686 = vld [vmem:[%s968 + $0x28] sm:$0xfe]
        %v6687 = vld [vmem:[%s968 + $0x30] sm:$0x1]
        %v6688 = vld [vmem:[%s968 + $0x38] sm:$0x1]
        %v6689 = vld [vmem:[%s968 + $0x40] sm:$0xfe]
        %v6690 = vld [vmem:[%s968 + $0x48] sm:$0xfe]
        %v6691 = vld [vmem:[%s968 + $0x50] sm:$0x1]
        %v6692 = vld [vmem:[%s968 + $0x58] sm:$0x1]
        %v6693 = vld [vmem:[%s968 + $0x60] sm:$0xfe]
        %v6694 = vld [vmem:[%s968 + $0x68] sm:$0xfe]
        %v6695 = vld [vmem:[%s968 + $0x70] sm:$0x1]
        %v6696 = vld [vmem:[%s968 + $0x78] sm:$0x1]
        %v6697 = vld [vmem:[%s968 + $0x80] sm:$0xfe]
        %v6698 = vld [vmem:[%s968 + $0x88] sm:$0xfe]
        %v6699 = vld [vmem:[%s968 + $0x90] sm:$0x1]
        %v6700 = vld [vmem:[%s968 + $0x98] sm:$0x1]
        %v6701 = vld [vmem:[%s968 + $0xa0] sm:$0xfe]
        %v6702 = vld [vmem:[%s968 + $0xa8] sm:$0xfe]
        %v6703 = vld [vmem:[%s968 + $0xb0] sm:$0x1]
        %v6704 = vld [vmem:[%s968 + $0xb8] sm:$0x1]
        %v6705 = vld [vmem:[%s968 + $0xc0] sm:$0xfe]
        %v6706 = vld [vmem:[%s968 + $0xc8] sm:$0xfe]
        %v6707 = vld [vmem:[%s968 + $0xd0] sm:$0x1]
        %v6708 = vld [vmem:[%s968 + $0xd8] sm:$0x1]
        %v6709 = vld [vmem:[%s968 + $0xe0] sm:$0xfe]
        %v6710 = vld [vmem:[%s968 + $0xe8] sm:$0xfe]
        %v6711 = vld [vmem:[%s968 + $0xf0] sm:$0x1]
        %v6712 = vld [vmem:[%s968 + $0xf8] sm:$0x1]
        %v6745 = vrot.slane %v6681, 1
        %v6746 = vrot.slane %v6683, 1
        %v6747 = vsel %vm1386, %v6745, %v6746
        %v6748 = vrot.slane %v6682, 1
        %v6749 = vrot.slane %v6684, 1
        %v6750 = vsel %vm1386, %v6748, %v6749
        %v6751 = vrot.slane %v6685, 1
        %v6752 = vrot.slane %v6687, 1
        %v6753 = vsel %vm1386, %v6751, %v6752
        %v6754 = vrot.slane %v6686, 1
        %v6755 = vrot.slane %v6688, 1
        %v6756 = vsel %vm1386, %v6754, %v6755
        %v6757 = vrot.slane %v6689, 1
        %v6758 = vrot.slane %v6691, 1
        %v6759 = vsel %vm1386, %v6757, %v6758
        %v6760 = vrot.slane %v6690, 1
        %v6761 = vrot.slane %v6692, 1
        %v6762 = vsel %vm1386, %v6760, %v6761
        %v6763 = vrot.slane %v6693, 1
        %v6764 = vrot.slane %v6695, 1
        %v6765 = vsel %vm1386, %v6763, %v6764
        %v6766 = vrot.slane %v6694, 1
        %v6767 = vrot.slane %v6696, 1
        %v6768 = vsel %vm1386, %v6766, %v6767
        %v6769 = vrot.slane %v6697, 1
        %v6770 = vrot.slane %v6699, 1
        %v6771 = vsel %vm1386, %v6769, %v6770
        %v6772 = vrot.slane %v6698, 1
        %v6773 = vrot.slane %v6700, 1
        %v6774 = vsel %vm1386, %v6772, %v6773
        %v6775 = vrot.slane %v6701, 1
        %v6776 = vrot.slane %v6703, 1
        %v6777 = vsel %vm1386, %v6775, %v6776
        %v6778 = vrot.slane %v6702, 1
        %v6779 = vrot.slane %v6704, 1
        %v6780 = vsel %vm1386, %v6778, %v6779
        %v6781 = vrot.slane %v6705, 1
        %v6782 = vrot.slane %v6707, 1
        %v6783 = vsel %vm1386, %v6781, %v6782
        %v6784 = vrot.slane %v6706, 1
        %v6785 = vrot.slane %v6708, 1
        %v6786 = vsel %vm1386, %v6784, %v6785
        %v6787 = vrot.slane %v6709, 1
        %v6788 = vrot.slane %v6711, 1
        %v6789 = vsel %vm1386, %v6787, %v6788
        %v6790 = vrot.slane %v6710, 1
        %v6791 = vrot.slane %v6712, 1
        %v6792 = vsel %vm1386, %v6790, %v6791
        %v6809 = vmul.f32 %v6747, %v6643
        %v6810 = vmul.f32 %v6750, %v6645
        %v6811 = vmul.f32 %v6753, %v6647
        %v6812 = vmul.f32 %v6756, %v6649
        %v6813 = vmul.f32 %v6759, %v6653
        %v6814 = vmul.f32 %v6762, %v6655
        %v6815 = vmul.f32 %v6765, %v6657
        %v6816 = vmul.f32 %v6768, %v6659
        %v6817 = vmul.f32 %v6771, %v6663
        %v6818 = vmul.f32 %v6774, %v6665
        %v6819 = vmul.f32 %v6777, %v6667
        %v6820 = vmul.f32 %v6780, %v6669
        %v6821 = vmul.f32 %v6783, %v6673
        %v6822 = vmul.f32 %v6786, %v6675
        %v6823 = vmul.f32 %v6789, %v6677
        %v6824 = vmul.f32 %v6792, %v6679
        %v6825 = vpack.c.bf16 %v6811, %v6809
        %v6826 = vpack.c.bf16 %v6812, %v6810
        %v6827 = vpack.c.bf16 %v6815, %v6813
        %v6828 = vpack.c.bf16 %v6816, %v6814
        %v6829 = vpack.c.bf16 %v6819, %v6817
        %v6830 = vpack.c.bf16 %v6820, %v6818
        %v6831 = vpack.c.bf16 %v6823, %v6821
        %v6832 = vpack.c.bf16 %v6824, %v6822
        %v6833 = vld [vmem:[%s8] sm:$0xff]
        %v6834 = vld [vmem:[%s8 + $0x8] sm:$0xff]
        %v6835 = vld [vmem:[%s8 + $0x10] sm:$0xff]
        %v6836 = vld [vmem:[%s8 + $0x18] sm:$0xff]
        %v6837 = vld [vmem:[%s8 + $0x20] sm:$0xff]
        %v6838 = vld [vmem:[%s8 + $0x28] sm:$0xff]
        %v6839 = vld [vmem:[%s8 + $0x30] sm:$0xff]
        %v6840 = vld [vmem:[%s8 + $0x38] sm:$0xff]
        %v6841 = vld [vmem:[%s8 + $0x40] sm:$0xff]
        %v6842 = vld [vmem:[%s8 + $0x48] sm:$0xff]
        %v6843 = vld [vmem:[%s8 + $0x50] sm:$0xff]
        %v6844 = vld [vmem:[%s8 + $0x58] sm:$0xff]
        %v6845 = vld [vmem:[%s8 + $0x60] sm:$0xff]
        %v6846 = vld [vmem:[%s8 + $0x68] sm:$0xff]
        %v6847 = vld [vmem:[%s8 + $0x70] sm:$0xff]
        %v6848 = vld [vmem:[%s8 + $0x78] sm:$0xff]
        %v6849 = vld [vmem:[%s8 + $0x80] sm:$0xff]
        %v6850 = vld [vmem:[%s8 + $0x88] sm:$0xff]
        %v6851 = vld [vmem:[%s8 + $0x90] sm:$0xff]
        %v6852 = vld [vmem:[%s8 + $0x98] sm:$0xff]
        %v6853 = vld [vmem:[%s8 + $0xa0] sm:$0xff]
        %v6854 = vld [vmem:[%s8 + $0xa8] sm:$0xff]
        %v6855 = vld [vmem:[%s8 + $0xb0] sm:$0xff]
        %v6856 = vld [vmem:[%s8 + $0xb8] sm:$0xff]
        %s6857 = scalar_lea.vmem %s9, 7
        %v6858 = vld [vmem:[%s6857] ss:$8 sm:$0x3]
        %v6860 = vlaneseq
        %v6861 = vshrl.u32 %v6860, 7
        %v6862 = vsub.s32 0, %v6861
        %v6863 = vrot.slane %v6858, %v6862
        %v6864 = vlaneseq
        %v6865 = vshrl.u32 %v6864, 7
        %v6866 = vsub.s32 1, %v6865
        %v6867 = vrot.slane %v6858, %v6866
        %v6894 = vunpack.c.l.b16 %v6833
        %v6895 = vunpack.c.h.b16 %v6833
        %v6896 = vunpack.c.l.b16 %v6834
        %v6897 = vunpack.c.h.b16 %v6834
        %v6898 = vunpack.c.l.b16 %v6835
        %v6899 = vunpack.c.h.b16 %v6835
        %v6900 = vunpack.c.l.b16 %v6836
        %v6901 = vunpack.c.h.b16 %v6836
        %v6902 = vunpack.c.l.b16 %v6837
        %v6903 = vunpack.c.h.b16 %v6837
        %v6904 = vunpack.c.l.b16 %v6838
        %v6905 = vunpack.c.h.b16 %v6838
        %v6906 = vunpack.c.l.b16 %v6839
        %v6907 = vunpack.c.h.b16 %v6839
        %v6908 = vunpack.c.l.b16 %v6840
        %v6909 = vunpack.c.h.b16 %v6840
        %v6910 = vunpack.c.l.b16 %v6841
        %v6911 = vunpack.c.h.b16 %v6841
        %v6912 = vunpack.c.l.b16 %v6842
        %v6913 = vunpack.c.h.b16 %v6842
        %v6914 = vunpack.c.l.b16 %v6843
        %v6915 = vunpack.c.h.b16 %v6843
        %v6916 = vunpack.c.l.b16 %v6844
        %v6917 = vunpack.c.h.b16 %v6844
        %v6918 = vunpack.c.l.b16 %v6845
        %v6919 = vunpack.c.h.b16 %v6845
        %v6920 = vunpack.c.l.b16 %v6846
        %v6921 = vunpack.c.h.b16 %v6846
        %v6922 = vunpack.c.l.b16 %v6847
        %v6923 = vunpack.c.h.b16 %v6847
        %v6924 = vunpack.c.l.b16 %v6848
        %v6925 = vunpack.c.h.b16 %v6848
        %v6926 = vunpack.c.l.b16 %v6849
        %v6927 = vunpack.c.h.b16 %v6849
        %v6928 = vunpack.c.l.b16 %v6850
        %v6929 = vunpack.c.h.b16 %v6850
        %v6930 = vunpack.c.l.b16 %v6851
        %v6931 = vunpack.c.h.b16 %v6851
        %v6932 = vunpack.c.l.b16 %v6852
        %v6933 = vunpack.c.h.b16 %v6852
        %v6934 = vunpack.c.l.b16 %v6853
        %v6935 = vunpack.c.h.b16 %v6853
        %v6936 = vunpack.c.l.b16 %v6854
        %v6937 = vunpack.c.h.b16 %v6854
        %v6938 = vunpack.c.l.b16 %v6855
        %v6939 = vunpack.c.h.b16 %v6855
        %v6940 = vunpack.c.l.b16 %v6856
        %v6941 = vunpack.c.h.b16 %v6856
        %v6942 = vpack.c.b16 %v6896, %v6894
        %v6943 = vpack.c.b16 %v6897, %v6895
        %v6944 = vpack.c.b16 %v6900, %v6898
        %v6945 = vpack.c.b16 %v6901, %v6899
        %v6946 = vpack.c.b16 %v6904, %v6902
        %v6947 = vpack.c.b16 %v6905, %v6903
        %v6948 = vpack.c.b16 %v6908, %v6906
        %v6949 = vpack.c.b16 %v6909, %v6907
        %v6950 = vpack.c.b16 %v6912, %v6910
        %v6951 = vpack.c.b16 %v6913, %v6911
        %v6952 = vpack.c.b16 %v6916, %v6914
        %v6953 = vpack.c.b16 %v6917, %v6915
        %v6954 = vpack.c.b16 %v6920, %v6918
        %v6955 = vpack.c.b16 %v6921, %v6919
        %v6956 = vpack.c.b16 %v6924, %v6922
        %v6957 = vpack.c.b16 %v6925, %v6923
        %v6958 = vpack.c.b16 %v6928, %v6926
        %v6959 = vpack.c.b16 %v6929, %v6927
        %v6960 = vpack.c.b16 %v6932, %v6930
        %v6961 = vpack.c.b16 %v6933, %v6931
        %v6962 = vpack.c.b16 %v6936, %v6934
        %v6963 = vpack.c.b16 %v6937, %v6935
        %v6964 = vpack.c.b16 %v6940, %v6938
        %v6965 = vpack.c.b16 %v6941, %v6939
        %v6991 = vsel %vm799, %v6826, 0
        %v6994 = vsel %vm799, %v6828, 0
        %v6997 = vsel %vm799, %v6830, 0
        %v7000 = vsel %vm799, %v6832, 0
        %7002 = vmatprep.subr.bf16.mxu0 %v6957
        %7003 = vmatpush1.bf16.msra.mxu0 %v6956
        %7004 = vmatprep.subr.bf16.mxu0 %v6955
        %7005 = vmatpush1.bf16.msra.mxu0 %v6954
        %7006 = vmatprep.subr.bf16.mxu0 %v6953
        %7007 = vmatpush1.bf16.msra.mxu0 %v6952
        %7008 = vmatprep.subr.bf16.mxu0 %v6951
        %7009 = vmatpush1.bf16.msra.mxu0 %v6950
        %7010 = vmatprep.subr.bf16.mxu0 %v6949
        %7011 = vmatpush1.bf16.msra.mxu0 %v6948
        %7012 = vmatprep.subr.bf16.mxu0 %v6947
        %7013 = vmatpush1.bf16.msra.mxu0 %v6946
        %7014 = vmatprep.subr.bf16.mxu0 %v6945
        %7015 = vmatpush1.bf16.msra.mxu0 %v6944
        %7016 = vmatprep.subr.bf16.mxu0 %v6943
        %7017 = vmatpush1.bf16.msra.mxu0 %v6942
        %7018 = vmatprep.subr.bf16.mxu0 0
        %7019 = vmatpush2.bf16.msra.mxu0 0
        %7020 = vmatprep.subr.bf16.mxu0 0
        %7021 = vmatpush2.bf16.msra.mxu0 0
        %7022 = vmatprep.subr.bf16.mxu0 0
        %7023 = vmatpush2.bf16.msra.mxu0 0
        %7024 = vmatprep.subr.bf16.mxu0 0
        %7025 = vmatpush2.bf16.msra.mxu0 0
        %7026 = vmatprep.subr.bf16.mxu0 %v6965
        %7027 = vmatpush2.bf16.msra.mxu0 %v6964
        %7028 = vmatprep.subr.bf16.mxu0 %v6963
        %7029 = vmatpush2.bf16.msra.mxu0 %v6962
        %7030 = vmatprep.subr.bf16.mxu0 %v6961
        %7031 = vmatpush2.bf16.msra.mxu0 %v6960
        %7032 = vmatprep.subr.bf16.mxu0 %v6959
        %7033 = vmatpush2.bf16.msra.mxu0 %v6958
        %7034 = vmatprep.mubr.bf16.mxu0 %v6991
        %7035 = vmatmul.mubr.bf16.gmra.mxu0 %v6825
        %v7036 = vpop.f32.mrf.mxu0
        %v7037 = vadd.f32 %v6863, %v7036
        %v7038 = vpop.f32.mrf.mxu0
        %v7039 = vadd.f32 %v6867, %v7038
        %v7040 = vpop.f32.mrf.mxu0
        %v7041 = vadd.f32 %v6863, %v7040
        %v7042 = vpop.f32.mrf.mxu0
        %v7043 = vadd.f32 %v6867, %v7042
        %7044 = vmatprep.mubr.bf16.mxu0 %v6994
        %7045 = vmatmul.mubr.bf16.gmra.mxu0 %v6827
        %v7046 = vpop.f32.mrf.mxu0
        %v7047 = vadd.f32 %v6863, %v7046
        %v7048 = vpop.f32.mrf.mxu0
        %v7049 = vadd.f32 %v6867, %v7048
        %v7050 = vpop.f32.mrf.mxu0
        %v7051 = vadd.f32 %v6863, %v7050
        %v7052 = vpop.f32.mrf.mxu0
        %v7053 = vadd.f32 %v6867, %v7052
        %7054 = vmatprep.mubr.bf16.mxu0 %v6997
        %7055 = vmatmul.mubr.bf16.gmra.mxu0 %v6829
        %v7056 = vpop.f32.mrf.mxu0
        %v7057 = vadd.f32 %v6863, %v7056
        %v7058 = vpop.f32.mrf.mxu0
        %v7059 = vadd.f32 %v6867, %v7058
        %v7060 = vpop.f32.mrf.mxu0
        %v7061 = vadd.f32 %v6863, %v7060
        %v7062 = vpop.f32.mrf.mxu0
        %v7063 = vadd.f32 %v6867, %v7062
        %7064 = vmatprep.mubr.bf16.mxu0 %v7000
        %7065 = vmatmul.mubr.bf16.gmra.mxu0 %v6831
        %v7066 = vpop.f32.mrf.mxu0
        %v7067 = vadd.f32 %v6863, %v7066
        %v7068 = vpop.f32.mrf.mxu0
        %v7069 = vadd.f32 %v6867, %v7068
        %v7070 = vpop.f32.mrf.mxu0
        %v7071 = vadd.f32 %v6863, %v7070
        %v7072 = vpop.f32.mrf.mxu0
        %v7073 = vadd.f32 %v6867, %v7072
        %7074 = vdwg.mxu0
        %v7075 = vxor.u32 %v7037, 2147483648
        %v7076 = vxor.u32 %v7039, 2147483648
        %v7077 = vxor.u32 %v7041, 2147483648
        %v7078 = vxor.u32 %v7043, 2147483648
        %v7079 = vxor.u32 %v7047, 2147483648
        %v7080 = vxor.u32 %v7049, 2147483648
        %v7081 = vxor.u32 %v7051, 2147483648
        %v7082 = vxor.u32 %v7053, 2147483648
        %v7083 = vxor.u32 %v7057, 2147483648
        %v7084 = vxor.u32 %v7059, 2147483648
        %v7085 = vxor.u32 %v7061, 2147483648
        %v7086 = vxor.u32 %v7063, 2147483648
        %v7087 = vxor.u32 %v7067, 2147483648
        %v7088 = vxor.u32 %v7069, 2147483648
        %v7089 = vxor.u32 %v7071, 2147483648
        %v7090 = vxor.u32 %v7073, 2147483648
        %v7091 = vmul.f32 %v7075, 1.442695
        %v7092 = vpow.pop %v7091
        %v7093 = vmul.f32 %v7076, 1.442695
        %v7094 = vpow.pop %v7093
        %v7095 = vmul.f32 %v7077, 1.442695
        %v7096 = vpow.pop %v7095
        %v7097 = vmul.f32 %v7078, 1.442695
        %v7098 = vpow.pop %v7097
        %v7099 = vmul.f32 %v7079, 1.442695
        %v7100 = vpow.pop %v7099
        %v7101 = vmul.f32 %v7080, 1.442695
        %v7102 = vpow.pop %v7101
        %v7103 = vmul.f32 %v7081, 1.442695
        %v7104 = vpow.pop %v7103
        %v7105 = vmul.f32 %v7082, 1.442695
        %v7106 = vpow.pop %v7105
        %v7107 = vmul.f32 %v7083, 1.442695
        %v7108 = vpow.pop %v7107
        %v7109 = vmul.f32 %v7084, 1.442695
        %v7110 = vpow.pop %v7109
        %v7111 = vmul.f32 %v7085, 1.442695
        %v7112 = vpow.pop %v7111
        %v7113 = vmul.f32 %v7086, 1.442695
        %v7114 = vpow.pop %v7113
        %v7115 = vmul.f32 %v7087, 1.442695
        %v7116 = vpow.pop %v7115
        %v7117 = vmul.f32 %v7088, 1.442695
        %v7118 = vpow.pop %v7117
        %v7119 = vmul.f32 %v7089, 1.442695
        %v7120 = vpow.pop %v7119
        %v7121 = vmul.f32 %v7090, 1.442695
        %v7122 = vpow.pop %v7121
        %v7123 = vadd.f32 %v7092, 1.0
        %v7124 = vadd.f32 %v7094, 1.0
        %v7125 = vadd.f32 %v7096, 1.0
        %v7126 = vadd.f32 %v7098, 1.0
        %v7127 = vadd.f32 %v7100, 1.0
        %v7128 = vadd.f32 %v7102, 1.0
        %v7129 = vadd.f32 %v7104, 1.0
        %v7130 = vadd.f32 %v7106, 1.0
        %v7131 = vadd.f32 %v7108, 1.0
        %v7132 = vadd.f32 %v7110, 1.0
        %v7133 = vadd.f32 %v7112, 1.0
        %v7134 = vadd.f32 %v7114, 1.0
        %v7135 = vadd.f32 %v7116, 1.0
        %v7136 = vadd.f32 %v7118, 1.0
        %v7137 = vadd.f32 %v7120, 1.0
        %v7138 = vadd.f32 %v7122, 1.0
        %v7139 = vrcp.pop %v7123
        %v7140 = vmul.f32 1.0, %v7139
        %v7141 = vrcp.pop %v7124
        %v7142 = vmul.f32 1.0, %v7141
        %v7143 = vrcp.pop %v7125
        %v7144 = vmul.f32 1.0, %v7143
        %v7145 = vrcp.pop %v7126
        %v7146 = vmul.f32 1.0, %v7145
        %v7147 = vrcp.pop %v7127
        %v7148 = vmul.f32 1.0, %v7147
        %v7149 = vrcp.pop %v7128
        %v7150 = vmul.f32 1.0, %v7149
        %v7151 = vrcp.pop %v7129
        %v7152 = vmul.f32 1.0, %v7151
        %v7153 = vrcp.pop %v7130
        %v7154 = vmul.f32 1.0, %v7153
        %v7155 = vrcp.pop %v7131
        %v7156 = vmul.f32 1.0, %v7155
        %v7157 = vrcp.pop %v7132
        %v7158 = vmul.f32 1.0, %v7157
        %v7159 = vrcp.pop %v7133
        %v7160 = vmul.f32 1.0, %v7159
        %v7161 = vrcp.pop %v7134
        %v7162 = vmul.f32 1.0, %v7161
        %v7163 = vrcp.pop %v7135
        %v7164 = vmul.f32 1.0, %v7163
        %v7165 = vrcp.pop %v7136
        %v7166 = vmul.f32 1.0, %v7165
        %v7167 = vrcp.pop %v7137
        %v7168 = vmul.f32 1.0, %v7167
        %v7169 = vrcp.pop %v7138
        %v7170 = vmul.f32 1.0, %v7169
        %v7171 = vmul.f32 %v7037, %v7140
        %v7172 = vmul.f32 %v7039, %v7142
        %v7173 = vmul.f32 %v7041, %v7144
        %v7174 = vmul.f32 %v7043, %v7146
        %v7175 = vmul.f32 %v7047, %v7148
        %v7176 = vmul.f32 %v7049, %v7150
        %v7177 = vmul.f32 %v7051, %v7152
        %v7178 = vmul.f32 %v7053, %v7154
        %v7179 = vmul.f32 %v7057, %v7156
        %v7180 = vmul.f32 %v7059, %v7158
        %v7181 = vmul.f32 %v7061, %v7160
        %v7182 = vmul.f32 %v7063, %v7162
        %v7183 = vmul.f32 %v7067, %v7164
        %v7184 = vmul.f32 %v7069, %v7166
        %v7185 = vmul.f32 %v7071, %v7168
        %v7186 = vmul.f32 %v7073, %v7170
        %7187 = vst [vmem:[%s352] sm:$0xff] %v7171
        %7188 = vst.msk [vmem:[%s352 + $0x8] sm:$0xff] %vm799, %v7172
        %7189 = vst [vmem:[%s352 + $0x10] sm:$0xff] %v7173
        %7190 = vst.msk [vmem:[%s352 + $0x18] sm:$0xff] %vm799, %v7174
        %7191 = vst [vmem:[%s352 + $0x20] sm:$0xff] %v7175
        %7192 = vst.msk [vmem:[%s352 + $0x28] sm:$0xff] %vm799, %v7176
        %7193 = vst [vmem:[%s352 + $0x30] sm:$0xff] %v7177
        %7194 = vst.msk [vmem:[%s352 + $0x38] sm:$0xff] %vm799, %v7178
        %7195 = vst [vmem:[%s352 + $0x40] sm:$0xff] %v7179
        %7196 = vst.msk [vmem:[%s352 + $0x48] sm:$0xff] %vm799, %v7180
        %7197 = vst [vmem:[%s352 + $0x50] sm:$0xff] %v7181
        %7198 = vst.msk [vmem:[%s352 + $0x58] sm:$0xff] %vm799, %v7182
        %7199 = vst [vmem:[%s352 + $0x60] sm:$0xff] %v7183
        %7200 = vst.msk [vmem:[%s352 + $0x68] sm:$0xff] %vm799, %v7184
        %7201 = vst [vmem:[%s352 + $0x70] sm:$0xff] %v7185
        %7202 = vst.msk [vmem:[%s352 + $0x78] sm:$0xff] %vm799, %v7186
        %s7203 = sand.u32 %s247, 1
        %s7204 = scalar_lea.sflag [#allocation6], %s7203
        %s7205 = sand.u32 %s247, 1
        %s7206 = smul.addr %s7205, 128
        %s7207 = scalar_lea.vmem [#allocation5], %s7206
        // Predicated region
        $region61: #{unify_forward.1} parent=59 // pred_check
          %p7208 = pneg %p257
        $region62: #{unify_forward.1} parent=59 // pred_check_branch
          %7210 = sbr.rel (%p7208) target = $region64
        $region63: #{unify_forward.1} parent=59 // pred_region
          %s7212 = ssub.s32 2048, 2048
          %7213 = vsyncadd %s7204, %s7212
          %s7214 = smul.addr %s24, 16
          %s7215 = smul.addr %s7214, 128
          %s7216 = scalar_lea.hbm %s10, %s7215
          %s7217 = sshll.u32 %s7207, 4
          %s7218 = int_to_ptr.vmem [resolvable:$true] %s7217
          %7223 = dma.vmem_to_hbm [thread:$0]  %s7218, 2048, %s7216, %s7204, 256, 256, 16
        $region64: #{unify_forward.1} parent=59 // pred_fallthru
          _
      $region60: #{unify_forward.1} parent=5 // pred_fallthru
        _
      %p7224 = scmp.le.s32.totalorder 2, %s19
      // Predicated region
      $region65: #{unify_forward.1} parent=5 // pred_check
        %p7225 = pneg %p7224
      $region66: #{unify_forward.1} parent=5 // pred_check_branch
        %7227 = sbr.rel (%p7225) target = $region68
      $region67: #{unify_forward.1} parent=5 // pred_region
        %s7228 = ssub.s32 %s19, 2
        // Predicated region
        $region69: #{unify_forward.1} parent=67 // pred_check
          %p7229 = pneg %p263
        $region70: #{unify_forward.1} parent=67 // pred_check_branch
          %7231 = sbr.rel (%p7229) target = $region72
        $region71: #{unify_forward.1} parent=67 // pred_region
          %s7232 = sand.u32 %s248, 1
          %s7233 = scalar_lea.sflag [#allocation6], %s7232
          %s7234 = sand.u32 %s248, 1
          %s7235 = smul.addr %s7234, 128
          %s7236 = scalar_lea.vmem [#allocation5], %s7235
          %7237 = dma.done %s7233, 2048
        $region72: #{unify_forward.1} parent=67 // pred_fallthru
          _
      $region68: #{unify_forward.1} parent=5 // pred_fallthru
        _
    $region6: #{unify_forward.1} parent=1 // loop_footer
      %s23 = sadd.s32 1, %s19
    $region7: #{unify_forward.1} parent=1 // loop_footer_branch
      %18 = sbr.rel target = $region3
    $region8: #{unify_forward.1} parent=1 // loop_exit
      _
    %7238 = vsyncpa [#allocation6], 1
    %s7239 = scalar_lea.sflag [#allocation6], 1
    %7240 = vsyncpa %s7239, 1

</llo_original>
